<compile_context>
chip_gen: v6e
topology: v6e:2x2x1
jax: 0.10.0
libtpu: 0.0.40
codegen_flags: <defaults>
</compile_context>

<pallas_src>
import jax
import jax.numpy as jnp
from jax.experimental import pallas as pl
from jax.experimental.pallas import tpu as pltpu


def _round_up(x, m):
    return (x + m - 1) // m * m


def _cdiv(a, b):
    return (a + b - 1) // b


# ----------------------------------------------------------------------------
# Pallas kernels
# ----------------------------------------------------------------------------

def _conv_bn_relu_kernel(a_ref, w_ref, shift_ref, o_ref):
    # a: (tm, K_pad) bf16 im2col rows; w: (K_pad, 128) bf16, BN scale folded in.
    acc = jnp.dot(a_ref[...], w_ref[...], preferred_element_type=jnp.float32)
    y = jnp.maximum(acc + shift_ref[...], 0.0)           # folded BN shift + ReLU
    o_ref[...] = y.astype(o_ref.dtype)


def conv_bn_relu_matmul(patches, w_mat, shift, tm_max=2048):
    """(M, K_pad) @ (K_pad, 128) with fused per-channel shift and ReLU.

    Output is lane-dense (128 zero-padded output channels) bfloat16.
    """
    M, K_pad = patches.shape
    _, N_pad = w_mat.shape
    # At least 2 grid steps when possible (v7x megacore); tm multiple of 16
    # (bf16 sublane packing); cap so VMEM stays a few MB.
    tm = max(16, min(tm_max, _round_up(_cdiv(M, 2), 16)))
    grid = _cdiv(M, tm)
    return pl.pallas_call(
        _conv_bn_relu_kernel,
        out_shape=jax.ShapeDtypeStruct((M, N_pad), jnp.bfloat16),
        grid_spec=pltpu.PrefetchScalarGridSpec(
            num_scalar_prefetch=0,
            grid=(grid,),
            in_specs=[
                pl.BlockSpec((tm, K_pad), lambda i: (i, 0)),
                pl.BlockSpec((K_pad, N_pad), lambda i: (0, 0)),
                pl.BlockSpec((1, N_pad), lambda i: (0, 0)),
            ],
            out_specs=pl.BlockSpec((tm, N_pad), lambda i: (i, 0)),
        ),
        compiler_params=pltpu.CompilerParams(
            dimension_semantics=("parallel",)),
    )(patches, w_mat, shift)


def _mlp_kernel(x_ref, w1_ref, b1_ref, w2_ref, b2_ref, o_ref):
    h = jnp.dot(x_ref[...], w1_ref[...], preferred_element_type=jnp.float32)
    h = jnp.maximum(h + b1_ref[...], 0.0)                # relu(fc1(x))
    y = jnp.dot(h.astype(jnp.bfloat16), w2_ref[...],
                preferred_element_type=jnp.float32)
    y = jnp.maximum(y + b2_ref[...], 0.0)                # relu(fc2(x))
    y = y - jnp.max(y, axis=1, keepdims=True)            # log_softmax(dim=1)
    lse = jnp.log(jnp.sum(jnp.exp(y), axis=1, keepdims=True))
    o_ref[...] = y - lse


def mlp_head(x, w1, b1, w2, b2):
    B, D = x.shape
    H = w1.shape[1]
    N = w2.shape[1]
    # Full-array blocks (B=2, N=10 are tiny; masked store cost is negligible).
    return pl.pallas_call(
        _mlp_kernel,
        out_shape=jax.ShapeDtypeStruct((B, N), jnp.float32),
        grid_spec=pltpu.PrefetchScalarGridSpec(
            num_scalar_prefetch=0,
            grid=(1,),
            in_specs=[
                pl.BlockSpec((B, D), lambda i: (0, 0)),
                pl.BlockSpec((D, H), lambda i: (0, 0)),
                pl.BlockSpec((1, H), lambda i: (0, 0)),
                pl.BlockSpec((H, N), lambda i: (0, 0)),
                pl.BlockSpec((1, N), lambda i: (0, 0)),
            ],
            out_specs=pl.BlockSpec((B, N), lambda i: (0, 0)),
        ),
    )(x, w1, b1, w2, b2)


# ----------------------------------------------------------------------------
# JAX glue: im2col, maxpool, parameter setup, forward
# ----------------------------------------------------------------------------

def maxpool2(x):
    # x: (B, H, W, C), kernel=2, stride=2, floor (drop trailing row/col)
    B, H, W, C = x.shape
    Ho, Wo = H // 2, W // 2
    x = x[:, :Ho * 2, :Wo * 2, :].reshape(B, Ho, 2, Wo, 2, C)
    return jnp.max(x, axis=(2, 4))


def conv_block(x, w_mat, shift, cout, k=3, stride=2):
    # x: (B, H, W, Cin) NHWC bf16 -> conv(k, s=2, no pad) + BN + ReLU + maxpool2
    B, H, W, C = x.shape
    OH = (H - k) // stride + 1
    OW = (W - k) // stride + 1
    K = k * k * C
    K_pad = w_mat.shape[0]
    taps = []
    for di in range(k):
        for dj in range(k):
            taps.append(x[:, di:di + stride * (OH - 1) + 1:stride,
                          dj:dj + stride * (OW - 1) + 1:stride, :])
    if K_pad > K:  # bake K padding into the im2col build (no extra pad pass)
        taps.append(jnp.zeros((B, OH, OW, K_pad - K), x.dtype))
    patches = jnp.concatenate(taps, axis=-1).reshape(B * OH * OW, K_pad)
    y = conv_bn_relu_matmul(patches, w_mat, shift)        # (M, 128) bf16
    y = y[:, :cout].reshape(B, OH, OW, cout)
    return maxpool2(y)


def init_params(key):
    keys = jax.random.split(key, 5)
    eps = 1e-5
    n_pad = 128

    def conv_stage(k, cin, cout, ksz=3):
        # xavier_normal_ on (cout, cin, k, k); bias zero; BN gamma=1, beta=0
        fan_in, fan_out = cin * ksz * ksz, cout * ksz * ksz
        std = (2.0 / (fan_in + fan_out)) ** 0.5
        w = jax.random.normal(k, (ksz, ksz, cin, cout), jnp.float32) * std
        b = jnp.zeros((cout,), jnp.float32)
        gamma = jnp.ones((cout,), jnp.float32)
        beta = jnp.zeros((cout,), jnp.float32)
        run_mean = jnp.zeros((cout,), jnp.float32)
        run_var = jnp.ones((cout,), jnp.float32)
        scale = gamma / jnp.sqrt(run_var + eps)
        shift = (b - run_mean) * scale + beta
        K = ksz * ksz * cin
        K_pad = _round_up(K, 128)
        # Fold BN scale into the weights; pad K rows and output cols with zeros.
        w_mat = w.reshape(K, cout) * scale[None, :]        # cols (kh, kw, cin)
        w_mat = jnp.pad(w_mat, ((0, K_pad - K), (0, n_pad - cout)))
        shift_p = jnp.pad(shift, (0, n_pad - cout)).reshape(1, n_pad)
        return w_mat.astype(jnp.bfloat16), shift_p

    def linear(k, din, dout):
        # normal_(0, 0.01) on (dout, din); stored transposed; bias zero
        w = jax.random.normal(k, (din, dout), jnp.float32) * 0.01
        b = jnp.zeros((1, dout), jnp.float32)
        return w.astype(jnp.bfloat16), b

    params = {
        "conv1": conv_stage(keys[0], 3, 16),
        "conv2": conv_stage(keys[1], 16, 32),
        "conv3": conv_stage(keys[2], 32, 64),
    }
    params["w1"], params["b1"] = linear(keys[3], 3 * 3 * 64, 64)
    params["w2"], params["b2"] = linear(keys[4], 64, 10)
    return params


def cnn_forward(params, x_nchw):
    x = jnp.transpose(x_nchw, (0, 2, 3, 1)).astype(jnp.bfloat16)  # NCHW->NHWC
    x = conv_block(x, *params["conv1"], 16)     # (B, 55, 55, 16)
    x = conv_block(x, *params["conv2"], 32)     # (B, 13, 13, 32)
    x = conv_block(x, *params["conv3"], 64)     # (B, 3, 3, 64)
    B = x.shape[0]
    # flatten in PyTorch's (C, H, W) order to mirror x.view(B, -1) on NCHW
    x = jnp.transpose(x, (0, 3, 1, 2)).reshape(B, 3 * 3 * 64)
    return mlp_head(x, params["w1"], params["b1"],
                    params["w2"], params["b2"])


if __name__ == "__main__":
    key = jax.random.PRNGKey(0)
    k_param, k_input = jax.random.split(key)
    params = init_params(k_param)
    # 224x224 input is required so the conv/pool stack yields 3*3*64 features.
    x = jax.random.normal(k_input, (2, 3, 224, 224), jnp.float32)
    out = jax.jit(cnn_forward)(params, x)
    out = jax.block_until_ready(out)
    assert out.shape == (2, 10)
    assert bool(jnp.all(jnp.isfinite(out)))
    # log_softmax rows must exponentiate-sum to ~1
    assert bool(jnp.allclose(jnp.sum(jnp.exp(out), axis=1), 1.0, atol=1e-3))
    print("KERNEL_OK")
</pallas_src>

<mosaic_0001>
module attributes {stable_mosaic.version = 11 : i64} {
  func.func @_conv_bn_relu_kernel(%arg0: i32, %arg1: memref<2048x128xbf16, #tpu.memory_space<vmem>>, %arg2: memref<128x128xbf16, #tpu.memory_space<vmem>>, %arg3: memref<1x128xf32, #tpu.memory_space<vmem>>, %arg4: memref<2048x128xbf16, #tpu.memory_space<vmem>>) attributes {dimension_semantics = [#tpu.dimension_semantics<parallel>], iteration_bounds = array<i64: 13>, scalar_prefetch = 0 : i64, scratch_operands = 0 : i64, tpu.core_type = #tpu.core_type<tc>, window_params = [{transform_indices = @transform_0, window_bounds = array<i64: 2048, 128>}, {pipeline_mode = #tpu.pipeline_mode<synchronous>, transform_indices = @transform_1, window_bounds = array<i64: 128, 128>}, {pipeline_mode = #tpu.pipeline_mode<synchronous>, transform_indices = @transform_2, window_bounds = array<i64: 1, 128>}, {transform_indices = @transform_3, window_bounds = array<i64: 2048, 128>}]} {
    %c0 = arith.constant 0 : index
    %c0_0 = arith.constant 0 : index
    %0 = vector.load %arg1[%c0, %c0_0] : memref<2048x128xbf16, #tpu.memory_space<vmem>>, vector<2048x128xbf16>
    %c0_1 = arith.constant 0 : index
    %c0_2 = arith.constant 0 : index
    %1 = vector.load %arg2[%c0_1, %c0_2] : memref<128x128xbf16, #tpu.memory_space<vmem>>, vector<128x128xbf16>
    %cst = arith.constant dense<0.000000e+00> : vector<2048x128xf32>
    %2 = tpu.matmul %0, %1, %cst {dimension_numbers = #tpu.dot_dimension_numbers<[1], [0], [0], [1], [0, 0, 1, 1], [], []>} : vector<2048x128xbf16>, vector<128x128xbf16>, vector<2048x128xf32> -> vector<2048x128xf32>
    %c0_3 = arith.constant 0 : index
    %c0_4 = arith.constant 0 : index
    %3 = vector.load %arg3[%c0_3, %c0_4] : memref<1x128xf32, #tpu.memory_space<vmem>>, vector<1x128xf32>
    %4 = vector.broadcast %3 : vector<1x128xf32> to vector<2048x128xf32>
    %5 = arith.addf %2, %4 : vector<2048x128xf32>
    %cst_5 = arith.constant 0.000000e+00 : f32
    %6 = vector.broadcast %cst_5 : f32 to vector<2048x128xf32>
    %7 = arith.maximumf %5, %6 : vector<2048x128xf32>
    %8 = arith.truncf %7 : vector<2048x128xf32> to vector<2048x128xbf16>
    %c0_6 = arith.constant 0 : index
    %c0_7 = arith.constant 0 : index
    %9 = vector.load %arg4[%c0_6, %c0_7] : memref<2048x128xbf16, #tpu.memory_space<vmem>>, vector<2048x128xbf16>
    tpu.vector_store %arg4[%c0_6, %c0_7], %8 {strides = array<i32>} : memref<2048x128xbf16, #tpu.memory_space<vmem>>, vector<2048x128xbf16>,
    return
  }
  func.func @transform_0(%arg0: i32) -> (i32, i32) {
    %c0_i32 = arith.constant 0 : i32
    %c0_i32_0 = arith.constant 0 : i32
    return %arg0, %c0_i32 : i32, i32
  }
  func.func @transform_1(%arg0: i32) -> (i32, i32) {
    %c0_i32 = arith.constant 0 : i32
    %c0_i32_0 = arith.constant 0 : i32
    %c0_i32_1 = arith.constant 0 : i32
    return %c0_i32, %c0_i32_0 : i32, i32
  }
  func.func @transform_2(%arg0: i32) -> (i32, i32) {
    %c0_i32 = arith.constant 0 : i32
    %c0_i32_0 = arith.constant 0 : i32
    %c0_i32_1 = arith.constant 0 : i32
    return %c0_i32, %c0_i32_0 : i32, i32
  }
  func.func @transform_3(%arg0: i32) -> (i32, i32) {
    %c0_i32 = arith.constant 0 : i32
    %c0_i32_0 = arith.constant 0 : i32
    return %arg0, %c0_i32 : i32, i32
  }
}

module attributes {stable_mosaic.version = 11 : i64} {
  func.func @_conv_bn_relu_kernel(%arg0: i32, %arg1: memref<736x256xbf16, #tpu.memory_space<vmem>>, %arg2: memref<256x128xbf16, #tpu.memory_space<vmem>>, %arg3: memref<1x128xf32, #tpu.memory_space<vmem>>, %arg4: memref<736x128xbf16, #tpu.memory_space<vmem>>) attributes {dimension_semantics = [#tpu.dimension_semantics<parallel>], iteration_bounds = array<i64: 2>, scalar_prefetch = 0 : i64, scratch_operands = 0 : i64, tpu.core_type = #tpu.core_type<tc>, window_params = [{transform_indices = @transform_0, window_bounds = array<i64: 736, 256>}, {pipeline_mode = #tpu.pipeline_mode<synchronous>, transform_indices = @transform_1, window_bounds = array<i64: 256, 128>}, {pipeline_mode = #tpu.pipeline_mode<synchronous>, transform_indices = @transform_2, window_bounds = array<i64: 1, 128>}, {transform_indices = @transform_3, window_bounds = array<i64: 736, 128>}]} {
    %c0 = arith.constant 0 : index
    %c0_0 = arith.constant 0 : index
    %0 = vector.load %arg1[%c0, %c0_0] : memref<736x256xbf16, #tpu.memory_space<vmem>>, vector<736x256xbf16>
    %c0_1 = arith.constant 0 : index
    %c0_2 = arith.constant 0 : index
    %1 = vector.load %arg2[%c0_1, %c0_2] : memref<256x128xbf16, #tpu.memory_space<vmem>>, vector<256x128xbf16>
    %cst = arith.constant dense<0.000000e+00> : vector<736x128xf32>
    %2 = tpu.matmul %0, %1, %cst {dimension_numbers = #tpu.dot_dimension_numbers<[1], [0], [0], [1], [0, 0, 1, 1], [], []>} : vector<736x256xbf16>, vector<256x128xbf16>, vector<736x128xf32> -> vector<736x128xf32>
    %c0_3 = arith.constant 0 : index
    %c0_4 = arith.constant 0 : index
    %3 = vector.load %arg3[%c0_3, %c0_4] : memref<1x128xf32, #tpu.memory_space<vmem>>, vector<1x128xf32>
    %4 = vector.broadcast %3 : vector<1x128xf32> to vector<736x128xf32>
    %5 = arith.addf %2, %4 : vector<736x128xf32>
    %cst_5 = arith.constant 0.000000e+00 : f32
    %6 = vector.broadcast %cst_5 : f32 to vector<736x128xf32>
    %7 = arith.maximumf %5, %6 : vector<736x128xf32>
    %8 = arith.truncf %7 : vector<736x128xf32> to vector<736x128xbf16>
    %c0_6 = arith.constant 0 : index
    %c0_7 = arith.constant 0 : index
    %9 = vector.load %arg4[%c0_6, %c0_7] : memref<736x128xbf16, #tpu.memory_space<vmem>>, vector<736x128xbf16>
    tpu.vector_store %arg4[%c0_6, %c0_7], %8 {strides = array<i32>} : memref<736x128xbf16, #tpu.memory_space<vmem>>, vector<736x128xbf16>,
    return
  }
  func.func @transform_0(%arg0: i32) -> (i32, i32) {
    %c0_i32 = arith.constant 0 : i32
    %c0_i32_0 = arith.constant 0 : i32
    return %arg0, %c0_i32 : i32, i32
  }
  func.func @transform_1(%arg0: i32) -> (i32, i32) {
    %c0_i32 = arith.constant 0 : i32
    %c0_i32_0 = arith.constant 0 : i32
    %c0_i32_1 = arith.constant 0 : i32
    return %c0_i32, %c0_i32_0 : i32, i32
  }
  func.func @transform_2(%arg0: i32) -> (i32, i32) {
    %c0_i32 = arith.constant 0 : i32
    %c0_i32_0 = arith.constant 0 : i32
    %c0_i32_1 = arith.constant 0 : i32
    return %c0_i32, %c0_i32_0 : i32, i32
  }
  func.func @transform_3(%arg0: i32) -> (i32, i32) {
    %c0_i32 = arith.constant 0 : i32
    %c0_i32_0 = arith.constant 0 : i32
    return %arg0, %c0_i32 : i32, i32
  }
}

module attributes {stable_mosaic.version = 11 : i64} {
  func.func @_conv_bn_relu_kernel(%arg0: i32, %arg1: memref<48x384xbf16, #tpu.memory_space<vmem>>, %arg2: memref<384x128xbf16, #tpu.memory_space<vmem>>, %arg3: memref<1x128xf32, #tpu.memory_space<vmem>>, %arg4: memref<48x128xbf16, #tpu.memory_space<vmem>>) attributes {dimension_semantics = [#tpu.dimension_semantics<parallel>], iteration_bounds = array<i64: 2>, scalar_prefetch = 0 : i64, scratch_operands = 0 : i64, tpu.core_type = #tpu.core_type<tc>, window_params = [{transform_indices = @transform_0, window_bounds = array<i64: 48, 384>}, {pipeline_mode = #tpu.pipeline_mode<synchronous>, transform_indices = @transform_1, window_bounds = array<i64: 384, 128>}, {pipeline_mode = #tpu.pipeline_mode<synchronous>, transform_indices = @transform_2, window_bounds = array<i64: 1, 128>}, {transform_indices = @transform_3, window_bounds = array<i64: 48, 128>}]} {
    %c0 = arith.constant 0 : index
    %c0_0 = arith.constant 0 : index
    %0 = vector.load %arg1[%c0, %c0_0] : memref<48x384xbf16, #tpu.memory_space<vmem>>, vector<48x384xbf16>
    %c0_1 = arith.constant 0 : index
    %c0_2 = arith.constant 0 : index
    %1 = vector.load %arg2[%c0_1, %c0_2] : memref<384x128xbf16, #tpu.memory_space<vmem>>, vector<384x128xbf16>
    %cst = arith.constant dense<0.000000e+00> : vector<48x128xf32>
    %2 = tpu.matmul %0, %1, %cst {dimension_numbers = #tpu.dot_dimension_numbers<[1], [0], [0], [1], [0, 0, 1, 1], [], []>} : vector<48x384xbf16>, vector<384x128xbf16>, vector<48x128xf32> -> vector<48x128xf32>
    %c0_3 = arith.constant 0 : index
    %c0_4 = arith.constant 0 : index
    %3 = vector.load %arg3[%c0_3, %c0_4] : memref<1x128xf32, #tpu.memory_space<vmem>>, vector<1x128xf32>
    %4 = vector.broadcast %3 : vector<1x128xf32> to vector<48x128xf32>
    %5 = arith.addf %2, %4 : vector<48x128xf32>
    %cst_5 = arith.constant 0.000000e+00 : f32
    %6 = vector.broadcast %cst_5 : f32 to vector<48x128xf32>
    %7 = arith.maximumf %5, %6 : vector<48x128xf32>
    %8 = arith.truncf %7 : vector<48x128xf32> to vector<48x128xbf16>
    %c0_6 = arith.constant 0 : index
    %c0_7 = arith.constant 0 : index
    %9 = vector.load %arg4[%c0_6, %c0_7] : memref<48x128xbf16, #tpu.memory_space<vmem>>, vector<48x128xbf16>
    tpu.vector_store %arg4[%c0_6, %c0_7], %8 {strides = array<i32>} : memref<48x128xbf16, #tpu.memory_space<vmem>>, vector<48x128xbf16>,
    return
  }
  func.func @transform_0(%arg0: i32) -> (i32, i32) {
    %c0_i32 = arith.constant 0 : i32
    %c0_i32_0 = arith.constant 0 : i32
    return %arg0, %c0_i32 : i32, i32
  }
  func.func @transform_1(%arg0: i32) -> (i32, i32) {
    %c0_i32 = arith.constant 0 : i32
    %c0_i32_0 = arith.constant 0 : i32
    %c0_i32_1 = arith.constant 0 : i32
    return %c0_i32, %c0_i32_0 : i32, i32
  }
  func.func @transform_2(%arg0: i32) -> (i32, i32) {
    %c0_i32 = arith.constant 0 : i32
    %c0_i32_0 = arith.constant 0 : i32
    %c0_i32_1 = arith.constant 0 : i32
    return %c0_i32, %c0_i32_0 : i32, i32
  }
  func.func @transform_3(%arg0: i32) -> (i32, i32) {
    %c0_i32 = arith.constant 0 : i32
    %c0_i32_0 = arith.constant 0 : i32
    return %arg0, %c0_i32 : i32, i32
  }
}

module attributes {stable_mosaic.version = 11 : i64} {
  func.func @_mlp_kernel(%arg0: i32, %arg1: memref<2x576xbf16, #tpu.memory_space<vmem>>, %arg2: memref<576x64xbf16, #tpu.memory_space<vmem>>, %arg3: memref<1x64xf32, #tpu.memory_space<vmem>>, %arg4: memref<64x10xbf16, #tpu.memory_space<vmem>>, %arg5: memref<1x10xf32, #tpu.memory_space<vmem>>, %arg6: memref<2x10xf32, #tpu.memory_space<vmem>>) attributes {dimension_semantics = [#tpu.dimension_semantics<arbitrary>], iteration_bounds = array<i64: 1>, scalar_prefetch = 0 : i64, scratch_operands = 0 : i64, tpu.core_type = #tpu.core_type<tc>, window_params = [{pipeline_mode = #tpu.pipeline_mode<synchronous>, transform_indices = @transform_0, window_bounds = array<i64: 2, 576>}, {pipeline_mode = #tpu.pipeline_mode<synchronous>, transform_indices = @transform_1, window_bounds = array<i64: 576, 64>}, {pipeline_mode = #tpu.pipeline_mode<synchronous>, transform_indices = @transform_2, window_bounds = array<i64: 1, 64>}, {pipeline_mode = #tpu.pipeline_mode<synchronous>, transform_indices = @transform_3, window_bounds = array<i64: 64, 10>}, {pipeline_mode = #tpu.pipeline_mode<synchronous>, transform_indices = @transform_4, window_bounds = array<i64: 1, 10>}, {pipeline_mode = #tpu.pipeline_mode<synchronous>, transform_indices = @transform_5, window_bounds = array<i64: 2, 10>}]} {
    %c0 = arith.constant 0 : index
    %c0_0 = arith.constant 0 : index
    %0 = vector.load %arg1[%c0, %c0_0] : memref<2x576xbf16, #tpu.memory_space<vmem>>, vector<2x576xbf16>
    %c0_1 = arith.constant 0 : index
    %c0_2 = arith.constant 0 : index
    %1 = vector.load %arg2[%c0_1, %c0_2] : memref<576x64xbf16, #tpu.memory_space<vmem>>, vector<576x64xbf16>
    %cst = arith.constant dense<0.000000e+00> : vector<2x64xf32>
    %2 = tpu.matmul %0, %1, %cst {dimension_numbers = #tpu.dot_dimension_numbers<[1], [0], [0], [1], [0, 0, 1, 1], [], []>} : vector<2x576xbf16>, vector<576x64xbf16>, vector<2x64xf32> -> vector<2x64xf32>
    %c0_3 = arith.constant 0 : index
    %c0_4 = arith.constant 0 : index
    %3 = vector.load %arg3[%c0_3, %c0_4] : memref<1x64xf32, #tpu.memory_space<vmem>>, vector<1x64xf32>
    %4 = vector.broadcast %3 : vector<1x64xf32> to vector<2x64xf32>
    %5 = arith.addf %2, %4 : vector<2x64xf32>
    %cst_5 = arith.constant 0.000000e+00 : f32
    %6 = vector.broadcast %cst_5 : f32 to vector<2x64xf32>
    %7 = arith.maximumf %5, %6 : vector<2x64xf32>
    %8 = arith.truncf %7 : vector<2x64xf32> to vector<2x64xbf16>
    %c0_6 = arith.constant 0 : index
    %c0_7 = arith.constant 0 : index
    %9 = vector.load %arg4[%c0_6, %c0_7] : memref<64x10xbf16, #tpu.memory_space<vmem>>, vector<64x10xbf16>
    %cst_8 = arith.constant dense<0.000000e+00> : vector<2x10xf32>
    %10 = tpu.matmul %8, %9, %cst_8 {dimension_numbers = #tpu.dot_dimension_numbers<[1], [0], [0], [1], [0, 0, 1, 1], [], []>} : vector<2x64xbf16>, vector<64x10xbf16>, vector<2x10xf32> -> vector<2x10xf32>
    %c0_9 = arith.constant 0 : index
    %c0_10 = arith.constant 0 : index
    %11 = vector.load %arg5[%c0_9, %c0_10] : memref<1x10xf32, #tpu.memory_space<vmem>>, vector<1x10xf32>
    %12 = vector.broadcast %11 : vector<1x10xf32> to vector<2x10xf32>
    %13 = arith.addf %10, %12 : vector<2x10xf32>
    %cst_11 = arith.constant 0.000000e+00 : f32
    %14 = vector.broadcast %cst_11 : f32 to vector<2x10xf32>
    %15 = arith.maximumf %13, %14 : vector<2x10xf32>
    %cst_12 = arith.constant dense<0xFF800000> : vector<2xf32>
    %16 = vector.multi_reduction <maximumf>, %15, %cst_12 [1] : vector<2x10xf32> to vector<2xf32>
    %17 = vector.shape_cast %16 : vector<2xf32> to vector<2x1xf32>
    %18 = vector.broadcast %17 : vector<2x1xf32> to vector<2x10xf32>
    %19 = arith.subf %15, %18 : vector<2x10xf32>
    %20 = math.exp %19 : vector<2x10xf32>
    %cst_13 = arith.constant dense<0.000000e+00> : vector<2xf32>
    %21 = vector.multi_reduction <add>, %20, %cst_13 [1] : vector<2x10xf32> to vector<2xf32>
    %22 = vector.shape_cast %21 : vector<2xf32> to vector<2x1xf32>
    %23 = math.log %22 : vector<2x1xf32>
    %24 = vector.broadcast %23 : vector<2x1xf32> to vector<2x10xf32>
    %25 = arith.subf %19, %24 : vector<2x10xf32>
    %c0_14 = arith.constant 0 : index
    %c0_15 = arith.constant 0 : index
    %26 = vector.load %arg6[%c0_14, %c0_15] : memref<2x10xf32, #tpu.memory_space<vmem>>, vector<2x10xf32>
    tpu.vector_store %arg6[%c0_14, %c0_15], %25 {strides = array<i32>} : memref<2x10xf32, #tpu.memory_space<vmem>>, vector<2x10xf32>,
    return
  }
  func.func @transform_0(%arg0: i32) -> (i32, i32) {
    %c0_i32 = arith.constant 0 : i32
    %c0_i32_0 = arith.constant 0 : i32
    %c0_i32_1 = arith.constant 0 : i32
    return %c0_i32, %c0_i32_0 : i32, i32
  }
  func.func @transform_1(%arg0: i32) -> (i32, i32) {
    %c0_i32 = arith.constant 0 : i32
    %c0_i32_0 = arith.constant 0 : i32
    %c0_i32_1 = arith.constant 0 : i32
    return %c0_i32, %c0_i32_0 : i32, i32
  }
  func.func @transform_2(%arg0: i32) -> (i32, i32) {
    %c0_i32 = arith.constant 0 : i32
    %c0_i32_0 = arith.constant 0 : i32
    %c0_i32_1 = arith.constant 0 : i32
    return %c0_i32, %c0_i32_0 : i32, i32
  }
  func.func @transform_3(%arg0: i32) -> (i32, i32) {
    %c0_i32 = arith.constant 0 : i32
    %c0_i32_0 = arith.constant 0 : i32
    %c0_i32_1 = arith.constant 0 : i32
    return %c0_i32, %c0_i32_0 : i32, i32
  }
  func.func @transform_4(%arg0: i32) -> (i32, i32) {
    %c0_i32 = arith.constant 0 : i32
    %c0_i32_0 = arith.constant 0 : i32
    %c0_i32_1 = arith.constant 0 : i32
    return %c0_i32, %c0_i32_0 : i32, i32
  }
  func.func @transform_5(%arg0: i32) -> (i32, i32) {
    %c0_i32 = arith.constant 0 : i32
    %c0_i32_0 = arith.constant 0 : i32
    %c0_i32_1 = arith.constant 0 : i32
    return %c0_i32, %c0_i32_0 : i32, i32
  }
}

</mosaic_0001>

<llo_original>
// kernel: cnn_forward.4
$region0: #{cnn_forward.4}
  #allocation0 [shape = 'u32[]', space=smem, size = 0x4, offset = 0x4, fixed_abs, tag = 'smem constant byte address 0x4 - core index']
  #allocation1 [shape = 'u32[144,128]{1,0:T(1,128)}', space=vmem, size = 0x12000, scoped, tag = 'internal scratch']
  %s0 = inlined_call_operand.vmem [shape: bf16[24642,128], index: 0, kind: input, shape index: {}]
  %s1 = inlined_call_operand.vmem [shape: bf16[128,128], index: 1, kind: input, shape index: {}]
  %s2 = inlined_call_operand.vmem [shape: f32[1,128], index: 2, kind: input, shape index: {}]
  %s3 = inlined_call_operand.vmem [shape: bf16[24642,128], index: 3, kind: output, shape index: {}]
  %s4 = sld [smem:[#allocation0]]
  $region89: #{cnn_forward.4} parent=0
    _
  %s6 = ssub.s32 1, %s4
  %s7 = scalar_select 0, %s6, %s4
  $region1: #{cnn_forward.4} parent=0
    #allocation2 [shape = 'u8[1048576]{0}', space=vmem, size = 0x100000, scoped, tag = 'output window, operand 0']
    loop: start=0, step=1, limit=15
    $region2: #{cnn_forward.4} parent=1 // loop_pre_header
      _
    $region3: #{cnn_forward.4} parent=1 // loop_header
      %s9 = sphi 0, %s13
      %p10 = scmp.ge.s32.totalorder %s9, 15
      %s19 = sphi 0, %s21
      %s22 = sphi 0, %s19
      %s23 = sphi 0, %s22
      %s39 = sphi 0, %s23
      %s43 = sphi 0, %s43
      %s45 = sphi 0, %s43
      %s46 = sphi 0, %s45
      %s60 = sphi 0, %s46
      %s64 = sphi 0, %s64
      %s66 = sphi 0, %s64
      %s67 = sphi 0, %s66
      %s81 = sphi 0, %s67
      %s87 = sphi 0, %s89
      %s90 = sphi 0, %s87
      %s91 = sphi 0, %s90
      %s107 = sphi 0, %s91
    $region4: #{cnn_forward.4} parent=1 // loop_header_branch
      %12 = sbr.rel (%p10) target = $region8
    $region5: #{cnn_forward.4} parent=1 // loop_body
      %s14 = ssub.s32 %s9, 1
      %s15 = ssub.s32 %s9, 2
      %s16 = sadd.s32 %s9, 1
      %s17 = ssub.s32 %s9, %s16
      %p18 = scmp.eq.s32.totalorder %s17, 0
      %s20 = sadd.s32 %s19, 1
      %s21 = scalar_select %p18, %s19, %s20
      %p24 = pneg %p18
      %p25 = scmp.eq.s32.totalorder %s9, 12
      %p26 = por %p24, %p25
      %p27 = scmp.ne.s32.totalorder %s19, %s22
      %p28 = scmp.eq.s32.totalorder %s9, 0
      %p29 = por %p27, %p28
      %p30 = scmp.ne.s32.totalorder %s19, %s22
      %p31 = scmp.eq.s32.totalorder %s14, 12
      %p32 = por %p30, %p31
      %p33 = scmp.ne.s32.totalorder %s22, %s23
      %p34 = scmp.eq.s32.totalorder %s14, 0
      %p35 = por %p33, %p34
      %p36 = scmp.ne.s32.totalorder %s22, %s23
      %p37 = scmp.eq.s32.totalorder %s15, 12
      %p38 = por %p36, %p37
      %p40 = scmp.ne.s32.totalorder %s23, %s39
      %p41 = scmp.eq.s32.totalorder %s15, 0
      %p42 = por %p40, %p41
      %s44 = sadd.s32 %s43, 1
      %p47 = scmp.eq.s32.totalorder %s9, 12
      %p48 = scmp.ne.s32.totalorder %s43, %s45
      %p49 = scmp.eq.s32.totalorder %s9, 0
      %p50 = por %p48, %p49
      %p51 = scmp.ne.s32.totalorder %s43, %s45
      %p52 = scmp.eq.s32.totalorder %s14, 12
      %p53 = por %p51, %p52
      %p54 = scmp.ne.s32.totalorder %s45, %s46
      %p55 = scmp.eq.s32.totalorder %s14, 0
      %p56 = por %p54, %p55
      %p57 = scmp.ne.s32.totalorder %s45, %s46
      %p58 = scmp.eq.s32.totalorder %s15, 12
      %p59 = por %p57, %p58
      %p61 = scmp.ne.s32.totalorder %s46, %s60
      %p62 = scmp.eq.s32.totalorder %s15, 0
      %p63 = por %p61, %p62
      %s65 = sadd.s32 %s64, 1
      %p68 = scmp.eq.s32.totalorder %s9, 12
      %p69 = scmp.ne.s32.totalorder %s64, %s66
      %p70 = scmp.eq.s32.totalorder %s9, 0
      %p71 = por %p69, %p70
      %p72 = scmp.ne.s32.totalorder %s64, %s66
      %p73 = scmp.eq.s32.totalorder %s14, 12
      %p74 = por %p72, %p73
      %p75 = scmp.ne.s32.totalorder %s66, %s67
      %p76 = scmp.eq.s32.totalorder %s14, 0
      %p77 = por %p75, %p76
      %p78 = scmp.ne.s32.totalorder %s66, %s67
      %p79 = scmp.eq.s32.totalorder %s15, 12
      %p80 = por %p78, %p79
      %p82 = scmp.ne.s32.totalorder %s67, %s81
      %p83 = scmp.eq.s32.totalorder %s15, 0
      %p84 = por %p82, %p83
      %s85 = ssub.s32 %s9, %s16
      %p86 = scmp.eq.s32.totalorder %s85, 0
      %s88 = sadd.s32 %s87, 1
      %s89 = scalar_select %p86, %s87, %s88
      %p92 = pneg %p86
      %p93 = scmp.eq.s32.totalorder %s9, 12
      %p94 = por %p92, %p93
      %p95 = scmp.ne.s32.totalorder %s87, %s90
      %p96 = scmp.eq.s32.totalorder %s9, 0
      %p97 = por %p95, %p96
      %p98 = scmp.ne.s32.totalorder %s87, %s90
      %p99 = scmp.eq.s32.totalorder %s14, 12
      %p100 = por %p98, %p99
      %p101 = scmp.ne.s32.totalorder %s90, %s91
      %p102 = scmp.eq.s32.totalorder %s14, 0
      %p103 = por %p101, %p102
      %p104 = scmp.ne.s32.totalorder %s90, %s91
      %p105 = scmp.eq.s32.totalorder %s15, 12
      %p106 = por %p104, %p105
      %p108 = scmp.ne.s32.totalorder %s91, %s107
      %p109 = scmp.eq.s32.totalorder %s15, 0
      %p110 = por %p108, %p109
      %p111 = scmp.le.s32.totalorder 1, %s9
      %p112 = scmp.lt.s32.totalorder %s9, 14
      %p113 = pnand %p111, %p112
      %p114 = pneg %p113
      // Predicated region
      $region9: #{cnn_forward.4} parent=5 // pred_check
        _
      $region10: #{cnn_forward.4} parent=5 // pred_check_branch
        %116 = sbr.rel (%p113) target = $region12
      $region11: #{cnn_forward.4} parent=5 // pred_region
        %s117 = ssub.s32 %s9, 1
        // Predicated region
        $region13: #{cnn_forward.4} parent=11 // pred_check
          %p118 = pneg %p56
        $region14: #{cnn_forward.4} parent=11 // pred_check_branch
          %120 = sbr.rel (%p118) target = $region16
        $region15: #{cnn_forward.4} parent=11 // pred_region
          _
        $region16: #{cnn_forward.4} parent=11 // pred_fallthru
          _
        // Predicated region
        $region17: #{cnn_forward.4} parent=11 // pred_check
          %p121 = pneg %p77
        $region18: #{cnn_forward.4} parent=11 // pred_check_branch
          %123 = sbr.rel (%p121) target = $region20
        $region19: #{cnn_forward.4} parent=11 // pred_region
          _
        $region20: #{cnn_forward.4} parent=11 // pred_fallthru
          _
      $region12: #{cnn_forward.4} parent=5 // pred_fallthru
        _
      %p124 = scmp.lt.s32.totalorder %s9, 13
      // Predicated region
      $region21: #{cnn_forward.4} parent=5 // pred_check
        %p125 = pneg %p124
      $region22: #{cnn_forward.4} parent=5 // pred_check_branch
        %127 = sbr.rel (%p125) target = $region24
      $region23: #{cnn_forward.4} parent=5 // pred_region
        // Predicated region
        $region25: #{cnn_forward.4} parent=23 // pred_check
          %p128 = pneg %p29
        $region26: #{cnn_forward.4} parent=23 // pred_check_branch
          %130 = sbr.rel (%p128) target = $region28
        $region27: #{cnn_forward.4} parent=23 // pred_region
          %s131 = smul.u32 256, %s9
          %s132 = ssub.s32 3081, %s131
          %p133 = scmp.lt.s32.totalorder %s132, 256
          %s134 = scalar_select %p133, %s132, 256
          %s135 = smul.u32 64, %s134
          %p136 = scmp.lt.s32.totalorder %s131, 3080
          %s137 = scalar_select %p136, %s131, 3080
          %s138 = smul.addr %s137, 4
          %s139 = scalar_lea.vmem %s0, %s138
          %s140 = smul.u32 256, %s9
          %s141 = ssub.s32 3081, %s140
          %p142 = scmp.lt.s32.totalorder %s141, 256
          %s143 = scalar_select %p142, %s141, 256
          %s144 = smul.u32 64, %s143
        $region28: #{cnn_forward.4} parent=23 // pred_fallthru
          _
      $region24: #{cnn_forward.4} parent=5 // pred_fallthru
        _
      %p145 = scmp.le.s32.totalorder 1, %s9
      %p146 = scmp.lt.s32.totalorder %s9, 14
      %p147 = pnand %p145, %p146
      %p148 = pneg %p147
      // Predicated region
      $region29: #{cnn_forward.4} parent=5 // pred_check
        _
      $region30: #{cnn_forward.4} parent=5 // pred_check_branch
        %150 = sbr.rel (%p147) target = $region32
      $region31: #{cnn_forward.4} parent=5 // pred_region
        %s151 = ssub.s32 %s9, 1
        %s152 = smul.u32 256, %s14
        %s153 = ssub.s32 3081, %s152
        %p154 = scmp.lt.s32.totalorder %s153, 256
        %s155 = scalar_select %p154, %s153, 256
        %s156 = smul.u32 64, %s155
        %p157 = scmp.lt.s32.totalorder %s152, 3080
        %s158 = scalar_select %p157, %s152, 3080
        %s159 = smul.addr %s158, 4
        %s160 = scalar_lea.vmem %s0, %s159
        %p161 = pneg %p35
        %p162 = pneg %p32
        %p163 = pneg %p56
        %p164 = pneg %p53
        %p165 = pneg %p77
        %p166 = pneg %p74
        %p167 = pneg %p103
        %p168 = pneg %p100
        %s169 = sand.u32 %s90, 1
        %s170 = sand.u32 %s90, 1
        %s171 = smul.addr %s170, 1024
        %s172 = scalar_lea.vmem [#allocation2], %s171
        %s173 = smul.u32 256, %s14
        %s174 = ssub.s32 3081, %s173
        %p175 = scmp.lt.s32.totalorder %s174, 256
        %s176 = scalar_select %p175, %s174, 256
        %s177 = smul.u32 64, %s176
        %p178 = scmp.lt.s32.totalorder %s173, 3080
        %s179 = scalar_select %p178, %s173, 3080
        %s180 = smul.addr %s179, 4
        %s181 = scalar_lea.vmem %s0, %s180
        %s182 = smul.u32 256, %s14
        %s183 = ssub.s32 3081, %s182
        %p184 = scmp.lt.s32.totalorder %s183, 256
        %s185 = scalar_select %p184, %s183, 256
        %s186 = smul.u32 64, %s185
        %s187 = smul.u32 256, %s14
        %s188 = ssub.s32 3081, %s187
        %p189 = scmp.lt.s32.totalorder %s188, 256
        %s190 = scalar_select %p189, %s188, 256
        %s191 = smul.u32 64, %s190
        %v193 = vld [vmem:[%s181] sm:$0xf]
        %v194 = vld [vmem:[%s181 + $0x4] sm:$0xf]
        %v195 = vld [vmem:[%s181 + $0x8] sm:$0xf]
        %v196 = vld [vmem:[%s181 + $0xc] sm:$0xf]
        %v197 = vld [vmem:[%s181 + $0x10] sm:$0xf]
        %v198 = vld [vmem:[%s181 + $0x14] sm:$0xf]
        %v199 = vld [vmem:[%s181 + $0x18] sm:$0xf]
        %v200 = vld [vmem:[%s181 + $0x1c] sm:$0xf]
        %v201 = vld [vmem:[%s181 + $0x20] sm:$0xf]
        %v202 = vld [vmem:[%s181 + $0x24] sm:$0xf]
        %v203 = vld [vmem:[%s181 + $0x28] sm:$0xf]
        %v204 = vld [vmem:[%s181 + $0x2c] sm:$0xf]
        %v205 = vld [vmem:[%s181 + $0x30] sm:$0xf]
        %v206 = vld [vmem:[%s181 + $0x34] sm:$0xf]
        %v207 = vld [vmem:[%s181 + $0x38] sm:$0xf]
        %v208 = vld [vmem:[%s181 + $0x3c] sm:$0xf]
        %v209 = vld [vmem:[%s181 + $0x40] sm:$0xf]
        %v210 = vld [vmem:[%s181 + $0x44] sm:$0xf]
        %v211 = vld [vmem:[%s181 + $0x48] sm:$0xf]
        %v212 = vld [vmem:[%s181 + $0x4c] sm:$0xf]
        %v213 = vld [vmem:[%s181 + $0x50] sm:$0xf]
        %v214 = vld [vmem:[%s181 + $0x54] sm:$0xf]
        %v215 = vld [vmem:[%s181 + $0x58] sm:$0xf]
        %v216 = vld [vmem:[%s181 + $0x5c] sm:$0xf]
        %v217 = vld [vmem:[%s181 + $0x60] sm:$0xf]
        %v218 = vld [vmem:[%s181 + $0x64] sm:$0xf]
        %v219 = vld [vmem:[%s181 + $0x68] sm:$0xf]
        %v220 = vld [vmem:[%s181 + $0x6c] sm:$0xf]
        %v221 = vld [vmem:[%s181 + $0x70] sm:$0xf]
        %v222 = vld [vmem:[%s181 + $0x74] sm:$0xf]
        %v223 = vld [vmem:[%s181 + $0x78] sm:$0xf]
        %v224 = vld [vmem:[%s181 + $0x7c] sm:$0xf]
        %v225 = vld [vmem:[%s181 + $0x80] sm:$0xf]
        %v226 = vld [vmem:[%s181 + $0x84] sm:$0xf]
        %v227 = vld [vmem:[%s181 + $0x88] sm:$0xf]
        %v228 = vld [vmem:[%s181 + $0x8c] sm:$0xf]
        %v229 = vld [vmem:[%s181 + $0x90] sm:$0xf]
        %v230 = vld [vmem:[%s181 + $0x94] sm:$0xf]
        %v231 = vld [vmem:[%s181 + $0x98] sm:$0xf]
        %v232 = vld [vmem:[%s181 + $0x9c] sm:$0xf]
        %v233 = vld [vmem:[%s181 + $0xa0] sm:$0xf]
        %v234 = vld [vmem:[%s181 + $0xa4] sm:$0xf]
        %v235 = vld [vmem:[%s181 + $0xa8] sm:$0xf]
        %v236 = vld [vmem:[%s181 + $0xac] sm:$0xf]
        %v237 = vld [vmem:[%s181 + $0xb0] sm:$0xf]
        %v238 = vld [vmem:[%s181 + $0xb4] sm:$0xf]
        %v239 = vld [vmem:[%s181 + $0xb8] sm:$0xf]
        %v240 = vld [vmem:[%s181 + $0xbc] sm:$0xf]
        %v241 = vld [vmem:[%s181 + $0xc0] sm:$0xf]
        %v242 = vld [vmem:[%s181 + $0xc4] sm:$0xf]
        %v243 = vld [vmem:[%s181 + $0xc8] sm:$0xf]
        %v244 = vld [vmem:[%s181 + $0xcc] sm:$0xf]
        %v245 = vld [vmem:[%s181 + $0xd0] sm:$0xf]
        %v246 = vld [vmem:[%s181 + $0xd4] sm:$0xf]
        %v247 = vld [vmem:[%s181 + $0xd8] sm:$0xf]
        %v248 = vld [vmem:[%s181 + $0xdc] sm:$0xf]
        %v249 = vld [vmem:[%s181 + $0xe0] sm:$0xf]
        %v250 = vld [vmem:[%s181 + $0xe4] sm:$0xf]
        %v251 = vld [vmem:[%s181 + $0xe8] sm:$0xf]
        %v252 = vld [vmem:[%s181 + $0xec] sm:$0xf]
        %v253 = vld [vmem:[%s181 + $0xf0] sm:$0xf]
        %v254 = vld [vmem:[%s181 + $0xf4] sm:$0xf]
        %v255 = vld [vmem:[%s181 + $0xf8] sm:$0xf]
        %v256 = vld [vmem:[%s181 + $0xfc] sm:$0xf]
        %v257 = vld [vmem:[%s181 + $0x100] sm:$0xf]
        %v258 = vld [vmem:[%s181 + $0x104] sm:$0xf]
        %v259 = vld [vmem:[%s181 + $0x108] sm:$0xf]
        %v260 = vld [vmem:[%s181 + $0x10c] sm:$0xf]
        %v261 = vld [vmem:[%s181 + $0x110] sm:$0xf]
        %v262 = vld [vmem:[%s181 + $0x114] sm:$0xf]
        %v263 = vld [vmem:[%s181 + $0x118] sm:$0xf]
        %v264 = vld [vmem:[%s181 + $0x11c] sm:$0xf]
        %v265 = vld [vmem:[%s181 + $0x120] sm:$0xf]
        %v266 = vld [vmem:[%s181 + $0x124] sm:$0xf]
        %v267 = vld [vmem:[%s181 + $0x128] sm:$0xf]
        %v268 = vld [vmem:[%s181 + $0x12c] sm:$0xf]
        %v269 = vld [vmem:[%s181 + $0x130] sm:$0xf]
        %v270 = vld [vmem:[%s181 + $0x134] sm:$0xf]
        %v271 = vld [vmem:[%s181 + $0x138] sm:$0xf]
        %v272 = vld [vmem:[%s181 + $0x13c] sm:$0xf]
        %v273 = vld [vmem:[%s181 + $0x140] sm:$0xf]
        %v274 = vld [vmem:[%s181 + $0x144] sm:$0xf]
        %v275 = vld [vmem:[%s181 + $0x148] sm:$0xf]
        %v276 = vld [vmem:[%s181 + $0x14c] sm:$0xf]
        %v277 = vld [vmem:[%s181 + $0x150] sm:$0xf]
        %v278 = vld [vmem:[%s181 + $0x154] sm:$0xf]
        %v279 = vld [vmem:[%s181 + $0x158] sm:$0xf]
        %v280 = vld [vmem:[%s181 + $0x15c] sm:$0xf]
        %v281 = vld [vmem:[%s181 + $0x160] sm:$0xf]
        %v282 = vld [vmem:[%s181 + $0x164] sm:$0xf]
        %v283 = vld [vmem:[%s181 + $0x168] sm:$0xf]
        %v284 = vld [vmem:[%s181 + $0x16c] sm:$0xf]
        %v285 = vld [vmem:[%s181 + $0x170] sm:$0xf]
        %v286 = vld [vmem:[%s181 + $0x174] sm:$0xf]
        %v287 = vld [vmem:[%s181 + $0x178] sm:$0xf]
        %v288 = vld [vmem:[%s181 + $0x17c] sm:$0xf]
        %v289 = vld [vmem:[%s181 + $0x180] sm:$0xf]
        %v290 = vld [vmem:[%s181 + $0x184] sm:$0xf]
        %v291 = vld [vmem:[%s181 + $0x188] sm:$0xf]
        %v292 = vld [vmem:[%s181 + $0x18c] sm:$0xf]
        %v293 = vld [vmem:[%s181 + $0x190] sm:$0xf]
        %v294 = vld [vmem:[%s181 + $0x194] sm:$0xf]
        %v295 = vld [vmem:[%s181 + $0x198] sm:$0xf]
        %v296 = vld [vmem:[%s181 + $0x19c] sm:$0xf]
        %v297 = vld [vmem:[%s181 + $0x1a0] sm:$0xf]
        %v298 = vld [vmem:[%s181 + $0x1a4] sm:$0xf]
        %v299 = vld [vmem:[%s181 + $0x1a8] sm:$0xf]
        %v300 = vld [vmem:[%s181 + $0x1ac] sm:$0xf]
        %v301 = vld [vmem:[%s181 + $0x1b0] sm:$0xf]
        %v302 = vld [vmem:[%s181 + $0x1b4] sm:$0xf]
        %v303 = vld [vmem:[%s181 + $0x1b8] sm:$0xf]
        %v304 = vld [vmem:[%s181 + $0x1bc] sm:$0xf]
        %v305 = vld [vmem:[%s181 + $0x1c0] sm:$0xf]
        %v306 = vld [vmem:[%s181 + $0x1c4] sm:$0xf]
        %v307 = vld [vmem:[%s181 + $0x1c8] sm:$0xf]
        %v308 = vld [vmem:[%s181 + $0x1cc] sm:$0xf]
        %v309 = vld [vmem:[%s181 + $0x1d0] sm:$0xf]
        %v310 = vld [vmem:[%s181 + $0x1d4] sm:$0xf]
        %v311 = vld [vmem:[%s181 + $0x1d8] sm:$0xf]
        %v312 = vld [vmem:[%s181 + $0x1dc] sm:$0xf]
        %v313 = vld [vmem:[%s181 + $0x1e0] sm:$0xf]
        %v314 = vld [vmem:[%s181 + $0x1e4] sm:$0xf]
        %v315 = vld [vmem:[%s181 + $0x1e8] sm:$0xf]
        %v316 = vld [vmem:[%s181 + $0x1ec] sm:$0xf]
        %v317 = vld [vmem:[%s181 + $0x1f0] sm:$0xf]
        %v318 = vld [vmem:[%s181 + $0x1f4] sm:$0xf]
        %v319 = vld [vmem:[%s181 + $0x1f8] sm:$0xf]
        %v320 = vld [vmem:[%s181 + $0x1fc] sm:$0xf]
        %v321 = vld [vmem:[%s181 + $0x200] sm:$0xf]
        %v322 = vld [vmem:[%s181 + $0x204] sm:$0xf]
        %v323 = vld [vmem:[%s181 + $0x208] sm:$0xf]
        %v324 = vld [vmem:[%s181 + $0x20c] sm:$0xf]
        %v325 = vld [vmem:[%s181 + $0x210] sm:$0xf]
        %v326 = vld [vmem:[%s181 + $0x214] sm:$0xf]
        %v327 = vld [vmem:[%s181 + $0x218] sm:$0xf]
        %v328 = vld [vmem:[%s181 + $0x21c] sm:$0xf]
        %v329 = vld [vmem:[%s181 + $0x220] sm:$0xf]
        %v330 = vld [vmem:[%s181 + $0x224] sm:$0xf]
        %v331 = vld [vmem:[%s181 + $0x228] sm:$0xf]
        %v332 = vld [vmem:[%s181 + $0x22c] sm:$0xf]
        %v333 = vld [vmem:[%s181 + $0x230] sm:$0xf]
        %v334 = vld [vmem:[%s181 + $0x234] sm:$0xf]
        %v335 = vld [vmem:[%s181 + $0x238] sm:$0xf]
        %v336 = vld [vmem:[%s181 + $0x23c] sm:$0xf]
        %v337 = vld [vmem:[%s181 + $0x240] sm:$0xf]
        %v338 = vld [vmem:[%s181 + $0x244] sm:$0xf]
        %v339 = vld [vmem:[%s181 + $0x248] sm:$0xf]
        %v340 = vld [vmem:[%s181 + $0x24c] sm:$0xf]
        %v341 = vld [vmem:[%s181 + $0x250] sm:$0xf]
        %v342 = vld [vmem:[%s181 + $0x254] sm:$0xf]
        %v343 = vld [vmem:[%s181 + $0x258] sm:$0xf]
        %v344 = vld [vmem:[%s181 + $0x25c] sm:$0xf]
        %v345 = vld [vmem:[%s181 + $0x260] sm:$0xf]
        %v346 = vld [vmem:[%s181 + $0x264] sm:$0xf]
        %v347 = vld [vmem:[%s181 + $0x268] sm:$0xf]
        %v348 = vld [vmem:[%s181 + $0x26c] sm:$0xf]
        %v349 = vld [vmem:[%s181 + $0x270] sm:$0xf]
        %v350 = vld [vmem:[%s181 + $0x274] sm:$0xf]
        %v351 = vld [vmem:[%s181 + $0x278] sm:$0xf]
        %v352 = vld [vmem:[%s181 + $0x27c] sm:$0xf]
        %v353 = vld [vmem:[%s181 + $0x280] sm:$0xf]
        %v354 = vld [vmem:[%s181 + $0x284] sm:$0xf]
        %v355 = vld [vmem:[%s181 + $0x288] sm:$0xf]
        %v356 = vld [vmem:[%s181 + $0x28c] sm:$0xf]
        %v357 = vld [vmem:[%s181 + $0x290] sm:$0xf]
        %v358 = vld [vmem:[%s181 + $0x294] sm:$0xf]
        %v359 = vld [vmem:[%s181 + $0x298] sm:$0xf]
        %v360 = vld [vmem:[%s181 + $0x29c] sm:$0xf]
        %v361 = vld [vmem:[%s181 + $0x2a0] sm:$0xf]
        %v362 = vld [vmem:[%s181 + $0x2a4] sm:$0xf]
        %v363 = vld [vmem:[%s181 + $0x2a8] sm:$0xf]
        %v364 = vld [vmem:[%s181 + $0x2ac] sm:$0xf]
        %v365 = vld [vmem:[%s181 + $0x2b0] sm:$0xf]
        %v366 = vld [vmem:[%s181 + $0x2b4] sm:$0xf]
        %v367 = vld [vmem:[%s181 + $0x2b8] sm:$0xf]
        %v368 = vld [vmem:[%s181 + $0x2bc] sm:$0xf]
        %v369 = vld [vmem:[%s181 + $0x2c0] sm:$0xf]
        %v370 = vld [vmem:[%s181 + $0x2c4] sm:$0xf]
        %v371 = vld [vmem:[%s181 + $0x2c8] sm:$0xf]
        %v372 = vld [vmem:[%s181 + $0x2cc] sm:$0xf]
        %v373 = vld [vmem:[%s181 + $0x2d0] sm:$0xf]
        %v374 = vld [vmem:[%s181 + $0x2d4] sm:$0xf]
        %v375 = vld [vmem:[%s181 + $0x2d8] sm:$0xf]
        %v376 = vld [vmem:[%s181 + $0x2dc] sm:$0xf]
        %v377 = vld [vmem:[%s181 + $0x2e0] sm:$0xf]
        %v378 = vld [vmem:[%s181 + $0x2e4] sm:$0xf]
        %v379 = vld [vmem:[%s181 + $0x2e8] sm:$0xf]
        %v380 = vld [vmem:[%s181 + $0x2ec] sm:$0xf]
        %v381 = vld [vmem:[%s181 + $0x2f0] sm:$0xf]
        %v382 = vld [vmem:[%s181 + $0x2f4] sm:$0xf]
        %v383 = vld [vmem:[%s181 + $0x2f8] sm:$0xf]
        %v384 = vld [vmem:[%s181 + $0x2fc] sm:$0xf]
        %v385 = vld [vmem:[%s181 + $0x300] sm:$0xf]
        %v386 = vld [vmem:[%s181 + $0x304] sm:$0xf]
        %v387 = vld [vmem:[%s181 + $0x308] sm:$0xf]
        %v388 = vld [vmem:[%s181 + $0x30c] sm:$0xf]
        %v389 = vld [vmem:[%s181 + $0x310] sm:$0xf]
        %v390 = vld [vmem:[%s181 + $0x314] sm:$0xf]
        %v391 = vld [vmem:[%s181 + $0x318] sm:$0xf]
        %v392 = vld [vmem:[%s181 + $0x31c] sm:$0xf]
        %v393 = vld [vmem:[%s181 + $0x320] sm:$0xf]
        %v394 = vld [vmem:[%s181 + $0x324] sm:$0xf]
        %v395 = vld [vmem:[%s181 + $0x328] sm:$0xf]
        %v396 = vld [vmem:[%s181 + $0x32c] sm:$0xf]
        %v397 = vld [vmem:[%s181 + $0x330] sm:$0xf]
        %v398 = vld [vmem:[%s181 + $0x334] sm:$0xf]
        %v399 = vld [vmem:[%s181 + $0x338] sm:$0xf]
        %v400 = vld [vmem:[%s181 + $0x33c] sm:$0xf]
        %v401 = vld [vmem:[%s181 + $0x340] sm:$0xf]
        %v402 = vld [vmem:[%s181 + $0x344] sm:$0xf]
        %v403 = vld [vmem:[%s181 + $0x348] sm:$0xf]
        %v404 = vld [vmem:[%s181 + $0x34c] sm:$0xf]
        %v405 = vld [vmem:[%s181 + $0x350] sm:$0xf]
        %v406 = vld [vmem:[%s181 + $0x354] sm:$0xf]
        %v407 = vld [vmem:[%s181 + $0x358] sm:$0xf]
        %v408 = vld [vmem:[%s181 + $0x35c] sm:$0xf]
        %v409 = vld [vmem:[%s181 + $0x360] sm:$0xf]
        %v410 = vld [vmem:[%s181 + $0x364] sm:$0xf]
        %v411 = vld [vmem:[%s181 + $0x368] sm:$0xf]
        %v412 = vld [vmem:[%s181 + $0x36c] sm:$0xf]
        %v413 = vld [vmem:[%s181 + $0x370] sm:$0xf]
        %v414 = vld [vmem:[%s181 + $0x374] sm:$0xf]
        %v415 = vld [vmem:[%s181 + $0x378] sm:$0xf]
        %v416 = vld [vmem:[%s181 + $0x37c] sm:$0xf]
        %v417 = vld [vmem:[%s181 + $0x380] sm:$0xf]
        %v418 = vld [vmem:[%s181 + $0x384] sm:$0xf]
        %v419 = vld [vmem:[%s181 + $0x388] sm:$0xf]
        %v420 = vld [vmem:[%s181 + $0x38c] sm:$0xf]
        %v421 = vld [vmem:[%s181 + $0x390] sm:$0xf]
        %v422 = vld [vmem:[%s181 + $0x394] sm:$0xf]
        %v423 = vld [vmem:[%s181 + $0x398] sm:$0xf]
        %v424 = vld [vmem:[%s181 + $0x39c] sm:$0xf]
        %v425 = vld [vmem:[%s181 + $0x3a0] sm:$0xf]
        %v426 = vld [vmem:[%s181 + $0x3a4] sm:$0xf]
        %v427 = vld [vmem:[%s181 + $0x3a8] sm:$0xf]
        %v428 = vld [vmem:[%s181 + $0x3ac] sm:$0xf]
        %v429 = vld [vmem:[%s181 + $0x3b0] sm:$0xf]
        %v430 = vld [vmem:[%s181 + $0x3b4] sm:$0xf]
        %v431 = vld [vmem:[%s181 + $0x3b8] sm:$0xf]
        %v432 = vld [vmem:[%s181 + $0x3bc] sm:$0xf]
        %v433 = vld [vmem:[%s181 + $0x3c0] sm:$0xf]
        %v434 = vld [vmem:[%s181 + $0x3c4] sm:$0xf]
        %v435 = vld [vmem:[%s181 + $0x3c8] sm:$0xf]
        %v436 = vld [vmem:[%s181 + $0x3cc] sm:$0xf]
        %v437 = vld [vmem:[%s181 + $0x3d0] sm:$0xf]
        %v438 = vld [vmem:[%s181 + $0x3d4] sm:$0xf]
        %v439 = vld [vmem:[%s181 + $0x3d8] sm:$0xf]
        %v440 = vld [vmem:[%s181 + $0x3dc] sm:$0xf]
        %v441 = vld [vmem:[%s181 + $0x3e0] sm:$0xf]
        %v442 = vld [vmem:[%s181 + $0x3e4] sm:$0xf]
        %v443 = vld [vmem:[%s181 + $0x3e8] sm:$0xf]
        %v444 = vld [vmem:[%s181 + $0x3ec] sm:$0xf]
        %v445 = vld [vmem:[%s181 + $0x3f0] sm:$0xf]
        %v446 = vld [vmem:[%s181 + $0x3f4] sm:$0xf]
        %v447 = vld [vmem:[%s181 + $0x3f8] sm:$0xf]
        %v448 = vld [vmem:[%s181 + $0x3fc] sm:$0xf]
        %v449 = vld [vmem:[%s1] sm:$0xf]
        %v450 = vld [vmem:[%s1 + $0x4] sm:$0xf]
        %v451 = vld [vmem:[%s1 + $0x8] sm:$0xf]
        %v452 = vld [vmem:[%s1 + $0xc] sm:$0xf]
        %v453 = vld [vmem:[%s1 + $0x10] sm:$0xf]
        %v454 = vld [vmem:[%s1 + $0x14] sm:$0xf]
        %v455 = vld [vmem:[%s1 + $0x18] sm:$0xf]
        %v456 = vld [vmem:[%s1 + $0x1c] sm:$0xf]
        %v457 = vld [vmem:[%s1 + $0x20] sm:$0xf]
        %v458 = vld [vmem:[%s1 + $0x24] sm:$0xf]
        %v459 = vld [vmem:[%s1 + $0x28] sm:$0xf]
        %v460 = vld [vmem:[%s1 + $0x2c] sm:$0xf]
        %v461 = vld [vmem:[%s1 + $0x30] sm:$0xf]
        %v462 = vld [vmem:[%s1 + $0x34] sm:$0xf]
        %v463 = vld [vmem:[%s1 + $0x38] sm:$0xf]
        %v464 = vld [vmem:[%s1 + $0x3c] sm:$0xf]
        %v465 = vld [vmem:[%s2] sm:$0x1]
        %v467 = vlaneseq
        %v468 = vshrl.u32 %v467, 7
        %v469 = vsub.s32 0, %v468
        %v470 = vrot.slane %v465, %v469
        %v728 = vunpack.c.l.b16 %v193
        %v729 = vunpack.c.l.b16 %v194
        %v730 = vunpack.c.l.b16 %v195
        %v731 = vunpack.c.l.b16 %v196
        %v732 = vunpack.c.l.b16 %v197
        %v733 = vunpack.c.l.b16 %v198
        %v734 = vunpack.c.l.b16 %v199
        %v735 = vunpack.c.l.b16 %v200
        %v736 = vunpack.c.l.b16 %v201
        %v737 = vunpack.c.l.b16 %v202
        %v738 = vunpack.c.l.b16 %v203
        %v739 = vunpack.c.l.b16 %v204
        %v740 = vunpack.c.l.b16 %v205
        %v741 = vunpack.c.l.b16 %v206
        %v742 = vunpack.c.l.b16 %v207
        %v743 = vunpack.c.l.b16 %v208
        %v744 = vunpack.c.l.b16 %v209
        %v745 = vunpack.c.l.b16 %v210
        %v746 = vunpack.c.l.b16 %v211
        %v747 = vunpack.c.l.b16 %v212
        %v748 = vunpack.c.l.b16 %v213
        %v749 = vunpack.c.l.b16 %v214
        %v750 = vunpack.c.l.b16 %v215
        %v751 = vunpack.c.l.b16 %v216
        %v752 = vunpack.c.l.b16 %v217
        %v753 = vunpack.c.l.b16 %v218
        %v754 = vunpack.c.l.b16 %v219
        %v755 = vunpack.c.l.b16 %v220
        %v756 = vunpack.c.l.b16 %v221
        %v757 = vunpack.c.l.b16 %v222
        %v758 = vunpack.c.l.b16 %v223
        %v759 = vunpack.c.l.b16 %v224
        %v760 = vunpack.c.l.b16 %v225
        %v761 = vunpack.c.l.b16 %v226
        %v762 = vunpack.c.l.b16 %v227
        %v763 = vunpack.c.l.b16 %v228
        %v764 = vunpack.c.l.b16 %v229
        %v765 = vunpack.c.l.b16 %v230
        %v766 = vunpack.c.l.b16 %v231
        %v767 = vunpack.c.l.b16 %v232
        %v768 = vunpack.c.l.b16 %v233
        %v769 = vunpack.c.l.b16 %v234
        %v770 = vunpack.c.l.b16 %v235
        %v771 = vunpack.c.l.b16 %v236
        %v772 = vunpack.c.l.b16 %v237
        %v773 = vunpack.c.l.b16 %v238
        %v774 = vunpack.c.l.b16 %v239
        %v775 = vunpack.c.l.b16 %v240
        %v776 = vunpack.c.l.b16 %v241
        %v777 = vunpack.c.l.b16 %v242
        %v778 = vunpack.c.l.b16 %v243
        %v779 = vunpack.c.l.b16 %v244
        %v780 = vunpack.c.l.b16 %v245
        %v781 = vunpack.c.l.b16 %v246
        %v782 = vunpack.c.l.b16 %v247
        %v783 = vunpack.c.l.b16 %v248
        %v784 = vunpack.c.l.b16 %v249
        %v785 = vunpack.c.l.b16 %v250
        %v786 = vunpack.c.l.b16 %v251
        %v787 = vunpack.c.l.b16 %v252
        %v788 = vunpack.c.l.b16 %v253
        %v789 = vunpack.c.l.b16 %v254
        %v790 = vunpack.c.l.b16 %v255
        %v791 = vunpack.c.l.b16 %v256
        %v792 = vunpack.c.l.b16 %v257
        %v793 = vunpack.c.l.b16 %v258
        %v794 = vunpack.c.l.b16 %v259
        %v795 = vunpack.c.l.b16 %v260
        %v796 = vunpack.c.l.b16 %v261
        %v797 = vunpack.c.l.b16 %v262
        %v798 = vunpack.c.l.b16 %v263
        %v799 = vunpack.c.l.b16 %v264
        %v800 = vunpack.c.l.b16 %v265
        %v801 = vunpack.c.l.b16 %v266
        %v802 = vunpack.c.l.b16 %v267
        %v803 = vunpack.c.l.b16 %v268
        %v804 = vunpack.c.l.b16 %v269
        %v805 = vunpack.c.l.b16 %v270
        %v806 = vunpack.c.l.b16 %v271
        %v807 = vunpack.c.l.b16 %v272
        %v808 = vunpack.c.l.b16 %v273
        %v809 = vunpack.c.l.b16 %v274
        %v810 = vunpack.c.l.b16 %v275
        %v811 = vunpack.c.l.b16 %v276
        %v812 = vunpack.c.l.b16 %v277
        %v813 = vunpack.c.l.b16 %v278
        %v814 = vunpack.c.l.b16 %v279
        %v815 = vunpack.c.l.b16 %v280
        %v816 = vunpack.c.l.b16 %v281
        %v817 = vunpack.c.l.b16 %v282
        %v818 = vunpack.c.l.b16 %v283
        %v819 = vunpack.c.l.b16 %v284
        %v820 = vunpack.c.l.b16 %v285
        %v821 = vunpack.c.l.b16 %v286
        %v822 = vunpack.c.l.b16 %v287
        %v823 = vunpack.c.l.b16 %v288
        %v824 = vunpack.c.l.b16 %v289
        %v825 = vunpack.c.l.b16 %v290
        %v826 = vunpack.c.l.b16 %v291
        %v827 = vunpack.c.l.b16 %v292
        %v828 = vunpack.c.l.b16 %v293
        %v829 = vunpack.c.l.b16 %v294
        %v830 = vunpack.c.l.b16 %v295
        %v831 = vunpack.c.l.b16 %v296
        %v832 = vunpack.c.l.b16 %v297
        %v833 = vunpack.c.l.b16 %v298
        %v834 = vunpack.c.l.b16 %v299
        %v835 = vunpack.c.l.b16 %v300
        %v836 = vunpack.c.l.b16 %v301
        %v837 = vunpack.c.l.b16 %v302
        %v838 = vunpack.c.l.b16 %v303
        %v839 = vunpack.c.l.b16 %v304
        %v840 = vunpack.c.l.b16 %v305
        %v841 = vunpack.c.l.b16 %v306
        %v842 = vunpack.c.l.b16 %v307
        %v843 = vunpack.c.l.b16 %v308
        %v844 = vunpack.c.l.b16 %v309
        %v845 = vunpack.c.l.b16 %v310
        %v846 = vunpack.c.l.b16 %v311
        %v847 = vunpack.c.l.b16 %v312
        %v848 = vunpack.c.l.b16 %v313
        %v849 = vunpack.c.l.b16 %v314
        %v850 = vunpack.c.l.b16 %v315
        %v851 = vunpack.c.l.b16 %v316
        %v852 = vunpack.c.l.b16 %v317
        %v853 = vunpack.c.l.b16 %v318
        %v854 = vunpack.c.l.b16 %v319
        %v855 = vunpack.c.l.b16 %v320
        %v856 = vunpack.c.l.b16 %v321
        %v857 = vunpack.c.l.b16 %v322
        %v858 = vunpack.c.l.b16 %v323
        %v859 = vunpack.c.l.b16 %v324
        %v860 = vunpack.c.l.b16 %v325
        %v861 = vunpack.c.l.b16 %v326
        %v862 = vunpack.c.l.b16 %v327
        %v863 = vunpack.c.l.b16 %v328
        %v864 = vunpack.c.l.b16 %v329
        %v865 = vunpack.c.l.b16 %v330
        %v866 = vunpack.c.l.b16 %v331
        %v867 = vunpack.c.l.b16 %v332
        %v868 = vunpack.c.l.b16 %v333
        %v869 = vunpack.c.l.b16 %v334
        %v870 = vunpack.c.l.b16 %v335
        %v871 = vunpack.c.l.b16 %v336
        %v872 = vunpack.c.l.b16 %v337
        %v873 = vunpack.c.l.b16 %v338
        %v874 = vunpack.c.l.b16 %v339
        %v875 = vunpack.c.l.b16 %v340
        %v876 = vunpack.c.l.b16 %v341
        %v877 = vunpack.c.l.b16 %v342
        %v878 = vunpack.c.l.b16 %v343
        %v879 = vunpack.c.l.b16 %v344
        %v880 = vunpack.c.l.b16 %v345
        %v881 = vunpack.c.l.b16 %v346
        %v882 = vunpack.c.l.b16 %v347
        %v883 = vunpack.c.l.b16 %v348
        %v884 = vunpack.c.l.b16 %v349
        %v885 = vunpack.c.l.b16 %v350
        %v886 = vunpack.c.l.b16 %v351
        %v887 = vunpack.c.l.b16 %v352
        %v888 = vunpack.c.l.b16 %v353
        %v889 = vunpack.c.l.b16 %v354
        %v890 = vunpack.c.l.b16 %v355
        %v891 = vunpack.c.l.b16 %v356
        %v892 = vunpack.c.l.b16 %v357
        %v893 = vunpack.c.l.b16 %v358
        %v894 = vunpack.c.l.b16 %v359
        %v895 = vunpack.c.l.b16 %v360
        %v896 = vunpack.c.l.b16 %v361
        %v897 = vunpack.c.l.b16 %v362
        %v898 = vunpack.c.l.b16 %v363
        %v899 = vunpack.c.l.b16 %v364
        %v900 = vunpack.c.l.b16 %v365
        %v901 = vunpack.c.l.b16 %v366
        %v902 = vunpack.c.l.b16 %v367
        %v903 = vunpack.c.l.b16 %v368
        %v904 = vunpack.c.l.b16 %v369
        %v905 = vunpack.c.l.b16 %v370
        %v906 = vunpack.c.l.b16 %v371
        %v907 = vunpack.c.l.b16 %v372
        %v908 = vunpack.c.l.b16 %v373
        %v909 = vunpack.c.l.b16 %v374
        %v910 = vunpack.c.l.b16 %v375
        %v911 = vunpack.c.l.b16 %v376
        %v912 = vunpack.c.l.b16 %v377
        %v913 = vunpack.c.l.b16 %v378
        %v914 = vunpack.c.l.b16 %v379
        %v915 = vunpack.c.l.b16 %v380
        %v916 = vunpack.c.l.b16 %v381
        %v917 = vunpack.c.l.b16 %v382
        %v918 = vunpack.c.l.b16 %v383
        %v919 = vunpack.c.l.b16 %v384
        %v920 = vunpack.c.l.b16 %v385
        %v921 = vunpack.c.l.b16 %v386
        %v922 = vunpack.c.l.b16 %v387
        %v923 = vunpack.c.l.b16 %v388
        %v924 = vunpack.c.l.b16 %v389
        %v925 = vunpack.c.l.b16 %v390
        %v926 = vunpack.c.l.b16 %v391
        %v927 = vunpack.c.l.b16 %v392
        %v928 = vunpack.c.l.b16 %v393
        %v929 = vunpack.c.l.b16 %v394
        %v930 = vunpack.c.l.b16 %v395
        %v931 = vunpack.c.l.b16 %v396
        %v932 = vunpack.c.l.b16 %v397
        %v933 = vunpack.c.l.b16 %v398
        %v934 = vunpack.c.l.b16 %v399
        %v935 = vunpack.c.l.b16 %v400
        %v936 = vunpack.c.l.b16 %v401
        %v937 = vunpack.c.l.b16 %v402
        %v938 = vunpack.c.l.b16 %v403
        %v939 = vunpack.c.l.b16 %v404
        %v940 = vunpack.c.l.b16 %v405
        %v941 = vunpack.c.l.b16 %v406
        %v942 = vunpack.c.l.b16 %v407
        %v943 = vunpack.c.l.b16 %v408
        %v944 = vunpack.c.l.b16 %v409
        %v945 = vunpack.c.l.b16 %v410
        %v946 = vunpack.c.l.b16 %v411
        %v947 = vunpack.c.l.b16 %v412
        %v948 = vunpack.c.l.b16 %v413
        %v949 = vunpack.c.l.b16 %v414
        %v950 = vunpack.c.l.b16 %v415
        %v951 = vunpack.c.l.b16 %v416
        %v952 = vunpack.c.l.b16 %v417
        %v953 = vunpack.c.l.b16 %v418
        %v954 = vunpack.c.l.b16 %v419
        %v955 = vunpack.c.l.b16 %v420
        %v956 = vunpack.c.l.b16 %v421
        %v957 = vunpack.c.l.b16 %v422
        %v958 = vunpack.c.l.b16 %v423
        %v959 = vunpack.c.l.b16 %v424
        %v960 = vunpack.c.l.b16 %v425
        %v961 = vunpack.c.l.b16 %v426
        %v962 = vunpack.c.l.b16 %v427
        %v963 = vunpack.c.l.b16 %v428
        %v964 = vunpack.c.l.b16 %v429
        %v965 = vunpack.c.l.b16 %v430
        %v966 = vunpack.c.l.b16 %v431
        %v967 = vunpack.c.l.b16 %v432
        %v968 = vunpack.c.l.b16 %v433
        %v969 = vunpack.c.l.b16 %v434
        %v970 = vunpack.c.l.b16 %v435
        %v971 = vunpack.c.l.b16 %v436
        %v972 = vunpack.c.l.b16 %v437
        %v973 = vunpack.c.l.b16 %v438
        %v974 = vunpack.c.l.b16 %v439
        %v975 = vunpack.c.l.b16 %v440
        %v976 = vunpack.c.l.b16 %v441
        %v977 = vunpack.c.l.b16 %v442
        %v978 = vunpack.c.l.b16 %v443
        %v979 = vunpack.c.l.b16 %v444
        %v980 = vunpack.c.l.b16 %v445
        %v981 = vunpack.c.l.b16 %v446
        %v982 = vunpack.c.l.b16 %v447
        %v983 = vunpack.c.l.b16 %v448
        %v984 = vpack.c.b16 %v729, %v728
        %v985 = vpack.c.b16 %v731, %v730
        %v986 = vpack.c.b16 %v733, %v732
        %v987 = vpack.c.b16 %v735, %v734
        %v988 = vpack.c.b16 %v737, %v736
        %v989 = vpack.c.b16 %v739, %v738
        %v990 = vpack.c.b16 %v741, %v740
        %v991 = vpack.c.b16 %v743, %v742
        %v992 = vpack.c.b16 %v745, %v744
        %v993 = vpack.c.b16 %v747, %v746
        %v994 = vpack.c.b16 %v749, %v748
        %v995 = vpack.c.b16 %v751, %v750
        %v996 = vpack.c.b16 %v753, %v752
        %v997 = vpack.c.b16 %v755, %v754
        %v998 = vpack.c.b16 %v757, %v756
        %v999 = vpack.c.b16 %v759, %v758
        %v1000 = vpack.c.b16 %v761, %v760
        %v1001 = vpack.c.b16 %v763, %v762
        %v1002 = vpack.c.b16 %v765, %v764
        %v1003 = vpack.c.b16 %v767, %v766
        %v1004 = vpack.c.b16 %v769, %v768
        %v1005 = vpack.c.b16 %v771, %v770
        %v1006 = vpack.c.b16 %v773, %v772
        %v1007 = vpack.c.b16 %v775, %v774
        %v1008 = vpack.c.b16 %v777, %v776
        %v1009 = vpack.c.b16 %v779, %v778
        %v1010 = vpack.c.b16 %v781, %v780
        %v1011 = vpack.c.b16 %v783, %v782
        %v1012 = vpack.c.b16 %v785, %v784
        %v1013 = vpack.c.b16 %v787, %v786
        %v1014 = vpack.c.b16 %v789, %v788
        %v1015 = vpack.c.b16 %v791, %v790
        %v1016 = vpack.c.b16 %v793, %v792
        %v1017 = vpack.c.b16 %v795, %v794
        %v1018 = vpack.c.b16 %v797, %v796
        %v1019 = vpack.c.b16 %v799, %v798
        %v1020 = vpack.c.b16 %v801, %v800
        %v1021 = vpack.c.b16 %v803, %v802
        %v1022 = vpack.c.b16 %v805, %v804
        %v1023 = vpack.c.b16 %v807, %v806
        %v1024 = vpack.c.b16 %v809, %v808
        %v1025 = vpack.c.b16 %v811, %v810
        %v1026 = vpack.c.b16 %v813, %v812
        %v1027 = vpack.c.b16 %v815, %v814
        %v1028 = vpack.c.b16 %v817, %v816
        %v1029 = vpack.c.b16 %v819, %v818
        %v1030 = vpack.c.b16 %v821, %v820
        %v1031 = vpack.c.b16 %v823, %v822
        %v1032 = vpack.c.b16 %v825, %v824
        %v1033 = vpack.c.b16 %v827, %v826
        %v1034 = vpack.c.b16 %v829, %v828
        %v1035 = vpack.c.b16 %v831, %v830
        %v1036 = vpack.c.b16 %v833, %v832
        %v1037 = vpack.c.b16 %v835, %v834
        %v1038 = vpack.c.b16 %v837, %v836
        %v1039 = vpack.c.b16 %v839, %v838
        %v1040 = vpack.c.b16 %v841, %v840
        %v1041 = vpack.c.b16 %v843, %v842
        %v1042 = vpack.c.b16 %v845, %v844
        %v1043 = vpack.c.b16 %v847, %v846
        %v1044 = vpack.c.b16 %v849, %v848
        %v1045 = vpack.c.b16 %v851, %v850
        %v1046 = vpack.c.b16 %v853, %v852
        %v1047 = vpack.c.b16 %v855, %v854
        %v1048 = vpack.c.b16 %v857, %v856
        %v1049 = vpack.c.b16 %v859, %v858
        %v1050 = vpack.c.b16 %v861, %v860
        %v1051 = vpack.c.b16 %v863, %v862
        %v1052 = vpack.c.b16 %v865, %v864
        %v1053 = vpack.c.b16 %v867, %v866
        %v1054 = vpack.c.b16 %v869, %v868
        %v1055 = vpack.c.b16 %v871, %v870
        %v1056 = vpack.c.b16 %v873, %v872
        %v1057 = vpack.c.b16 %v875, %v874
        %v1058 = vpack.c.b16 %v877, %v876
        %v1059 = vpack.c.b16 %v879, %v878
        %v1060 = vpack.c.b16 %v881, %v880
        %v1061 = vpack.c.b16 %v883, %v882
        %v1062 = vpack.c.b16 %v885, %v884
        %v1063 = vpack.c.b16 %v887, %v886
        %v1064 = vpack.c.b16 %v889, %v888
        %v1065 = vpack.c.b16 %v891, %v890
        %v1066 = vpack.c.b16 %v893, %v892
        %v1067 = vpack.c.b16 %v895, %v894
        %v1068 = vpack.c.b16 %v897, %v896
        %v1069 = vpack.c.b16 %v899, %v898
        %v1070 = vpack.c.b16 %v901, %v900
        %v1071 = vpack.c.b16 %v903, %v902
        %v1072 = vpack.c.b16 %v905, %v904
        %v1073 = vpack.c.b16 %v907, %v906
        %v1074 = vpack.c.b16 %v909, %v908
        %v1075 = vpack.c.b16 %v911, %v910
        %v1076 = vpack.c.b16 %v913, %v912
        %v1077 = vpack.c.b16 %v915, %v914
        %v1078 = vpack.c.b16 %v917, %v916
        %v1079 = vpack.c.b16 %v919, %v918
        %v1080 = vpack.c.b16 %v921, %v920
        %v1081 = vpack.c.b16 %v923, %v922
        %v1082 = vpack.c.b16 %v925, %v924
        %v1083 = vpack.c.b16 %v927, %v926
        %v1084 = vpack.c.b16 %v929, %v928
        %v1085 = vpack.c.b16 %v931, %v930
        %v1086 = vpack.c.b16 %v933, %v932
        %v1087 = vpack.c.b16 %v935, %v934
        %v1088 = vpack.c.b16 %v937, %v936
        %v1089 = vpack.c.b16 %v939, %v938
        %v1090 = vpack.c.b16 %v941, %v940
        %v1091 = vpack.c.b16 %v943, %v942
        %v1092 = vpack.c.b16 %v945, %v944
        %v1093 = vpack.c.b16 %v947, %v946
        %v1094 = vpack.c.b16 %v949, %v948
        %v1095 = vpack.c.b16 %v951, %v950
        %v1096 = vpack.c.b16 %v953, %v952
        %v1097 = vpack.c.b16 %v955, %v954
        %v1098 = vpack.c.b16 %v957, %v956
        %v1099 = vpack.c.b16 %v959, %v958
        %v1100 = vpack.c.b16 %v961, %v960
        %v1101 = vpack.c.b16 %v963, %v962
        %v1102 = vpack.c.b16 %v965, %v964
        %v1103 = vpack.c.b16 %v967, %v966
        %v1104 = vpack.c.b16 %v969, %v968
        %v1105 = vpack.c.b16 %v971, %v970
        %v1106 = vpack.c.b16 %v973, %v972
        %v1107 = vpack.c.b16 %v975, %v974
        %v1108 = vpack.c.b16 %v977, %v976
        %v1109 = vpack.c.b16 %v979, %v978
        %v1110 = vpack.c.b16 %v981, %v980
        %v1111 = vpack.c.b16 %v983, %v982
        %v1256 = vunpack.c.l.b16 %v449
        %v1257 = vunpack.c.l.b16 %v450
        %v1258 = vunpack.c.l.b16 %v451
        %v1259 = vunpack.c.l.b16 %v452
        %v1260 = vunpack.c.l.b16 %v453
        %v1261 = vunpack.c.l.b16 %v454
        %v1262 = vunpack.c.l.b16 %v455
        %v1263 = vunpack.c.l.b16 %v456
        %v1264 = vunpack.c.l.b16 %v457
        %v1265 = vunpack.c.l.b16 %v458
        %v1266 = vunpack.c.l.b16 %v459
        %v1267 = vunpack.c.l.b16 %v460
        %v1268 = vunpack.c.l.b16 %v461
        %v1269 = vunpack.c.l.b16 %v462
        %v1270 = vunpack.c.l.b16 %v463
        %v1271 = vunpack.c.l.b16 %v464
        %v1272 = vpack.c.b16 %v1257, %v1256
        %v1273 = vpack.c.b16 %v1259, %v1258
        %v1274 = vpack.c.b16 %v1261, %v1260
        %v1275 = vpack.c.b16 %v1263, %v1262
        %v1276 = vpack.c.b16 %v1265, %v1264
        %v1277 = vpack.c.b16 %v1267, %v1266
        %v1278 = vpack.c.b16 %v1269, %v1268
        %v1279 = vpack.c.b16 %v1271, %v1270
        %1288 = vmatprep.subr.bf16.mxu0 0
        %1289 = vmatpush1.bf16.msra.mxu0 %v1279
        %1290 = vmatprep.subr.bf16.mxu0 0
        %1291 = vmatpush1.bf16.msra.mxu0 %v1278
        %1292 = vmatprep.subr.bf16.mxu0 0
        %1293 = vmatpush1.bf16.msra.mxu0 %v1277
        %1294 = vmatprep.subr.bf16.mxu0 0
        %1295 = vmatpush1.bf16.msra.mxu0 %v1276
        %1296 = vmatprep.subr.bf16.mxu0 0
        %1297 = vmatpush1.bf16.msra.mxu0 %v1275
        %1298 = vmatprep.subr.bf16.mxu0 0
        %1299 = vmatpush1.bf16.msra.mxu0 %v1274
        %1300 = vmatprep.subr.bf16.mxu0 0
        %1301 = vmatpush1.bf16.msra.mxu0 %v1273
        %1302 = vmatprep.subr.bf16.mxu0 0
        %1303 = vmatpush1.bf16.msra.mxu0 %v1272
        %1304 = vmatprep.subr.bf16.mxu0 0
        %1305 = vmatpush2.bf16.msra.mxu0 0
        %1306 = vmatprep.subr.bf16.mxu0 0
        %1307 = vmatpush2.bf16.msra.mxu0 0
        %1308 = vmatprep.subr.bf16.mxu0 0
        %1309 = vmatpush2.bf16.msra.mxu0 0
        %1310 = vmatprep.subr.bf16.mxu0 0
        %1311 = vmatpush2.bf16.msra.mxu0 0
        %1312 = vmatprep.subr.bf16.mxu0 0
        %1313 = vmatpush2.bf16.msra.mxu0 0
        %1314 = vmatprep.subr.bf16.mxu0 0
        %1315 = vmatpush2.bf16.msra.mxu0 0
        %1316 = vmatprep.subr.bf16.mxu0 0
        %1317 = vmatpush2.bf16.msra.mxu0 0
        %1318 = vmatprep.subr.bf16.mxu0 0
        %1319 = vmatpush2.bf16.msra.mxu0 0
        %1320 = vmatprep.mubr.bf16.mxu0 0
        %1321 = vmatmul.mubr.bf16.gmra.mxu0 %v984
        %v1322 = vpop.f32.mrf.mxu0
        %v1323 = vadd.f32 %v470, %v1322
        %v1324 = vpop.f32.mrf.mxu0
        %v1325 = vpop.f32.mrf.mxu0
        %v1326 = vadd.f32 %v470, %v1325
        %v1327 = vpop.f32.mrf.mxu0
        %1328 = vmatprep.mubr.bf16.mxu0 0
        %1329 = vmatmul.mubr.bf16.gmra.mxu0 %v985
        %v1330 = vpop.f32.mrf.mxu0
        %v1331 = vadd.f32 %v470, %v1330
        %v1332 = vpop.f32.mrf.mxu0
        %v1333 = vpop.f32.mrf.mxu0
        %v1334 = vadd.f32 %v470, %v1333
        %v1335 = vpop.f32.mrf.mxu0
        %1336 = vmatprep.mubr.bf16.mxu0 0
        %1337 = vmatmul.mubr.bf16.gmra.mxu0 %v986
        %v1338 = vpop.f32.mrf.mxu0
        %v1339 = vadd.f32 %v470, %v1338
        %v1340 = vpop.f32.mrf.mxu0
        %v1341 = vpop.f32.mrf.mxu0
        %v1342 = vadd.f32 %v470, %v1341
        %v1343 = vpop.f32.mrf.mxu0
        %1344 = vmatprep.mubr.bf16.mxu0 0
        %1345 = vmatmul.mubr.bf16.gmra.mxu0 %v987
        %v1346 = vpop.f32.mrf.mxu0
        %v1347 = vadd.f32 %v470, %v1346
        %v1348 = vpop.f32.mrf.mxu0
        %v1349 = vpop.f32.mrf.mxu0
        %v1350 = vadd.f32 %v470, %v1349
        %v1351 = vpop.f32.mrf.mxu0
        %1352 = vmatprep.mubr.bf16.mxu0 0
        %1353 = vmatmul.mubr.bf16.gmra.mxu0 %v988
        %v1354 = vpop.f32.mrf.mxu0
        %v1355 = vadd.f32 %v470, %v1354
        %v1356 = vpop.f32.mrf.mxu0
        %v1357 = vpop.f32.mrf.mxu0
        %v1358 = vadd.f32 %v470, %v1357
        %v1359 = vpop.f32.mrf.mxu0
        %1360 = vmatprep.mubr.bf16.mxu0 0
        %1361 = vmatmul.mubr.bf16.gmra.mxu0 %v989
        %v1362 = vpop.f32.mrf.mxu0
        %v1363 = vadd.f32 %v470, %v1362
        %v1364 = vpop.f32.mrf.mxu0
        %v1365 = vpop.f32.mrf.mxu0
        %v1366 = vadd.f32 %v470, %v1365
        %v1367 = vpop.f32.mrf.mxu0
        %1368 = vmatprep.mubr.bf16.mxu0 0
        %1369 = vmatmul.mubr.bf16.gmra.mxu0 %v990
        %v1370 = vpop.f32.mrf.mxu0
        %v1371 = vadd.f32 %v470, %v1370
        %v1372 = vpop.f32.mrf.mxu0
        %v1373 = vpop.f32.mrf.mxu0
        %v1374 = vadd.f32 %v470, %v1373
        %v1375 = vpop.f32.mrf.mxu0
        %1376 = vmatprep.mubr.bf16.mxu0 0
        %1377 = vmatmul.mubr.bf16.gmra.mxu0 %v991
        %v1378 = vpop.f32.mrf.mxu0
        %v1379 = vadd.f32 %v470, %v1378
        %v1380 = vpop.f32.mrf.mxu0
        %v1381 = vpop.f32.mrf.mxu0
        %v1382 = vadd.f32 %v470, %v1381
        %v1383 = vpop.f32.mrf.mxu0
        %1384 = vmatprep.mubr.bf16.mxu0 0
        %1385 = vmatmul.mubr.bf16.gmra.mxu0 %v992
        %v1386 = vpop.f32.mrf.mxu0
        %v1387 = vadd.f32 %v470, %v1386
        %v1388 = vpop.f32.mrf.mxu0
        %v1389 = vpop.f32.mrf.mxu0
        %v1390 = vadd.f32 %v470, %v1389
        %v1391 = vpop.f32.mrf.mxu0
        %1392 = vmatprep.mubr.bf16.mxu0 0
        %1393 = vmatmul.mubr.bf16.gmra.mxu0 %v993
        %v1394 = vpop.f32.mrf.mxu0
        %v1395 = vadd.f32 %v470, %v1394
        %v1396 = vpop.f32.mrf.mxu0
        %v1397 = vpop.f32.mrf.mxu0
        %v1398 = vadd.f32 %v470, %v1397
        %v1399 = vpop.f32.mrf.mxu0
        %1400 = vmatprep.mubr.bf16.mxu0 0
        %1401 = vmatmul.mubr.bf16.gmra.mxu0 %v994
        %v1402 = vpop.f32.mrf.mxu0
        %v1403 = vadd.f32 %v470, %v1402
        %v1404 = vpop.f32.mrf.mxu0
        %v1405 = vpop.f32.mrf.mxu0
        %v1406 = vadd.f32 %v470, %v1405
        %v1407 = vpop.f32.mrf.mxu0
        %1408 = vmatprep.mubr.bf16.mxu0 0
        %1409 = vmatmul.mubr.bf16.gmra.mxu0 %v995
        %v1410 = vpop.f32.mrf.mxu0
        %v1411 = vadd.f32 %v470, %v1410
        %v1412 = vpop.f32.mrf.mxu0
        %v1413 = vpop.f32.mrf.mxu0
        %v1414 = vadd.f32 %v470, %v1413
        %v1415 = vpop.f32.mrf.mxu0
        %1416 = vmatprep.mubr.bf16.mxu0 0
        %1417 = vmatmul.mubr.bf16.gmra.mxu0 %v996
        %v1418 = vpop.f32.mrf.mxu0
        %v1419 = vadd.f32 %v470, %v1418
        %v1420 = vpop.f32.mrf.mxu0
        %v1421 = vpop.f32.mrf.mxu0
        %v1422 = vadd.f32 %v470, %v1421
        %v1423 = vpop.f32.mrf.mxu0
        %1424 = vmatprep.mubr.bf16.mxu0 0
        %1425 = vmatmul.mubr.bf16.gmra.mxu0 %v997
        %v1426 = vpop.f32.mrf.mxu0
        %v1427 = vadd.f32 %v470, %v1426
        %v1428 = vpop.f32.mrf.mxu0
        %v1429 = vpop.f32.mrf.mxu0
        %v1430 = vadd.f32 %v470, %v1429
        %v1431 = vpop.f32.mrf.mxu0
        %1432 = vmatprep.mubr.bf16.mxu0 0
        %1433 = vmatmul.mubr.bf16.gmra.mxu0 %v998
        %v1434 = vpop.f32.mrf.mxu0
        %v1435 = vadd.f32 %v470, %v1434
        %v1436 = vpop.f32.mrf.mxu0
        %v1437 = vpop.f32.mrf.mxu0
        %v1438 = vadd.f32 %v470, %v1437
        %v1439 = vpop.f32.mrf.mxu0
        %1440 = vmatprep.mubr.bf16.mxu0 0
        %1441 = vmatmul.mubr.bf16.gmra.mxu0 %v999
        %v1442 = vpop.f32.mrf.mxu0
        %v1443 = vadd.f32 %v470, %v1442
        %v1444 = vpop.f32.mrf.mxu0
        %v1445 = vpop.f32.mrf.mxu0
        %v1446 = vadd.f32 %v470, %v1445
        %v1447 = vpop.f32.mrf.mxu0
        %1448 = vmatprep.mubr.bf16.mxu0 0
        %1449 = vmatmul.mubr.bf16.gmra.mxu0 %v1000
        %v1450 = vpop.f32.mrf.mxu0
        %v1451 = vadd.f32 %v470, %v1450
        %v1452 = vpop.f32.mrf.mxu0
        %v1453 = vpop.f32.mrf.mxu0
        %v1454 = vadd.f32 %v470, %v1453
        %v1455 = vpop.f32.mrf.mxu0
        %1456 = vmatprep.mubr.bf16.mxu0 0
        %1457 = vmatmul.mubr.bf16.gmra.mxu0 %v1001
        %v1458 = vpop.f32.mrf.mxu0
        %v1459 = vadd.f32 %v470, %v1458
        %v1460 = vpop.f32.mrf.mxu0
        %v1461 = vpop.f32.mrf.mxu0
        %v1462 = vadd.f32 %v470, %v1461
        %v1463 = vpop.f32.mrf.mxu0
        %1464 = vmatprep.mubr.bf16.mxu0 0
        %1465 = vmatmul.mubr.bf16.gmra.mxu0 %v1002
        %v1466 = vpop.f32.mrf.mxu0
        %v1467 = vadd.f32 %v470, %v1466
        %v1468 = vpop.f32.mrf.mxu0
        %v1469 = vpop.f32.mrf.mxu0
        %v1470 = vadd.f32 %v470, %v1469
        %v1471 = vpop.f32.mrf.mxu0
        %1472 = vmatprep.mubr.bf16.mxu0 0
        %1473 = vmatmul.mubr.bf16.gmra.mxu0 %v1003
        %v1474 = vpop.f32.mrf.mxu0
        %v1475 = vadd.f32 %v470, %v1474
        %v1476 = vpop.f32.mrf.mxu0
        %v1477 = vpop.f32.mrf.mxu0
        %v1478 = vadd.f32 %v470, %v1477
        %v1479 = vpop.f32.mrf.mxu0
        %1480 = vmatprep.mubr.bf16.mxu0 0
        %1481 = vmatmul.mubr.bf16.gmra.mxu0 %v1004
        %v1482 = vpop.f32.mrf.mxu0
        %v1483 = vadd.f32 %v470, %v1482
        %v1484 = vpop.f32.mrf.mxu0
        %v1485 = vpop.f32.mrf.mxu0
        %v1486 = vadd.f32 %v470, %v1485
        %v1487 = vpop.f32.mrf.mxu0
        %1488 = vmatprep.mubr.bf16.mxu0 0
        %1489 = vmatmul.mubr.bf16.gmra.mxu0 %v1005
        %v1490 = vpop.f32.mrf.mxu0
        %v1491 = vadd.f32 %v470, %v1490
        %v1492 = vpop.f32.mrf.mxu0
        %v1493 = vpop.f32.mrf.mxu0
        %v1494 = vadd.f32 %v470, %v1493
        %v1495 = vpop.f32.mrf.mxu0
        %1496 = vmatprep.mubr.bf16.mxu0 0
        %1497 = vmatmul.mubr.bf16.gmra.mxu0 %v1006
        %v1498 = vpop.f32.mrf.mxu0
        %v1499 = vadd.f32 %v470, %v1498
        %v1500 = vpop.f32.mrf.mxu0
        %v1501 = vpop.f32.mrf.mxu0
        %v1502 = vadd.f32 %v470, %v1501
        %v1503 = vpop.f32.mrf.mxu0
        %1504 = vmatprep.mubr.bf16.mxu0 0
        %1505 = vmatmul.mubr.bf16.gmra.mxu0 %v1007
        %v1506 = vpop.f32.mrf.mxu0
        %v1507 = vadd.f32 %v470, %v1506
        %v1508 = vpop.f32.mrf.mxu0
        %v1509 = vpop.f32.mrf.mxu0
        %v1510 = vadd.f32 %v470, %v1509
        %v1511 = vpop.f32.mrf.mxu0
        %1512 = vmatprep.mubr.bf16.mxu0 0
        %1513 = vmatmul.mubr.bf16.gmra.mxu0 %v1008
        %v1514 = vpop.f32.mrf.mxu0
        %v1515 = vadd.f32 %v470, %v1514
        %v1516 = vpop.f32.mrf.mxu0
        %v1517 = vpop.f32.mrf.mxu0
        %v1518 = vadd.f32 %v470, %v1517
        %v1519 = vpop.f32.mrf.mxu0
        %1520 = vmatprep.mubr.bf16.mxu0 0
        %1521 = vmatmul.mubr.bf16.gmra.mxu0 %v1009
        %v1522 = vpop.f32.mrf.mxu0
        %v1523 = vadd.f32 %v470, %v1522
        %v1524 = vpop.f32.mrf.mxu0
        %v1525 = vpop.f32.mrf.mxu0
        %v1526 = vadd.f32 %v470, %v1525
        %v1527 = vpop.f32.mrf.mxu0
        %1528 = vmatprep.mubr.bf16.mxu0 0
        %1529 = vmatmul.mubr.bf16.gmra.mxu0 %v1010
        %v1530 = vpop.f32.mrf.mxu0
        %v1531 = vadd.f32 %v470, %v1530
        %v1532 = vpop.f32.mrf.mxu0
        %v1533 = vpop.f32.mrf.mxu0
        %v1534 = vadd.f32 %v470, %v1533
        %v1535 = vpop.f32.mrf.mxu0
        %1536 = vmatprep.mubr.bf16.mxu0 0
        %1537 = vmatmul.mubr.bf16.gmra.mxu0 %v1011
        %v1538 = vpop.f32.mrf.mxu0
        %v1539 = vadd.f32 %v470, %v1538
        %v1540 = vpop.f32.mrf.mxu0
        %v1541 = vpop.f32.mrf.mxu0
        %v1542 = vadd.f32 %v470, %v1541
        %v1543 = vpop.f32.mrf.mxu0
        %1544 = vmatprep.mubr.bf16.mxu0 0
        %1545 = vmatmul.mubr.bf16.gmra.mxu0 %v1012
        %v1546 = vpop.f32.mrf.mxu0
        %v1547 = vadd.f32 %v470, %v1546
        %v1548 = vpop.f32.mrf.mxu0
        %v1549 = vpop.f32.mrf.mxu0
        %v1550 = vadd.f32 %v470, %v1549
        %v1551 = vpop.f32.mrf.mxu0
        %1552 = vmatprep.mubr.bf16.mxu0 0
        %1553 = vmatmul.mubr.bf16.gmra.mxu0 %v1013
        %v1554 = vpop.f32.mrf.mxu0
        %v1555 = vadd.f32 %v470, %v1554
        %v1556 = vpop.f32.mrf.mxu0
        %v1557 = vpop.f32.mrf.mxu0
        %v1558 = vadd.f32 %v470, %v1557
        %v1559 = vpop.f32.mrf.mxu0
        %1560 = vmatprep.mubr.bf16.mxu0 0
        %1561 = vmatmul.mubr.bf16.gmra.mxu0 %v1014
        %v1562 = vpop.f32.mrf.mxu0
        %v1563 = vadd.f32 %v470, %v1562
        %v1564 = vpop.f32.mrf.mxu0
        %v1565 = vpop.f32.mrf.mxu0
        %v1566 = vadd.f32 %v470, %v1565
        %v1567 = vpop.f32.mrf.mxu0
        %1568 = vmatprep.mubr.bf16.mxu0 0
        %1569 = vmatmul.mubr.bf16.gmra.mxu0 %v1015
        %v1570 = vpop.f32.mrf.mxu0
        %v1571 = vadd.f32 %v470, %v1570
        %v1572 = vpop.f32.mrf.mxu0
        %v1573 = vpop.f32.mrf.mxu0
        %v1574 = vadd.f32 %v470, %v1573
        %v1575 = vpop.f32.mrf.mxu0
        %1576 = vmatprep.mubr.bf16.mxu0 0
        %1577 = vmatmul.mubr.bf16.gmra.mxu0 %v1016
        %v1578 = vpop.f32.mrf.mxu0
        %v1579 = vadd.f32 %v470, %v1578
        %v1580 = vpop.f32.mrf.mxu0
        %v1581 = vpop.f32.mrf.mxu0
        %v1582 = vadd.f32 %v470, %v1581
        %v1583 = vpop.f32.mrf.mxu0
        %1584 = vmatprep.mubr.bf16.mxu0 0
        %1585 = vmatmul.mubr.bf16.gmra.mxu0 %v1017
        %v1586 = vpop.f32.mrf.mxu0
        %v1587 = vadd.f32 %v470, %v1586
        %v1588 = vpop.f32.mrf.mxu0
        %v1589 = vpop.f32.mrf.mxu0
        %v1590 = vadd.f32 %v470, %v1589
        %v1591 = vpop.f32.mrf.mxu0
        %1592 = vmatprep.mubr.bf16.mxu0 0
        %1593 = vmatmul.mubr.bf16.gmra.mxu0 %v1018
        %v1594 = vpop.f32.mrf.mxu0
        %v1595 = vadd.f32 %v470, %v1594
        %v1596 = vpop.f32.mrf.mxu0
        %v1597 = vpop.f32.mrf.mxu0
        %v1598 = vadd.f32 %v470, %v1597
        %v1599 = vpop.f32.mrf.mxu0
        %1600 = vmatprep.mubr.bf16.mxu0 0
        %1601 = vmatmul.mubr.bf16.gmra.mxu0 %v1019
        %v1602 = vpop.f32.mrf.mxu0
        %v1603 = vadd.f32 %v470, %v1602
        %v1604 = vpop.f32.mrf.mxu0
        %v1605 = vpop.f32.mrf.mxu0
        %v1606 = vadd.f32 %v470, %v1605
        %v1607 = vpop.f32.mrf.mxu0
        %1608 = vmatprep.mubr.bf16.mxu0 0
        %1609 = vmatmul.mubr.bf16.gmra.mxu0 %v1020
        %v1610 = vpop.f32.mrf.mxu0
        %v1611 = vadd.f32 %v470, %v1610
        %v1612 = vpop.f32.mrf.mxu0
        %v1613 = vpop.f32.mrf.mxu0
        %v1614 = vadd.f32 %v470, %v1613
        %v1615 = vpop.f32.mrf.mxu0
        %1616 = vmatprep.mubr.bf16.mxu0 0
        %1617 = vmatmul.mubr.bf16.gmra.mxu0 %v1021
        %v1618 = vpop.f32.mrf.mxu0
        %v1619 = vadd.f32 %v470, %v1618
        %v1620 = vpop.f32.mrf.mxu0
        %v1621 = vpop.f32.mrf.mxu0
        %v1622 = vadd.f32 %v470, %v1621
        %v1623 = vpop.f32.mrf.mxu0
        %1624 = vmatprep.mubr.bf16.mxu0 0
        %1625 = vmatmul.mubr.bf16.gmra.mxu0 %v1022
        %v1626 = vpop.f32.mrf.mxu0
        %v1627 = vadd.f32 %v470, %v1626
        %v1628 = vpop.f32.mrf.mxu0
        %v1629 = vpop.f32.mrf.mxu0
        %v1630 = vadd.f32 %v470, %v1629
        %v1631 = vpop.f32.mrf.mxu0
        %1632 = vmatprep.mubr.bf16.mxu0 0
        %1633 = vmatmul.mubr.bf16.gmra.mxu0 %v1023
        %v1634 = vpop.f32.mrf.mxu0
        %v1635 = vadd.f32 %v470, %v1634
        %v1636 = vpop.f32.mrf.mxu0
        %v1637 = vpop.f32.mrf.mxu0
        %v1638 = vadd.f32 %v470, %v1637
        %v1639 = vpop.f32.mrf.mxu0
        %1640 = vmatprep.mubr.bf16.mxu0 0
        %1641 = vmatmul.mubr.bf16.gmra.mxu0 %v1024
        %v1642 = vpop.f32.mrf.mxu0
        %v1643 = vadd.f32 %v470, %v1642
        %v1644 = vpop.f32.mrf.mxu0
        %v1645 = vpop.f32.mrf.mxu0
        %v1646 = vadd.f32 %v470, %v1645
        %v1647 = vpop.f32.mrf.mxu0
        %1648 = vmatprep.mubr.bf16.mxu0 0
        %1649 = vmatmul.mubr.bf16.gmra.mxu0 %v1025
        %v1650 = vpop.f32.mrf.mxu0
        %v1651 = vadd.f32 %v470, %v1650
        %v1652 = vpop.f32.mrf.mxu0
        %v1653 = vpop.f32.mrf.mxu0
        %v1654 = vadd.f32 %v470, %v1653
        %v1655 = vpop.f32.mrf.mxu0
        %1656 = vmatprep.mubr.bf16.mxu0 0
        %1657 = vmatmul.mubr.bf16.gmra.mxu0 %v1026
        %v1658 = vpop.f32.mrf.mxu0
        %v1659 = vadd.f32 %v470, %v1658
        %v1660 = vpop.f32.mrf.mxu0
        %v1661 = vpop.f32.mrf.mxu0
        %v1662 = vadd.f32 %v470, %v1661
        %v1663 = vpop.f32.mrf.mxu0
        %1664 = vmatprep.mubr.bf16.mxu0 0
        %1665 = vmatmul.mubr.bf16.gmra.mxu0 %v1027
        %v1666 = vpop.f32.mrf.mxu0
        %v1667 = vadd.f32 %v470, %v1666
        %v1668 = vpop.f32.mrf.mxu0
        %v1669 = vpop.f32.mrf.mxu0
        %v1670 = vadd.f32 %v470, %v1669
        %v1671 = vpop.f32.mrf.mxu0
        %1672 = vmatprep.mubr.bf16.mxu0 0
        %1673 = vmatmul.mubr.bf16.gmra.mxu0 %v1028
        %v1674 = vpop.f32.mrf.mxu0
        %v1675 = vadd.f32 %v470, %v1674
        %v1676 = vpop.f32.mrf.mxu0
        %v1677 = vpop.f32.mrf.mxu0
        %v1678 = vadd.f32 %v470, %v1677
        %v1679 = vpop.f32.mrf.mxu0
        %1680 = vmatprep.mubr.bf16.mxu0 0
        %1681 = vmatmul.mubr.bf16.gmra.mxu0 %v1029
        %v1682 = vpop.f32.mrf.mxu0
        %v1683 = vadd.f32 %v470, %v1682
        %v1684 = vpop.f32.mrf.mxu0
        %v1685 = vpop.f32.mrf.mxu0
        %v1686 = vadd.f32 %v470, %v1685
        %v1687 = vpop.f32.mrf.mxu0
        %1688 = vmatprep.mubr.bf16.mxu0 0
        %1689 = vmatmul.mubr.bf16.gmra.mxu0 %v1030
        %v1690 = vpop.f32.mrf.mxu0
        %v1691 = vadd.f32 %v470, %v1690
        %v1692 = vpop.f32.mrf.mxu0
        %v1693 = vpop.f32.mrf.mxu0
        %v1694 = vadd.f32 %v470, %v1693
        %v1695 = vpop.f32.mrf.mxu0
        %1696 = vmatprep.mubr.bf16.mxu0 0
        %1697 = vmatmul.mubr.bf16.gmra.mxu0 %v1031
        %v1698 = vpop.f32.mrf.mxu0
        %v1699 = vadd.f32 %v470, %v1698
        %v1700 = vpop.f32.mrf.mxu0
        %v1701 = vpop.f32.mrf.mxu0
        %v1702 = vadd.f32 %v470, %v1701
        %v1703 = vpop.f32.mrf.mxu0
        %1704 = vmatprep.mubr.bf16.mxu0 0
        %1705 = vmatmul.mubr.bf16.gmra.mxu0 %v1032
        %v1706 = vpop.f32.mrf.mxu0
        %v1707 = vadd.f32 %v470, %v1706
        %v1708 = vpop.f32.mrf.mxu0
        %v1709 = vpop.f32.mrf.mxu0
        %v1710 = vadd.f32 %v470, %v1709
        %v1711 = vpop.f32.mrf.mxu0
        %1712 = vmatprep.mubr.bf16.mxu0 0
        %1713 = vmatmul.mubr.bf16.gmra.mxu0 %v1033
        %v1714 = vpop.f32.mrf.mxu0
        %v1715 = vadd.f32 %v470, %v1714
        %v1716 = vpop.f32.mrf.mxu0
        %v1717 = vpop.f32.mrf.mxu0
        %v1718 = vadd.f32 %v470, %v1717
        %v1719 = vpop.f32.mrf.mxu0
        %1720 = vmatprep.mubr.bf16.mxu0 0
        %1721 = vmatmul.mubr.bf16.gmra.mxu0 %v1034
        %v1722 = vpop.f32.mrf.mxu0
        %v1723 = vadd.f32 %v470, %v1722
        %v1724 = vpop.f32.mrf.mxu0
        %v1725 = vpop.f32.mrf.mxu0
        %v1726 = vadd.f32 %v470, %v1725
        %v1727 = vpop.f32.mrf.mxu0
        %1728 = vmatprep.mubr.bf16.mxu0 0
        %1729 = vmatmul.mubr.bf16.gmra.mxu0 %v1035
        %v1730 = vpop.f32.mrf.mxu0
        %v1731 = vadd.f32 %v470, %v1730
        %v1732 = vpop.f32.mrf.mxu0
        %v1733 = vpop.f32.mrf.mxu0
        %v1734 = vadd.f32 %v470, %v1733
        %v1735 = vpop.f32.mrf.mxu0
        %1736 = vmatprep.mubr.bf16.mxu0 0
        %1737 = vmatmul.mubr.bf16.gmra.mxu0 %v1036
        %v1738 = vpop.f32.mrf.mxu0
        %v1739 = vadd.f32 %v470, %v1738
        %v1740 = vpop.f32.mrf.mxu0
        %v1741 = vpop.f32.mrf.mxu0
        %v1742 = vadd.f32 %v470, %v1741
        %v1743 = vpop.f32.mrf.mxu0
        %1744 = vmatprep.mubr.bf16.mxu0 0
        %1745 = vmatmul.mubr.bf16.gmra.mxu0 %v1037
        %v1746 = vpop.f32.mrf.mxu0
        %v1747 = vadd.f32 %v470, %v1746
        %v1748 = vpop.f32.mrf.mxu0
        %v1749 = vpop.f32.mrf.mxu0
        %v1750 = vadd.f32 %v470, %v1749
        %v1751 = vpop.f32.mrf.mxu0
        %1752 = vmatprep.mubr.bf16.mxu0 0
        %1753 = vmatmul.mubr.bf16.gmra.mxu0 %v1038
        %v1754 = vpop.f32.mrf.mxu0
        %v1755 = vadd.f32 %v470, %v1754
        %v1756 = vpop.f32.mrf.mxu0
        %v1757 = vpop.f32.mrf.mxu0
        %v1758 = vadd.f32 %v470, %v1757
        %v1759 = vpop.f32.mrf.mxu0
        %1760 = vmatprep.mubr.bf16.mxu0 0
        %1761 = vmatmul.mubr.bf16.gmra.mxu0 %v1039
        %v1762 = vpop.f32.mrf.mxu0
        %v1763 = vadd.f32 %v470, %v1762
        %v1764 = vpop.f32.mrf.mxu0
        %v1765 = vpop.f32.mrf.mxu0
        %v1766 = vadd.f32 %v470, %v1765
        %v1767 = vpop.f32.mrf.mxu0
        %1768 = vmatprep.mubr.bf16.mxu0 0
        %1769 = vmatmul.mubr.bf16.gmra.mxu0 %v1040
        %v1770 = vpop.f32.mrf.mxu0
        %v1771 = vadd.f32 %v470, %v1770
        %v1772 = vpop.f32.mrf.mxu0
        %v1773 = vpop.f32.mrf.mxu0
        %v1774 = vadd.f32 %v470, %v1773
        %v1775 = vpop.f32.mrf.mxu0
        %1776 = vmatprep.mubr.bf16.mxu0 0
        %1777 = vmatmul.mubr.bf16.gmra.mxu0 %v1041
        %v1778 = vpop.f32.mrf.mxu0
        %v1779 = vadd.f32 %v470, %v1778
        %v1780 = vpop.f32.mrf.mxu0
        %v1781 = vpop.f32.mrf.mxu0
        %v1782 = vadd.f32 %v470, %v1781
        %v1783 = vpop.f32.mrf.mxu0
        %1784 = vmatprep.mubr.bf16.mxu0 0
        %1785 = vmatmul.mubr.bf16.gmra.mxu0 %v1042
        %v1786 = vpop.f32.mrf.mxu0
        %v1787 = vadd.f32 %v470, %v1786
        %v1788 = vpop.f32.mrf.mxu0
        %v1789 = vpop.f32.mrf.mxu0
        %v1790 = vadd.f32 %v470, %v1789
        %v1791 = vpop.f32.mrf.mxu0
        %1792 = vmatprep.mubr.bf16.mxu0 0
        %1793 = vmatmul.mubr.bf16.gmra.mxu0 %v1043
        %v1794 = vpop.f32.mrf.mxu0
        %v1795 = vadd.f32 %v470, %v1794
        %v1796 = vpop.f32.mrf.mxu0
        %v1797 = vpop.f32.mrf.mxu0
        %v1798 = vadd.f32 %v470, %v1797
        %v1799 = vpop.f32.mrf.mxu0
        %1800 = vmatprep.mubr.bf16.mxu0 0
        %1801 = vmatmul.mubr.bf16.gmra.mxu0 %v1044
        %v1802 = vpop.f32.mrf.mxu0
        %v1803 = vadd.f32 %v470, %v1802
        %v1804 = vpop.f32.mrf.mxu0
        %v1805 = vpop.f32.mrf.mxu0
        %v1806 = vadd.f32 %v470, %v1805
        %v1807 = vpop.f32.mrf.mxu0
        %1808 = vmatprep.mubr.bf16.mxu0 0
        %1809 = vmatmul.mubr.bf16.gmra.mxu0 %v1045
        %v1810 = vpop.f32.mrf.mxu0
        %v1811 = vadd.f32 %v470, %v1810
        %v1812 = vpop.f32.mrf.mxu0
        %v1813 = vpop.f32.mrf.mxu0
        %v1814 = vadd.f32 %v470, %v1813
        %v1815 = vpop.f32.mrf.mxu0
        %1816 = vmatprep.mubr.bf16.mxu0 0
        %1817 = vmatmul.mubr.bf16.gmra.mxu0 %v1046
        %v1818 = vpop.f32.mrf.mxu0
        %v1819 = vadd.f32 %v470, %v1818
        %v1820 = vpop.f32.mrf.mxu0
        %v1821 = vpop.f32.mrf.mxu0
        %v1822 = vadd.f32 %v470, %v1821
        %v1823 = vpop.f32.mrf.mxu0
        %1824 = vmatprep.mubr.bf16.mxu0 0
        %1825 = vmatmul.mubr.bf16.gmra.mxu0 %v1047
        %v1826 = vpop.f32.mrf.mxu0
        %v1827 = vadd.f32 %v470, %v1826
        %v1828 = vpop.f32.mrf.mxu0
        %v1829 = vpop.f32.mrf.mxu0
        %v1830 = vadd.f32 %v470, %v1829
        %v1831 = vpop.f32.mrf.mxu0
        %1832 = vmatprep.mubr.bf16.mxu0 0
        %1833 = vmatmul.mubr.bf16.gmra.mxu0 %v1048
        %v1834 = vpop.f32.mrf.mxu0
        %v1835 = vadd.f32 %v470, %v1834
        %v1836 = vpop.f32.mrf.mxu0
        %v1837 = vpop.f32.mrf.mxu0
        %v1838 = vadd.f32 %v470, %v1837
        %v1839 = vpop.f32.mrf.mxu0
        %1840 = vmatprep.mubr.bf16.mxu0 0
        %1841 = vmatmul.mubr.bf16.gmra.mxu0 %v1049
        %v1842 = vpop.f32.mrf.mxu0
        %v1843 = vadd.f32 %v470, %v1842
        %v1844 = vpop.f32.mrf.mxu0
        %v1845 = vpop.f32.mrf.mxu0
        %v1846 = vadd.f32 %v470, %v1845
        %v1847 = vpop.f32.mrf.mxu0
        %1848 = vmatprep.mubr.bf16.mxu0 0
        %1849 = vmatmul.mubr.bf16.gmra.mxu0 %v1050
        %v1850 = vpop.f32.mrf.mxu0
        %v1851 = vadd.f32 %v470, %v1850
        %v1852 = vpop.f32.mrf.mxu0
        %v1853 = vpop.f32.mrf.mxu0
        %v1854 = vadd.f32 %v470, %v1853
        %v1855 = vpop.f32.mrf.mxu0
        %1856 = vmatprep.mubr.bf16.mxu0 0
        %1857 = vmatmul.mubr.bf16.gmra.mxu0 %v1051
        %v1858 = vpop.f32.mrf.mxu0
        %v1859 = vadd.f32 %v470, %v1858
        %v1860 = vpop.f32.mrf.mxu0
        %v1861 = vpop.f32.mrf.mxu0
        %v1862 = vadd.f32 %v470, %v1861
        %v1863 = vpop.f32.mrf.mxu0
        %1864 = vmatprep.mubr.bf16.mxu0 0
        %1865 = vmatmul.mubr.bf16.gmra.mxu0 %v1052
        %v1866 = vpop.f32.mrf.mxu0
        %v1867 = vadd.f32 %v470, %v1866
        %v1868 = vpop.f32.mrf.mxu0
        %v1869 = vpop.f32.mrf.mxu0
        %v1870 = vadd.f32 %v470, %v1869
        %v1871 = vpop.f32.mrf.mxu0
        %1872 = vmatprep.mubr.bf16.mxu0 0
        %1873 = vmatmul.mubr.bf16.gmra.mxu0 %v1053
        %v1874 = vpop.f32.mrf.mxu0
        %v1875 = vadd.f32 %v470, %v1874
        %v1876 = vpop.f32.mrf.mxu0
        %v1877 = vpop.f32.mrf.mxu0
        %v1878 = vadd.f32 %v470, %v1877
        %v1879 = vpop.f32.mrf.mxu0
        %1880 = vmatprep.mubr.bf16.mxu0 0
        %1881 = vmatmul.mubr.bf16.gmra.mxu0 %v1054
        %v1882 = vpop.f32.mrf.mxu0
        %v1883 = vadd.f32 %v470, %v1882
        %v1884 = vpop.f32.mrf.mxu0
        %v1885 = vpop.f32.mrf.mxu0
        %v1886 = vadd.f32 %v470, %v1885
        %v1887 = vpop.f32.mrf.mxu0
        %1888 = vmatprep.mubr.bf16.mxu0 0
        %1889 = vmatmul.mubr.bf16.gmra.mxu0 %v1055
        %v1890 = vpop.f32.mrf.mxu0
        %v1891 = vadd.f32 %v470, %v1890
        %v1892 = vpop.f32.mrf.mxu0
        %v1893 = vpop.f32.mrf.mxu0
        %v1894 = vadd.f32 %v470, %v1893
        %v1895 = vpop.f32.mrf.mxu0
        %1896 = vmatprep.mubr.bf16.mxu0 0
        %1897 = vmatmul.mubr.bf16.gmra.mxu0 %v1056
        %v1898 = vpop.f32.mrf.mxu0
        %v1899 = vadd.f32 %v470, %v1898
        %v1900 = vpop.f32.mrf.mxu0
        %v1901 = vpop.f32.mrf.mxu0
        %v1902 = vadd.f32 %v470, %v1901
        %v1903 = vpop.f32.mrf.mxu0
        %1904 = vmatprep.mubr.bf16.mxu0 0
        %1905 = vmatmul.mubr.bf16.gmra.mxu0 %v1057
        %v1906 = vpop.f32.mrf.mxu0
        %v1907 = vadd.f32 %v470, %v1906
        %v1908 = vpop.f32.mrf.mxu0
        %v1909 = vpop.f32.mrf.mxu0
        %v1910 = vadd.f32 %v470, %v1909
        %v1911 = vpop.f32.mrf.mxu0
        %1912 = vmatprep.mubr.bf16.mxu0 0
        %1913 = vmatmul.mubr.bf16.gmra.mxu0 %v1058
        %v1914 = vpop.f32.mrf.mxu0
        %v1915 = vadd.f32 %v470, %v1914
        %v1916 = vpop.f32.mrf.mxu0
        %v1917 = vpop.f32.mrf.mxu0
        %v1918 = vadd.f32 %v470, %v1917
        %v1919 = vpop.f32.mrf.mxu0
        %1920 = vmatprep.mubr.bf16.mxu0 0
        %1921 = vmatmul.mubr.bf16.gmra.mxu0 %v1059
        %v1922 = vpop.f32.mrf.mxu0
        %v1923 = vadd.f32 %v470, %v1922
        %v1924 = vpop.f32.mrf.mxu0
        %v1925 = vpop.f32.mrf.mxu0
        %v1926 = vadd.f32 %v470, %v1925
        %v1927 = vpop.f32.mrf.mxu0
        %1928 = vmatprep.mubr.bf16.mxu0 0
        %1929 = vmatmul.mubr.bf16.gmra.mxu0 %v1060
        %v1930 = vpop.f32.mrf.mxu0
        %v1931 = vadd.f32 %v470, %v1930
        %v1932 = vpop.f32.mrf.mxu0
        %v1933 = vpop.f32.mrf.mxu0
        %v1934 = vadd.f32 %v470, %v1933
        %v1935 = vpop.f32.mrf.mxu0
        %1936 = vmatprep.mubr.bf16.mxu0 0
        %1937 = vmatmul.mubr.bf16.gmra.mxu0 %v1061
        %v1938 = vpop.f32.mrf.mxu0
        %v1939 = vadd.f32 %v470, %v1938
        %v1940 = vpop.f32.mrf.mxu0
        %v1941 = vpop.f32.mrf.mxu0
        %v1942 = vadd.f32 %v470, %v1941
        %v1943 = vpop.f32.mrf.mxu0
        %1944 = vmatprep.mubr.bf16.mxu0 0
        %1945 = vmatmul.mubr.bf16.gmra.mxu0 %v1062
        %v1946 = vpop.f32.mrf.mxu0
        %v1947 = vadd.f32 %v470, %v1946
        %v1948 = vpop.f32.mrf.mxu0
        %v1949 = vpop.f32.mrf.mxu0
        %v1950 = vadd.f32 %v470, %v1949
        %v1951 = vpop.f32.mrf.mxu0
        %1952 = vmatprep.mubr.bf16.mxu0 0
        %1953 = vmatmul.mubr.bf16.gmra.mxu0 %v1063
        %v1954 = vpop.f32.mrf.mxu0
        %v1955 = vadd.f32 %v470, %v1954
        %v1956 = vpop.f32.mrf.mxu0
        %v1957 = vpop.f32.mrf.mxu0
        %v1958 = vadd.f32 %v470, %v1957
        %v1959 = vpop.f32.mrf.mxu0
        %1960 = vmatprep.mubr.bf16.mxu0 0
        %1961 = vmatmul.mubr.bf16.gmra.mxu0 %v1064
        %v1962 = vpop.f32.mrf.mxu0
        %v1963 = vadd.f32 %v470, %v1962
        %v1964 = vpop.f32.mrf.mxu0
        %v1965 = vpop.f32.mrf.mxu0
        %v1966 = vadd.f32 %v470, %v1965
        %v1967 = vpop.f32.mrf.mxu0
        %1968 = vmatprep.mubr.bf16.mxu0 0
        %1969 = vmatmul.mubr.bf16.gmra.mxu0 %v1065
        %v1970 = vpop.f32.mrf.mxu0
        %v1971 = vadd.f32 %v470, %v1970
        %v1972 = vpop.f32.mrf.mxu0
        %v1973 = vpop.f32.mrf.mxu0
        %v1974 = vadd.f32 %v470, %v1973
        %v1975 = vpop.f32.mrf.mxu0
        %1976 = vmatprep.mubr.bf16.mxu0 0
        %1977 = vmatmul.mubr.bf16.gmra.mxu0 %v1066
        %v1978 = vpop.f32.mrf.mxu0
        %v1979 = vadd.f32 %v470, %v1978
        %v1980 = vpop.f32.mrf.mxu0
        %v1981 = vpop.f32.mrf.mxu0
        %v1982 = vadd.f32 %v470, %v1981
        %v1983 = vpop.f32.mrf.mxu0
        %1984 = vmatprep.mubr.bf16.mxu0 0
        %1985 = vmatmul.mubr.bf16.gmra.mxu0 %v1067
        %v1986 = vpop.f32.mrf.mxu0
        %v1987 = vadd.f32 %v470, %v1986
        %v1988 = vpop.f32.mrf.mxu0
        %v1989 = vpop.f32.mrf.mxu0
        %v1990 = vadd.f32 %v470, %v1989
        %v1991 = vpop.f32.mrf.mxu0
        %1992 = vmatprep.mubr.bf16.mxu0 0
        %1993 = vmatmul.mubr.bf16.gmra.mxu0 %v1068
        %v1994 = vpop.f32.mrf.mxu0
        %v1995 = vadd.f32 %v470, %v1994
        %v1996 = vpop.f32.mrf.mxu0
        %v1997 = vpop.f32.mrf.mxu0
        %v1998 = vadd.f32 %v470, %v1997
        %v1999 = vpop.f32.mrf.mxu0
        %2000 = vmatprep.mubr.bf16.mxu0 0
        %2001 = vmatmul.mubr.bf16.gmra.mxu0 %v1069
        %v2002 = vpop.f32.mrf.mxu0
        %v2003 = vadd.f32 %v470, %v2002
        %v2004 = vpop.f32.mrf.mxu0
        %v2005 = vpop.f32.mrf.mxu0
        %v2006 = vadd.f32 %v470, %v2005
        %v2007 = vpop.f32.mrf.mxu0
        %2008 = vmatprep.mubr.bf16.mxu0 0
        %2009 = vmatmul.mubr.bf16.gmra.mxu0 %v1070
        %v2010 = vpop.f32.mrf.mxu0
        %v2011 = vadd.f32 %v470, %v2010
        %v2012 = vpop.f32.mrf.mxu0
        %v2013 = vpop.f32.mrf.mxu0
        %v2014 = vadd.f32 %v470, %v2013
        %v2015 = vpop.f32.mrf.mxu0
        %2016 = vmatprep.mubr.bf16.mxu0 0
        %2017 = vmatmul.mubr.bf16.gmra.mxu0 %v1071
        %v2018 = vpop.f32.mrf.mxu0
        %v2019 = vadd.f32 %v470, %v2018
        %v2020 = vpop.f32.mrf.mxu0
        %v2021 = vpop.f32.mrf.mxu0
        %v2022 = vadd.f32 %v470, %v2021
        %v2023 = vpop.f32.mrf.mxu0
        %2024 = vmatprep.mubr.bf16.mxu0 0
        %2025 = vmatmul.mubr.bf16.gmra.mxu0 %v1072
        %v2026 = vpop.f32.mrf.mxu0
        %v2027 = vadd.f32 %v470, %v2026
        %v2028 = vpop.f32.mrf.mxu0
        %v2029 = vpop.f32.mrf.mxu0
        %v2030 = vadd.f32 %v470, %v2029
        %v2031 = vpop.f32.mrf.mxu0
        %2032 = vmatprep.mubr.bf16.mxu0 0
        %2033 = vmatmul.mubr.bf16.gmra.mxu0 %v1073
        %v2034 = vpop.f32.mrf.mxu0
        %v2035 = vadd.f32 %v470, %v2034
        %v2036 = vpop.f32.mrf.mxu0
        %v2037 = vpop.f32.mrf.mxu0
        %v2038 = vadd.f32 %v470, %v2037
        %v2039 = vpop.f32.mrf.mxu0
        %2040 = vmatprep.mubr.bf16.mxu0 0
        %2041 = vmatmul.mubr.bf16.gmra.mxu0 %v1074
        %v2042 = vpop.f32.mrf.mxu0
        %v2043 = vadd.f32 %v470, %v2042
        %v2044 = vpop.f32.mrf.mxu0
        %v2045 = vpop.f32.mrf.mxu0
        %v2046 = vadd.f32 %v470, %v2045
        %v2047 = vpop.f32.mrf.mxu0
        %2048 = vmatprep.mubr.bf16.mxu0 0
        %2049 = vmatmul.mubr.bf16.gmra.mxu0 %v1075
        %v2050 = vpop.f32.mrf.mxu0
        %v2051 = vadd.f32 %v470, %v2050
        %v2052 = vpop.f32.mrf.mxu0
        %v2053 = vpop.f32.mrf.mxu0
        %v2054 = vadd.f32 %v470, %v2053
        %v2055 = vpop.f32.mrf.mxu0
        %2056 = vmatprep.mubr.bf16.mxu0 0
        %2057 = vmatmul.mubr.bf16.gmra.mxu0 %v1076
        %v2058 = vpop.f32.mrf.mxu0
        %v2059 = vadd.f32 %v470, %v2058
        %v2060 = vpop.f32.mrf.mxu0
        %v2061 = vpop.f32.mrf.mxu0
        %v2062 = vadd.f32 %v470, %v2061
        %v2063 = vpop.f32.mrf.mxu0
        %2064 = vmatprep.mubr.bf16.mxu0 0
        %2065 = vmatmul.mubr.bf16.gmra.mxu0 %v1077
        %v2066 = vpop.f32.mrf.mxu0
        %v2067 = vadd.f32 %v470, %v2066
        %v2068 = vpop.f32.mrf.mxu0
        %v2069 = vpop.f32.mrf.mxu0
        %v2070 = vadd.f32 %v470, %v2069
        %v2071 = vpop.f32.mrf.mxu0
        %2072 = vmatprep.mubr.bf16.mxu0 0
        %2073 = vmatmul.mubr.bf16.gmra.mxu0 %v1078
        %v2074 = vpop.f32.mrf.mxu0
        %v2075 = vadd.f32 %v470, %v2074
        %v2076 = vpop.f32.mrf.mxu0
        %v2077 = vpop.f32.mrf.mxu0
        %v2078 = vadd.f32 %v470, %v2077
        %v2079 = vpop.f32.mrf.mxu0
        %2080 = vmatprep.mubr.bf16.mxu0 0
        %2081 = vmatmul.mubr.bf16.gmra.mxu0 %v1079
        %v2082 = vpop.f32.mrf.mxu0
        %v2083 = vadd.f32 %v470, %v2082
        %v2084 = vpop.f32.mrf.mxu0
        %v2085 = vpop.f32.mrf.mxu0
        %v2086 = vadd.f32 %v470, %v2085
        %v2087 = vpop.f32.mrf.mxu0
        %2088 = vmatprep.mubr.bf16.mxu0 0
        %2089 = vmatmul.mubr.bf16.gmra.mxu0 %v1080
        %v2090 = vpop.f32.mrf.mxu0
        %v2091 = vadd.f32 %v470, %v2090
        %v2092 = vpop.f32.mrf.mxu0
        %v2093 = vpop.f32.mrf.mxu0
        %v2094 = vadd.f32 %v470, %v2093
        %v2095 = vpop.f32.mrf.mxu0
        %2096 = vmatprep.mubr.bf16.mxu0 0
        %2097 = vmatmul.mubr.bf16.gmra.mxu0 %v1081
        %v2098 = vpop.f32.mrf.mxu0
        %v2099 = vadd.f32 %v470, %v2098
        %v2100 = vpop.f32.mrf.mxu0
        %v2101 = vpop.f32.mrf.mxu0
        %v2102 = vadd.f32 %v470, %v2101
        %v2103 = vpop.f32.mrf.mxu0
        %2104 = vmatprep.mubr.bf16.mxu0 0
        %2105 = vmatmul.mubr.bf16.gmra.mxu0 %v1082
        %v2106 = vpop.f32.mrf.mxu0
        %v2107 = vadd.f32 %v470, %v2106
        %v2108 = vpop.f32.mrf.mxu0
        %v2109 = vpop.f32.mrf.mxu0
        %v2110 = vadd.f32 %v470, %v2109
        %v2111 = vpop.f32.mrf.mxu0
        %2112 = vmatprep.mubr.bf16.mxu0 0
        %2113 = vmatmul.mubr.bf16.gmra.mxu0 %v1083
        %v2114 = vpop.f32.mrf.mxu0
        %v2115 = vadd.f32 %v470, %v2114
        %v2116 = vpop.f32.mrf.mxu0
        %v2117 = vpop.f32.mrf.mxu0
        %v2118 = vadd.f32 %v470, %v2117
        %v2119 = vpop.f32.mrf.mxu0
        %2120 = vmatprep.mubr.bf16.mxu0 0
        %2121 = vmatmul.mubr.bf16.gmra.mxu0 %v1084
        %v2122 = vpop.f32.mrf.mxu0
        %v2123 = vadd.f32 %v470, %v2122
        %v2124 = vpop.f32.mrf.mxu0
        %v2125 = vpop.f32.mrf.mxu0
        %v2126 = vadd.f32 %v470, %v2125
        %v2127 = vpop.f32.mrf.mxu0
        %2128 = vmatprep.mubr.bf16.mxu0 0
        %2129 = vmatmul.mubr.bf16.gmra.mxu0 %v1085
        %v2130 = vpop.f32.mrf.mxu0
        %v2131 = vadd.f32 %v470, %v2130
        %v2132 = vpop.f32.mrf.mxu0
        %v2133 = vpop.f32.mrf.mxu0
        %v2134 = vadd.f32 %v470, %v2133
        %v2135 = vpop.f32.mrf.mxu0
        %2136 = vmatprep.mubr.bf16.mxu0 0
        %2137 = vmatmul.mubr.bf16.gmra.mxu0 %v1086
        %v2138 = vpop.f32.mrf.mxu0
        %v2139 = vadd.f32 %v470, %v2138
        %v2140 = vpop.f32.mrf.mxu0
        %v2141 = vpop.f32.mrf.mxu0
        %v2142 = vadd.f32 %v470, %v2141
        %v2143 = vpop.f32.mrf.mxu0
        %2144 = vmatprep.mubr.bf16.mxu0 0
        %2145 = vmatmul.mubr.bf16.gmra.mxu0 %v1087
        %v2146 = vpop.f32.mrf.mxu0
        %v2147 = vadd.f32 %v470, %v2146
        %v2148 = vpop.f32.mrf.mxu0
        %v2149 = vpop.f32.mrf.mxu0
        %v2150 = vadd.f32 %v470, %v2149
        %v2151 = vpop.f32.mrf.mxu0
        %2152 = vmatprep.mubr.bf16.mxu0 0
        %2153 = vmatmul.mubr.bf16.gmra.mxu0 %v1088
        %v2154 = vpop.f32.mrf.mxu0
        %v2155 = vadd.f32 %v470, %v2154
        %v2156 = vpop.f32.mrf.mxu0
        %v2157 = vpop.f32.mrf.mxu0
        %v2158 = vadd.f32 %v470, %v2157
        %v2159 = vpop.f32.mrf.mxu0
        %2160 = vmatprep.mubr.bf16.mxu0 0
        %2161 = vmatmul.mubr.bf16.gmra.mxu0 %v1089
        %v2162 = vpop.f32.mrf.mxu0
        %v2163 = vadd.f32 %v470, %v2162
        %v2164 = vpop.f32.mrf.mxu0
        %v2165 = vpop.f32.mrf.mxu0
        %v2166 = vadd.f32 %v470, %v2165
        %v2167 = vpop.f32.mrf.mxu0
        %2168 = vmatprep.mubr.bf16.mxu0 0
        %2169 = vmatmul.mubr.bf16.gmra.mxu0 %v1090
        %v2170 = vpop.f32.mrf.mxu0
        %v2171 = vadd.f32 %v470, %v2170
        %v2172 = vpop.f32.mrf.mxu0
        %v2173 = vpop.f32.mrf.mxu0
        %v2174 = vadd.f32 %v470, %v2173
        %v2175 = vpop.f32.mrf.mxu0
        %2176 = vmatprep.mubr.bf16.mxu0 0
        %2177 = vmatmul.mubr.bf16.gmra.mxu0 %v1091
        %v2178 = vpop.f32.mrf.mxu0
        %v2179 = vadd.f32 %v470, %v2178
        %v2180 = vpop.f32.mrf.mxu0
        %v2181 = vpop.f32.mrf.mxu0
        %v2182 = vadd.f32 %v470, %v2181
        %v2183 = vpop.f32.mrf.mxu0
        %2184 = vmatprep.mubr.bf16.mxu0 0
        %2185 = vmatmul.mubr.bf16.gmra.mxu0 %v1092
        %v2186 = vpop.f32.mrf.mxu0
        %v2187 = vadd.f32 %v470, %v2186
        %v2188 = vpop.f32.mrf.mxu0
        %v2189 = vpop.f32.mrf.mxu0
        %v2190 = vadd.f32 %v470, %v2189
        %v2191 = vpop.f32.mrf.mxu0
        %2192 = vmatprep.mubr.bf16.mxu0 0
        %2193 = vmatmul.mubr.bf16.gmra.mxu0 %v1093
        %v2194 = vpop.f32.mrf.mxu0
        %v2195 = vadd.f32 %v470, %v2194
        %v2196 = vpop.f32.mrf.mxu0
        %v2197 = vpop.f32.mrf.mxu0
        %v2198 = vadd.f32 %v470, %v2197
        %v2199 = vpop.f32.mrf.mxu0
        %2200 = vmatprep.mubr.bf16.mxu0 0
        %2201 = vmatmul.mubr.bf16.gmra.mxu0 %v1094
        %v2202 = vpop.f32.mrf.mxu0
        %v2203 = vadd.f32 %v470, %v2202
        %v2204 = vpop.f32.mrf.mxu0
        %v2205 = vpop.f32.mrf.mxu0
        %v2206 = vadd.f32 %v470, %v2205
        %v2207 = vpop.f32.mrf.mxu0
        %2208 = vmatprep.mubr.bf16.mxu0 0
        %2209 = vmatmul.mubr.bf16.gmra.mxu0 %v1095
        %v2210 = vpop.f32.mrf.mxu0
        %v2211 = vadd.f32 %v470, %v2210
        %v2212 = vpop.f32.mrf.mxu0
        %v2213 = vpop.f32.mrf.mxu0
        %v2214 = vadd.f32 %v470, %v2213
        %v2215 = vpop.f32.mrf.mxu0
        %2216 = vmatprep.mubr.bf16.mxu0 0
        %2217 = vmatmul.mubr.bf16.gmra.mxu0 %v1096
        %v2218 = vpop.f32.mrf.mxu0
        %v2219 = vadd.f32 %v470, %v2218
        %v2220 = vpop.f32.mrf.mxu0
        %v2221 = vpop.f32.mrf.mxu0
        %v2222 = vadd.f32 %v470, %v2221
        %v2223 = vpop.f32.mrf.mxu0
        %2224 = vmatprep.mubr.bf16.mxu0 0
        %2225 = vmatmul.mubr.bf16.gmra.mxu0 %v1097
        %v2226 = vpop.f32.mrf.mxu0
        %v2227 = vadd.f32 %v470, %v2226
        %v2228 = vpop.f32.mrf.mxu0
        %v2229 = vpop.f32.mrf.mxu0
        %v2230 = vadd.f32 %v470, %v2229
        %v2231 = vpop.f32.mrf.mxu0
        %2232 = vmatprep.mubr.bf16.mxu0 0
        %2233 = vmatmul.mubr.bf16.gmra.mxu0 %v1098
        %v2234 = vpop.f32.mrf.mxu0
        %v2235 = vadd.f32 %v470, %v2234
        %v2236 = vpop.f32.mrf.mxu0
        %v2237 = vpop.f32.mrf.mxu0
        %v2238 = vadd.f32 %v470, %v2237
        %v2239 = vpop.f32.mrf.mxu0
        %2240 = vmatprep.mubr.bf16.mxu0 0
        %2241 = vmatmul.mubr.bf16.gmra.mxu0 %v1099
        %v2242 = vpop.f32.mrf.mxu0
        %v2243 = vadd.f32 %v470, %v2242
        %v2244 = vpop.f32.mrf.mxu0
        %v2245 = vpop.f32.mrf.mxu0
        %v2246 = vadd.f32 %v470, %v2245
        %v2247 = vpop.f32.mrf.mxu0
        %2248 = vmatprep.mubr.bf16.mxu0 0
        %2249 = vmatmul.mubr.bf16.gmra.mxu0 %v1100
        %v2250 = vpop.f32.mrf.mxu0
        %v2251 = vadd.f32 %v470, %v2250
        %v2252 = vpop.f32.mrf.mxu0
        %v2253 = vpop.f32.mrf.mxu0
        %v2254 = vadd.f32 %v470, %v2253
        %v2255 = vpop.f32.mrf.mxu0
        %2256 = vmatprep.mubr.bf16.mxu0 0
        %2257 = vmatmul.mubr.bf16.gmra.mxu0 %v1101
        %v2258 = vpop.f32.mrf.mxu0
        %v2259 = vadd.f32 %v470, %v2258
        %v2260 = vpop.f32.mrf.mxu0
        %v2261 = vpop.f32.mrf.mxu0
        %v2262 = vadd.f32 %v470, %v2261
        %v2263 = vpop.f32.mrf.mxu0
        %2264 = vmatprep.mubr.bf16.mxu0 0
        %2265 = vmatmul.mubr.bf16.gmra.mxu0 %v1102
        %v2266 = vpop.f32.mrf.mxu0
        %v2267 = vadd.f32 %v470, %v2266
        %v2268 = vpop.f32.mrf.mxu0
        %v2269 = vpop.f32.mrf.mxu0
        %v2270 = vadd.f32 %v470, %v2269
        %v2271 = vpop.f32.mrf.mxu0
        %2272 = vmatprep.mubr.bf16.mxu0 0
        %2273 = vmatmul.mubr.bf16.gmra.mxu0 %v1103
        %v2274 = vpop.f32.mrf.mxu0
        %v2275 = vadd.f32 %v470, %v2274
        %v2276 = vpop.f32.mrf.mxu0
        %v2277 = vpop.f32.mrf.mxu0
        %v2278 = vadd.f32 %v470, %v2277
        %v2279 = vpop.f32.mrf.mxu0
        %2280 = vmatprep.mubr.bf16.mxu0 0
        %2281 = vmatmul.mubr.bf16.gmra.mxu0 %v1104
        %v2282 = vpop.f32.mrf.mxu0
        %v2283 = vadd.f32 %v470, %v2282
        %v2284 = vpop.f32.mrf.mxu0
        %v2285 = vpop.f32.mrf.mxu0
        %v2286 = vadd.f32 %v470, %v2285
        %v2287 = vpop.f32.mrf.mxu0
        %2288 = vmatprep.mubr.bf16.mxu0 0
        %2289 = vmatmul.mubr.bf16.gmra.mxu0 %v1105
        %v2290 = vpop.f32.mrf.mxu0
        %v2291 = vadd.f32 %v470, %v2290
        %v2292 = vpop.f32.mrf.mxu0
        %v2293 = vpop.f32.mrf.mxu0
        %v2294 = vadd.f32 %v470, %v2293
        %v2295 = vpop.f32.mrf.mxu0
        %2296 = vmatprep.mubr.bf16.mxu0 0
        %2297 = vmatmul.mubr.bf16.gmra.mxu0 %v1106
        %v2298 = vpop.f32.mrf.mxu0
        %v2299 = vadd.f32 %v470, %v2298
        %v2300 = vpop.f32.mrf.mxu0
        %v2301 = vpop.f32.mrf.mxu0
        %v2302 = vadd.f32 %v470, %v2301
        %v2303 = vpop.f32.mrf.mxu0
        %2304 = vmatprep.mubr.bf16.mxu0 0
        %2305 = vmatmul.mubr.bf16.gmra.mxu0 %v1107
        %v2306 = vpop.f32.mrf.mxu0
        %v2307 = vadd.f32 %v470, %v2306
        %v2308 = vpop.f32.mrf.mxu0
        %v2309 = vpop.f32.mrf.mxu0
        %v2310 = vadd.f32 %v470, %v2309
        %v2311 = vpop.f32.mrf.mxu0
        %2312 = vmatprep.mubr.bf16.mxu0 0
        %2313 = vmatmul.mubr.bf16.gmra.mxu0 %v1108
        %v2314 = vpop.f32.mrf.mxu0
        %v2315 = vadd.f32 %v470, %v2314
        %v2316 = vpop.f32.mrf.mxu0
        %v2317 = vpop.f32.mrf.mxu0
        %v2318 = vadd.f32 %v470, %v2317
        %v2319 = vpop.f32.mrf.mxu0
        %2320 = vmatprep.mubr.bf16.mxu0 0
        %2321 = vmatmul.mubr.bf16.gmra.mxu0 %v1109
        %v2322 = vpop.f32.mrf.mxu0
        %v2323 = vadd.f32 %v470, %v2322
        %v2324 = vpop.f32.mrf.mxu0
        %v2325 = vpop.f32.mrf.mxu0
        %v2326 = vadd.f32 %v470, %v2325
        %v2327 = vpop.f32.mrf.mxu0
        %2328 = vmatprep.mubr.bf16.mxu0 0
        %2329 = vmatmul.mubr.bf16.gmra.mxu0 %v1110
        %v2330 = vpop.f32.mrf.mxu0
        %v2331 = vadd.f32 %v470, %v2330
        %v2332 = vpop.f32.mrf.mxu0
        %v2333 = vpop.f32.mrf.mxu0
        %v2334 = vadd.f32 %v470, %v2333
        %v2335 = vpop.f32.mrf.mxu0
        %2336 = vmatprep.mubr.bf16.mxu0 0
        %2337 = vmatmul.mubr.bf16.gmra.mxu0 %v1111
        %v2338 = vpop.f32.mrf.mxu0
        %v2339 = vadd.f32 %v470, %v2338
        %v2340 = vpop.f32.mrf.mxu0
        %v2341 = vpop.f32.mrf.mxu0
        %v2342 = vadd.f32 %v470, %v2341
        %v2343 = vpop.f32.mrf.mxu0
        %2344 = vdwg.mxu0
        %v2345 = vmax.f32 %v1323, 0.0
        %v2346 = vmax.f32 %v1326, 0.0
        %v2347 = vmax.f32 %v1331, 0.0
        %v2348 = vmax.f32 %v1334, 0.0
        %v2349 = vmax.f32 %v1339, 0.0
        %v2350 = vmax.f32 %v1342, 0.0
        %v2351 = vmax.f32 %v1347, 0.0
        %v2352 = vmax.f32 %v1350, 0.0
        %v2353 = vmax.f32 %v1355, 0.0
        %v2354 = vmax.f32 %v1358, 0.0
        %v2355 = vmax.f32 %v1363, 0.0
        %v2356 = vmax.f32 %v1366, 0.0
        %v2357 = vmax.f32 %v1371, 0.0
        %v2358 = vmax.f32 %v1374, 0.0
        %v2359 = vmax.f32 %v1379, 0.0
        %v2360 = vmax.f32 %v1382, 0.0
        %v2361 = vmax.f32 %v1387, 0.0
        %v2362 = vmax.f32 %v1390, 0.0
        %v2363 = vmax.f32 %v1395, 0.0
        %v2364 = vmax.f32 %v1398, 0.0
        %v2365 = vmax.f32 %v1403, 0.0
        %v2366 = vmax.f32 %v1406, 0.0
        %v2367 = vmax.f32 %v1411, 0.0
        %v2368 = vmax.f32 %v1414, 0.0
        %v2369 = vmax.f32 %v1419, 0.0
        %v2370 = vmax.f32 %v1422, 0.0
        %v2371 = vmax.f32 %v1427, 0.0
        %v2372 = vmax.f32 %v1430, 0.0
        %v2373 = vmax.f32 %v1435, 0.0
        %v2374 = vmax.f32 %v1438, 0.0
        %v2375 = vmax.f32 %v1443, 0.0
        %v2376 = vmax.f32 %v1446, 0.0
        %v2377 = vmax.f32 %v1451, 0.0
        %v2378 = vmax.f32 %v1454, 0.0
        %v2379 = vmax.f32 %v1459, 0.0
        %v2380 = vmax.f32 %v1462, 0.0
        %v2381 = vmax.f32 %v1467, 0.0
        %v2382 = vmax.f32 %v1470, 0.0
        %v2383 = vmax.f32 %v1475, 0.0
        %v2384 = vmax.f32 %v1478, 0.0
        %v2385 = vmax.f32 %v1483, 0.0
        %v2386 = vmax.f32 %v1486, 0.0
        %v2387 = vmax.f32 %v1491, 0.0
        %v2388 = vmax.f32 %v1494, 0.0
        %v2389 = vmax.f32 %v1499, 0.0
        %v2390 = vmax.f32 %v1502, 0.0
        %v2391 = vmax.f32 %v1507, 0.0
        %v2392 = vmax.f32 %v1510, 0.0
        %v2393 = vmax.f32 %v1515, 0.0
        %v2394 = vmax.f32 %v1518, 0.0
        %v2395 = vmax.f32 %v1523, 0.0
        %v2396 = vmax.f32 %v1526, 0.0
        %v2397 = vmax.f32 %v1531, 0.0
        %v2398 = vmax.f32 %v1534, 0.0
        %v2399 = vmax.f32 %v1539, 0.0
        %v2400 = vmax.f32 %v1542, 0.0
        %v2401 = vmax.f32 %v1547, 0.0
        %v2402 = vmax.f32 %v1550, 0.0
        %v2403 = vmax.f32 %v1555, 0.0
        %v2404 = vmax.f32 %v1558, 0.0
        %v2405 = vmax.f32 %v1563, 0.0
        %v2406 = vmax.f32 %v1566, 0.0
        %v2407 = vmax.f32 %v1571, 0.0
        %v2408 = vmax.f32 %v1574, 0.0
        %v2409 = vmax.f32 %v1579, 0.0
        %v2410 = vmax.f32 %v1582, 0.0
        %v2411 = vmax.f32 %v1587, 0.0
        %v2412 = vmax.f32 %v1590, 0.0
        %v2413 = vmax.f32 %v1595, 0.0
        %v2414 = vmax.f32 %v1598, 0.0
        %v2415 = vmax.f32 %v1603, 0.0
        %v2416 = vmax.f32 %v1606, 0.0
        %v2417 = vmax.f32 %v1611, 0.0
        %v2418 = vmax.f32 %v1614, 0.0
        %v2419 = vmax.f32 %v1619, 0.0
        %v2420 = vmax.f32 %v1622, 0.0
        %v2421 = vmax.f32 %v1627, 0.0
        %v2422 = vmax.f32 %v1630, 0.0
        %v2423 = vmax.f32 %v1635, 0.0
        %v2424 = vmax.f32 %v1638, 0.0
        %v2425 = vmax.f32 %v1643, 0.0
        %v2426 = vmax.f32 %v1646, 0.0
        %v2427 = vmax.f32 %v1651, 0.0
        %v2428 = vmax.f32 %v1654, 0.0
        %v2429 = vmax.f32 %v1659, 0.0
        %v2430 = vmax.f32 %v1662, 0.0
        %v2431 = vmax.f32 %v1667, 0.0
        %v2432 = vmax.f32 %v1670, 0.0
        %v2433 = vmax.f32 %v1675, 0.0
        %v2434 = vmax.f32 %v1678, 0.0
        %v2435 = vmax.f32 %v1683, 0.0
        %v2436 = vmax.f32 %v1686, 0.0
        %v2437 = vmax.f32 %v1691, 0.0
        %v2438 = vmax.f32 %v1694, 0.0
        %v2439 = vmax.f32 %v1699, 0.0
        %v2440 = vmax.f32 %v1702, 0.0
        %v2441 = vmax.f32 %v1707, 0.0
        %v2442 = vmax.f32 %v1710, 0.0
        %v2443 = vmax.f32 %v1715, 0.0
        %v2444 = vmax.f32 %v1718, 0.0
        %v2445 = vmax.f32 %v1723, 0.0
        %v2446 = vmax.f32 %v1726, 0.0
        %v2447 = vmax.f32 %v1731, 0.0
        %v2448 = vmax.f32 %v1734, 0.0
        %v2449 = vmax.f32 %v1739, 0.0
        %v2450 = vmax.f32 %v1742, 0.0
        %v2451 = vmax.f32 %v1747, 0.0
        %v2452 = vmax.f32 %v1750, 0.0
        %v2453 = vmax.f32 %v1755, 0.0
        %v2454 = vmax.f32 %v1758, 0.0
        %v2455 = vmax.f32 %v1763, 0.0
        %v2456 = vmax.f32 %v1766, 0.0
        %v2457 = vmax.f32 %v1771, 0.0
        %v2458 = vmax.f32 %v1774, 0.0
        %v2459 = vmax.f32 %v1779, 0.0
        %v2460 = vmax.f32 %v1782, 0.0
        %v2461 = vmax.f32 %v1787, 0.0
        %v2462 = vmax.f32 %v1790, 0.0
        %v2463 = vmax.f32 %v1795, 0.0
        %v2464 = vmax.f32 %v1798, 0.0
        %v2465 = vmax.f32 %v1803, 0.0
        %v2466 = vmax.f32 %v1806, 0.0
        %v2467 = vmax.f32 %v1811, 0.0
        %v2468 = vmax.f32 %v1814, 0.0
        %v2469 = vmax.f32 %v1819, 0.0
        %v2470 = vmax.f32 %v1822, 0.0
        %v2471 = vmax.f32 %v1827, 0.0
        %v2472 = vmax.f32 %v1830, 0.0
        %v2473 = vmax.f32 %v1835, 0.0
        %v2474 = vmax.f32 %v1838, 0.0
        %v2475 = vmax.f32 %v1843, 0.0
        %v2476 = vmax.f32 %v1846, 0.0
        %v2477 = vmax.f32 %v1851, 0.0
        %v2478 = vmax.f32 %v1854, 0.0
        %v2479 = vmax.f32 %v1859, 0.0
        %v2480 = vmax.f32 %v1862, 0.0
        %v2481 = vmax.f32 %v1867, 0.0
        %v2482 = vmax.f32 %v1870, 0.0
        %v2483 = vmax.f32 %v1875, 0.0
        %v2484 = vmax.f32 %v1878, 0.0
        %v2485 = vmax.f32 %v1883, 0.0
        %v2486 = vmax.f32 %v1886, 0.0
        %v2487 = vmax.f32 %v1891, 0.0
        %v2488 = vmax.f32 %v1894, 0.0
        %v2489 = vmax.f32 %v1899, 0.0
        %v2490 = vmax.f32 %v1902, 0.0
        %v2491 = vmax.f32 %v1907, 0.0
        %v2492 = vmax.f32 %v1910, 0.0
        %v2493 = vmax.f32 %v1915, 0.0
        %v2494 = vmax.f32 %v1918, 0.0
        %v2495 = vmax.f32 %v1923, 0.0
        %v2496 = vmax.f32 %v1926, 0.0
        %v2497 = vmax.f32 %v1931, 0.0
        %v2498 = vmax.f32 %v1934, 0.0
        %v2499 = vmax.f32 %v1939, 0.0
        %v2500 = vmax.f32 %v1942, 0.0
        %v2501 = vmax.f32 %v1947, 0.0
        %v2502 = vmax.f32 %v1950, 0.0
        %v2503 = vmax.f32 %v1955, 0.0
        %v2504 = vmax.f32 %v1958, 0.0
        %v2505 = vmax.f32 %v1963, 0.0
        %v2506 = vmax.f32 %v1966, 0.0
        %v2507 = vmax.f32 %v1971, 0.0
        %v2508 = vmax.f32 %v1974, 0.0
        %v2509 = vmax.f32 %v1979, 0.0
        %v2510 = vmax.f32 %v1982, 0.0
        %v2511 = vmax.f32 %v1987, 0.0
        %v2512 = vmax.f32 %v1990, 0.0
        %v2513 = vmax.f32 %v1995, 0.0
        %v2514 = vmax.f32 %v1998, 0.0
        %v2515 = vmax.f32 %v2003, 0.0
        %v2516 = vmax.f32 %v2006, 0.0
        %v2517 = vmax.f32 %v2011, 0.0
        %v2518 = vmax.f32 %v2014, 0.0
        %v2519 = vmax.f32 %v2019, 0.0
        %v2520 = vmax.f32 %v2022, 0.0
        %v2521 = vmax.f32 %v2027, 0.0
        %v2522 = vmax.f32 %v2030, 0.0
        %v2523 = vmax.f32 %v2035, 0.0
        %v2524 = vmax.f32 %v2038, 0.0
        %v2525 = vmax.f32 %v2043, 0.0
        %v2526 = vmax.f32 %v2046, 0.0
        %v2527 = vmax.f32 %v2051, 0.0
        %v2528 = vmax.f32 %v2054, 0.0
        %v2529 = vmax.f32 %v2059, 0.0
        %v2530 = vmax.f32 %v2062, 0.0
        %v2531 = vmax.f32 %v2067, 0.0
        %v2532 = vmax.f32 %v2070, 0.0
        %v2533 = vmax.f32 %v2075, 0.0
        %v2534 = vmax.f32 %v2078, 0.0
        %v2535 = vmax.f32 %v2083, 0.0
        %v2536 = vmax.f32 %v2086, 0.0
        %v2537 = vmax.f32 %v2091, 0.0
        %v2538 = vmax.f32 %v2094, 0.0
        %v2539 = vmax.f32 %v2099, 0.0
        %v2540 = vmax.f32 %v2102, 0.0
        %v2541 = vmax.f32 %v2107, 0.0
        %v2542 = vmax.f32 %v2110, 0.0
        %v2543 = vmax.f32 %v2115, 0.0
        %v2544 = vmax.f32 %v2118, 0.0
        %v2545 = vmax.f32 %v2123, 0.0
        %v2546 = vmax.f32 %v2126, 0.0
        %v2547 = vmax.f32 %v2131, 0.0
        %v2548 = vmax.f32 %v2134, 0.0
        %v2549 = vmax.f32 %v2139, 0.0
        %v2550 = vmax.f32 %v2142, 0.0
        %v2551 = vmax.f32 %v2147, 0.0
        %v2552 = vmax.f32 %v2150, 0.0
        %v2553 = vmax.f32 %v2155, 0.0
        %v2554 = vmax.f32 %v2158, 0.0
        %v2555 = vmax.f32 %v2163, 0.0
        %v2556 = vmax.f32 %v2166, 0.0
        %v2557 = vmax.f32 %v2171, 0.0
        %v2558 = vmax.f32 %v2174, 0.0
        %v2559 = vmax.f32 %v2179, 0.0
        %v2560 = vmax.f32 %v2182, 0.0
        %v2561 = vmax.f32 %v2187, 0.0
        %v2562 = vmax.f32 %v2190, 0.0
        %v2563 = vmax.f32 %v2195, 0.0
        %v2564 = vmax.f32 %v2198, 0.0
        %v2565 = vmax.f32 %v2203, 0.0
        %v2566 = vmax.f32 %v2206, 0.0
        %v2567 = vmax.f32 %v2211, 0.0
        %v2568 = vmax.f32 %v2214, 0.0
        %v2569 = vmax.f32 %v2219, 0.0
        %v2570 = vmax.f32 %v2222, 0.0
        %v2571 = vmax.f32 %v2227, 0.0
        %v2572 = vmax.f32 %v2230, 0.0
        %v2573 = vmax.f32 %v2235, 0.0
        %v2574 = vmax.f32 %v2238, 0.0
        %v2575 = vmax.f32 %v2243, 0.0
        %v2576 = vmax.f32 %v2246, 0.0
        %v2577 = vmax.f32 %v2251, 0.0
        %v2578 = vmax.f32 %v2254, 0.0
        %v2579 = vmax.f32 %v2259, 0.0
        %v2580 = vmax.f32 %v2262, 0.0
        %v2581 = vmax.f32 %v2267, 0.0
        %v2582 = vmax.f32 %v2270, 0.0
        %v2583 = vmax.f32 %v2275, 0.0
        %v2584 = vmax.f32 %v2278, 0.0
        %v2585 = vmax.f32 %v2283, 0.0
        %v2586 = vmax.f32 %v2286, 0.0
        %v2587 = vmax.f32 %v2291, 0.0
        %v2588 = vmax.f32 %v2294, 0.0
        %v2589 = vmax.f32 %v2299, 0.0
        %v2590 = vmax.f32 %v2302, 0.0
        %v2591 = vmax.f32 %v2307, 0.0
        %v2592 = vmax.f32 %v2310, 0.0
        %v2593 = vmax.f32 %v2315, 0.0
        %v2594 = vmax.f32 %v2318, 0.0
        %v2595 = vmax.f32 %v2323, 0.0
        %v2596 = vmax.f32 %v2326, 0.0
        %v2597 = vmax.f32 %v2331, 0.0
        %v2598 = vmax.f32 %v2334, 0.0
        %v2599 = vmax.f32 %v2339, 0.0
        %v2600 = vmax.f32 %v2342, 0.0
        %v2601 = vpack.c.bf16 %v2346, %v2345
        %v2602 = vpack.c.bf16 %v2348, %v2347
        %v2603 = vpack.c.bf16 %v2350, %v2349
        %v2604 = vpack.c.bf16 %v2352, %v2351
        %v2605 = vpack.c.bf16 %v2354, %v2353
        %v2606 = vpack.c.bf16 %v2356, %v2355
        %v2607 = vpack.c.bf16 %v2358, %v2357
        %v2608 = vpack.c.bf16 %v2360, %v2359
        %v2609 = vpack.c.bf16 %v2362, %v2361
        %v2610 = vpack.c.bf16 %v2364, %v2363
        %v2611 = vpack.c.bf16 %v2366, %v2365
        %v2612 = vpack.c.bf16 %v2368, %v2367
        %v2613 = vpack.c.bf16 %v2370, %v2369
        %v2614 = vpack.c.bf16 %v2372, %v2371
        %v2615 = vpack.c.bf16 %v2374, %v2373
        %v2616 = vpack.c.bf16 %v2376, %v2375
        %v2617 = vpack.c.bf16 %v2378, %v2377
        %v2618 = vpack.c.bf16 %v2380, %v2379
        %v2619 = vpack.c.bf16 %v2382, %v2381
        %v2620 = vpack.c.bf16 %v2384, %v2383
        %v2621 = vpack.c.bf16 %v2386, %v2385
        %v2622 = vpack.c.bf16 %v2388, %v2387
        %v2623 = vpack.c.bf16 %v2390, %v2389
        %v2624 = vpack.c.bf16 %v2392, %v2391
        %v2625 = vpack.c.bf16 %v2394, %v2393
        %v2626 = vpack.c.bf16 %v2396, %v2395
        %v2627 = vpack.c.bf16 %v2398, %v2397
        %v2628 = vpack.c.bf16 %v2400, %v2399
        %v2629 = vpack.c.bf16 %v2402, %v2401
        %v2630 = vpack.c.bf16 %v2404, %v2403
        %v2631 = vpack.c.bf16 %v2406, %v2405
        %v2632 = vpack.c.bf16 %v2408, %v2407
        %v2633 = vpack.c.bf16 %v2410, %v2409
        %v2634 = vpack.c.bf16 %v2412, %v2411
        %v2635 = vpack.c.bf16 %v2414, %v2413
        %v2636 = vpack.c.bf16 %v2416, %v2415
        %v2637 = vpack.c.bf16 %v2418, %v2417
        %v2638 = vpack.c.bf16 %v2420, %v2419
        %v2639 = vpack.c.bf16 %v2422, %v2421
        %v2640 = vpack.c.bf16 %v2424, %v2423
        %v2641 = vpack.c.bf16 %v2426, %v2425
        %v2642 = vpack.c.bf16 %v2428, %v2427
        %v2643 = vpack.c.bf16 %v2430, %v2429
        %v2644 = vpack.c.bf16 %v2432, %v2431
        %v2645 = vpack.c.bf16 %v2434, %v2433
        %v2646 = vpack.c.bf16 %v2436, %v2435
        %v2647 = vpack.c.bf16 %v2438, %v2437
        %v2648 = vpack.c.bf16 %v2440, %v2439
        %v2649 = vpack.c.bf16 %v2442, %v2441
        %v2650 = vpack.c.bf16 %v2444, %v2443
        %v2651 = vpack.c.bf16 %v2446, %v2445
        %v2652 = vpack.c.bf16 %v2448, %v2447
        %v2653 = vpack.c.bf16 %v2450, %v2449
        %v2654 = vpack.c.bf16 %v2452, %v2451
        %v2655 = vpack.c.bf16 %v2454, %v2453
        %v2656 = vpack.c.bf16 %v2456, %v2455
        %v2657 = vpack.c.bf16 %v2458, %v2457
        %v2658 = vpack.c.bf16 %v2460, %v2459
        %v2659 = vpack.c.bf16 %v2462, %v2461
        %v2660 = vpack.c.bf16 %v2464, %v2463
        %v2661 = vpack.c.bf16 %v2466, %v2465
        %v2662 = vpack.c.bf16 %v2468, %v2467
        %v2663 = vpack.c.bf16 %v2470, %v2469
        %v2664 = vpack.c.bf16 %v2472, %v2471
        %v2665 = vpack.c.bf16 %v2474, %v2473
        %v2666 = vpack.c.bf16 %v2476, %v2475
        %v2667 = vpack.c.bf16 %v2478, %v2477
        %v2668 = vpack.c.bf16 %v2480, %v2479
        %v2669 = vpack.c.bf16 %v2482, %v2481
        %v2670 = vpack.c.bf16 %v2484, %v2483
        %v2671 = vpack.c.bf16 %v2486, %v2485
        %v2672 = vpack.c.bf16 %v2488, %v2487
        %v2673 = vpack.c.bf16 %v2490, %v2489
        %v2674 = vpack.c.bf16 %v2492, %v2491
        %v2675 = vpack.c.bf16 %v2494, %v2493
        %v2676 = vpack.c.bf16 %v2496, %v2495
        %v2677 = vpack.c.bf16 %v2498, %v2497
        %v2678 = vpack.c.bf16 %v2500, %v2499
        %v2679 = vpack.c.bf16 %v2502, %v2501
        %v2680 = vpack.c.bf16 %v2504, %v2503
        %v2681 = vpack.c.bf16 %v2506, %v2505
        %v2682 = vpack.c.bf16 %v2508, %v2507
        %v2683 = vpack.c.bf16 %v2510, %v2509
        %v2684 = vpack.c.bf16 %v2512, %v2511
        %v2685 = vpack.c.bf16 %v2514, %v2513
        %v2686 = vpack.c.bf16 %v2516, %v2515
        %v2687 = vpack.c.bf16 %v2518, %v2517
        %v2688 = vpack.c.bf16 %v2520, %v2519
        %v2689 = vpack.c.bf16 %v2522, %v2521
        %v2690 = vpack.c.bf16 %v2524, %v2523
        %v2691 = vpack.c.bf16 %v2526, %v2525
        %v2692 = vpack.c.bf16 %v2528, %v2527
        %v2693 = vpack.c.bf16 %v2530, %v2529
        %v2694 = vpack.c.bf16 %v2532, %v2531
        %v2695 = vpack.c.bf16 %v2534, %v2533
        %v2696 = vpack.c.bf16 %v2536, %v2535
        %v2697 = vpack.c.bf16 %v2538, %v2537
        %v2698 = vpack.c.bf16 %v2540, %v2539
        %v2699 = vpack.c.bf16 %v2542, %v2541
        %v2700 = vpack.c.bf16 %v2544, %v2543
        %v2701 = vpack.c.bf16 %v2546, %v2545
        %v2702 = vpack.c.bf16 %v2548, %v2547
        %v2703 = vpack.c.bf16 %v2550, %v2549
        %v2704 = vpack.c.bf16 %v2552, %v2551
        %v2705 = vpack.c.bf16 %v2554, %v2553
        %v2706 = vpack.c.bf16 %v2556, %v2555
        %v2707 = vpack.c.bf16 %v2558, %v2557
        %v2708 = vpack.c.bf16 %v2560, %v2559
        %v2709 = vpack.c.bf16 %v2562, %v2561
        %v2710 = vpack.c.bf16 %v2564, %v2563
        %v2711 = vpack.c.bf16 %v2566, %v2565
        %v2712 = vpack.c.bf16 %v2568, %v2567
        %v2713 = vpack.c.bf16 %v2570, %v2569
        %v2714 = vpack.c.bf16 %v2572, %v2571
        %v2715 = vpack.c.bf16 %v2574, %v2573
        %v2716 = vpack.c.bf16 %v2576, %v2575
        %v2717 = vpack.c.bf16 %v2578, %v2577
        %v2718 = vpack.c.bf16 %v2580, %v2579
        %v2719 = vpack.c.bf16 %v2582, %v2581
        %v2720 = vpack.c.bf16 %v2584, %v2583
        %v2721 = vpack.c.bf16 %v2586, %v2585
        %v2722 = vpack.c.bf16 %v2588, %v2587
        %v2723 = vpack.c.bf16 %v2590, %v2589
        %v2724 = vpack.c.bf16 %v2592, %v2591
        %v2725 = vpack.c.bf16 %v2594, %v2593
        %v2726 = vpack.c.bf16 %v2596, %v2595
        %v2727 = vpack.c.bf16 %v2598, %v2597
        %v2728 = vpack.c.bf16 %v2600, %v2599
        %v2857 = vunpack.c.l.b16 %v2601
        %v2858 = vunpack.c.h.b16 %v2601
        %v2859 = vunpack.c.l.b16 %v2602
        %v2860 = vunpack.c.h.b16 %v2602
        %v2861 = vunpack.c.l.b16 %v2603
        %v2862 = vunpack.c.h.b16 %v2603
        %v2863 = vunpack.c.l.b16 %v2604
        %v2864 = vunpack.c.h.b16 %v2604
        %v2865 = vunpack.c.l.b16 %v2605
        %v2866 = vunpack.c.h.b16 %v2605
        %v2867 = vunpack.c.l.b16 %v2606
        %v2868 = vunpack.c.h.b16 %v2606
        %v2869 = vunpack.c.l.b16 %v2607
        %v2870 = vunpack.c.h.b16 %v2607
        %v2871 = vunpack.c.l.b16 %v2608
        %v2872 = vunpack.c.h.b16 %v2608
        %v2873 = vunpack.c.l.b16 %v2609
        %v2874 = vunpack.c.h.b16 %v2609
        %v2875 = vunpack.c.l.b16 %v2610
        %v2876 = vunpack.c.h.b16 %v2610
        %v2877 = vunpack.c.l.b16 %v2611
        %v2878 = vunpack.c.h.b16 %v2611
        %v2879 = vunpack.c.l.b16 %v2612
        %v2880 = vunpack.c.h.b16 %v2612
        %v2881 = vunpack.c.l.b16 %v2613
        %v2882 = vunpack.c.h.b16 %v2613
        %v2883 = vunpack.c.l.b16 %v2614
        %v2884 = vunpack.c.h.b16 %v2614
        %v2885 = vunpack.c.l.b16 %v2615
        %v2886 = vunpack.c.h.b16 %v2615
        %v2887 = vunpack.c.l.b16 %v2616
        %v2888 = vunpack.c.h.b16 %v2616
        %v2889 = vunpack.c.l.b16 %v2617
        %v2890 = vunpack.c.h.b16 %v2617
        %v2891 = vunpack.c.l.b16 %v2618
        %v2892 = vunpack.c.h.b16 %v2618
        %v2893 = vunpack.c.l.b16 %v2619
        %v2894 = vunpack.c.h.b16 %v2619
        %v2895 = vunpack.c.l.b16 %v2620
        %v2896 = vunpack.c.h.b16 %v2620
        %v2897 = vunpack.c.l.b16 %v2621
        %v2898 = vunpack.c.h.b16 %v2621
        %v2899 = vunpack.c.l.b16 %v2622
        %v2900 = vunpack.c.h.b16 %v2622
        %v2901 = vunpack.c.l.b16 %v2623
        %v2902 = vunpack.c.h.b16 %v2623
        %v2903 = vunpack.c.l.b16 %v2624
        %v2904 = vunpack.c.h.b16 %v2624
        %v2905 = vunpack.c.l.b16 %v2625
        %v2906 = vunpack.c.h.b16 %v2625
        %v2907 = vunpack.c.l.b16 %v2626
        %v2908 = vunpack.c.h.b16 %v2626
        %v2909 = vunpack.c.l.b16 %v2627
        %v2910 = vunpack.c.h.b16 %v2627
        %v2911 = vunpack.c.l.b16 %v2628
        %v2912 = vunpack.c.h.b16 %v2628
        %v2913 = vunpack.c.l.b16 %v2629
        %v2914 = vunpack.c.h.b16 %v2629
        %v2915 = vunpack.c.l.b16 %v2630
        %v2916 = vunpack.c.h.b16 %v2630
        %v2917 = vunpack.c.l.b16 %v2631
        %v2918 = vunpack.c.h.b16 %v2631
        %v2919 = vunpack.c.l.b16 %v2632
        %v2920 = vunpack.c.h.b16 %v2632
        %v2921 = vunpack.c.l.b16 %v2633
        %v2922 = vunpack.c.h.b16 %v2633
        %v2923 = vunpack.c.l.b16 %v2634
        %v2924 = vunpack.c.h.b16 %v2634
        %v2925 = vunpack.c.l.b16 %v2635
        %v2926 = vunpack.c.h.b16 %v2635
        %v2927 = vunpack.c.l.b16 %v2636
        %v2928 = vunpack.c.h.b16 %v2636
        %v2929 = vunpack.c.l.b16 %v2637
        %v2930 = vunpack.c.h.b16 %v2637
        %v2931 = vunpack.c.l.b16 %v2638
        %v2932 = vunpack.c.h.b16 %v2638
        %v2933 = vunpack.c.l.b16 %v2639
        %v2934 = vunpack.c.h.b16 %v2639
        %v2935 = vunpack.c.l.b16 %v2640
        %v2936 = vunpack.c.h.b16 %v2640
        %v2937 = vunpack.c.l.b16 %v2641
        %v2938 = vunpack.c.h.b16 %v2641
        %v2939 = vunpack.c.l.b16 %v2642
        %v2940 = vunpack.c.h.b16 %v2642
        %v2941 = vunpack.c.l.b16 %v2643
        %v2942 = vunpack.c.h.b16 %v2643
        %v2943 = vunpack.c.l.b16 %v2644
        %v2944 = vunpack.c.h.b16 %v2644
        %v2945 = vunpack.c.l.b16 %v2645
        %v2946 = vunpack.c.h.b16 %v2645
        %v2947 = vunpack.c.l.b16 %v2646
        %v2948 = vunpack.c.h.b16 %v2646
        %v2949 = vunpack.c.l.b16 %v2647
        %v2950 = vunpack.c.h.b16 %v2647
        %v2951 = vunpack.c.l.b16 %v2648
        %v2952 = vunpack.c.h.b16 %v2648
        %v2953 = vunpack.c.l.b16 %v2649
        %v2954 = vunpack.c.h.b16 %v2649
        %v2955 = vunpack.c.l.b16 %v2650
        %v2956 = vunpack.c.h.b16 %v2650
        %v2957 = vunpack.c.l.b16 %v2651
        %v2958 = vunpack.c.h.b16 %v2651
        %v2959 = vunpack.c.l.b16 %v2652
        %v2960 = vunpack.c.h.b16 %v2652
        %v2961 = vunpack.c.l.b16 %v2653
        %v2962 = vunpack.c.h.b16 %v2653
        %v2963 = vunpack.c.l.b16 %v2654
        %v2964 = vunpack.c.h.b16 %v2654
        %v2965 = vunpack.c.l.b16 %v2655
        %v2966 = vunpack.c.h.b16 %v2655
        %v2967 = vunpack.c.l.b16 %v2656
        %v2968 = vunpack.c.h.b16 %v2656
        %v2969 = vunpack.c.l.b16 %v2657
        %v2970 = vunpack.c.h.b16 %v2657
        %v2971 = vunpack.c.l.b16 %v2658
        %v2972 = vunpack.c.h.b16 %v2658
        %v2973 = vunpack.c.l.b16 %v2659
        %v2974 = vunpack.c.h.b16 %v2659
        %v2975 = vunpack.c.l.b16 %v2660
        %v2976 = vunpack.c.h.b16 %v2660
        %v2977 = vunpack.c.l.b16 %v2661
        %v2978 = vunpack.c.h.b16 %v2661
        %v2979 = vunpack.c.l.b16 %v2662
        %v2980 = vunpack.c.h.b16 %v2662
        %v2981 = vunpack.c.l.b16 %v2663
        %v2982 = vunpack.c.h.b16 %v2663
        %v2983 = vunpack.c.l.b16 %v2664
        %v2984 = vunpack.c.h.b16 %v2664
        %v2985 = vunpack.c.l.b16 %v2665
        %v2986 = vunpack.c.h.b16 %v2665
        %v2987 = vunpack.c.l.b16 %v2666
        %v2988 = vunpack.c.h.b16 %v2666
        %v2989 = vunpack.c.l.b16 %v2667
        %v2990 = vunpack.c.h.b16 %v2667
        %v2991 = vunpack.c.l.b16 %v2668
        %v2992 = vunpack.c.h.b16 %v2668
        %v2993 = vunpack.c.l.b16 %v2669
        %v2994 = vunpack.c.h.b16 %v2669
        %v2995 = vunpack.c.l.b16 %v2670
        %v2996 = vunpack.c.h.b16 %v2670
        %v2997 = vunpack.c.l.b16 %v2671
        %v2998 = vunpack.c.h.b16 %v2671
        %v2999 = vunpack.c.l.b16 %v2672
        %v3000 = vunpack.c.h.b16 %v2672
        %v3001 = vunpack.c.l.b16 %v2673
        %v3002 = vunpack.c.h.b16 %v2673
        %v3003 = vunpack.c.l.b16 %v2674
        %v3004 = vunpack.c.h.b16 %v2674
        %v3005 = vunpack.c.l.b16 %v2675
        %v3006 = vunpack.c.h.b16 %v2675
        %v3007 = vunpack.c.l.b16 %v2676
        %v3008 = vunpack.c.h.b16 %v2676
        %v3009 = vunpack.c.l.b16 %v2677
        %v3010 = vunpack.c.h.b16 %v2677
        %v3011 = vunpack.c.l.b16 %v2678
        %v3012 = vunpack.c.h.b16 %v2678
        %v3013 = vunpack.c.l.b16 %v2679
        %v3014 = vunpack.c.h.b16 %v2679
        %v3015 = vunpack.c.l.b16 %v2680
        %v3016 = vunpack.c.h.b16 %v2680
        %v3017 = vunpack.c.l.b16 %v2681
        %v3018 = vunpack.c.h.b16 %v2681
        %v3019 = vunpack.c.l.b16 %v2682
        %v3020 = vunpack.c.h.b16 %v2682
        %v3021 = vunpack.c.l.b16 %v2683
        %v3022 = vunpack.c.h.b16 %v2683
        %v3023 = vunpack.c.l.b16 %v2684
        %v3024 = vunpack.c.h.b16 %v2684
        %v3025 = vunpack.c.l.b16 %v2685
        %v3026 = vunpack.c.h.b16 %v2685
        %v3027 = vunpack.c.l.b16 %v2686
        %v3028 = vunpack.c.h.b16 %v2686
        %v3029 = vunpack.c.l.b16 %v2687
        %v3030 = vunpack.c.h.b16 %v2687
        %v3031 = vunpack.c.l.b16 %v2688
        %v3032 = vunpack.c.h.b16 %v2688
        %v3033 = vunpack.c.l.b16 %v2689
        %v3034 = vunpack.c.h.b16 %v2689
        %v3035 = vunpack.c.l.b16 %v2690
        %v3036 = vunpack.c.h.b16 %v2690
        %v3037 = vunpack.c.l.b16 %v2691
        %v3038 = vunpack.c.h.b16 %v2691
        %v3039 = vunpack.c.l.b16 %v2692
        %v3040 = vunpack.c.h.b16 %v2692
        %v3041 = vunpack.c.l.b16 %v2693
        %v3042 = vunpack.c.h.b16 %v2693
        %v3043 = vunpack.c.l.b16 %v2694
        %v3044 = vunpack.c.h.b16 %v2694
        %v3045 = vunpack.c.l.b16 %v2695
        %v3046 = vunpack.c.h.b16 %v2695
        %v3047 = vunpack.c.l.b16 %v2696
        %v3048 = vunpack.c.h.b16 %v2696
        %v3049 = vunpack.c.l.b16 %v2697
        %v3050 = vunpack.c.h.b16 %v2697
        %v3051 = vunpack.c.l.b16 %v2698
        %v3052 = vunpack.c.h.b16 %v2698
        %v3053 = vunpack.c.l.b16 %v2699
        %v3054 = vunpack.c.h.b16 %v2699
        %v3055 = vunpack.c.l.b16 %v2700
        %v3056 = vunpack.c.h.b16 %v2700
        %v3057 = vunpack.c.l.b16 %v2701
        %v3058 = vunpack.c.h.b16 %v2701
        %v3059 = vunpack.c.l.b16 %v2702
        %v3060 = vunpack.c.h.b16 %v2702
        %v3061 = vunpack.c.l.b16 %v2703
        %v3062 = vunpack.c.h.b16 %v2703
        %v3063 = vunpack.c.l.b16 %v2704
        %v3064 = vunpack.c.h.b16 %v2704
        %v3065 = vunpack.c.l.b16 %v2705
        %v3066 = vunpack.c.h.b16 %v2705
        %v3067 = vunpack.c.l.b16 %v2706
        %v3068 = vunpack.c.h.b16 %v2706
        %v3069 = vunpack.c.l.b16 %v2707
        %v3070 = vunpack.c.h.b16 %v2707
        %v3071 = vunpack.c.l.b16 %v2708
        %v3072 = vunpack.c.h.b16 %v2708
        %v3073 = vunpack.c.l.b16 %v2709
        %v3074 = vunpack.c.h.b16 %v2709
        %v3075 = vunpack.c.l.b16 %v2710
        %v3076 = vunpack.c.h.b16 %v2710
        %v3077 = vunpack.c.l.b16 %v2711
        %v3078 = vunpack.c.h.b16 %v2711
        %v3079 = vunpack.c.l.b16 %v2712
        %v3080 = vunpack.c.h.b16 %v2712
        %v3081 = vunpack.c.l.b16 %v2713
        %v3082 = vunpack.c.h.b16 %v2713
        %v3083 = vunpack.c.l.b16 %v2714
        %v3084 = vunpack.c.h.b16 %v2714
        %v3085 = vunpack.c.l.b16 %v2715
        %v3086 = vunpack.c.h.b16 %v2715
        %v3087 = vunpack.c.l.b16 %v2716
        %v3088 = vunpack.c.h.b16 %v2716
        %v3089 = vunpack.c.l.b16 %v2717
        %v3090 = vunpack.c.h.b16 %v2717
        %v3091 = vunpack.c.l.b16 %v2718
        %v3092 = vunpack.c.h.b16 %v2718
        %v3093 = vunpack.c.l.b16 %v2719
        %v3094 = vunpack.c.h.b16 %v2719
        %v3095 = vunpack.c.l.b16 %v2720
        %v3096 = vunpack.c.h.b16 %v2720
        %v3097 = vunpack.c.l.b16 %v2721
        %v3098 = vunpack.c.h.b16 %v2721
        %v3099 = vunpack.c.l.b16 %v2722
        %v3100 = vunpack.c.h.b16 %v2722
        %v3101 = vunpack.c.l.b16 %v2723
        %v3102 = vunpack.c.h.b16 %v2723
        %v3103 = vunpack.c.l.b16 %v2724
        %v3104 = vunpack.c.h.b16 %v2724
        %v3105 = vunpack.c.l.b16 %v2725
        %v3106 = vunpack.c.h.b16 %v2725
        %v3107 = vunpack.c.l.b16 %v2726
        %v3108 = vunpack.c.h.b16 %v2726
        %v3109 = vunpack.c.l.b16 %v2727
        %v3110 = vunpack.c.h.b16 %v2727
        %v3111 = vunpack.c.l.b16 %v2728
        %v3112 = vunpack.c.h.b16 %v2728
        %v3113 = vpack.c.b16 %v2857, %v2857
        %v3114 = vpack.c.b16 %v2858, %v2858
        %v3115 = vpack.c.b16 %v2859, %v2859
        %v3116 = vpack.c.b16 %v2860, %v2860
        %v3117 = vpack.c.b16 %v2861, %v2861
        %v3118 = vpack.c.b16 %v2862, %v2862
        %v3119 = vpack.c.b16 %v2863, %v2863
        %v3120 = vpack.c.b16 %v2864, %v2864
        %v3121 = vpack.c.b16 %v2865, %v2865
        %v3122 = vpack.c.b16 %v2866, %v2866
        %v3123 = vpack.c.b16 %v2867, %v2867
        %v3124 = vpack.c.b16 %v2868, %v2868
        %v3125 = vpack.c.b16 %v2869, %v2869
        %v3126 = vpack.c.b16 %v2870, %v2870
        %v3127 = vpack.c.b16 %v2871, %v2871
        %v3128 = vpack.c.b16 %v2872, %v2872
        %v3129 = vpack.c.b16 %v2873, %v2873
        %v3130 = vpack.c.b16 %v2874, %v2874
        %v3131 = vpack.c.b16 %v2875, %v2875
        %v3132 = vpack.c.b16 %v2876, %v2876
        %v3133 = vpack.c.b16 %v2877, %v2877
        %v3134 = vpack.c.b16 %v2878, %v2878
        %v3135 = vpack.c.b16 %v2879, %v2879
        %v3136 = vpack.c.b16 %v2880, %v2880
        %v3137 = vpack.c.b16 %v2881, %v2881
        %v3138 = vpack.c.b16 %v2882, %v2882
        %v3139 = vpack.c.b16 %v2883, %v2883
        %v3140 = vpack.c.b16 %v2884, %v2884
        %v3141 = vpack.c.b16 %v2885, %v2885
        %v3142 = vpack.c.b16 %v2886, %v2886
        %v3143 = vpack.c.b16 %v2887, %v2887
        %v3144 = vpack.c.b16 %v2888, %v2888
        %v3145 = vpack.c.b16 %v2889, %v2889
        %v3146 = vpack.c.b16 %v2890, %v2890
        %v3147 = vpack.c.b16 %v2891, %v2891
        %v3148 = vpack.c.b16 %v2892, %v2892
        %v3149 = vpack.c.b16 %v2893, %v2893
        %v3150 = vpack.c.b16 %v2894, %v2894
        %v3151 = vpack.c.b16 %v2895, %v2895
        %v3152 = vpack.c.b16 %v2896, %v2896
        %v3153 = vpack.c.b16 %v2897, %v2897
        %v3154 = vpack.c.b16 %v2898, %v2898
        %v3155 = vpack.c.b16 %v2899, %v2899
        %v3156 = vpack.c.b16 %v2900, %v2900
        %v3157 = vpack.c.b16 %v2901, %v2901
        %v3158 = vpack.c.b16 %v2902, %v2902
        %v3159 = vpack.c.b16 %v2903, %v2903
        %v3160 = vpack.c.b16 %v2904, %v2904
        %v3161 = vpack.c.b16 %v2905, %v2905
        %v3162 = vpack.c.b16 %v2906, %v2906
        %v3163 = vpack.c.b16 %v2907, %v2907
        %v3164 = vpack.c.b16 %v2908, %v2908
        %v3165 = vpack.c.b16 %v2909, %v2909
        %v3166 = vpack.c.b16 %v2910, %v2910
        %v3167 = vpack.c.b16 %v2911, %v2911
        %v3168 = vpack.c.b16 %v2912, %v2912
        %v3169 = vpack.c.b16 %v2913, %v2913
        %v3170 = vpack.c.b16 %v2914, %v2914
        %v3171 = vpack.c.b16 %v2915, %v2915
        %v3172 = vpack.c.b16 %v2916, %v2916
        %v3173 = vpack.c.b16 %v2917, %v2917
        %v3174 = vpack.c.b16 %v2918, %v2918
        %v3175 = vpack.c.b16 %v2919, %v2919
        %v3176 = vpack.c.b16 %v2920, %v2920
        %v3177 = vpack.c.b16 %v2921, %v2921
        %v3178 = vpack.c.b16 %v2922, %v2922
        %v3179 = vpack.c.b16 %v2923, %v2923
        %v3180 = vpack.c.b16 %v2924, %v2924
        %v3181 = vpack.c.b16 %v2925, %v2925
        %v3182 = vpack.c.b16 %v2926, %v2926
        %v3183 = vpack.c.b16 %v2927, %v2927
        %v3184 = vpack.c.b16 %v2928, %v2928
        %v3185 = vpack.c.b16 %v2929, %v2929
        %v3186 = vpack.c.b16 %v2930, %v2930
        %v3187 = vpack.c.b16 %v2931, %v2931
        %v3188 = vpack.c.b16 %v2932, %v2932
        %v3189 = vpack.c.b16 %v2933, %v2933
        %v3190 = vpack.c.b16 %v2934, %v2934
        %v3191 = vpack.c.b16 %v2935, %v2935
        %v3192 = vpack.c.b16 %v2936, %v2936
        %v3193 = vpack.c.b16 %v2937, %v2937
        %v3194 = vpack.c.b16 %v2938, %v2938
        %v3195 = vpack.c.b16 %v2939, %v2939
        %v3196 = vpack.c.b16 %v2940, %v2940
        %v3197 = vpack.c.b16 %v2941, %v2941
        %v3198 = vpack.c.b16 %v2942, %v2942
        %v3199 = vpack.c.b16 %v2943, %v2943
        %v3200 = vpack.c.b16 %v2944, %v2944
        %v3201 = vpack.c.b16 %v2945, %v2945
        %v3202 = vpack.c.b16 %v2946, %v2946
        %v3203 = vpack.c.b16 %v2947, %v2947
        %v3204 = vpack.c.b16 %v2948, %v2948
        %v3205 = vpack.c.b16 %v2949, %v2949
        %v3206 = vpack.c.b16 %v2950, %v2950
        %v3207 = vpack.c.b16 %v2951, %v2951
        %v3208 = vpack.c.b16 %v2952, %v2952
        %v3209 = vpack.c.b16 %v2953, %v2953
        %v3210 = vpack.c.b16 %v2954, %v2954
        %v3211 = vpack.c.b16 %v2955, %v2955
        %v3212 = vpack.c.b16 %v2956, %v2956
        %v3213 = vpack.c.b16 %v2957, %v2957
        %v3214 = vpack.c.b16 %v2958, %v2958
        %v3215 = vpack.c.b16 %v2959, %v2959
        %v3216 = vpack.c.b16 %v2960, %v2960
        %v3217 = vpack.c.b16 %v2961, %v2961
        %v3218 = vpack.c.b16 %v2962, %v2962
        %v3219 = vpack.c.b16 %v2963, %v2963
        %v3220 = vpack.c.b16 %v2964, %v2964
        %v3221 = vpack.c.b16 %v2965, %v2965
        %v3222 = vpack.c.b16 %v2966, %v2966
        %v3223 = vpack.c.b16 %v2967, %v2967
        %v3224 = vpack.c.b16 %v2968, %v2968
        %v3225 = vpack.c.b16 %v2969, %v2969
        %v3226 = vpack.c.b16 %v2970, %v2970
        %v3227 = vpack.c.b16 %v2971, %v2971
        %v3228 = vpack.c.b16 %v2972, %v2972
        %v3229 = vpack.c.b16 %v2973, %v2973
        %v3230 = vpack.c.b16 %v2974, %v2974
        %v3231 = vpack.c.b16 %v2975, %v2975
        %v3232 = vpack.c.b16 %v2976, %v2976
        %v3233 = vpack.c.b16 %v2977, %v2977
        %v3234 = vpack.c.b16 %v2978, %v2978
        %v3235 = vpack.c.b16 %v2979, %v2979
        %v3236 = vpack.c.b16 %v2980, %v2980
        %v3237 = vpack.c.b16 %v2981, %v2981
        %v3238 = vpack.c.b16 %v2982, %v2982
        %v3239 = vpack.c.b16 %v2983, %v2983
        %v3240 = vpack.c.b16 %v2984, %v2984
        %v3241 = vpack.c.b16 %v2985, %v2985
        %v3242 = vpack.c.b16 %v2986, %v2986
        %v3243 = vpack.c.b16 %v2987, %v2987
        %v3244 = vpack.c.b16 %v2988, %v2988
        %v3245 = vpack.c.b16 %v2989, %v2989
        %v3246 = vpack.c.b16 %v2990, %v2990
        %v3247 = vpack.c.b16 %v2991, %v2991
        %v3248 = vpack.c.b16 %v2992, %v2992
        %v3249 = vpack.c.b16 %v2993, %v2993
        %v3250 = vpack.c.b16 %v2994, %v2994
        %v3251 = vpack.c.b16 %v2995, %v2995
        %v3252 = vpack.c.b16 %v2996, %v2996
        %v3253 = vpack.c.b16 %v2997, %v2997
        %v3254 = vpack.c.b16 %v2998, %v2998
        %v3255 = vpack.c.b16 %v2999, %v2999
        %v3256 = vpack.c.b16 %v3000, %v3000
        %v3257 = vpack.c.b16 %v3001, %v3001
        %v3258 = vpack.c.b16 %v3002, %v3002
        %v3259 = vpack.c.b16 %v3003, %v3003
        %v3260 = vpack.c.b16 %v3004, %v3004
        %v3261 = vpack.c.b16 %v3005, %v3005
        %v3262 = vpack.c.b16 %v3006, %v3006
        %v3263 = vpack.c.b16 %v3007, %v3007
        %v3264 = vpack.c.b16 %v3008, %v3008
        %v3265 = vpack.c.b16 %v3009, %v3009
        %v3266 = vpack.c.b16 %v3010, %v3010
        %v3267 = vpack.c.b16 %v3011, %v3011
        %v3268 = vpack.c.b16 %v3012, %v3012
        %v3269 = vpack.c.b16 %v3013, %v3013
        %v3270 = vpack.c.b16 %v3014, %v3014
        %v3271 = vpack.c.b16 %v3015, %v3015
        %v3272 = vpack.c.b16 %v3016, %v3016
        %v3273 = vpack.c.b16 %v3017, %v3017
        %v3274 = vpack.c.b16 %v3018, %v3018
        %v3275 = vpack.c.b16 %v3019, %v3019
        %v3276 = vpack.c.b16 %v3020, %v3020
        %v3277 = vpack.c.b16 %v3021, %v3021
        %v3278 = vpack.c.b16 %v3022, %v3022
        %v3279 = vpack.c.b16 %v3023, %v3023
        %v3280 = vpack.c.b16 %v3024, %v3024
        %v3281 = vpack.c.b16 %v3025, %v3025
        %v3282 = vpack.c.b16 %v3026, %v3026
        %v3283 = vpack.c.b16 %v3027, %v3027
        %v3284 = vpack.c.b16 %v3028, %v3028
        %v3285 = vpack.c.b16 %v3029, %v3029
        %v3286 = vpack.c.b16 %v3030, %v3030
        %v3287 = vpack.c.b16 %v3031, %v3031
        %v3288 = vpack.c.b16 %v3032, %v3032
        %v3289 = vpack.c.b16 %v3033, %v3033
        %v3290 = vpack.c.b16 %v3034, %v3034
        %v3291 = vpack.c.b16 %v3035, %v3035
        %v3292 = vpack.c.b16 %v3036, %v3036
        %v3293 = vpack.c.b16 %v3037, %v3037
        %v3294 = vpack.c.b16 %v3038, %v3038
        %v3295 = vpack.c.b16 %v3039, %v3039
        %v3296 = vpack.c.b16 %v3040, %v3040
        %v3297 = vpack.c.b16 %v3041, %v3041
        %v3298 = vpack.c.b16 %v3042, %v3042
        %v3299 = vpack.c.b16 %v3043, %v3043
        %v3300 = vpack.c.b16 %v3044, %v3044
        %v3301 = vpack.c.b16 %v3045, %v3045
        %v3302 = vpack.c.b16 %v3046, %v3046
        %v3303 = vpack.c.b16 %v3047, %v3047
        %v3304 = vpack.c.b16 %v3048, %v3048
        %v3305 = vpack.c.b16 %v3049, %v3049
        %v3306 = vpack.c.b16 %v3050, %v3050
        %v3307 = vpack.c.b16 %v3051, %v3051
        %v3308 = vpack.c.b16 %v3052, %v3052
        %v3309 = vpack.c.b16 %v3053, %v3053
        %v3310 = vpack.c.b16 %v3054, %v3054
        %v3311 = vpack.c.b16 %v3055, %v3055
        %v3312 = vpack.c.b16 %v3056, %v3056
        %v3313 = vpack.c.b16 %v3057, %v3057
        %v3314 = vpack.c.b16 %v3058, %v3058
        %v3315 = vpack.c.b16 %v3059, %v3059
        %v3316 = vpack.c.b16 %v3060, %v3060
        %v3317 = vpack.c.b16 %v3061, %v3061
        %v3318 = vpack.c.b16 %v3062, %v3062
        %v3319 = vpack.c.b16 %v3063, %v3063
        %v3320 = vpack.c.b16 %v3064, %v3064
        %v3321 = vpack.c.b16 %v3065, %v3065
        %v3322 = vpack.c.b16 %v3066, %v3066
        %v3323 = vpack.c.b16 %v3067, %v3067
        %v3324 = vpack.c.b16 %v3068, %v3068
        %v3325 = vpack.c.b16 %v3069, %v3069
        %v3326 = vpack.c.b16 %v3070, %v3070
        %v3327 = vpack.c.b16 %v3071, %v3071
        %v3328 = vpack.c.b16 %v3072, %v3072
        %v3329 = vpack.c.b16 %v3073, %v3073
        %v3330 = vpack.c.b16 %v3074, %v3074
        %v3331 = vpack.c.b16 %v3075, %v3075
        %v3332 = vpack.c.b16 %v3076, %v3076
        %v3333 = vpack.c.b16 %v3077, %v3077
        %v3334 = vpack.c.b16 %v3078, %v3078
        %v3335 = vpack.c.b16 %v3079, %v3079
        %v3336 = vpack.c.b16 %v3080, %v3080
        %v3337 = vpack.c.b16 %v3081, %v3081
        %v3338 = vpack.c.b16 %v3082, %v3082
        %v3339 = vpack.c.b16 %v3083, %v3083
        %v3340 = vpack.c.b16 %v3084, %v3084
        %v3341 = vpack.c.b16 %v3085, %v3085
        %v3342 = vpack.c.b16 %v3086, %v3086
        %v3343 = vpack.c.b16 %v3087, %v3087
        %v3344 = vpack.c.b16 %v3088, %v3088
        %v3345 = vpack.c.b16 %v3089, %v3089
        %v3346 = vpack.c.b16 %v3090, %v3090
        %v3347 = vpack.c.b16 %v3091, %v3091
        %v3348 = vpack.c.b16 %v3092, %v3092
        %v3349 = vpack.c.b16 %v3093, %v3093
        %v3350 = vpack.c.b16 %v3094, %v3094
        %v3351 = vpack.c.b16 %v3095, %v3095
        %v3352 = vpack.c.b16 %v3096, %v3096
        %v3353 = vpack.c.b16 %v3097, %v3097
        %v3354 = vpack.c.b16 %v3098, %v3098
        %v3355 = vpack.c.b16 %v3099, %v3099
        %v3356 = vpack.c.b16 %v3100, %v3100
        %v3357 = vpack.c.b16 %v3101, %v3101
        %v3358 = vpack.c.b16 %v3102, %v3102
        %v3359 = vpack.c.b16 %v3103, %v3103
        %v3360 = vpack.c.b16 %v3104, %v3104
        %v3361 = vpack.c.b16 %v3105, %v3105
        %v3362 = vpack.c.b16 %v3106, %v3106
        %v3363 = vpack.c.b16 %v3107, %v3107
        %v3364 = vpack.c.b16 %v3108, %v3108
        %v3365 = vpack.c.b16 %v3109, %v3109
        %v3366 = vpack.c.b16 %v3110, %v3110
        %v3367 = vpack.c.b16 %v3111, %v3111
        %v3368 = vpack.c.b16 %v3112, %v3112
        %3625 = vst [vmem:[%s172] sm:$0xf] %v3113
        %3626 = vst [vmem:[%s172 + $0x4] sm:$0xf] %v3114
        %3627 = vst [vmem:[%s172 + $0x8] sm:$0xf] %v3115
        %3628 = vst [vmem:[%s172 + $0xc] sm:$0xf] %v3116
        %3629 = vst [vmem:[%s172 + $0x10] sm:$0xf] %v3117
        %3630 = vst [vmem:[%s172 + $0x14] sm:$0xf] %v3118
        %3631 = vst [vmem:[%s172 + $0x18] sm:$0xf] %v3119
        %3632 = vst [vmem:[%s172 + $0x1c] sm:$0xf] %v3120
        %3633 = vst [vmem:[%s172 + $0x20] sm:$0xf] %v3121
        %3634 = vst [vmem:[%s172 + $0x24] sm:$0xf] %v3122
        %3635 = vst [vmem:[%s172 + $0x28] sm:$0xf] %v3123
        %3636 = vst [vmem:[%s172 + $0x2c] sm:$0xf] %v3124
        %3637 = vst [vmem:[%s172 + $0x30] sm:$0xf] %v3125
        %3638 = vst [vmem:[%s172 + $0x34] sm:$0xf] %v3126
        %3639 = vst [vmem:[%s172 + $0x38] sm:$0xf] %v3127
        %3640 = vst [vmem:[%s172 + $0x3c] sm:$0xf] %v3128
        %3641 = vst [vmem:[%s172 + $0x40] sm:$0xf] %v3129
        %3642 = vst [vmem:[%s172 + $0x44] sm:$0xf] %v3130
        %3643 = vst [vmem:[%s172 + $0x48] sm:$0xf] %v3131
        %3644 = vst [vmem:[%s172 + $0x4c] sm:$0xf] %v3132
        %3645 = vst [vmem:[%s172 + $0x50] sm:$0xf] %v3133
        %3646 = vst [vmem:[%s172 + $0x54] sm:$0xf] %v3134
        %3647 = vst [vmem:[%s172 + $0x58] sm:$0xf] %v3135
        %3648 = vst [vmem:[%s172 + $0x5c] sm:$0xf] %v3136
        %3649 = vst [vmem:[%s172 + $0x60] sm:$0xf] %v3137
        %3650 = vst [vmem:[%s172 + $0x64] sm:$0xf] %v3138
        %3651 = vst [vmem:[%s172 + $0x68] sm:$0xf] %v3139
        %3652 = vst [vmem:[%s172 + $0x6c] sm:$0xf] %v3140
        %3653 = vst [vmem:[%s172 + $0x70] sm:$0xf] %v3141
        %3654 = vst [vmem:[%s172 + $0x74] sm:$0xf] %v3142
        %3655 = vst [vmem:[%s172 + $0x78] sm:$0xf] %v3143
        %3656 = vst [vmem:[%s172 + $0x7c] sm:$0xf] %v3144
        %3657 = vst [vmem:[%s172 + $0x80] sm:$0xf] %v3145
        %3658 = vst [vmem:[%s172 + $0x84] sm:$0xf] %v3146
        %3659 = vst [vmem:[%s172 + $0x88] sm:$0xf] %v3147
        %3660 = vst [vmem:[%s172 + $0x8c] sm:$0xf] %v3148
        %3661 = vst [vmem:[%s172 + $0x90] sm:$0xf] %v3149
        %3662 = vst [vmem:[%s172 + $0x94] sm:$0xf] %v3150
        %3663 = vst [vmem:[%s172 + $0x98] sm:$0xf] %v3151
        %3664 = vst [vmem:[%s172 + $0x9c] sm:$0xf] %v3152
        %3665 = vst [vmem:[%s172 + $0xa0] sm:$0xf] %v3153
        %3666 = vst [vmem:[%s172 + $0xa4] sm:$0xf] %v3154
        %3667 = vst [vmem:[%s172 + $0xa8] sm:$0xf] %v3155
        %3668 = vst [vmem:[%s172 + $0xac] sm:$0xf] %v3156
        %3669 = vst [vmem:[%s172 + $0xb0] sm:$0xf] %v3157
        %3670 = vst [vmem:[%s172 + $0xb4] sm:$0xf] %v3158
        %3671 = vst [vmem:[%s172 + $0xb8] sm:$0xf] %v3159
        %3672 = vst [vmem:[%s172 + $0xbc] sm:$0xf] %v3160
        %3673 = vst [vmem:[%s172 + $0xc0] sm:$0xf] %v3161
        %3674 = vst [vmem:[%s172 + $0xc4] sm:$0xf] %v3162
        %3675 = vst [vmem:[%s172 + $0xc8] sm:$0xf] %v3163
        %3676 = vst [vmem:[%s172 + $0xcc] sm:$0xf] %v3164
        %3677 = vst [vmem:[%s172 + $0xd0] sm:$0xf] %v3165
        %3678 = vst [vmem:[%s172 + $0xd4] sm:$0xf] %v3166
        %3679 = vst [vmem:[%s172 + $0xd8] sm:$0xf] %v3167
        %3680 = vst [vmem:[%s172 + $0xdc] sm:$0xf] %v3168
        %3681 = vst [vmem:[%s172 + $0xe0] sm:$0xf] %v3169
        %3682 = vst [vmem:[%s172 + $0xe4] sm:$0xf] %v3170
        %3683 = vst [vmem:[%s172 + $0xe8] sm:$0xf] %v3171
        %3684 = vst [vmem:[%s172 + $0xec] sm:$0xf] %v3172
        %3685 = vst [vmem:[%s172 + $0xf0] sm:$0xf] %v3173
        %3686 = vst [vmem:[%s172 + $0xf4] sm:$0xf] %v3174
        %3687 = vst [vmem:[%s172 + $0xf8] sm:$0xf] %v3175
        %3688 = vst [vmem:[%s172 + $0xfc] sm:$0xf] %v3176
        %3689 = vst [vmem:[%s172 + $0x100] sm:$0xf] %v3177
        %3690 = vst [vmem:[%s172 + $0x104] sm:$0xf] %v3178
        %3691 = vst [vmem:[%s172 + $0x108] sm:$0xf] %v3179
        %3692 = vst [vmem:[%s172 + $0x10c] sm:$0xf] %v3180
        %3693 = vst [vmem:[%s172 + $0x110] sm:$0xf] %v3181
        %3694 = vst [vmem:[%s172 + $0x114] sm:$0xf] %v3182
        %3695 = vst [vmem:[%s172 + $0x118] sm:$0xf] %v3183
        %3696 = vst [vmem:[%s172 + $0x11c] sm:$0xf] %v3184
        %3697 = vst [vmem:[%s172 + $0x120] sm:$0xf] %v3185
        %3698 = vst [vmem:[%s172 + $0x124] sm:$0xf] %v3186
        %3699 = vst [vmem:[%s172 + $0x128] sm:$0xf] %v3187
        %3700 = vst [vmem:[%s172 + $0x12c] sm:$0xf] %v3188
        %3701 = vst [vmem:[%s172 + $0x130] sm:$0xf] %v3189
        %3702 = vst [vmem:[%s172 + $0x134] sm:$0xf] %v3190
        %3703 = vst [vmem:[%s172 + $0x138] sm:$0xf] %v3191
        %3704 = vst [vmem:[%s172 + $0x13c] sm:$0xf] %v3192
        %3705 = vst [vmem:[%s172 + $0x140] sm:$0xf] %v3193
        %3706 = vst [vmem:[%s172 + $0x144] sm:$0xf] %v3194
        %3707 = vst [vmem:[%s172 + $0x148] sm:$0xf] %v3195
        %3708 = vst [vmem:[%s172 + $0x14c] sm:$0xf] %v3196
        %3709 = vst [vmem:[%s172 + $0x150] sm:$0xf] %v3197
        %3710 = vst [vmem:[%s172 + $0x154] sm:$0xf] %v3198
        %3711 = vst [vmem:[%s172 + $0x158] sm:$0xf] %v3199
        %3712 = vst [vmem:[%s172 + $0x15c] sm:$0xf] %v3200
        %3713 = vst [vmem:[%s172 + $0x160] sm:$0xf] %v3201
        %3714 = vst [vmem:[%s172 + $0x164] sm:$0xf] %v3202
        %3715 = vst [vmem:[%s172 + $0x168] sm:$0xf] %v3203
        %3716 = vst [vmem:[%s172 + $0x16c] sm:$0xf] %v3204
        %3717 = vst [vmem:[%s172 + $0x170] sm:$0xf] %v3205
        %3718 = vst [vmem:[%s172 + $0x174] sm:$0xf] %v3206
        %3719 = vst [vmem:[%s172 + $0x178] sm:$0xf] %v3207
        %3720 = vst [vmem:[%s172 + $0x17c] sm:$0xf] %v3208
        %3721 = vst [vmem:[%s172 + $0x180] sm:$0xf] %v3209
        %3722 = vst [vmem:[%s172 + $0x184] sm:$0xf] %v3210
        %3723 = vst [vmem:[%s172 + $0x188] sm:$0xf] %v3211
        %3724 = vst [vmem:[%s172 + $0x18c] sm:$0xf] %v3212
        %3725 = vst [vmem:[%s172 + $0x190] sm:$0xf] %v3213
        %3726 = vst [vmem:[%s172 + $0x194] sm:$0xf] %v3214
        %3727 = vst [vmem:[%s172 + $0x198] sm:$0xf] %v3215
        %3728 = vst [vmem:[%s172 + $0x19c] sm:$0xf] %v3216
        %3729 = vst [vmem:[%s172 + $0x1a0] sm:$0xf] %v3217
        %3730 = vst [vmem:[%s172 + $0x1a4] sm:$0xf] %v3218
        %3731 = vst [vmem:[%s172 + $0x1a8] sm:$0xf] %v3219
        %3732 = vst [vmem:[%s172 + $0x1ac] sm:$0xf] %v3220
        %3733 = vst [vmem:[%s172 + $0x1b0] sm:$0xf] %v3221
        %3734 = vst [vmem:[%s172 + $0x1b4] sm:$0xf] %v3222
        %3735 = vst [vmem:[%s172 + $0x1b8] sm:$0xf] %v3223
        %3736 = vst [vmem:[%s172 + $0x1bc] sm:$0xf] %v3224
        %3737 = vst [vmem:[%s172 + $0x1c0] sm:$0xf] %v3225
        %3738 = vst [vmem:[%s172 + $0x1c4] sm:$0xf] %v3226
        %3739 = vst [vmem:[%s172 + $0x1c8] sm:$0xf] %v3227
        %3740 = vst [vmem:[%s172 + $0x1cc] sm:$0xf] %v3228
        %3741 = vst [vmem:[%s172 + $0x1d0] sm:$0xf] %v3229
        %3742 = vst [vmem:[%s172 + $0x1d4] sm:$0xf] %v3230
        %3743 = vst [vmem:[%s172 + $0x1d8] sm:$0xf] %v3231
        %3744 = vst [vmem:[%s172 + $0x1dc] sm:$0xf] %v3232
        %3745 = vst [vmem:[%s172 + $0x1e0] sm:$0xf] %v3233
        %3746 = vst [vmem:[%s172 + $0x1e4] sm:$0xf] %v3234
        %3747 = vst [vmem:[%s172 + $0x1e8] sm:$0xf] %v3235
        %3748 = vst [vmem:[%s172 + $0x1ec] sm:$0xf] %v3236
        %3749 = vst [vmem:[%s172 + $0x1f0] sm:$0xf] %v3237
        %3750 = vst [vmem:[%s172 + $0x1f4] sm:$0xf] %v3238
        %3751 = vst [vmem:[%s172 + $0x1f8] sm:$0xf] %v3239
        %3752 = vst [vmem:[%s172 + $0x1fc] sm:$0xf] %v3240
        %3753 = vst [vmem:[%s172 + $0x200] sm:$0xf] %v3241
        %3754 = vst [vmem:[%s172 + $0x204] sm:$0xf] %v3242
        %3755 = vst [vmem:[%s172 + $0x208] sm:$0xf] %v3243
        %3756 = vst [vmem:[%s172 + $0x20c] sm:$0xf] %v3244
        %3757 = vst [vmem:[%s172 + $0x210] sm:$0xf] %v3245
        %3758 = vst [vmem:[%s172 + $0x214] sm:$0xf] %v3246
        %3759 = vst [vmem:[%s172 + $0x218] sm:$0xf] %v3247
        %3760 = vst [vmem:[%s172 + $0x21c] sm:$0xf] %v3248
        %3761 = vst [vmem:[%s172 + $0x220] sm:$0xf] %v3249
        %3762 = vst [vmem:[%s172 + $0x224] sm:$0xf] %v3250
        %3763 = vst [vmem:[%s172 + $0x228] sm:$0xf] %v3251
        %3764 = vst [vmem:[%s172 + $0x22c] sm:$0xf] %v3252
        %3765 = vst [vmem:[%s172 + $0x230] sm:$0xf] %v3253
        %3766 = vst [vmem:[%s172 + $0x234] sm:$0xf] %v3254
        %3767 = vst [vmem:[%s172 + $0x238] sm:$0xf] %v3255
        %3768 = vst [vmem:[%s172 + $0x23c] sm:$0xf] %v3256
        %3769 = vst [vmem:[%s172 + $0x240] sm:$0xf] %v3257
        %3770 = vst [vmem:[%s172 + $0x244] sm:$0xf] %v3258
        %3771 = vst [vmem:[%s172 + $0x248] sm:$0xf] %v3259
        %3772 = vst [vmem:[%s172 + $0x24c] sm:$0xf] %v3260
        %3773 = vst [vmem:[%s172 + $0x250] sm:$0xf] %v3261
        %3774 = vst [vmem:[%s172 + $0x254] sm:$0xf] %v3262
        %3775 = vst [vmem:[%s172 + $0x258] sm:$0xf] %v3263
        %3776 = vst [vmem:[%s172 + $0x25c] sm:$0xf] %v3264
        %3777 = vst [vmem:[%s172 + $0x260] sm:$0xf] %v3265
        %3778 = vst [vmem:[%s172 + $0x264] sm:$0xf] %v3266
        %3779 = vst [vmem:[%s172 + $0x268] sm:$0xf] %v3267
        %3780 = vst [vmem:[%s172 + $0x26c] sm:$0xf] %v3268
        %3781 = vst [vmem:[%s172 + $0x270] sm:$0xf] %v3269
        %3782 = vst [vmem:[%s172 + $0x274] sm:$0xf] %v3270
        %3783 = vst [vmem:[%s172 + $0x278] sm:$0xf] %v3271
        %3784 = vst [vmem:[%s172 + $0x27c] sm:$0xf] %v3272
        %3785 = vst [vmem:[%s172 + $0x280] sm:$0xf] %v3273
        %3786 = vst [vmem:[%s172 + $0x284] sm:$0xf] %v3274
        %3787 = vst [vmem:[%s172 + $0x288] sm:$0xf] %v3275
        %3788 = vst [vmem:[%s172 + $0x28c] sm:$0xf] %v3276
        %3789 = vst [vmem:[%s172 + $0x290] sm:$0xf] %v3277
        %3790 = vst [vmem:[%s172 + $0x294] sm:$0xf] %v3278
        %3791 = vst [vmem:[%s172 + $0x298] sm:$0xf] %v3279
        %3792 = vst [vmem:[%s172 + $0x29c] sm:$0xf] %v3280
        %3793 = vst [vmem:[%s172 + $0x2a0] sm:$0xf] %v3281
        %3794 = vst [vmem:[%s172 + $0x2a4] sm:$0xf] %v3282
        %3795 = vst [vmem:[%s172 + $0x2a8] sm:$0xf] %v3283
        %3796 = vst [vmem:[%s172 + $0x2ac] sm:$0xf] %v3284
        %3797 = vst [vmem:[%s172 + $0x2b0] sm:$0xf] %v3285
        %3798 = vst [vmem:[%s172 + $0x2b4] sm:$0xf] %v3286
        %3799 = vst [vmem:[%s172 + $0x2b8] sm:$0xf] %v3287
        %3800 = vst [vmem:[%s172 + $0x2bc] sm:$0xf] %v3288
        %3801 = vst [vmem:[%s172 + $0x2c0] sm:$0xf] %v3289
        %3802 = vst [vmem:[%s172 + $0x2c4] sm:$0xf] %v3290
        %3803 = vst [vmem:[%s172 + $0x2c8] sm:$0xf] %v3291
        %3804 = vst [vmem:[%s172 + $0x2cc] sm:$0xf] %v3292
        %3805 = vst [vmem:[%s172 + $0x2d0] sm:$0xf] %v3293
        %3806 = vst [vmem:[%s172 + $0x2d4] sm:$0xf] %v3294
        %3807 = vst [vmem:[%s172 + $0x2d8] sm:$0xf] %v3295
        %3808 = vst [vmem:[%s172 + $0x2dc] sm:$0xf] %v3296
        %3809 = vst [vmem:[%s172 + $0x2e0] sm:$0xf] %v3297
        %3810 = vst [vmem:[%s172 + $0x2e4] sm:$0xf] %v3298
        %3811 = vst [vmem:[%s172 + $0x2e8] sm:$0xf] %v3299
        %3812 = vst [vmem:[%s172 + $0x2ec] sm:$0xf] %v3300
        %3813 = vst [vmem:[%s172 + $0x2f0] sm:$0xf] %v3301
        %3814 = vst [vmem:[%s172 + $0x2f4] sm:$0xf] %v3302
        %3815 = vst [vmem:[%s172 + $0x2f8] sm:$0xf] %v3303
        %3816 = vst [vmem:[%s172 + $0x2fc] sm:$0xf] %v3304
        %3817 = vst [vmem:[%s172 + $0x300] sm:$0xf] %v3305
        %3818 = vst [vmem:[%s172 + $0x304] sm:$0xf] %v3306
        %3819 = vst [vmem:[%s172 + $0x308] sm:$0xf] %v3307
        %3820 = vst [vmem:[%s172 + $0x30c] sm:$0xf] %v3308
        %3821 = vst [vmem:[%s172 + $0x310] sm:$0xf] %v3309
        %3822 = vst [vmem:[%s172 + $0x314] sm:$0xf] %v3310
        %3823 = vst [vmem:[%s172 + $0x318] sm:$0xf] %v3311
        %3824 = vst [vmem:[%s172 + $0x31c] sm:$0xf] %v3312
        %3825 = vst [vmem:[%s172 + $0x320] sm:$0xf] %v3313
        %3826 = vst [vmem:[%s172 + $0x324] sm:$0xf] %v3314
        %3827 = vst [vmem:[%s172 + $0x328] sm:$0xf] %v3315
        %3828 = vst [vmem:[%s172 + $0x32c] sm:$0xf] %v3316
        %3829 = vst [vmem:[%s172 + $0x330] sm:$0xf] %v3317
        %3830 = vst [vmem:[%s172 + $0x334] sm:$0xf] %v3318
        %3831 = vst [vmem:[%s172 + $0x338] sm:$0xf] %v3319
        %3832 = vst [vmem:[%s172 + $0x33c] sm:$0xf] %v3320
        %3833 = vst [vmem:[%s172 + $0x340] sm:$0xf] %v3321
        %3834 = vst [vmem:[%s172 + $0x344] sm:$0xf] %v3322
        %3835 = vst [vmem:[%s172 + $0x348] sm:$0xf] %v3323
        %3836 = vst [vmem:[%s172 + $0x34c] sm:$0xf] %v3324
        %3837 = vst [vmem:[%s172 + $0x350] sm:$0xf] %v3325
        %3838 = vst [vmem:[%s172 + $0x354] sm:$0xf] %v3326
        %3839 = vst [vmem:[%s172 + $0x358] sm:$0xf] %v3327
        %3840 = vst [vmem:[%s172 + $0x35c] sm:$0xf] %v3328
        %3841 = vst [vmem:[%s172 + $0x360] sm:$0xf] %v3329
        %3842 = vst [vmem:[%s172 + $0x364] sm:$0xf] %v3330
        %3843 = vst [vmem:[%s172 + $0x368] sm:$0xf] %v3331
        %3844 = vst [vmem:[%s172 + $0x36c] sm:$0xf] %v3332
        %3845 = vst [vmem:[%s172 + $0x370] sm:$0xf] %v3333
        %3846 = vst [vmem:[%s172 + $0x374] sm:$0xf] %v3334
        %3847 = vst [vmem:[%s172 + $0x378] sm:$0xf] %v3335
        %3848 = vst [vmem:[%s172 + $0x37c] sm:$0xf] %v3336
        %3849 = vst [vmem:[%s172 + $0x380] sm:$0xf] %v3337
        %3850 = vst [vmem:[%s172 + $0x384] sm:$0xf] %v3338
        %3851 = vst [vmem:[%s172 + $0x388] sm:$0xf] %v3339
        %3852 = vst [vmem:[%s172 + $0x38c] sm:$0xf] %v3340
        %3853 = vst [vmem:[%s172 + $0x390] sm:$0xf] %v3341
        %3854 = vst [vmem:[%s172 + $0x394] sm:$0xf] %v3342
        %3855 = vst [vmem:[%s172 + $0x398] sm:$0xf] %v3343
        %3856 = vst [vmem:[%s172 + $0x39c] sm:$0xf] %v3344
        %3857 = vst [vmem:[%s172 + $0x3a0] sm:$0xf] %v3345
        %3858 = vst [vmem:[%s172 + $0x3a4] sm:$0xf] %v3346
        %3859 = vst [vmem:[%s172 + $0x3a8] sm:$0xf] %v3347
        %3860 = vst [vmem:[%s172 + $0x3ac] sm:$0xf] %v3348
        %3861 = vst [vmem:[%s172 + $0x3b0] sm:$0xf] %v3349
        %3862 = vst [vmem:[%s172 + $0x3b4] sm:$0xf] %v3350
        %3863 = vst [vmem:[%s172 + $0x3b8] sm:$0xf] %v3351
        %3864 = vst [vmem:[%s172 + $0x3bc] sm:$0xf] %v3352
        %3865 = vst [vmem:[%s172 + $0x3c0] sm:$0xf] %v3353
        %3866 = vst [vmem:[%s172 + $0x3c4] sm:$0xf] %v3354
        %3867 = vst [vmem:[%s172 + $0x3c8] sm:$0xf] %v3355
        %3868 = vst [vmem:[%s172 + $0x3cc] sm:$0xf] %v3356
        %3869 = vst [vmem:[%s172 + $0x3d0] sm:$0xf] %v3357
        %3870 = vst [vmem:[%s172 + $0x3d4] sm:$0xf] %v3358
        %3871 = vst [vmem:[%s172 + $0x3d8] sm:$0xf] %v3359
        %3872 = vst [vmem:[%s172 + $0x3dc] sm:$0xf] %v3360
        %3873 = vst [vmem:[%s172 + $0x3e0] sm:$0xf] %v3361
        %3874 = vst [vmem:[%s172 + $0x3e4] sm:$0xf] %v3362
        %3875 = vst [vmem:[%s172 + $0x3e8] sm:$0xf] %v3363
        %3876 = vst [vmem:[%s172 + $0x3ec] sm:$0xf] %v3364
        %3877 = vst [vmem:[%s172 + $0x3f0] sm:$0xf] %v3365
        %3878 = vst [vmem:[%s172 + $0x3f4] sm:$0xf] %v3366
        %3879 = vst [vmem:[%s172 + $0x3f8] sm:$0xf] %v3367
        %3880 = vst [vmem:[%s172 + $0x3fc] sm:$0xf] %v3368
        %s3881 = sand.u32 %s90, 1
        %s3882 = sand.u32 %s90, 1
        %s3883 = smul.addr %s3882, 1024
        %s3884 = scalar_lea.vmem [#allocation2], %s3883
        // Predicated region
        $region33: #{cnn_forward.4} parent=31 // pred_check
          %p3885 = pneg %p100
        $region34: #{cnn_forward.4} parent=31 // pred_check_branch
          %3887 = sbr.rel (%p3885) target = $region36
        $region35: #{cnn_forward.4} parent=31 // pred_region
          %s3888 = smul.u32 256, %s14
          %s3889 = ssub.s32 3081, %s3888
          %p3890 = scmp.lt.s32.totalorder %s3889, 256
          %s3891 = scalar_select %p3890, %s3889, 256
          %s3892 = smul.u32 64, %s3891
          %p3893 = scmp.ne.s32.totalorder 0, %s3892
          %s3894 = smul.addr %s3888, 4
          %s3895 = scalar_lea.vmem %s3, %s3894
          // Predicated region
          $region37: #{cnn_forward.4} parent=35 // pred_check
            %p3896 = pneg %p3893
          $region38: #{cnn_forward.4} parent=35 // pred_check_branch
            %3898 = sbr.rel (%p3896) target = $region40
          $region39: #{cnn_forward.4} parent=35 // pred_region
            // Predicated region
            $region41: #{cnn_forward.4} parent=39 // pred_check
              _
            $region42: #{cnn_forward.4} parent=39 // pred_check_branch
              %3900 = sbr.rel target = $region44
            $region43: #{cnn_forward.4} parent=39 // pred_region
              // Predicated region
              $region63: #{cnn_forward.4} parent=43 // pred_check
                _
              $region64: #{cnn_forward.4} parent=43 // pred_check_branch
                %4076 = sbr.rel (0) target = $region66
              $region65: #{cnn_forward.4} parent=43 // pred_region
                %s4078 = ssub.s32 16, 1
                %s4079 = sshrl.u32 %s3891, 6
                // While loop
                $region67: #{cnn_forward.4} parent=65 // loop_pre_header
                  _
                $region68: #{cnn_forward.4} parent=65 // loop_header
                  %s4081 = sphi 0, %s4083
                  %p4082 = scmp.ge.s32.totalorder %s4081, %s4079
                  %s4086 = sphi 0, %s4219
                  %s4087 = sphi %s3884, %s4222
                  %s4088 = sphi %s3895, %s4223
                $region69: #{cnn_forward.4} parent=65 // loop_header_branch
                  %4085 = sbr.rel (%p4082) target = $region73
                $region70: #{cnn_forward.4} parent=65 // loop_body
                  %v4089 = vld [vmem:[%s4087] sm:%s4078]
                  %4090 = vst [vmem:[%s4088] sm:%s4078] %v4089
                  %v4091 = vld [vmem:[%s4087 + $0x4] sm:%s4078]
                  %4092 = vst [vmem:[%s4088 + $0x4] sm:%s4078] %v4091
                  %v4093 = vld [vmem:[%s4087 + $0x8] sm:%s4078]
                  %4094 = vst [vmem:[%s4088 + $0x8] sm:%s4078] %v4093
                  %v4095 = vld [vmem:[%s4087 + $0xc] sm:%s4078]
                  %4096 = vst [vmem:[%s4088 + $0xc] sm:%s4078] %v4095
                  %v4097 = vld [vmem:[%s4087 + $0x10] sm:%s4078]
                  %4098 = vst [vmem:[%s4088 + $0x10] sm:%s4078] %v4097
                  %v4099 = vld [vmem:[%s4087 + $0x14] sm:%s4078]
                  %4100 = vst [vmem:[%s4088 + $0x14] sm:%s4078] %v4099
                  %v4101 = vld [vmem:[%s4087 + $0x18] sm:%s4078]
                  %4102 = vst [vmem:[%s4088 + $0x18] sm:%s4078] %v4101
                  %v4103 = vld [vmem:[%s4087 + $0x1c] sm:%s4078]
                  %4104 = vst [vmem:[%s4088 + $0x1c] sm:%s4078] %v4103
                  %v4105 = vld [vmem:[%s4087 + $0x20] sm:%s4078]
                  %4106 = vst [vmem:[%s4088 + $0x20] sm:%s4078] %v4105
                  %v4107 = vld [vmem:[%s4087 + $0x24] sm:%s4078]
                  %4108 = vst [vmem:[%s4088 + $0x24] sm:%s4078] %v4107
                  %v4109 = vld [vmem:[%s4087 + $0x28] sm:%s4078]
                  %4110 = vst [vmem:[%s4088 + $0x28] sm:%s4078] %v4109
                  %v4111 = vld [vmem:[%s4087 + $0x2c] sm:%s4078]
                  %4112 = vst [vmem:[%s4088 + $0x2c] sm:%s4078] %v4111
                  %v4113 = vld [vmem:[%s4087 + $0x30] sm:%s4078]
                  %4114 = vst [vmem:[%s4088 + $0x30] sm:%s4078] %v4113
                  %v4115 = vld [vmem:[%s4087 + $0x34] sm:%s4078]
                  %4116 = vst [vmem:[%s4088 + $0x34] sm:%s4078] %v4115
                  %v4117 = vld [vmem:[%s4087 + $0x38] sm:%s4078]
                  %4118 = vst [vmem:[%s4088 + $0x38] sm:%s4078] %v4117
                  %v4119 = vld [vmem:[%s4087 + $0x3c] sm:%s4078]
                  %4120 = vst [vmem:[%s4088 + $0x3c] sm:%s4078] %v4119
                  %v4121 = vld [vmem:[%s4087 + $0x40] sm:%s4078]
                  %4122 = vst [vmem:[%s4088 + $0x40] sm:%s4078] %v4121
                  %v4123 = vld [vmem:[%s4087 + $0x44] sm:%s4078]
                  %4124 = vst [vmem:[%s4088 + $0x44] sm:%s4078] %v4123
                  %v4125 = vld [vmem:[%s4087 + $0x48] sm:%s4078]
                  %4126 = vst [vmem:[%s4088 + $0x48] sm:%s4078] %v4125
                  %v4127 = vld [vmem:[%s4087 + $0x4c] sm:%s4078]
                  %4128 = vst [vmem:[%s4088 + $0x4c] sm:%s4078] %v4127
                  %v4129 = vld [vmem:[%s4087 + $0x50] sm:%s4078]
                  %4130 = vst [vmem:[%s4088 + $0x50] sm:%s4078] %v4129
                  %v4131 = vld [vmem:[%s4087 + $0x54] sm:%s4078]
                  %4132 = vst [vmem:[%s4088 + $0x54] sm:%s4078] %v4131
                  %v4133 = vld [vmem:[%s4087 + $0x58] sm:%s4078]
                  %4134 = vst [vmem:[%s4088 + $0x58] sm:%s4078] %v4133
                  %v4135 = vld [vmem:[%s4087 + $0x5c] sm:%s4078]
                  %4136 = vst [vmem:[%s4088 + $0x5c] sm:%s4078] %v4135
                  %v4137 = vld [vmem:[%s4087 + $0x60] sm:%s4078]
                  %4138 = vst [vmem:[%s4088 + $0x60] sm:%s4078] %v4137
                  %v4139 = vld [vmem:[%s4087 + $0x64] sm:%s4078]
                  %4140 = vst [vmem:[%s4088 + $0x64] sm:%s4078] %v4139
                  %v4141 = vld [vmem:[%s4087 + $0x68] sm:%s4078]
                  %4142 = vst [vmem:[%s4088 + $0x68] sm:%s4078] %v4141
                  %v4143 = vld [vmem:[%s4087 + $0x6c] sm:%s4078]
                  %4144 = vst [vmem:[%s4088 + $0x6c] sm:%s4078] %v4143
                  %v4145 = vld [vmem:[%s4087 + $0x70] sm:%s4078]
                  %4146 = vst [vmem:[%s4088 + $0x70] sm:%s4078] %v4145
                  %v4147 = vld [vmem:[%s4087 + $0x74] sm:%s4078]
                  %4148 = vst [vmem:[%s4088 + $0x74] sm:%s4078] %v4147
                  %v4149 = vld [vmem:[%s4087 + $0x78] sm:%s4078]
                  %4150 = vst [vmem:[%s4088 + $0x78] sm:%s4078] %v4149
                  %v4151 = vld [vmem:[%s4087 + $0x7c] sm:%s4078]
                  %4152 = vst [vmem:[%s4088 + $0x7c] sm:%s4078] %v4151
                  %v4153 = vld [vmem:[%s4087 + $0x80] sm:%s4078]
                  %4154 = vst [vmem:[%s4088 + $0x80] sm:%s4078] %v4153
                  %v4155 = vld [vmem:[%s4087 + $0x84] sm:%s4078]
                  %4156 = vst [vmem:[%s4088 + $0x84] sm:%s4078] %v4155
                  %v4157 = vld [vmem:[%s4087 + $0x88] sm:%s4078]
                  %4158 = vst [vmem:[%s4088 + $0x88] sm:%s4078] %v4157
                  %v4159 = vld [vmem:[%s4087 + $0x8c] sm:%s4078]
                  %4160 = vst [vmem:[%s4088 + $0x8c] sm:%s4078] %v4159
                  %v4161 = vld [vmem:[%s4087 + $0x90] sm:%s4078]
                  %4162 = vst [vmem:[%s4088 + $0x90] sm:%s4078] %v4161
                  %v4163 = vld [vmem:[%s4087 + $0x94] sm:%s4078]
                  %4164 = vst [vmem:[%s4088 + $0x94] sm:%s4078] %v4163
                  %v4165 = vld [vmem:[%s4087 + $0x98] sm:%s4078]
                  %4166 = vst [vmem:[%s4088 + $0x98] sm:%s4078] %v4165
                  %v4167 = vld [vmem:[%s4087 + $0x9c] sm:%s4078]
                  %4168 = vst [vmem:[%s4088 + $0x9c] sm:%s4078] %v4167
                  %v4169 = vld [vmem:[%s4087 + $0xa0] sm:%s4078]
                  %4170 = vst [vmem:[%s4088 + $0xa0] sm:%s4078] %v4169
                  %v4171 = vld [vmem:[%s4087 + $0xa4] sm:%s4078]
                  %4172 = vst [vmem:[%s4088 + $0xa4] sm:%s4078] %v4171
                  %v4173 = vld [vmem:[%s4087 + $0xa8] sm:%s4078]
                  %4174 = vst [vmem:[%s4088 + $0xa8] sm:%s4078] %v4173
                  %v4175 = vld [vmem:[%s4087 + $0xac] sm:%s4078]
                  %4176 = vst [vmem:[%s4088 + $0xac] sm:%s4078] %v4175
                  %v4177 = vld [vmem:[%s4087 + $0xb0] sm:%s4078]
                  %4178 = vst [vmem:[%s4088 + $0xb0] sm:%s4078] %v4177
                  %v4179 = vld [vmem:[%s4087 + $0xb4] sm:%s4078]
                  %4180 = vst [vmem:[%s4088 + $0xb4] sm:%s4078] %v4179
                  %v4181 = vld [vmem:[%s4087 + $0xb8] sm:%s4078]
                  %4182 = vst [vmem:[%s4088 + $0xb8] sm:%s4078] %v4181
                  %v4183 = vld [vmem:[%s4087 + $0xbc] sm:%s4078]
                  %4184 = vst [vmem:[%s4088 + $0xbc] sm:%s4078] %v4183
                  %v4185 = vld [vmem:[%s4087 + $0xc0] sm:%s4078]
                  %4186 = vst [vmem:[%s4088 + $0xc0] sm:%s4078] %v4185
                  %v4187 = vld [vmem:[%s4087 + $0xc4] sm:%s4078]
                  %4188 = vst [vmem:[%s4088 + $0xc4] sm:%s4078] %v4187
                  %v4189 = vld [vmem:[%s4087 + $0xc8] sm:%s4078]
                  %4190 = vst [vmem:[%s4088 + $0xc8] sm:%s4078] %v4189
                  %v4191 = vld [vmem:[%s4087 + $0xcc] sm:%s4078]
                  %4192 = vst [vmem:[%s4088 + $0xcc] sm:%s4078] %v4191
                  %v4193 = vld [vmem:[%s4087 + $0xd0] sm:%s4078]
                  %4194 = vst [vmem:[%s4088 + $0xd0] sm:%s4078] %v4193
                  %v4195 = vld [vmem:[%s4087 + $0xd4] sm:%s4078]
                  %4196 = vst [vmem:[%s4088 + $0xd4] sm:%s4078] %v4195
                  %v4197 = vld [vmem:[%s4087 + $0xd8] sm:%s4078]
                  %4198 = vst [vmem:[%s4088 + $0xd8] sm:%s4078] %v4197
                  %v4199 = vld [vmem:[%s4087 + $0xdc] sm:%s4078]
                  %4200 = vst [vmem:[%s4088 + $0xdc] sm:%s4078] %v4199
                  %v4201 = vld [vmem:[%s4087 + $0xe0] sm:%s4078]
                  %4202 = vst [vmem:[%s4088 + $0xe0] sm:%s4078] %v4201
                  %v4203 = vld [vmem:[%s4087 + $0xe4] sm:%s4078]
                  %4204 = vst [vmem:[%s4088 + $0xe4] sm:%s4078] %v4203
                  %v4205 = vld [vmem:[%s4087 + $0xe8] sm:%s4078]
                  %4206 = vst [vmem:[%s4088 + $0xe8] sm:%s4078] %v4205
                  %v4207 = vld [vmem:[%s4087 + $0xec] sm:%s4078]
                  %4208 = vst [vmem:[%s4088 + $0xec] sm:%s4078] %v4207
                  %v4209 = vld [vmem:[%s4087 + $0xf0] sm:%s4078]
                  %4210 = vst [vmem:[%s4088 + $0xf0] sm:%s4078] %v4209
                  %v4211 = vld [vmem:[%s4087 + $0xf4] sm:%s4078]
                  %4212 = vst [vmem:[%s4088 + $0xf4] sm:%s4078] %v4211
                  %v4213 = vld [vmem:[%s4087 + $0xf8] sm:%s4078]
                  %4214 = vst [vmem:[%s4088 + $0xf8] sm:%s4078] %v4213
                  %v4215 = vld [vmem:[%s4087 + $0xfc] sm:%s4078]
                  %4216 = vst [vmem:[%s4088 + $0xfc] sm:%s4078] %v4215
                  %s4217 = sadd.s32 1, %s4086
                  %p4218 = scmp.ge.s32.totalorder %s4217, %s4079
                  %s4219 = scalar_select %p4218, 0, %s4217
                  %s4220 = smul.u32 %s4219, 256
                  %s4221 = smul.u32 %s4219, 256
                  %s4222 = scalar_lea.vmem %s3884, %s4220 [#allocation2]
                  %s4223 = scalar_lea.vmem %s3895, %s4221
                $region71: #{cnn_forward.4} parent=65 // loop_footer
                  %s4083 = sadd.s32 %s4081, 1
                $region72: #{cnn_forward.4} parent=65 // loop_footer_branch
                  %4080 = sbr.rel target = $region68
                $region73: #{cnn_forward.4} parent=65 // loop_exit
                  _
                %s4224 = sshrl.u32 %s3891, 6
                %s4225 = sand.u32 %s3891, 63
                %s4226 = smul.u32 %s4224, 64
                %s4227 = smul.u32 4, %s4226
                %s4228 = scalar_lea.vmem %s3884, %s4227 [#allocation2]
                %s4229 = smul.u32 4, %s4226
                %s4230 = scalar_lea.vmem %s3895, %s4229
                // While loop
                $region74: #{cnn_forward.4} parent=65 // loop_pre_header
                  _
                $region75: #{cnn_forward.4} parent=65 // loop_header
                  %s4232 = sphi 0, %s4234
                  %p4233 = scmp.ge.s32.totalorder %s4232, %s4225
                  %s4237 = sphi 0, %s4244
                  %s4238 = sphi %s4228, %s4247
                  %s4239 = sphi %s4230, %s4248
                $region76: #{cnn_forward.4} parent=65 // loop_header_branch
                  %4236 = sbr.rel (%p4233) target = $region80
                $region77: #{cnn_forward.4} parent=65 // loop_body
                  %v4240 = vld [vmem:[%s4238] sm:%s4078]
                  %4241 = vst [vmem:[%s4239] sm:%s4078] %v4240
                  %s4242 = sadd.s32 1, %s4237
                  %p4243 = scmp.ge.s32.totalorder %s4242, %s4225
                  %s4244 = scalar_select %p4243, 0, %s4242
                  %s4245 = smul.u32 %s4244, 4
                  %s4246 = smul.u32 %s4244, 4
                  %s4247 = scalar_lea.vmem %s4228, %s4245 [#allocation2]
                  %s4248 = scalar_lea.vmem %s4230, %s4246
                $region78: #{cnn_forward.4} parent=65 // loop_footer
                  %s4234 = sadd.s32 %s4232, 1
                $region79: #{cnn_forward.4} parent=65 // loop_footer_branch
                  %4231 = sbr.rel target = $region75
                $region80: #{cnn_forward.4} parent=65 // loop_exit
                  _
              $region66: #{cnn_forward.4} parent=43 // pred_fallthru
                _
            $region44: #{cnn_forward.4} parent=39 // pred_fallthru
              _
            // Predicated region
            $region45: #{cnn_forward.4} parent=39 // pred_check
              _
            $region46: #{cnn_forward.4} parent=39 // pred_check_branch
              %3902 = sbr.rel (0) target = $region48
            $region47: #{cnn_forward.4} parent=39 // pred_region
              %s3904 = ssub.s32 16, 1
              %s3905 = sshrl.u32 %s3891, 6
              // While loop
              $region49: #{cnn_forward.4} parent=47 // loop_pre_header
                _
              $region50: #{cnn_forward.4} parent=47 // loop_header
                %s3907 = sphi 0, %s3909
                %p3908 = scmp.ge.s32.totalorder %s3907, %s3905
                %s3912 = sphi 0, %s4045
                %s3913 = sphi %s3884, %s4048
                %s3914 = sphi %s3895, %s4049
              $region51: #{cnn_forward.4} parent=47 // loop_header_branch
                %3911 = sbr.rel (%p3908) target = $region55
              $region52: #{cnn_forward.4} parent=47 // loop_body
                %v3915 = vld [vmem:[%s3913] sm:%s3904]
                %3916 = vst [vmem:[%s3914] sm:%s3904] %v3915
                %v3917 = vld [vmem:[%s3913 + $0x4] sm:%s3904]
                %3918 = vst [vmem:[%s3914 + $0x4] sm:%s3904] %v3917
                %v3919 = vld [vmem:[%s3913 + $0x8] sm:%s3904]
                %3920 = vst [vmem:[%s3914 + $0x8] sm:%s3904] %v3919
                %v3921 = vld [vmem:[%s3913 + $0xc] sm:%s3904]
                %3922 = vst [vmem:[%s3914 + $0xc] sm:%s3904] %v3921
                %v3923 = vld [vmem:[%s3913 + $0x10] sm:%s3904]
                %3924 = vst [vmem:[%s3914 + $0x10] sm:%s3904] %v3923
                %v3925 = vld [vmem:[%s3913 + $0x14] sm:%s3904]
                %3926 = vst [vmem:[%s3914 + $0x14] sm:%s3904] %v3925
                %v3927 = vld [vmem:[%s3913 + $0x18] sm:%s3904]
                %3928 = vst [vmem:[%s3914 + $0x18] sm:%s3904] %v3927
                %v3929 = vld [vmem:[%s3913 + $0x1c] sm:%s3904]
                %3930 = vst [vmem:[%s3914 + $0x1c] sm:%s3904] %v3929
                %v3931 = vld [vmem:[%s3913 + $0x20] sm:%s3904]
                %3932 = vst [vmem:[%s3914 + $0x20] sm:%s3904] %v3931
                %v3933 = vld [vmem:[%s3913 + $0x24] sm:%s3904]
                %3934 = vst [vmem:[%s3914 + $0x24] sm:%s3904] %v3933
                %v3935 = vld [vmem:[%s3913 + $0x28] sm:%s3904]
                %3936 = vst [vmem:[%s3914 + $0x28] sm:%s3904] %v3935
                %v3937 = vld [vmem:[%s3913 + $0x2c] sm:%s3904]
                %3938 = vst [vmem:[%s3914 + $0x2c] sm:%s3904] %v3937
                %v3939 = vld [vmem:[%s3913 + $0x30] sm:%s3904]
                %3940 = vst [vmem:[%s3914 + $0x30] sm:%s3904] %v3939
                %v3941 = vld [vmem:[%s3913 + $0x34] sm:%s3904]
                %3942 = vst [vmem:[%s3914 + $0x34] sm:%s3904] %v3941
                %v3943 = vld [vmem:[%s3913 + $0x38] sm:%s3904]
                %3944 = vst [vmem:[%s3914 + $0x38] sm:%s3904] %v3943
                %v3945 = vld [vmem:[%s3913 + $0x3c] sm:%s3904]
                %3946 = vst [vmem:[%s3914 + $0x3c] sm:%s3904] %v3945
                %v3947 = vld [vmem:[%s3913 + $0x40] sm:%s3904]
                %3948 = vst [vmem:[%s3914 + $0x40] sm:%s3904] %v3947
                %v3949 = vld [vmem:[%s3913 + $0x44] sm:%s3904]
                %3950 = vst [vmem:[%s3914 + $0x44] sm:%s3904] %v3949
                %v3951 = vld [vmem:[%s3913 + $0x48] sm:%s3904]
                %3952 = vst [vmem:[%s3914 + $0x48] sm:%s3904] %v3951
                %v3953 = vld [vmem:[%s3913 + $0x4c] sm:%s3904]
                %3954 = vst [vmem:[%s3914 + $0x4c] sm:%s3904] %v3953
                %v3955 = vld [vmem:[%s3913 + $0x50] sm:%s3904]
                %3956 = vst [vmem:[%s3914 + $0x50] sm:%s3904] %v3955
                %v3957 = vld [vmem:[%s3913 + $0x54] sm:%s3904]
                %3958 = vst [vmem:[%s3914 + $0x54] sm:%s3904] %v3957
                %v3959 = vld [vmem:[%s3913 + $0x58] sm:%s3904]
                %3960 = vst [vmem:[%s3914 + $0x58] sm:%s3904] %v3959
                %v3961 = vld [vmem:[%s3913 + $0x5c] sm:%s3904]
                %3962 = vst [vmem:[%s3914 + $0x5c] sm:%s3904] %v3961
                %v3963 = vld [vmem:[%s3913 + $0x60] sm:%s3904]
                %3964 = vst [vmem:[%s3914 + $0x60] sm:%s3904] %v3963
                %v3965 = vld [vmem:[%s3913 + $0x64] sm:%s3904]
                %3966 = vst [vmem:[%s3914 + $0x64] sm:%s3904] %v3965
                %v3967 = vld [vmem:[%s3913 + $0x68] sm:%s3904]
                %3968 = vst [vmem:[%s3914 + $0x68] sm:%s3904] %v3967
                %v3969 = vld [vmem:[%s3913 + $0x6c] sm:%s3904]
                %3970 = vst [vmem:[%s3914 + $0x6c] sm:%s3904] %v3969
                %v3971 = vld [vmem:[%s3913 + $0x70] sm:%s3904]
                %3972 = vst [vmem:[%s3914 + $0x70] sm:%s3904] %v3971
                %v3973 = vld [vmem:[%s3913 + $0x74] sm:%s3904]
                %3974 = vst [vmem:[%s3914 + $0x74] sm:%s3904] %v3973
                %v3975 = vld [vmem:[%s3913 + $0x78] sm:%s3904]
                %3976 = vst [vmem:[%s3914 + $0x78] sm:%s3904] %v3975
                %v3977 = vld [vmem:[%s3913 + $0x7c] sm:%s3904]
                %3978 = vst [vmem:[%s3914 + $0x7c] sm:%s3904] %v3977
                %v3979 = vld [vmem:[%s3913 + $0x80] sm:%s3904]
                %3980 = vst [vmem:[%s3914 + $0x80] sm:%s3904] %v3979
                %v3981 = vld [vmem:[%s3913 + $0x84] sm:%s3904]
                %3982 = vst [vmem:[%s3914 + $0x84] sm:%s3904] %v3981
                %v3983 = vld [vmem:[%s3913 + $0x88] sm:%s3904]
                %3984 = vst [vmem:[%s3914 + $0x88] sm:%s3904] %v3983
                %v3985 = vld [vmem:[%s3913 + $0x8c] sm:%s3904]
                %3986 = vst [vmem:[%s3914 + $0x8c] sm:%s3904] %v3985
                %v3987 = vld [vmem:[%s3913 + $0x90] sm:%s3904]
                %3988 = vst [vmem:[%s3914 + $0x90] sm:%s3904] %v3987
                %v3989 = vld [vmem:[%s3913 + $0x94] sm:%s3904]
                %3990 = vst [vmem:[%s3914 + $0x94] sm:%s3904] %v3989
                %v3991 = vld [vmem:[%s3913 + $0x98] sm:%s3904]
                %3992 = vst [vmem:[%s3914 + $0x98] sm:%s3904] %v3991
                %v3993 = vld [vmem:[%s3913 + $0x9c] sm:%s3904]
                %3994 = vst [vmem:[%s3914 + $0x9c] sm:%s3904] %v3993
                %v3995 = vld [vmem:[%s3913 + $0xa0] sm:%s3904]
                %3996 = vst [vmem:[%s3914 + $0xa0] sm:%s3904] %v3995
                %v3997 = vld [vmem:[%s3913 + $0xa4] sm:%s3904]
                %3998 = vst [vmem:[%s3914 + $0xa4] sm:%s3904] %v3997
                %v3999 = vld [vmem:[%s3913 + $0xa8] sm:%s3904]
                %4000 = vst [vmem:[%s3914 + $0xa8] sm:%s3904] %v3999
                %v4001 = vld [vmem:[%s3913 + $0xac] sm:%s3904]
                %4002 = vst [vmem:[%s3914 + $0xac] sm:%s3904] %v4001
                %v4003 = vld [vmem:[%s3913 + $0xb0] sm:%s3904]
                %4004 = vst [vmem:[%s3914 + $0xb0] sm:%s3904] %v4003
                %v4005 = vld [vmem:[%s3913 + $0xb4] sm:%s3904]
                %4006 = vst [vmem:[%s3914 + $0xb4] sm:%s3904] %v4005
                %v4007 = vld [vmem:[%s3913 + $0xb8] sm:%s3904]
                %4008 = vst [vmem:[%s3914 + $0xb8] sm:%s3904] %v4007
                %v4009 = vld [vmem:[%s3913 + $0xbc] sm:%s3904]
                %4010 = vst [vmem:[%s3914 + $0xbc] sm:%s3904] %v4009
                %v4011 = vld [vmem:[%s3913 + $0xc0] sm:%s3904]
                %4012 = vst [vmem:[%s3914 + $0xc0] sm:%s3904] %v4011
                %v4013 = vld [vmem:[%s3913 + $0xc4] sm:%s3904]
                %4014 = vst [vmem:[%s3914 + $0xc4] sm:%s3904] %v4013
                %v4015 = vld [vmem:[%s3913 + $0xc8] sm:%s3904]
                %4016 = vst [vmem:[%s3914 + $0xc8] sm:%s3904] %v4015
                %v4017 = vld [vmem:[%s3913 + $0xcc] sm:%s3904]
                %4018 = vst [vmem:[%s3914 + $0xcc] sm:%s3904] %v4017
                %v4019 = vld [vmem:[%s3913 + $0xd0] sm:%s3904]
                %4020 = vst [vmem:[%s3914 + $0xd0] sm:%s3904] %v4019
                %v4021 = vld [vmem:[%s3913 + $0xd4] sm:%s3904]
                %4022 = vst [vmem:[%s3914 + $0xd4] sm:%s3904] %v4021
                %v4023 = vld [vmem:[%s3913 + $0xd8] sm:%s3904]
                %4024 = vst [vmem:[%s3914 + $0xd8] sm:%s3904] %v4023
                %v4025 = vld [vmem:[%s3913 + $0xdc] sm:%s3904]
                %4026 = vst [vmem:[%s3914 + $0xdc] sm:%s3904] %v4025
                %v4027 = vld [vmem:[%s3913 + $0xe0] sm:%s3904]
                %4028 = vst [vmem:[%s3914 + $0xe0] sm:%s3904] %v4027
                %v4029 = vld [vmem:[%s3913 + $0xe4] sm:%s3904]
                %4030 = vst [vmem:[%s3914 + $0xe4] sm:%s3904] %v4029
                %v4031 = vld [vmem:[%s3913 + $0xe8] sm:%s3904]
                %4032 = vst [vmem:[%s3914 + $0xe8] sm:%s3904] %v4031
                %v4033 = vld [vmem:[%s3913 + $0xec] sm:%s3904]
                %4034 = vst [vmem:[%s3914 + $0xec] sm:%s3904] %v4033
                %v4035 = vld [vmem:[%s3913 + $0xf0] sm:%s3904]
                %4036 = vst [vmem:[%s3914 + $0xf0] sm:%s3904] %v4035
                %v4037 = vld [vmem:[%s3913 + $0xf4] sm:%s3904]
                %4038 = vst [vmem:[%s3914 + $0xf4] sm:%s3904] %v4037
                %v4039 = vld [vmem:[%s3913 + $0xf8] sm:%s3904]
                %4040 = vst [vmem:[%s3914 + $0xf8] sm:%s3904] %v4039
                %v4041 = vld [vmem:[%s3913 + $0xfc] sm:%s3904]
                %4042 = vst [vmem:[%s3914 + $0xfc] sm:%s3904] %v4041
                %s4043 = sadd.s32 1, %s3912
                %p4044 = scmp.ge.s32.totalorder %s4043, %s3905
                %s4045 = scalar_select %p4044, 0, %s4043
                %s4046 = smul.u32 %s4045, 256
                %s4047 = smul.u32 %s4045, 256
                %s4048 = scalar_lea.vmem %s3884, %s4046 [#allocation2]
                %s4049 = scalar_lea.vmem %s3895, %s4047
              $region53: #{cnn_forward.4} parent=47 // loop_footer
                %s3909 = sadd.s32 %s3907, 1
              $region54: #{cnn_forward.4} parent=47 // loop_footer_branch
                %3906 = sbr.rel target = $region50
              $region55: #{cnn_forward.4} parent=47 // loop_exit
                _
              %s4050 = sshrl.u32 %s3891, 6
              %s4051 = sand.u32 %s3891, 63
              %s4052 = smul.u32 %s4050, 64
              %s4053 = smul.u32 4, %s4052
              %s4054 = scalar_lea.vmem %s3884, %s4053 [#allocation2]
              %s4055 = smul.u32 4, %s4052
              %s4056 = scalar_lea.vmem %s3895, %s4055
              // While loop
              $region56: #{cnn_forward.4} parent=47 // loop_pre_header
                _
              $region57: #{cnn_forward.4} parent=47 // loop_header
                %s4058 = sphi 0, %s4060
                %p4059 = scmp.ge.s32.totalorder %s4058, %s4051
                %s4063 = sphi 0, %s4070
                %s4064 = sphi %s4054, %s4073
                %s4065 = sphi %s4056, %s4074
              $region58: #{cnn_forward.4} parent=47 // loop_header_branch
                %4062 = sbr.rel (%p4059) target = $region62
              $region59: #{cnn_forward.4} parent=47 // loop_body
                %v4066 = vld [vmem:[%s4064] sm:%s3904]
                %4067 = vst [vmem:[%s4065] sm:%s3904] %v4066
                %s4068 = sadd.s32 1, %s4063
                %p4069 = scmp.ge.s32.totalorder %s4068, %s4051
                %s4070 = scalar_select %p4069, 0, %s4068
                %s4071 = smul.u32 %s4070, 4
                %s4072 = smul.u32 %s4070, 4
                %s4073 = scalar_lea.vmem %s4054, %s4071 [#allocation2]
                %s4074 = scalar_lea.vmem %s4056, %s4072
              $region60: #{cnn_forward.4} parent=47 // loop_footer
                %s4060 = sadd.s32 %s4058, 1
              $region61: #{cnn_forward.4} parent=47 // loop_footer_branch
                %4057 = sbr.rel target = $region57
              $region62: #{cnn_forward.4} parent=47 // loop_exit
                _
            $region48: #{cnn_forward.4} parent=39 // pred_fallthru
              _
          $region40: #{cnn_forward.4} parent=35 // pred_fallthru
            _
          %4249 = vnop
        $region36: #{cnn_forward.4} parent=31 // pred_fallthru
          _
      $region32: #{cnn_forward.4} parent=5 // pred_fallthru
        _
      %p4250 = scmp.le.s32.totalorder 2, %s9
      // Predicated region
      $region81: #{cnn_forward.4} parent=5 // pred_check
        %p4251 = pneg %p4250
      $region82: #{cnn_forward.4} parent=5 // pred_check_branch
        %4253 = sbr.rel (%p4251) target = $region84
      $region83: #{cnn_forward.4} parent=5 // pred_region
        %s4254 = ssub.s32 %s9, 2
        // Predicated region
        $region85: #{cnn_forward.4} parent=83 // pred_check
          %p4255 = pneg %p106
        $region86: #{cnn_forward.4} parent=83 // pred_check_branch
          %4257 = sbr.rel (%p4255) target = $region88
        $region87: #{cnn_forward.4} parent=83 // pred_region
          %s4258 = sand.u32 %s91, 1
          %s4259 = sand.u32 %s91, 1
          %s4260 = smul.addr %s4259, 1024
          %s4261 = scalar_lea.vmem [#allocation2], %s4260
        $region88: #{cnn_forward.4} parent=83 // pred_fallthru
          _
      $region84: #{cnn_forward.4} parent=5 // pred_fallthru
        _
    $region6: #{cnn_forward.4} parent=1 // loop_footer
      %s13 = sadd.s32 1, %s9
    $region7: #{cnn_forward.4} parent=1 // loop_footer_branch
      %8 = sbr.rel target = $region3
    $region8: #{cnn_forward.4} parent=1 // loop_exit
      _

// kernel: cnn_forward.5
$region0: #{cnn_forward.5}
  #allocation0 [shape = 'u32[]', space=smem, size = 0x4, offset = 0x4, fixed_abs, tag = 'smem constant byte address 0x4 - core index']
  #allocation1 [shape = 'u32[144,128]{1,0:T(1,128)}', space=vmem, size = 0x12000, scoped, tag = 'internal scratch']
  %s0 = inlined_call_operand.vmem [shape: bf16[1458,256], index: 0, kind: input, shape index: {}]
  %s1 = inlined_call_operand.vmem [shape: bf16[256,128], index: 1, kind: input, shape index: {}]
  %s2 = inlined_call_operand.vmem [shape: f32[1,128], index: 2, kind: input, shape index: {}]
  %s3 = inlined_call_operand.vmem [shape: bf16[1458,128], index: 3, kind: output, shape index: {}]
  %s4 = sld [smem:[#allocation0]]
  $region89: #{cnn_forward.5} parent=0
    _
  %s6 = ssub.s32 1, %s4
  %s7 = scalar_select 0, %s6, %s4
  $region1: #{cnn_forward.5} parent=0
    #allocation2 [shape = 'u8[376832]{0}', space=vmem, size = 0x5c000, scoped, tag = 'output window, operand 0']
    loop: start=0, step=1, limit=4
    $region2: #{cnn_forward.5} parent=1 // loop_pre_header
      _
    $region3: #{cnn_forward.5} parent=1 // loop_header
      %s9 = sphi 0, %s13
      %p10 = scmp.ge.s32.totalorder %s9, 4
      %s19 = sphi 0, %s21
      %s22 = sphi 0, %s19
      %s23 = sphi 0, %s22
      %s39 = sphi 0, %s23
      %s43 = sphi 0, %s43
      %s45 = sphi 0, %s43
      %s46 = sphi 0, %s45
      %s60 = sphi 0, %s46
      %s64 = sphi 0, %s64
      %s66 = sphi 0, %s64
      %s67 = sphi 0, %s66
      %s81 = sphi 0, %s67
      %s87 = sphi 0, %s89
      %s90 = sphi 0, %s87
      %s91 = sphi 0, %s90
      %s107 = sphi 0, %s91
    $region4: #{cnn_forward.5} parent=1 // loop_header_branch
      %12 = sbr.rel (%p10) target = $region8
    $region5: #{cnn_forward.5} parent=1 // loop_body
      %s14 = ssub.s32 %s9, 1
      %s15 = ssub.s32 %s9, 2
      %s16 = sadd.s32 %s9, 1
      %s17 = ssub.s32 %s9, %s16
      %p18 = scmp.eq.s32.totalorder %s17, 0
      %s20 = sadd.s32 %s19, 1
      %s21 = scalar_select %p18, %s19, %s20
      %p24 = pneg %p18
      %p25 = scmp.eq.s32.totalorder %s9, 1
      %p26 = por %p24, %p25
      %p27 = scmp.ne.s32.totalorder %s19, %s22
      %p28 = scmp.eq.s32.totalorder %s9, 0
      %p29 = por %p27, %p28
      %p30 = scmp.ne.s32.totalorder %s19, %s22
      %p31 = scmp.eq.s32.totalorder %s14, 1
      %p32 = por %p30, %p31
      %p33 = scmp.ne.s32.totalorder %s22, %s23
      %p34 = scmp.eq.s32.totalorder %s14, 0
      %p35 = por %p33, %p34
      %p36 = scmp.ne.s32.totalorder %s22, %s23
      %p37 = scmp.eq.s32.totalorder %s15, 1
      %p38 = por %p36, %p37
      %p40 = scmp.ne.s32.totalorder %s23, %s39
      %p41 = scmp.eq.s32.totalorder %s15, 0
      %p42 = por %p40, %p41
      %s44 = sadd.s32 %s43, 1
      %p47 = scmp.eq.s32.totalorder %s9, 1
      %p48 = scmp.ne.s32.totalorder %s43, %s45
      %p49 = scmp.eq.s32.totalorder %s9, 0
      %p50 = por %p48, %p49
      %p51 = scmp.ne.s32.totalorder %s43, %s45
      %p52 = scmp.eq.s32.totalorder %s14, 1
      %p53 = por %p51, %p52
      %p54 = scmp.ne.s32.totalorder %s45, %s46
      %p55 = scmp.eq.s32.totalorder %s14, 0
      %p56 = por %p54, %p55
      %p57 = scmp.ne.s32.totalorder %s45, %s46
      %p58 = scmp.eq.s32.totalorder %s15, 1
      %p59 = por %p57, %p58
      %p61 = scmp.ne.s32.totalorder %s46, %s60
      %p62 = scmp.eq.s32.totalorder %s15, 0
      %p63 = por %p61, %p62
      %s65 = sadd.s32 %s64, 1
      %p68 = scmp.eq.s32.totalorder %s9, 1
      %p69 = scmp.ne.s32.totalorder %s64, %s66
      %p70 = scmp.eq.s32.totalorder %s9, 0
      %p71 = por %p69, %p70
      %p72 = scmp.ne.s32.totalorder %s64, %s66
      %p73 = scmp.eq.s32.totalorder %s14, 1
      %p74 = por %p72, %p73
      %p75 = scmp.ne.s32.totalorder %s66, %s67
      %p76 = scmp.eq.s32.totalorder %s14, 0
      %p77 = por %p75, %p76
      %p78 = scmp.ne.s32.totalorder %s66, %s67
      %p79 = scmp.eq.s32.totalorder %s15, 1
      %p80 = por %p78, %p79
      %p82 = scmp.ne.s32.totalorder %s67, %s81
      %p83 = scmp.eq.s32.totalorder %s15, 0
      %p84 = por %p82, %p83
      %s85 = ssub.s32 %s9, %s16
      %p86 = scmp.eq.s32.totalorder %s85, 0
      %s88 = sadd.s32 %s87, 1
      %s89 = scalar_select %p86, %s87, %s88
      %p92 = pneg %p86
      %p93 = scmp.eq.s32.totalorder %s9, 1
      %p94 = por %p92, %p93
      %p95 = scmp.ne.s32.totalorder %s87, %s90
      %p96 = scmp.eq.s32.totalorder %s9, 0
      %p97 = por %p95, %p96
      %p98 = scmp.ne.s32.totalorder %s87, %s90
      %p99 = scmp.eq.s32.totalorder %s14, 1
      %p100 = por %p98, %p99
      %p101 = scmp.ne.s32.totalorder %s90, %s91
      %p102 = scmp.eq.s32.totalorder %s14, 0
      %p103 = por %p101, %p102
      %p104 = scmp.ne.s32.totalorder %s90, %s91
      %p105 = scmp.eq.s32.totalorder %s15, 1
      %p106 = por %p104, %p105
      %p108 = scmp.ne.s32.totalorder %s91, %s107
      %p109 = scmp.eq.s32.totalorder %s15, 0
      %p110 = por %p108, %p109
      %p111 = scmp.le.s32.totalorder 1, %s9
      %p112 = scmp.lt.s32.totalorder %s9, 3
      %p113 = pnand %p111, %p112
      %p114 = pneg %p113
      // Predicated region
      $region9: #{cnn_forward.5} parent=5 // pred_check
        _
      $region10: #{cnn_forward.5} parent=5 // pred_check_branch
        %116 = sbr.rel (%p113) target = $region12
      $region11: #{cnn_forward.5} parent=5 // pred_region
        %s117 = ssub.s32 %s9, 1
        // Predicated region
        $region13: #{cnn_forward.5} parent=11 // pred_check
          %p118 = pneg %p56
        $region14: #{cnn_forward.5} parent=11 // pred_check_branch
          %120 = sbr.rel (%p118) target = $region16
        $region15: #{cnn_forward.5} parent=11 // pred_region
          _
        $region16: #{cnn_forward.5} parent=11 // pred_fallthru
          _
        // Predicated region
        $region17: #{cnn_forward.5} parent=11 // pred_check
          %p121 = pneg %p77
        $region18: #{cnn_forward.5} parent=11 // pred_check_branch
          %123 = sbr.rel (%p121) target = $region20
        $region19: #{cnn_forward.5} parent=11 // pred_region
          _
        $region20: #{cnn_forward.5} parent=11 // pred_fallthru
          _
      $region12: #{cnn_forward.5} parent=5 // pred_fallthru
        _
      %p124 = scmp.lt.s32.totalorder %s9, 2
      // Predicated region
      $region21: #{cnn_forward.5} parent=5 // pred_check
        %p125 = pneg %p124
      $region22: #{cnn_forward.5} parent=5 // pred_check_branch
        %127 = sbr.rel (%p125) target = $region24
      $region23: #{cnn_forward.5} parent=5 // pred_region
        // Predicated region
        $region25: #{cnn_forward.5} parent=23 // pred_check
          %p128 = pneg %p29
        $region26: #{cnn_forward.5} parent=23 // pred_check_branch
          %130 = sbr.rel (%p128) target = $region28
        $region27: #{cnn_forward.5} parent=23 // pred_region
          %s131 = smul.u32 92, %s9
          %s132 = ssub.s32 183, %s131
          %p133 = scmp.lt.s32.totalorder %s132, 92
          %s134 = scalar_select %p133, %s132, 92
          %s135 = smul.u32 64, %s134
          %s136 = smul.u32 %s135, 2
          %p137 = scmp.lt.s32.totalorder %s131, 182
          %s138 = scalar_select %p137, %s131, 182
          %s139 = smul.addr %s138, 2
          %s140 = smul.addr %s139, 4
          %s141 = scalar_lea.vmem %s0, %s140
          %s142 = smul.u32 92, %s9
          %s143 = ssub.s32 183, %s142
          %p144 = scmp.lt.s32.totalorder %s143, 92
          %s145 = scalar_select %p144, %s143, 92
          %s146 = smul.u32 64, %s145
          %s147 = smul.u32 %s146, 2
        $region28: #{cnn_forward.5} parent=23 // pred_fallthru
          _
      $region24: #{cnn_forward.5} parent=5 // pred_fallthru
        _
      %p148 = scmp.le.s32.totalorder 1, %s9
      %p149 = scmp.lt.s32.totalorder %s9, 3
      %p150 = pnand %p148, %p149
      %p151 = pneg %p150
      // Predicated region
      $region29: #{cnn_forward.5} parent=5 // pred_check
        _
      $region30: #{cnn_forward.5} parent=5 // pred_check_branch
        %153 = sbr.rel (%p150) target = $region32
      $region31: #{cnn_forward.5} parent=5 // pred_region
        %s154 = ssub.s32 %s9, 1
        %s155 = smul.u32 92, %s14
        %s156 = ssub.s32 183, %s155
        %p157 = scmp.lt.s32.totalorder %s156, 92
        %s158 = scalar_select %p157, %s156, 92
        %s159 = smul.u32 64, %s158
        %s160 = smul.u32 %s159, 2
        %p161 = scmp.lt.s32.totalorder %s155, 182
        %s162 = scalar_select %p161, %s155, 182
        %s163 = smul.addr %s162, 2
        %s164 = smul.addr %s163, 4
        %s165 = scalar_lea.vmem %s0, %s164
        %p166 = pneg %p35
        %p167 = pneg %p32
        %p168 = pneg %p56
        %p169 = pneg %p53
        %p170 = pneg %p77
        %p171 = pneg %p74
        %p172 = pneg %p103
        %p173 = pneg %p100
        %s174 = sand.u32 %s90, 1
        %s175 = sand.u32 %s90, 1
        %s176 = smul.addr %s175, 368
        %s177 = scalar_lea.vmem [#allocation2], %s176
        %s178 = smul.u32 92, %s14
        %s179 = ssub.s32 183, %s178
        %p180 = scmp.lt.s32.totalorder %s179, 92
        %s181 = scalar_select %p180, %s179, 92
        %s182 = smul.u32 64, %s181
        %s183 = smul.u32 %s182, 2
        %p184 = scmp.lt.s32.totalorder %s178, 182
        %s185 = scalar_select %p184, %s178, 182
        %s186 = smul.addr %s185, 2
        %s187 = smul.addr %s186, 4
        %s188 = scalar_lea.vmem %s0, %s187
        %s189 = smul.u32 92, %s14
        %s190 = ssub.s32 183, %s189
        %p191 = scmp.lt.s32.totalorder %s190, 92
        %s192 = scalar_select %p191, %s190, 92
        %s193 = smul.u32 64, %s192
        %s194 = smul.u32 %s193, 2
        %s195 = smul.u32 92, %s14
        %s196 = ssub.s32 183, %s195
        %p197 = scmp.lt.s32.totalorder %s196, 92
        %s198 = scalar_select %p197, %s196, 92
        %s199 = smul.u32 64, %s198
        %v201 = vld [vmem:[%s188] sm:$0xff]
        %v202 = vld [vmem:[%s188 + $0x8] sm:$0xff]
        %v203 = vld [vmem:[%s188 + $0x10] sm:$0xff]
        %v204 = vld [vmem:[%s188 + $0x18] sm:$0xff]
        %v205 = vld [vmem:[%s188 + $0x20] sm:$0xff]
        %v206 = vld [vmem:[%s188 + $0x28] sm:$0xff]
        %v207 = vld [vmem:[%s188 + $0x30] sm:$0xff]
        %v208 = vld [vmem:[%s188 + $0x38] sm:$0xff]
        %v209 = vld [vmem:[%s188 + $0x40] sm:$0xff]
        %v210 = vld [vmem:[%s188 + $0x48] sm:$0xff]
        %v211 = vld [vmem:[%s188 + $0x50] sm:$0xff]
        %v212 = vld [vmem:[%s188 + $0x58] sm:$0xff]
        %v213 = vld [vmem:[%s188 + $0x60] sm:$0xff]
        %v214 = vld [vmem:[%s188 + $0x68] sm:$0xff]
        %v215 = vld [vmem:[%s188 + $0x70] sm:$0xff]
        %v216 = vld [vmem:[%s188 + $0x78] sm:$0xff]
        %v217 = vld [vmem:[%s188 + $0x80] sm:$0xff]
        %v218 = vld [vmem:[%s188 + $0x88] sm:$0xff]
        %v219 = vld [vmem:[%s188 + $0x90] sm:$0xff]
        %v220 = vld [vmem:[%s188 + $0x98] sm:$0xff]
        %v221 = vld [vmem:[%s188 + $0xa0] sm:$0xff]
        %v222 = vld [vmem:[%s188 + $0xa8] sm:$0xff]
        %v223 = vld [vmem:[%s188 + $0xb0] sm:$0xff]
        %v224 = vld [vmem:[%s188 + $0xb8] sm:$0xff]
        %v225 = vld [vmem:[%s188 + $0xc0] sm:$0xff]
        %v226 = vld [vmem:[%s188 + $0xc8] sm:$0xff]
        %v227 = vld [vmem:[%s188 + $0xd0] sm:$0xff]
        %v228 = vld [vmem:[%s188 + $0xd8] sm:$0xff]
        %v229 = vld [vmem:[%s188 + $0xe0] sm:$0xff]
        %v230 = vld [vmem:[%s188 + $0xe8] sm:$0xff]
        %v231 = vld [vmem:[%s188 + $0xf0] sm:$0xff]
        %v232 = vld [vmem:[%s188 + $0xf8] sm:$0xff]
        %v233 = vld [vmem:[%s188 + $0x100] sm:$0xff]
        %v234 = vld [vmem:[%s188 + $0x108] sm:$0xff]
        %v235 = vld [vmem:[%s188 + $0x110] sm:$0xff]
        %v236 = vld [vmem:[%s188 + $0x118] sm:$0xff]
        %v237 = vld [vmem:[%s188 + $0x120] sm:$0xff]
        %v238 = vld [vmem:[%s188 + $0x128] sm:$0xff]
        %v239 = vld [vmem:[%s188 + $0x130] sm:$0xff]
        %v240 = vld [vmem:[%s188 + $0x138] sm:$0xff]
        %v241 = vld [vmem:[%s188 + $0x140] sm:$0xff]
        %v242 = vld [vmem:[%s188 + $0x148] sm:$0xff]
        %v243 = vld [vmem:[%s188 + $0x150] sm:$0xff]
        %v244 = vld [vmem:[%s188 + $0x158] sm:$0xff]
        %v245 = vld [vmem:[%s188 + $0x160] sm:$0xff]
        %v246 = vld [vmem:[%s188 + $0x168] sm:$0xff]
        %v247 = vld [vmem:[%s188 + $0x170] sm:$0xff]
        %v248 = vld [vmem:[%s188 + $0x178] sm:$0xff]
        %v249 = vld [vmem:[%s188 + $0x180] sm:$0xff]
        %v250 = vld [vmem:[%s188 + $0x188] sm:$0xff]
        %v251 = vld [vmem:[%s188 + $0x190] sm:$0xff]
        %v252 = vld [vmem:[%s188 + $0x198] sm:$0xff]
        %v253 = vld [vmem:[%s188 + $0x1a0] sm:$0xff]
        %v254 = vld [vmem:[%s188 + $0x1a8] sm:$0xff]
        %v255 = vld [vmem:[%s188 + $0x1b0] sm:$0xff]
        %v256 = vld [vmem:[%s188 + $0x1b8] sm:$0xff]
        %v257 = vld [vmem:[%s188 + $0x1c0] sm:$0xff]
        %v258 = vld [vmem:[%s188 + $0x1c8] sm:$0xff]
        %v259 = vld [vmem:[%s188 + $0x1d0] sm:$0xff]
        %v260 = vld [vmem:[%s188 + $0x1d8] sm:$0xff]
        %v261 = vld [vmem:[%s188 + $0x1e0] sm:$0xff]
        %v262 = vld [vmem:[%s188 + $0x1e8] sm:$0xff]
        %v263 = vld [vmem:[%s188 + $0x1f0] sm:$0xff]
        %v264 = vld [vmem:[%s188 + $0x1f8] sm:$0xff]
        %v265 = vld [vmem:[%s188 + $0x200] sm:$0xff]
        %v266 = vld [vmem:[%s188 + $0x208] sm:$0xff]
        %v267 = vld [vmem:[%s188 + $0x210] sm:$0xff]
        %v268 = vld [vmem:[%s188 + $0x218] sm:$0xff]
        %v269 = vld [vmem:[%s188 + $0x220] sm:$0xff]
        %v270 = vld [vmem:[%s188 + $0x228] sm:$0xff]
        %v271 = vld [vmem:[%s188 + $0x230] sm:$0xff]
        %v272 = vld [vmem:[%s188 + $0x238] sm:$0xff]
        %v273 = vld [vmem:[%s188 + $0x240] sm:$0xff]
        %v274 = vld [vmem:[%s188 + $0x248] sm:$0xff]
        %v275 = vld [vmem:[%s188 + $0x250] sm:$0xff]
        %v276 = vld [vmem:[%s188 + $0x258] sm:$0xff]
        %v277 = vld [vmem:[%s188 + $0x260] sm:$0xff]
        %v278 = vld [vmem:[%s188 + $0x268] sm:$0xff]
        %v279 = vld [vmem:[%s188 + $0x270] sm:$0xff]
        %v280 = vld [vmem:[%s188 + $0x278] sm:$0xff]
        %v281 = vld [vmem:[%s188 + $0x280] sm:$0xff]
        %v282 = vld [vmem:[%s188 + $0x288] sm:$0xff]
        %v283 = vld [vmem:[%s188 + $0x290] sm:$0xff]
        %v284 = vld [vmem:[%s188 + $0x298] sm:$0xff]
        %v285 = vld [vmem:[%s188 + $0x2a0] sm:$0xff]
        %v286 = vld [vmem:[%s188 + $0x2a8] sm:$0xff]
        %v287 = vld [vmem:[%s188 + $0x2b0] sm:$0xff]
        %v288 = vld [vmem:[%s188 + $0x2b8] sm:$0xff]
        %v289 = vld [vmem:[%s188 + $0x2c0] sm:$0xff]
        %v290 = vld [vmem:[%s188 + $0x2c8] sm:$0xff]
        %v291 = vld [vmem:[%s188 + $0x2d0] sm:$0xff]
        %v292 = vld [vmem:[%s188 + $0x2d8] sm:$0xff]
        %v293 = vld [vmem:[%s1] sm:$0xf]
        %v294 = vld [vmem:[%s1 + $0x4] sm:$0xf]
        %v295 = vld [vmem:[%s1 + $0x8] sm:$0xf]
        %v296 = vld [vmem:[%s1 + $0xc] sm:$0xf]
        %v297 = vld [vmem:[%s1 + $0x10] sm:$0xf]
        %v298 = vld [vmem:[%s1 + $0x14] sm:$0xf]
        %v299 = vld [vmem:[%s1 + $0x18] sm:$0xf]
        %v300 = vld [vmem:[%s1 + $0x1c] sm:$0xf]
        %v301 = vld [vmem:[%s1 + $0x20] sm:$0xf]
        %v302 = vld [vmem:[%s1 + $0x24] sm:$0xf]
        %v303 = vld [vmem:[%s1 + $0x28] sm:$0xf]
        %v304 = vld [vmem:[%s1 + $0x2c] sm:$0xf]
        %v305 = vld [vmem:[%s1 + $0x30] sm:$0xf]
        %v306 = vld [vmem:[%s1 + $0x34] sm:$0xf]
        %v307 = vld [vmem:[%s1 + $0x38] sm:$0xf]
        %v308 = vld [vmem:[%s1 + $0x3c] sm:$0xf]
        %v309 = vld [vmem:[%s1 + $0x40] sm:$0xf]
        %v310 = vld [vmem:[%s1 + $0x44] sm:$0xf]
        %v311 = vld [vmem:[%s1 + $0x48] sm:$0xf]
        %v312 = vld [vmem:[%s1 + $0x4c] sm:$0xf]
        %v313 = vld [vmem:[%s1 + $0x50] sm:$0xf]
        %v314 = vld [vmem:[%s1 + $0x54] sm:$0xf]
        %v315 = vld [vmem:[%s1 + $0x58] sm:$0xf]
        %v316 = vld [vmem:[%s1 + $0x5c] sm:$0xf]
        %v317 = vld [vmem:[%s1 + $0x60] sm:$0xf]
        %v318 = vld [vmem:[%s1 + $0x64] sm:$0xf]
        %v319 = vld [vmem:[%s1 + $0x68] sm:$0xf]
        %v320 = vld [vmem:[%s1 + $0x6c] sm:$0xf]
        %v321 = vld [vmem:[%s1 + $0x70] sm:$0xf]
        %v322 = vld [vmem:[%s1 + $0x74] sm:$0xf]
        %v323 = vld [vmem:[%s1 + $0x78] sm:$0xf]
        %v324 = vld [vmem:[%s1 + $0x7c] sm:$0xf]
        %v325 = vld [vmem:[%s2] sm:$0x1]
        %v327 = vlaneseq
        %v328 = vshrl.u32 %v327, 7
        %v329 = vsub.s32 0, %v328
        %v330 = vrot.slane %v325, %v329
        %v424 = vunpack.c.l.b16 %v201
        %v425 = vunpack.c.h.b16 %v201
        %v426 = vunpack.c.l.b16 %v202
        %v427 = vunpack.c.h.b16 %v202
        %v428 = vunpack.c.l.b16 %v203
        %v429 = vunpack.c.h.b16 %v203
        %v430 = vunpack.c.l.b16 %v204
        %v431 = vunpack.c.h.b16 %v204
        %v432 = vunpack.c.l.b16 %v205
        %v433 = vunpack.c.h.b16 %v205
        %v434 = vunpack.c.l.b16 %v206
        %v435 = vunpack.c.h.b16 %v206
        %v436 = vunpack.c.l.b16 %v207
        %v437 = vunpack.c.h.b16 %v207
        %v438 = vunpack.c.l.b16 %v208
        %v439 = vunpack.c.h.b16 %v208
        %v440 = vunpack.c.l.b16 %v209
        %v441 = vunpack.c.h.b16 %v209
        %v442 = vunpack.c.l.b16 %v210
        %v443 = vunpack.c.h.b16 %v210
        %v444 = vunpack.c.l.b16 %v211
        %v445 = vunpack.c.h.b16 %v211
        %v446 = vunpack.c.l.b16 %v212
        %v447 = vunpack.c.h.b16 %v212
        %v448 = vunpack.c.l.b16 %v213
        %v449 = vunpack.c.h.b16 %v213
        %v450 = vunpack.c.l.b16 %v214
        %v451 = vunpack.c.h.b16 %v214
        %v452 = vunpack.c.l.b16 %v215
        %v453 = vunpack.c.h.b16 %v215
        %v454 = vunpack.c.l.b16 %v216
        %v455 = vunpack.c.h.b16 %v216
        %v456 = vunpack.c.l.b16 %v217
        %v457 = vunpack.c.h.b16 %v217
        %v458 = vunpack.c.l.b16 %v218
        %v459 = vunpack.c.h.b16 %v218
        %v460 = vunpack.c.l.b16 %v219
        %v461 = vunpack.c.h.b16 %v219
        %v462 = vunpack.c.l.b16 %v220
        %v463 = vunpack.c.h.b16 %v220
        %v464 = vunpack.c.l.b16 %v221
        %v465 = vunpack.c.h.b16 %v221
        %v466 = vunpack.c.l.b16 %v222
        %v467 = vunpack.c.h.b16 %v222
        %v468 = vunpack.c.l.b16 %v223
        %v469 = vunpack.c.h.b16 %v223
        %v470 = vunpack.c.l.b16 %v224
        %v471 = vunpack.c.h.b16 %v224
        %v472 = vunpack.c.l.b16 %v225
        %v473 = vunpack.c.h.b16 %v225
        %v474 = vunpack.c.l.b16 %v226
        %v475 = vunpack.c.h.b16 %v226
        %v476 = vunpack.c.l.b16 %v227
        %v477 = vunpack.c.h.b16 %v227
        %v478 = vunpack.c.l.b16 %v228
        %v479 = vunpack.c.h.b16 %v228
        %v480 = vunpack.c.l.b16 %v229
        %v481 = vunpack.c.h.b16 %v229
        %v482 = vunpack.c.l.b16 %v230
        %v483 = vunpack.c.h.b16 %v230
        %v484 = vunpack.c.l.b16 %v231
        %v485 = vunpack.c.h.b16 %v231
        %v486 = vunpack.c.l.b16 %v232
        %v487 = vunpack.c.h.b16 %v232
        %v488 = vunpack.c.l.b16 %v233
        %v489 = vunpack.c.h.b16 %v233
        %v490 = vunpack.c.l.b16 %v234
        %v491 = vunpack.c.h.b16 %v234
        %v492 = vunpack.c.l.b16 %v235
        %v493 = vunpack.c.h.b16 %v235
        %v494 = vunpack.c.l.b16 %v236
        %v495 = vunpack.c.h.b16 %v236
        %v496 = vunpack.c.l.b16 %v237
        %v497 = vunpack.c.h.b16 %v237
        %v498 = vunpack.c.l.b16 %v238
        %v499 = vunpack.c.h.b16 %v238
        %v500 = vunpack.c.l.b16 %v239
        %v501 = vunpack.c.h.b16 %v239
        %v502 = vunpack.c.l.b16 %v240
        %v503 = vunpack.c.h.b16 %v240
        %v504 = vunpack.c.l.b16 %v241
        %v505 = vunpack.c.h.b16 %v241
        %v506 = vunpack.c.l.b16 %v242
        %v507 = vunpack.c.h.b16 %v242
        %v508 = vunpack.c.l.b16 %v243
        %v509 = vunpack.c.h.b16 %v243
        %v510 = vunpack.c.l.b16 %v244
        %v511 = vunpack.c.h.b16 %v244
        %v512 = vunpack.c.l.b16 %v245
        %v513 = vunpack.c.h.b16 %v245
        %v514 = vunpack.c.l.b16 %v246
        %v515 = vunpack.c.h.b16 %v246
        %v516 = vunpack.c.l.b16 %v247
        %v517 = vunpack.c.h.b16 %v247
        %v518 = vunpack.c.l.b16 %v248
        %v519 = vunpack.c.h.b16 %v248
        %v520 = vunpack.c.l.b16 %v249
        %v521 = vunpack.c.h.b16 %v249
        %v522 = vunpack.c.l.b16 %v250
        %v523 = vunpack.c.h.b16 %v250
        %v524 = vunpack.c.l.b16 %v251
        %v525 = vunpack.c.h.b16 %v251
        %v526 = vunpack.c.l.b16 %v252
        %v527 = vunpack.c.h.b16 %v252
        %v528 = vunpack.c.l.b16 %v253
        %v529 = vunpack.c.h.b16 %v253
        %v530 = vunpack.c.l.b16 %v254
        %v531 = vunpack.c.h.b16 %v254
        %v532 = vunpack.c.l.b16 %v255
        %v533 = vunpack.c.h.b16 %v255
        %v534 = vunpack.c.l.b16 %v256
        %v535 = vunpack.c.h.b16 %v256
        %v536 = vunpack.c.l.b16 %v257
        %v537 = vunpack.c.h.b16 %v257
        %v538 = vunpack.c.l.b16 %v258
        %v539 = vunpack.c.h.b16 %v258
        %v540 = vunpack.c.l.b16 %v259
        %v541 = vunpack.c.h.b16 %v259
        %v542 = vunpack.c.l.b16 %v260
        %v543 = vunpack.c.h.b16 %v260
        %v544 = vunpack.c.l.b16 %v261
        %v545 = vunpack.c.h.b16 %v261
        %v546 = vunpack.c.l.b16 %v262
        %v547 = vunpack.c.h.b16 %v262
        %v548 = vunpack.c.l.b16 %v263
        %v549 = vunpack.c.h.b16 %v263
        %v550 = vunpack.c.l.b16 %v264
        %v551 = vunpack.c.h.b16 %v264
        %v552 = vunpack.c.l.b16 %v265
        %v553 = vunpack.c.h.b16 %v265
        %v554 = vunpack.c.l.b16 %v266
        %v555 = vunpack.c.h.b16 %v266
        %v556 = vunpack.c.l.b16 %v267
        %v557 = vunpack.c.h.b16 %v267
        %v558 = vunpack.c.l.b16 %v268
        %v559 = vunpack.c.h.b16 %v268
        %v560 = vunpack.c.l.b16 %v269
        %v561 = vunpack.c.h.b16 %v269
        %v562 = vunpack.c.l.b16 %v270
        %v563 = vunpack.c.h.b16 %v270
        %v564 = vunpack.c.l.b16 %v271
        %v565 = vunpack.c.h.b16 %v271
        %v566 = vunpack.c.l.b16 %v272
        %v567 = vunpack.c.h.b16 %v272
        %v568 = vunpack.c.l.b16 %v273
        %v569 = vunpack.c.h.b16 %v273
        %v570 = vunpack.c.l.b16 %v274
        %v571 = vunpack.c.h.b16 %v274
        %v572 = vunpack.c.l.b16 %v275
        %v573 = vunpack.c.h.b16 %v275
        %v574 = vunpack.c.l.b16 %v276
        %v575 = vunpack.c.h.b16 %v276
        %v576 = vunpack.c.l.b16 %v277
        %v577 = vunpack.c.h.b16 %v277
        %v578 = vunpack.c.l.b16 %v278
        %v579 = vunpack.c.h.b16 %v278
        %v580 = vunpack.c.l.b16 %v279
        %v581 = vunpack.c.h.b16 %v279
        %v582 = vunpack.c.l.b16 %v280
        %v583 = vunpack.c.h.b16 %v280
        %v584 = vunpack.c.l.b16 %v281
        %v585 = vunpack.c.h.b16 %v281
        %v586 = vunpack.c.l.b16 %v282
        %v587 = vunpack.c.h.b16 %v282
        %v588 = vunpack.c.l.b16 %v283
        %v589 = vunpack.c.h.b16 %v283
        %v590 = vunpack.c.l.b16 %v284
        %v591 = vunpack.c.h.b16 %v284
        %v592 = vunpack.c.l.b16 %v285
        %v593 = vunpack.c.h.b16 %v285
        %v594 = vunpack.c.l.b16 %v286
        %v595 = vunpack.c.h.b16 %v286
        %v596 = vunpack.c.l.b16 %v287
        %v597 = vunpack.c.h.b16 %v287
        %v598 = vunpack.c.l.b16 %v288
        %v599 = vunpack.c.h.b16 %v288
        %v600 = vunpack.c.l.b16 %v289
        %v601 = vunpack.c.h.b16 %v289
        %v602 = vunpack.c.l.b16 %v290
        %v603 = vunpack.c.h.b16 %v290
        %v604 = vunpack.c.l.b16 %v291
        %v605 = vunpack.c.h.b16 %v291
        %v606 = vunpack.c.l.b16 %v292
        %v607 = vunpack.c.h.b16 %v292
        %v608 = vpack.c.b16 %v426, %v424
        %v609 = vpack.c.b16 %v427, %v425
        %v610 = vpack.c.b16 %v430, %v428
        %v611 = vpack.c.b16 %v431, %v429
        %v612 = vpack.c.b16 %v434, %v432
        %v613 = vpack.c.b16 %v435, %v433
        %v614 = vpack.c.b16 %v438, %v436
        %v615 = vpack.c.b16 %v439, %v437
        %v616 = vpack.c.b16 %v442, %v440
        %v617 = vpack.c.b16 %v443, %v441
        %v618 = vpack.c.b16 %v446, %v444
        %v619 = vpack.c.b16 %v447, %v445
        %v620 = vpack.c.b16 %v450, %v448
        %v621 = vpack.c.b16 %v451, %v449
        %v622 = vpack.c.b16 %v454, %v452
        %v623 = vpack.c.b16 %v455, %v453
        %v624 = vpack.c.b16 %v458, %v456
        %v625 = vpack.c.b16 %v459, %v457
        %v626 = vpack.c.b16 %v462, %v460
        %v627 = vpack.c.b16 %v463, %v461
        %v628 = vpack.c.b16 %v466, %v464
        %v629 = vpack.c.b16 %v467, %v465
        %v630 = vpack.c.b16 %v470, %v468
        %v631 = vpack.c.b16 %v471, %v469
        %v632 = vpack.c.b16 %v474, %v472
        %v633 = vpack.c.b16 %v475, %v473
        %v634 = vpack.c.b16 %v478, %v476
        %v635 = vpack.c.b16 %v479, %v477
        %v636 = vpack.c.b16 %v482, %v480
        %v637 = vpack.c.b16 %v483, %v481
        %v638 = vpack.c.b16 %v486, %v484
        %v639 = vpack.c.b16 %v487, %v485
        %v640 = vpack.c.b16 %v490, %v488
        %v641 = vpack.c.b16 %v491, %v489
        %v642 = vpack.c.b16 %v494, %v492
        %v643 = vpack.c.b16 %v495, %v493
        %v644 = vpack.c.b16 %v498, %v496
        %v645 = vpack.c.b16 %v499, %v497
        %v646 = vpack.c.b16 %v502, %v500
        %v647 = vpack.c.b16 %v503, %v501
        %v648 = vpack.c.b16 %v506, %v504
        %v649 = vpack.c.b16 %v507, %v505
        %v650 = vpack.c.b16 %v510, %v508
        %v651 = vpack.c.b16 %v511, %v509
        %v652 = vpack.c.b16 %v514, %v512
        %v653 = vpack.c.b16 %v515, %v513
        %v654 = vpack.c.b16 %v518, %v516
        %v655 = vpack.c.b16 %v519, %v517
        %v656 = vpack.c.b16 %v522, %v520
        %v657 = vpack.c.b16 %v523, %v521
        %v658 = vpack.c.b16 %v526, %v524
        %v659 = vpack.c.b16 %v527, %v525
        %v660 = vpack.c.b16 %v530, %v528
        %v661 = vpack.c.b16 %v531, %v529
        %v662 = vpack.c.b16 %v534, %v532
        %v663 = vpack.c.b16 %v535, %v533
        %v664 = vpack.c.b16 %v538, %v536
        %v665 = vpack.c.b16 %v539, %v537
        %v666 = vpack.c.b16 %v542, %v540
        %v667 = vpack.c.b16 %v543, %v541
        %v668 = vpack.c.b16 %v546, %v544
        %v669 = vpack.c.b16 %v547, %v545
        %v670 = vpack.c.b16 %v550, %v548
        %v671 = vpack.c.b16 %v551, %v549
        %v672 = vpack.c.b16 %v554, %v552
        %v673 = vpack.c.b16 %v555, %v553
        %v674 = vpack.c.b16 %v558, %v556
        %v675 = vpack.c.b16 %v559, %v557
        %v676 = vpack.c.b16 %v562, %v560
        %v677 = vpack.c.b16 %v563, %v561
        %v678 = vpack.c.b16 %v566, %v564
        %v679 = vpack.c.b16 %v567, %v565
        %v680 = vpack.c.b16 %v570, %v568
        %v681 = vpack.c.b16 %v571, %v569
        %v682 = vpack.c.b16 %v574, %v572
        %v683 = vpack.c.b16 %v575, %v573
        %v684 = vpack.c.b16 %v578, %v576
        %v685 = vpack.c.b16 %v579, %v577
        %v686 = vpack.c.b16 %v582, %v580
        %v687 = vpack.c.b16 %v583, %v581
        %v688 = vpack.c.b16 %v586, %v584
        %v689 = vpack.c.b16 %v587, %v585
        %v690 = vpack.c.b16 %v590, %v588
        %v691 = vpack.c.b16 %v591, %v589
        %v692 = vpack.c.b16 %v594, %v592
        %v693 = vpack.c.b16 %v595, %v593
        %v694 = vpack.c.b16 %v598, %v596
        %v695 = vpack.c.b16 %v599, %v597
        %v696 = vpack.c.b16 %v602, %v600
        %v697 = vpack.c.b16 %v603, %v601
        %v698 = vpack.c.b16 %v606, %v604
        %v699 = vpack.c.b16 %v607, %v605
        %v824 = vunpack.c.l.b16 %v293
        %v825 = vunpack.c.l.b16 %v294
        %v826 = vunpack.c.l.b16 %v295
        %v827 = vunpack.c.l.b16 %v296
        %v828 = vunpack.c.l.b16 %v297
        %v829 = vunpack.c.l.b16 %v298
        %v830 = vunpack.c.l.b16 %v299
        %v831 = vunpack.c.l.b16 %v300
        %v832 = vunpack.c.l.b16 %v301
        %v833 = vunpack.c.l.b16 %v302
        %v834 = vunpack.c.l.b16 %v303
        %v835 = vunpack.c.l.b16 %v304
        %v836 = vunpack.c.l.b16 %v305
        %v837 = vunpack.c.l.b16 %v306
        %v838 = vunpack.c.l.b16 %v307
        %v839 = vunpack.c.l.b16 %v308
        %v840 = vunpack.c.l.b16 %v309
        %v841 = vunpack.c.l.b16 %v310
        %v842 = vunpack.c.l.b16 %v311
        %v843 = vunpack.c.l.b16 %v312
        %v844 = vunpack.c.l.b16 %v313
        %v845 = vunpack.c.l.b16 %v314
        %v846 = vunpack.c.l.b16 %v315
        %v847 = vunpack.c.l.b16 %v316
        %v848 = vunpack.c.l.b16 %v317
        %v849 = vunpack.c.l.b16 %v318
        %v850 = vunpack.c.l.b16 %v319
        %v851 = vunpack.c.l.b16 %v320
        %v852 = vunpack.c.l.b16 %v321
        %v853 = vunpack.c.l.b16 %v322
        %v854 = vunpack.c.l.b16 %v323
        %v855 = vunpack.c.l.b16 %v324
        %v856 = vpack.c.b16 %v825, %v824
        %v857 = vpack.c.b16 %v827, %v826
        %v858 = vpack.c.b16 %v829, %v828
        %v859 = vpack.c.b16 %v831, %v830
        %v860 = vpack.c.b16 %v833, %v832
        %v861 = vpack.c.b16 %v835, %v834
        %v862 = vpack.c.b16 %v837, %v836
        %v863 = vpack.c.b16 %v839, %v838
        %v864 = vpack.c.b16 %v841, %v840
        %v865 = vpack.c.b16 %v843, %v842
        %v866 = vpack.c.b16 %v845, %v844
        %v867 = vpack.c.b16 %v847, %v846
        %v868 = vpack.c.b16 %v849, %v848
        %v869 = vpack.c.b16 %v851, %v850
        %v870 = vpack.c.b16 %v853, %v852
        %v871 = vpack.c.b16 %v855, %v854
        %888 = vmatprep.subr.bf16.mxu0 0
        %889 = vmatpush1.bf16.msra.mxu0 %v863
        %890 = vmatprep.subr.bf16.mxu0 0
        %891 = vmatpush1.bf16.msra.mxu0 %v862
        %892 = vmatprep.subr.bf16.mxu0 0
        %893 = vmatpush1.bf16.msra.mxu0 %v861
        %894 = vmatprep.subr.bf16.mxu0 0
        %895 = vmatpush1.bf16.msra.mxu0 %v860
        %896 = vmatprep.subr.bf16.mxu0 0
        %897 = vmatpush1.bf16.msra.mxu0 %v859
        %898 = vmatprep.subr.bf16.mxu0 0
        %899 = vmatpush1.bf16.msra.mxu0 %v858
        %900 = vmatprep.subr.bf16.mxu0 0
        %901 = vmatpush1.bf16.msra.mxu0 %v857
        %902 = vmatprep.subr.bf16.mxu0 0
        %903 = vmatpush1.bf16.msra.mxu0 %v856
        %904 = vmatprep.subr.bf16.mxu0 0
        %905 = vmatpush2.bf16.msra.mxu0 %v871
        %906 = vmatprep.subr.bf16.mxu0 0
        %907 = vmatpush2.bf16.msra.mxu0 %v870
        %908 = vmatprep.subr.bf16.mxu0 0
        %909 = vmatpush2.bf16.msra.mxu0 %v869
        %910 = vmatprep.subr.bf16.mxu0 0
        %911 = vmatpush2.bf16.msra.mxu0 %v868
        %912 = vmatprep.subr.bf16.mxu0 0
        %913 = vmatpush2.bf16.msra.mxu0 %v867
        %914 = vmatprep.subr.bf16.mxu0 0
        %915 = vmatpush2.bf16.msra.mxu0 %v866
        %916 = vmatprep.subr.bf16.mxu0 0
        %917 = vmatpush2.bf16.msra.mxu0 %v865
        %918 = vmatprep.subr.bf16.mxu0 0
        %919 = vmatpush2.bf16.msra.mxu0 %v864
        %920 = vmatprep.mubr.bf16.mxu0 %v609
        %921 = vmatmul.mubr.bf16.gmra.mxu0 %v608
        %v922 = vpop.f32.mrf.mxu0
        %v923 = vadd.f32 %v330, %v922
        %v924 = vpop.f32.mrf.mxu0
        %v925 = vpop.f32.mrf.mxu0
        %v926 = vadd.f32 %v330, %v925
        %v927 = vpop.f32.mrf.mxu0
        %928 = vmatprep.mubr.bf16.mxu0 %v611
        %929 = vmatmul.mubr.bf16.gmra.mxu0 %v610
        %v930 = vpop.f32.mrf.mxu0
        %v931 = vadd.f32 %v330, %v930
        %v932 = vpop.f32.mrf.mxu0
        %v933 = vpop.f32.mrf.mxu0
        %v934 = vadd.f32 %v330, %v933
        %v935 = vpop.f32.mrf.mxu0
        %936 = vmatprep.mubr.bf16.mxu0 %v613
        %937 = vmatmul.mubr.bf16.gmra.mxu0 %v612
        %v938 = vpop.f32.mrf.mxu0
        %v939 = vadd.f32 %v330, %v938
        %v940 = vpop.f32.mrf.mxu0
        %v941 = vpop.f32.mrf.mxu0
        %v942 = vadd.f32 %v330, %v941
        %v943 = vpop.f32.mrf.mxu0
        %944 = vmatprep.mubr.bf16.mxu0 %v615
        %945 = vmatmul.mubr.bf16.gmra.mxu0 %v614
        %v946 = vpop.f32.mrf.mxu0
        %v947 = vadd.f32 %v330, %v946
        %v948 = vpop.f32.mrf.mxu0
        %v949 = vpop.f32.mrf.mxu0
        %v950 = vadd.f32 %v330, %v949
        %v951 = vpop.f32.mrf.mxu0
        %952 = vmatprep.mubr.bf16.mxu0 %v617
        %953 = vmatmul.mubr.bf16.gmra.mxu0 %v616
        %v954 = vpop.f32.mrf.mxu0
        %v955 = vadd.f32 %v330, %v954
        %v956 = vpop.f32.mrf.mxu0
        %v957 = vpop.f32.mrf.mxu0
        %v958 = vadd.f32 %v330, %v957
        %v959 = vpop.f32.mrf.mxu0
        %960 = vmatprep.mubr.bf16.mxu0 %v619
        %961 = vmatmul.mubr.bf16.gmra.mxu0 %v618
        %v962 = vpop.f32.mrf.mxu0
        %v963 = vadd.f32 %v330, %v962
        %v964 = vpop.f32.mrf.mxu0
        %v965 = vpop.f32.mrf.mxu0
        %v966 = vadd.f32 %v330, %v965
        %v967 = vpop.f32.mrf.mxu0
        %968 = vmatprep.mubr.bf16.mxu0 %v621
        %969 = vmatmul.mubr.bf16.gmra.mxu0 %v620
        %v970 = vpop.f32.mrf.mxu0
        %v971 = vadd.f32 %v330, %v970
        %v972 = vpop.f32.mrf.mxu0
        %v973 = vpop.f32.mrf.mxu0
        %v974 = vadd.f32 %v330, %v973
        %v975 = vpop.f32.mrf.mxu0
        %976 = vmatprep.mubr.bf16.mxu0 %v623
        %977 = vmatmul.mubr.bf16.gmra.mxu0 %v622
        %v978 = vpop.f32.mrf.mxu0
        %v979 = vadd.f32 %v330, %v978
        %v980 = vpop.f32.mrf.mxu0
        %v981 = vpop.f32.mrf.mxu0
        %v982 = vadd.f32 %v330, %v981
        %v983 = vpop.f32.mrf.mxu0
        %984 = vmatprep.mubr.bf16.mxu0 %v625
        %985 = vmatmul.mubr.bf16.gmra.mxu0 %v624
        %v986 = vpop.f32.mrf.mxu0
        %v987 = vadd.f32 %v330, %v986
        %v988 = vpop.f32.mrf.mxu0
        %v989 = vpop.f32.mrf.mxu0
        %v990 = vadd.f32 %v330, %v989
        %v991 = vpop.f32.mrf.mxu0
        %992 = vmatprep.mubr.bf16.mxu0 %v627
        %993 = vmatmul.mubr.bf16.gmra.mxu0 %v626
        %v994 = vpop.f32.mrf.mxu0
        %v995 = vadd.f32 %v330, %v994
        %v996 = vpop.f32.mrf.mxu0
        %v997 = vpop.f32.mrf.mxu0
        %v998 = vadd.f32 %v330, %v997
        %v999 = vpop.f32.mrf.mxu0
        %1000 = vmatprep.mubr.bf16.mxu0 %v629
        %1001 = vmatmul.mubr.bf16.gmra.mxu0 %v628
        %v1002 = vpop.f32.mrf.mxu0
        %v1003 = vadd.f32 %v330, %v1002
        %v1004 = vpop.f32.mrf.mxu0
        %v1005 = vpop.f32.mrf.mxu0
        %v1006 = vadd.f32 %v330, %v1005
        %v1007 = vpop.f32.mrf.mxu0
        %1008 = vmatprep.mubr.bf16.mxu0 %v631
        %1009 = vmatmul.mubr.bf16.gmra.mxu0 %v630
        %v1010 = vpop.f32.mrf.mxu0
        %v1011 = vadd.f32 %v330, %v1010
        %v1012 = vpop.f32.mrf.mxu0
        %v1013 = vpop.f32.mrf.mxu0
        %v1014 = vadd.f32 %v330, %v1013
        %v1015 = vpop.f32.mrf.mxu0
        %1016 = vmatprep.mubr.bf16.mxu0 %v633
        %1017 = vmatmul.mubr.bf16.gmra.mxu0 %v632
        %v1018 = vpop.f32.mrf.mxu0
        %v1019 = vadd.f32 %v330, %v1018
        %v1020 = vpop.f32.mrf.mxu0
        %v1021 = vpop.f32.mrf.mxu0
        %v1022 = vadd.f32 %v330, %v1021
        %v1023 = vpop.f32.mrf.mxu0
        %1024 = vmatprep.mubr.bf16.mxu0 %v635
        %1025 = vmatmul.mubr.bf16.gmra.mxu0 %v634
        %v1026 = vpop.f32.mrf.mxu0
        %v1027 = vadd.f32 %v330, %v1026
        %v1028 = vpop.f32.mrf.mxu0
        %v1029 = vpop.f32.mrf.mxu0
        %v1030 = vadd.f32 %v330, %v1029
        %v1031 = vpop.f32.mrf.mxu0
        %1032 = vmatprep.mubr.bf16.mxu0 %v637
        %1033 = vmatmul.mubr.bf16.gmra.mxu0 %v636
        %v1034 = vpop.f32.mrf.mxu0
        %v1035 = vadd.f32 %v330, %v1034
        %v1036 = vpop.f32.mrf.mxu0
        %v1037 = vpop.f32.mrf.mxu0
        %v1038 = vadd.f32 %v330, %v1037
        %v1039 = vpop.f32.mrf.mxu0
        %1040 = vmatprep.mubr.bf16.mxu0 %v639
        %1041 = vmatmul.mubr.bf16.gmra.mxu0 %v638
        %v1042 = vpop.f32.mrf.mxu0
        %v1043 = vadd.f32 %v330, %v1042
        %v1044 = vpop.f32.mrf.mxu0
        %v1045 = vpop.f32.mrf.mxu0
        %v1046 = vadd.f32 %v330, %v1045
        %v1047 = vpop.f32.mrf.mxu0
        %1048 = vmatprep.mubr.bf16.mxu0 %v641
        %1049 = vmatmul.mubr.bf16.gmra.mxu0 %v640
        %v1050 = vpop.f32.mrf.mxu0
        %v1051 = vadd.f32 %v330, %v1050
        %v1052 = vpop.f32.mrf.mxu0
        %v1053 = vpop.f32.mrf.mxu0
        %v1054 = vadd.f32 %v330, %v1053
        %v1055 = vpop.f32.mrf.mxu0
        %1056 = vmatprep.mubr.bf16.mxu0 %v643
        %1057 = vmatmul.mubr.bf16.gmra.mxu0 %v642
        %v1058 = vpop.f32.mrf.mxu0
        %v1059 = vadd.f32 %v330, %v1058
        %v1060 = vpop.f32.mrf.mxu0
        %v1061 = vpop.f32.mrf.mxu0
        %v1062 = vadd.f32 %v330, %v1061
        %v1063 = vpop.f32.mrf.mxu0
        %1064 = vmatprep.mubr.bf16.mxu0 %v645
        %1065 = vmatmul.mubr.bf16.gmra.mxu0 %v644
        %v1066 = vpop.f32.mrf.mxu0
        %v1067 = vadd.f32 %v330, %v1066
        %v1068 = vpop.f32.mrf.mxu0
        %v1069 = vpop.f32.mrf.mxu0
        %v1070 = vadd.f32 %v330, %v1069
        %v1071 = vpop.f32.mrf.mxu0
        %1072 = vmatprep.mubr.bf16.mxu0 %v647
        %1073 = vmatmul.mubr.bf16.gmra.mxu0 %v646
        %v1074 = vpop.f32.mrf.mxu0
        %v1075 = vadd.f32 %v330, %v1074
        %v1076 = vpop.f32.mrf.mxu0
        %v1077 = vpop.f32.mrf.mxu0
        %v1078 = vadd.f32 %v330, %v1077
        %v1079 = vpop.f32.mrf.mxu0
        %1080 = vmatprep.mubr.bf16.mxu0 %v649
        %1081 = vmatmul.mubr.bf16.gmra.mxu0 %v648
        %v1082 = vpop.f32.mrf.mxu0
        %v1083 = vadd.f32 %v330, %v1082
        %v1084 = vpop.f32.mrf.mxu0
        %v1085 = vpop.f32.mrf.mxu0
        %v1086 = vadd.f32 %v330, %v1085
        %v1087 = vpop.f32.mrf.mxu0
        %1088 = vmatprep.mubr.bf16.mxu0 %v651
        %1089 = vmatmul.mubr.bf16.gmra.mxu0 %v650
        %v1090 = vpop.f32.mrf.mxu0
        %v1091 = vadd.f32 %v330, %v1090
        %v1092 = vpop.f32.mrf.mxu0
        %v1093 = vpop.f32.mrf.mxu0
        %v1094 = vadd.f32 %v330, %v1093
        %v1095 = vpop.f32.mrf.mxu0
        %1096 = vmatprep.mubr.bf16.mxu0 %v653
        %1097 = vmatmul.mubr.bf16.gmra.mxu0 %v652
        %v1098 = vpop.f32.mrf.mxu0
        %v1099 = vadd.f32 %v330, %v1098
        %v1100 = vpop.f32.mrf.mxu0
        %v1101 = vpop.f32.mrf.mxu0
        %v1102 = vadd.f32 %v330, %v1101
        %v1103 = vpop.f32.mrf.mxu0
        %1104 = vmatprep.mubr.bf16.mxu0 %v655
        %1105 = vmatmul.mubr.bf16.gmra.mxu0 %v654
        %v1106 = vpop.f32.mrf.mxu0
        %v1107 = vadd.f32 %v330, %v1106
        %v1108 = vpop.f32.mrf.mxu0
        %v1109 = vpop.f32.mrf.mxu0
        %v1110 = vadd.f32 %v330, %v1109
        %v1111 = vpop.f32.mrf.mxu0
        %1112 = vmatprep.mubr.bf16.mxu0 %v657
        %1113 = vmatmul.mubr.bf16.gmra.mxu0 %v656
        %v1114 = vpop.f32.mrf.mxu0
        %v1115 = vadd.f32 %v330, %v1114
        %v1116 = vpop.f32.mrf.mxu0
        %v1117 = vpop.f32.mrf.mxu0
        %v1118 = vadd.f32 %v330, %v1117
        %v1119 = vpop.f32.mrf.mxu0
        %1120 = vmatprep.mubr.bf16.mxu0 %v659
        %1121 = vmatmul.mubr.bf16.gmra.mxu0 %v658
        %v1122 = vpop.f32.mrf.mxu0
        %v1123 = vadd.f32 %v330, %v1122
        %v1124 = vpop.f32.mrf.mxu0
        %v1125 = vpop.f32.mrf.mxu0
        %v1126 = vadd.f32 %v330, %v1125
        %v1127 = vpop.f32.mrf.mxu0
        %1128 = vmatprep.mubr.bf16.mxu0 %v661
        %1129 = vmatmul.mubr.bf16.gmra.mxu0 %v660
        %v1130 = vpop.f32.mrf.mxu0
        %v1131 = vadd.f32 %v330, %v1130
        %v1132 = vpop.f32.mrf.mxu0
        %v1133 = vpop.f32.mrf.mxu0
        %v1134 = vadd.f32 %v330, %v1133
        %v1135 = vpop.f32.mrf.mxu0
        %1136 = vmatprep.mubr.bf16.mxu0 %v663
        %1137 = vmatmul.mubr.bf16.gmra.mxu0 %v662
        %v1138 = vpop.f32.mrf.mxu0
        %v1139 = vadd.f32 %v330, %v1138
        %v1140 = vpop.f32.mrf.mxu0
        %v1141 = vpop.f32.mrf.mxu0
        %v1142 = vadd.f32 %v330, %v1141
        %v1143 = vpop.f32.mrf.mxu0
        %1144 = vmatprep.mubr.bf16.mxu0 %v665
        %1145 = vmatmul.mubr.bf16.gmra.mxu0 %v664
        %v1146 = vpop.f32.mrf.mxu0
        %v1147 = vadd.f32 %v330, %v1146
        %v1148 = vpop.f32.mrf.mxu0
        %v1149 = vpop.f32.mrf.mxu0
        %v1150 = vadd.f32 %v330, %v1149
        %v1151 = vpop.f32.mrf.mxu0
        %1152 = vmatprep.mubr.bf16.mxu0 %v667
        %1153 = vmatmul.mubr.bf16.gmra.mxu0 %v666
        %v1154 = vpop.f32.mrf.mxu0
        %v1155 = vadd.f32 %v330, %v1154
        %v1156 = vpop.f32.mrf.mxu0
        %v1157 = vpop.f32.mrf.mxu0
        %v1158 = vadd.f32 %v330, %v1157
        %v1159 = vpop.f32.mrf.mxu0
        %1160 = vmatprep.mubr.bf16.mxu0 %v669
        %1161 = vmatmul.mubr.bf16.gmra.mxu0 %v668
        %v1162 = vpop.f32.mrf.mxu0
        %v1163 = vadd.f32 %v330, %v1162
        %v1164 = vpop.f32.mrf.mxu0
        %v1165 = vpop.f32.mrf.mxu0
        %v1166 = vadd.f32 %v330, %v1165
        %v1167 = vpop.f32.mrf.mxu0
        %1168 = vmatprep.mubr.bf16.mxu0 %v671
        %1169 = vmatmul.mubr.bf16.gmra.mxu0 %v670
        %v1170 = vpop.f32.mrf.mxu0
        %v1171 = vadd.f32 %v330, %v1170
        %v1172 = vpop.f32.mrf.mxu0
        %v1173 = vpop.f32.mrf.mxu0
        %v1174 = vadd.f32 %v330, %v1173
        %v1175 = vpop.f32.mrf.mxu0
        %1176 = vmatprep.mubr.bf16.mxu0 %v673
        %1177 = vmatmul.mubr.bf16.gmra.mxu0 %v672
        %v1178 = vpop.f32.mrf.mxu0
        %v1179 = vadd.f32 %v330, %v1178
        %v1180 = vpop.f32.mrf.mxu0
        %v1181 = vpop.f32.mrf.mxu0
        %v1182 = vadd.f32 %v330, %v1181
        %v1183 = vpop.f32.mrf.mxu0
        %1184 = vmatprep.mubr.bf16.mxu0 %v675
        %1185 = vmatmul.mubr.bf16.gmra.mxu0 %v674
        %v1186 = vpop.f32.mrf.mxu0
        %v1187 = vadd.f32 %v330, %v1186
        %v1188 = vpop.f32.mrf.mxu0
        %v1189 = vpop.f32.mrf.mxu0
        %v1190 = vadd.f32 %v330, %v1189
        %v1191 = vpop.f32.mrf.mxu0
        %1192 = vmatprep.mubr.bf16.mxu0 %v677
        %1193 = vmatmul.mubr.bf16.gmra.mxu0 %v676
        %v1194 = vpop.f32.mrf.mxu0
        %v1195 = vadd.f32 %v330, %v1194
        %v1196 = vpop.f32.mrf.mxu0
        %v1197 = vpop.f32.mrf.mxu0
        %v1198 = vadd.f32 %v330, %v1197
        %v1199 = vpop.f32.mrf.mxu0
        %1200 = vmatprep.mubr.bf16.mxu0 %v679
        %1201 = vmatmul.mubr.bf16.gmra.mxu0 %v678
        %v1202 = vpop.f32.mrf.mxu0
        %v1203 = vadd.f32 %v330, %v1202
        %v1204 = vpop.f32.mrf.mxu0
        %v1205 = vpop.f32.mrf.mxu0
        %v1206 = vadd.f32 %v330, %v1205
        %v1207 = vpop.f32.mrf.mxu0
        %1208 = vmatprep.mubr.bf16.mxu0 %v681
        %1209 = vmatmul.mubr.bf16.gmra.mxu0 %v680
        %v1210 = vpop.f32.mrf.mxu0
        %v1211 = vadd.f32 %v330, %v1210
        %v1212 = vpop.f32.mrf.mxu0
        %v1213 = vpop.f32.mrf.mxu0
        %v1214 = vadd.f32 %v330, %v1213
        %v1215 = vpop.f32.mrf.mxu0
        %1216 = vmatprep.mubr.bf16.mxu0 %v683
        %1217 = vmatmul.mubr.bf16.gmra.mxu0 %v682
        %v1218 = vpop.f32.mrf.mxu0
        %v1219 = vadd.f32 %v330, %v1218
        %v1220 = vpop.f32.mrf.mxu0
        %v1221 = vpop.f32.mrf.mxu0
        %v1222 = vadd.f32 %v330, %v1221
        %v1223 = vpop.f32.mrf.mxu0
        %1224 = vmatprep.mubr.bf16.mxu0 %v685
        %1225 = vmatmul.mubr.bf16.gmra.mxu0 %v684
        %v1226 = vpop.f32.mrf.mxu0
        %v1227 = vadd.f32 %v330, %v1226
        %v1228 = vpop.f32.mrf.mxu0
        %v1229 = vpop.f32.mrf.mxu0
        %v1230 = vadd.f32 %v330, %v1229
        %v1231 = vpop.f32.mrf.mxu0
        %1232 = vmatprep.mubr.bf16.mxu0 %v687
        %1233 = vmatmul.mubr.bf16.gmra.mxu0 %v686
        %v1234 = vpop.f32.mrf.mxu0
        %v1235 = vadd.f32 %v330, %v1234
        %v1236 = vpop.f32.mrf.mxu0
        %v1237 = vpop.f32.mrf.mxu0
        %v1238 = vadd.f32 %v330, %v1237
        %v1239 = vpop.f32.mrf.mxu0
        %1240 = vmatprep.mubr.bf16.mxu0 %v689
        %1241 = vmatmul.mubr.bf16.gmra.mxu0 %v688
        %v1242 = vpop.f32.mrf.mxu0
        %v1243 = vadd.f32 %v330, %v1242
        %v1244 = vpop.f32.mrf.mxu0
        %v1245 = vpop.f32.mrf.mxu0
        %v1246 = vadd.f32 %v330, %v1245
        %v1247 = vpop.f32.mrf.mxu0
        %1248 = vmatprep.mubr.bf16.mxu0 %v691
        %1249 = vmatmul.mubr.bf16.gmra.mxu0 %v690
        %v1250 = vpop.f32.mrf.mxu0
        %v1251 = vadd.f32 %v330, %v1250
        %v1252 = vpop.f32.mrf.mxu0
        %v1253 = vpop.f32.mrf.mxu0
        %v1254 = vadd.f32 %v330, %v1253
        %v1255 = vpop.f32.mrf.mxu0
        %1256 = vmatprep.mubr.bf16.mxu0 %v693
        %1257 = vmatmul.mubr.bf16.gmra.mxu0 %v692
        %v1258 = vpop.f32.mrf.mxu0
        %v1259 = vadd.f32 %v330, %v1258
        %v1260 = vpop.f32.mrf.mxu0
        %v1261 = vpop.f32.mrf.mxu0
        %v1262 = vadd.f32 %v330, %v1261
        %v1263 = vpop.f32.mrf.mxu0
        %1264 = vmatprep.mubr.bf16.mxu0 %v695
        %1265 = vmatmul.mubr.bf16.gmra.mxu0 %v694
        %v1266 = vpop.f32.mrf.mxu0
        %v1267 = vadd.f32 %v330, %v1266
        %v1268 = vpop.f32.mrf.mxu0
        %v1269 = vpop.f32.mrf.mxu0
        %v1270 = vadd.f32 %v330, %v1269
        %v1271 = vpop.f32.mrf.mxu0
        %1272 = vmatprep.mubr.bf16.mxu0 %v697
        %1273 = vmatmul.mubr.bf16.gmra.mxu0 %v696
        %v1274 = vpop.f32.mrf.mxu0
        %v1275 = vadd.f32 %v330, %v1274
        %v1276 = vpop.f32.mrf.mxu0
        %v1277 = vpop.f32.mrf.mxu0
        %v1278 = vadd.f32 %v330, %v1277
        %v1279 = vpop.f32.mrf.mxu0
        %1280 = vmatprep.mubr.bf16.mxu0 %v699
        %1281 = vmatmul.mubr.bf16.gmra.mxu0 %v698
        %v1282 = vpop.f32.mrf.mxu0
        %v1283 = vadd.f32 %v330, %v1282
        %v1284 = vpop.f32.mrf.mxu0
        %v1285 = vpop.f32.mrf.mxu0
        %v1286 = vadd.f32 %v330, %v1285
        %v1287 = vpop.f32.mrf.mxu0
        %1288 = vdwg.mxu0
        %v1289 = vmax.f32 %v923, 0.0
        %v1290 = vmax.f32 %v926, 0.0
        %v1291 = vmax.f32 %v931, 0.0
        %v1292 = vmax.f32 %v934, 0.0
        %v1293 = vmax.f32 %v939, 0.0
        %v1294 = vmax.f32 %v942, 0.0
        %v1295 = vmax.f32 %v947, 0.0
        %v1296 = vmax.f32 %v950, 0.0
        %v1297 = vmax.f32 %v955, 0.0
        %v1298 = vmax.f32 %v958, 0.0
        %v1299 = vmax.f32 %v963, 0.0
        %v1300 = vmax.f32 %v966, 0.0
        %v1301 = vmax.f32 %v971, 0.0
        %v1302 = vmax.f32 %v974, 0.0
        %v1303 = vmax.f32 %v979, 0.0
        %v1304 = vmax.f32 %v982, 0.0
        %v1305 = vmax.f32 %v987, 0.0
        %v1306 = vmax.f32 %v990, 0.0
        %v1307 = vmax.f32 %v995, 0.0
        %v1308 = vmax.f32 %v998, 0.0
        %v1309 = vmax.f32 %v1003, 0.0
        %v1310 = vmax.f32 %v1006, 0.0
        %v1311 = vmax.f32 %v1011, 0.0
        %v1312 = vmax.f32 %v1014, 0.0
        %v1313 = vmax.f32 %v1019, 0.0
        %v1314 = vmax.f32 %v1022, 0.0
        %v1315 = vmax.f32 %v1027, 0.0
        %v1316 = vmax.f32 %v1030, 0.0
        %v1317 = vmax.f32 %v1035, 0.0
        %v1318 = vmax.f32 %v1038, 0.0
        %v1319 = vmax.f32 %v1043, 0.0
        %v1320 = vmax.f32 %v1046, 0.0
        %v1321 = vmax.f32 %v1051, 0.0
        %v1322 = vmax.f32 %v1054, 0.0
        %v1323 = vmax.f32 %v1059, 0.0
        %v1324 = vmax.f32 %v1062, 0.0
        %v1325 = vmax.f32 %v1067, 0.0
        %v1326 = vmax.f32 %v1070, 0.0
        %v1327 = vmax.f32 %v1075, 0.0
        %v1328 = vmax.f32 %v1078, 0.0
        %v1329 = vmax.f32 %v1083, 0.0
        %v1330 = vmax.f32 %v1086, 0.0
        %v1331 = vmax.f32 %v1091, 0.0
        %v1332 = vmax.f32 %v1094, 0.0
        %v1333 = vmax.f32 %v1099, 0.0
        %v1334 = vmax.f32 %v1102, 0.0
        %v1335 = vmax.f32 %v1107, 0.0
        %v1336 = vmax.f32 %v1110, 0.0
        %v1337 = vmax.f32 %v1115, 0.0
        %v1338 = vmax.f32 %v1118, 0.0
        %v1339 = vmax.f32 %v1123, 0.0
        %v1340 = vmax.f32 %v1126, 0.0
        %v1341 = vmax.f32 %v1131, 0.0
        %v1342 = vmax.f32 %v1134, 0.0
        %v1343 = vmax.f32 %v1139, 0.0
        %v1344 = vmax.f32 %v1142, 0.0
        %v1345 = vmax.f32 %v1147, 0.0
        %v1346 = vmax.f32 %v1150, 0.0
        %v1347 = vmax.f32 %v1155, 0.0
        %v1348 = vmax.f32 %v1158, 0.0
        %v1349 = vmax.f32 %v1163, 0.0
        %v1350 = vmax.f32 %v1166, 0.0
        %v1351 = vmax.f32 %v1171, 0.0
        %v1352 = vmax.f32 %v1174, 0.0
        %v1353 = vmax.f32 %v1179, 0.0
        %v1354 = vmax.f32 %v1182, 0.0
        %v1355 = vmax.f32 %v1187, 0.0
        %v1356 = vmax.f32 %v1190, 0.0
        %v1357 = vmax.f32 %v1195, 0.0
        %v1358 = vmax.f32 %v1198, 0.0
        %v1359 = vmax.f32 %v1203, 0.0
        %v1360 = vmax.f32 %v1206, 0.0
        %v1361 = vmax.f32 %v1211, 0.0
        %v1362 = vmax.f32 %v1214, 0.0
        %v1363 = vmax.f32 %v1219, 0.0
        %v1364 = vmax.f32 %v1222, 0.0
        %v1365 = vmax.f32 %v1227, 0.0
        %v1366 = vmax.f32 %v1230, 0.0
        %v1367 = vmax.f32 %v1235, 0.0
        %v1368 = vmax.f32 %v1238, 0.0
        %v1369 = vmax.f32 %v1243, 0.0
        %v1370 = vmax.f32 %v1246, 0.0
        %v1371 = vmax.f32 %v1251, 0.0
        %v1372 = vmax.f32 %v1254, 0.0
        %v1373 = vmax.f32 %v1259, 0.0
        %v1374 = vmax.f32 %v1262, 0.0
        %v1375 = vmax.f32 %v1267, 0.0
        %v1376 = vmax.f32 %v1270, 0.0
        %v1377 = vmax.f32 %v1275, 0.0
        %v1378 = vmax.f32 %v1278, 0.0
        %v1379 = vmax.f32 %v1283, 0.0
        %v1380 = vmax.f32 %v1286, 0.0
        %v1381 = vpack.c.bf16 %v1290, %v1289
        %v1382 = vpack.c.bf16 %v1292, %v1291
        %v1383 = vpack.c.bf16 %v1294, %v1293
        %v1384 = vpack.c.bf16 %v1296, %v1295
        %v1385 = vpack.c.bf16 %v1298, %v1297
        %v1386 = vpack.c.bf16 %v1300, %v1299
        %v1387 = vpack.c.bf16 %v1302, %v1301
        %v1388 = vpack.c.bf16 %v1304, %v1303
        %v1389 = vpack.c.bf16 %v1306, %v1305
        %v1390 = vpack.c.bf16 %v1308, %v1307
        %v1391 = vpack.c.bf16 %v1310, %v1309
        %v1392 = vpack.c.bf16 %v1312, %v1311
        %v1393 = vpack.c.bf16 %v1314, %v1313
        %v1394 = vpack.c.bf16 %v1316, %v1315
        %v1395 = vpack.c.bf16 %v1318, %v1317
        %v1396 = vpack.c.bf16 %v1320, %v1319
        %v1397 = vpack.c.bf16 %v1322, %v1321
        %v1398 = vpack.c.bf16 %v1324, %v1323
        %v1399 = vpack.c.bf16 %v1326, %v1325
        %v1400 = vpack.c.bf16 %v1328, %v1327
        %v1401 = vpack.c.bf16 %v1330, %v1329
        %v1402 = vpack.c.bf16 %v1332, %v1331
        %v1403 = vpack.c.bf16 %v1334, %v1333
        %v1404 = vpack.c.bf16 %v1336, %v1335
        %v1405 = vpack.c.bf16 %v1338, %v1337
        %v1406 = vpack.c.bf16 %v1340, %v1339
        %v1407 = vpack.c.bf16 %v1342, %v1341
        %v1408 = vpack.c.bf16 %v1344, %v1343
        %v1409 = vpack.c.bf16 %v1346, %v1345
        %v1410 = vpack.c.bf16 %v1348, %v1347
        %v1411 = vpack.c.bf16 %v1350, %v1349
        %v1412 = vpack.c.bf16 %v1352, %v1351
        %v1413 = vpack.c.bf16 %v1354, %v1353
        %v1414 = vpack.c.bf16 %v1356, %v1355
        %v1415 = vpack.c.bf16 %v1358, %v1357
        %v1416 = vpack.c.bf16 %v1360, %v1359
        %v1417 = vpack.c.bf16 %v1362, %v1361
        %v1418 = vpack.c.bf16 %v1364, %v1363
        %v1419 = vpack.c.bf16 %v1366, %v1365
        %v1420 = vpack.c.bf16 %v1368, %v1367
        %v1421 = vpack.c.bf16 %v1370, %v1369
        %v1422 = vpack.c.bf16 %v1372, %v1371
        %v1423 = vpack.c.bf16 %v1374, %v1373
        %v1424 = vpack.c.bf16 %v1376, %v1375
        %v1425 = vpack.c.bf16 %v1378, %v1377
        %v1426 = vpack.c.bf16 %v1380, %v1379
        %v1473 = vunpack.c.l.b16 %v1381
        %v1474 = vunpack.c.h.b16 %v1381
        %v1475 = vunpack.c.l.b16 %v1382
        %v1476 = vunpack.c.h.b16 %v1382
        %v1477 = vunpack.c.l.b16 %v1383
        %v1478 = vunpack.c.h.b16 %v1383
        %v1479 = vunpack.c.l.b16 %v1384
        %v1480 = vunpack.c.h.b16 %v1384
        %v1481 = vunpack.c.l.b16 %v1385
        %v1482 = vunpack.c.h.b16 %v1385
        %v1483 = vunpack.c.l.b16 %v1386
        %v1484 = vunpack.c.h.b16 %v1386
        %v1485 = vunpack.c.l.b16 %v1387
        %v1486 = vunpack.c.h.b16 %v1387
        %v1487 = vunpack.c.l.b16 %v1388
        %v1488 = vunpack.c.h.b16 %v1388
        %v1489 = vunpack.c.l.b16 %v1389
        %v1490 = vunpack.c.h.b16 %v1389
        %v1491 = vunpack.c.l.b16 %v1390
        %v1492 = vunpack.c.h.b16 %v1390
        %v1493 = vunpack.c.l.b16 %v1391
        %v1494 = vunpack.c.h.b16 %v1391
        %v1495 = vunpack.c.l.b16 %v1392
        %v1496 = vunpack.c.h.b16 %v1392
        %v1497 = vunpack.c.l.b16 %v1393
        %v1498 = vunpack.c.h.b16 %v1393
        %v1499 = vunpack.c.l.b16 %v1394
        %v1500 = vunpack.c.h.b16 %v1394
        %v1501 = vunpack.c.l.b16 %v1395
        %v1502 = vunpack.c.h.b16 %v1395
        %v1503 = vunpack.c.l.b16 %v1396
        %v1504 = vunpack.c.h.b16 %v1396
        %v1505 = vunpack.c.l.b16 %v1397
        %v1506 = vunpack.c.h.b16 %v1397
        %v1507 = vunpack.c.l.b16 %v1398
        %v1508 = vunpack.c.h.b16 %v1398
        %v1509 = vunpack.c.l.b16 %v1399
        %v1510 = vunpack.c.h.b16 %v1399
        %v1511 = vunpack.c.l.b16 %v1400
        %v1512 = vunpack.c.h.b16 %v1400
        %v1513 = vunpack.c.l.b16 %v1401
        %v1514 = vunpack.c.h.b16 %v1401
        %v1515 = vunpack.c.l.b16 %v1402
        %v1516 = vunpack.c.h.b16 %v1402
        %v1517 = vunpack.c.l.b16 %v1403
        %v1518 = vunpack.c.h.b16 %v1403
        %v1519 = vunpack.c.l.b16 %v1404
        %v1520 = vunpack.c.h.b16 %v1404
        %v1521 = vunpack.c.l.b16 %v1405
        %v1522 = vunpack.c.h.b16 %v1405
        %v1523 = vunpack.c.l.b16 %v1406
        %v1524 = vunpack.c.h.b16 %v1406
        %v1525 = vunpack.c.l.b16 %v1407
        %v1526 = vunpack.c.h.b16 %v1407
        %v1527 = vunpack.c.l.b16 %v1408
        %v1528 = vunpack.c.h.b16 %v1408
        %v1529 = vunpack.c.l.b16 %v1409
        %v1530 = vunpack.c.h.b16 %v1409
        %v1531 = vunpack.c.l.b16 %v1410
        %v1532 = vunpack.c.h.b16 %v1410
        %v1533 = vunpack.c.l.b16 %v1411
        %v1534 = vunpack.c.h.b16 %v1411
        %v1535 = vunpack.c.l.b16 %v1412
        %v1536 = vunpack.c.h.b16 %v1412
        %v1537 = vunpack.c.l.b16 %v1413
        %v1538 = vunpack.c.h.b16 %v1413
        %v1539 = vunpack.c.l.b16 %v1414
        %v1540 = vunpack.c.h.b16 %v1414
        %v1541 = vunpack.c.l.b16 %v1415
        %v1542 = vunpack.c.h.b16 %v1415
        %v1543 = vunpack.c.l.b16 %v1416
        %v1544 = vunpack.c.h.b16 %v1416
        %v1545 = vunpack.c.l.b16 %v1417
        %v1546 = vunpack.c.h.b16 %v1417
        %v1547 = vunpack.c.l.b16 %v1418
        %v1548 = vunpack.c.h.b16 %v1418
        %v1549 = vunpack.c.l.b16 %v1419
        %v1550 = vunpack.c.h.b16 %v1419
        %v1551 = vunpack.c.l.b16 %v1420
        %v1552 = vunpack.c.h.b16 %v1420
        %v1553 = vunpack.c.l.b16 %v1421
        %v1554 = vunpack.c.h.b16 %v1421
        %v1555 = vunpack.c.l.b16 %v1422
        %v1556 = vunpack.c.h.b16 %v1422
        %v1557 = vunpack.c.l.b16 %v1423
        %v1558 = vunpack.c.h.b16 %v1423
        %v1559 = vunpack.c.l.b16 %v1424
        %v1560 = vunpack.c.h.b16 %v1424
        %v1561 = vunpack.c.l.b16 %v1425
        %v1562 = vunpack.c.h.b16 %v1425
        %v1563 = vunpack.c.l.b16 %v1426
        %v1564 = vunpack.c.h.b16 %v1426
        %v1565 = vpack.c.b16 %v1473, %v1473
        %v1566 = vpack.c.b16 %v1474, %v1474
        %v1567 = vpack.c.b16 %v1475, %v1475
        %v1568 = vpack.c.b16 %v1476, %v1476
        %v1569 = vpack.c.b16 %v1477, %v1477
        %v1570 = vpack.c.b16 %v1478, %v1478
        %v1571 = vpack.c.b16 %v1479, %v1479
        %v1572 = vpack.c.b16 %v1480, %v1480
        %v1573 = vpack.c.b16 %v1481, %v1481
        %v1574 = vpack.c.b16 %v1482, %v1482
        %v1575 = vpack.c.b16 %v1483, %v1483
        %v1576 = vpack.c.b16 %v1484, %v1484
        %v1577 = vpack.c.b16 %v1485, %v1485
        %v1578 = vpack.c.b16 %v1486, %v1486
        %v1579 = vpack.c.b16 %v1487, %v1487
        %v1580 = vpack.c.b16 %v1488, %v1488
        %v1581 = vpack.c.b16 %v1489, %v1489
        %v1582 = vpack.c.b16 %v1490, %v1490
        %v1583 = vpack.c.b16 %v1491, %v1491
        %v1584 = vpack.c.b16 %v1492, %v1492
        %v1585 = vpack.c.b16 %v1493, %v1493
        %v1586 = vpack.c.b16 %v1494, %v1494
        %v1587 = vpack.c.b16 %v1495, %v1495
        %v1588 = vpack.c.b16 %v1496, %v1496
        %v1589 = vpack.c.b16 %v1497, %v1497
        %v1590 = vpack.c.b16 %v1498, %v1498
        %v1591 = vpack.c.b16 %v1499, %v1499
        %v1592 = vpack.c.b16 %v1500, %v1500
        %v1593 = vpack.c.b16 %v1501, %v1501
        %v1594 = vpack.c.b16 %v1502, %v1502
        %v1595 = vpack.c.b16 %v1503, %v1503
        %v1596 = vpack.c.b16 %v1504, %v1504
        %v1597 = vpack.c.b16 %v1505, %v1505
        %v1598 = vpack.c.b16 %v1506, %v1506
        %v1599 = vpack.c.b16 %v1507, %v1507
        %v1600 = vpack.c.b16 %v1508, %v1508
        %v1601 = vpack.c.b16 %v1509, %v1509
        %v1602 = vpack.c.b16 %v1510, %v1510
        %v1603 = vpack.c.b16 %v1511, %v1511
        %v1604 = vpack.c.b16 %v1512, %v1512
        %v1605 = vpack.c.b16 %v1513, %v1513
        %v1606 = vpack.c.b16 %v1514, %v1514
        %v1607 = vpack.c.b16 %v1515, %v1515
        %v1608 = vpack.c.b16 %v1516, %v1516
        %v1609 = vpack.c.b16 %v1517, %v1517
        %v1610 = vpack.c.b16 %v1518, %v1518
        %v1611 = vpack.c.b16 %v1519, %v1519
        %v1612 = vpack.c.b16 %v1520, %v1520
        %v1613 = vpack.c.b16 %v1521, %v1521
        %v1614 = vpack.c.b16 %v1522, %v1522
        %v1615 = vpack.c.b16 %v1523, %v1523
        %v1616 = vpack.c.b16 %v1524, %v1524
        %v1617 = vpack.c.b16 %v1525, %v1525
        %v1618 = vpack.c.b16 %v1526, %v1526
        %v1619 = vpack.c.b16 %v1527, %v1527
        %v1620 = vpack.c.b16 %v1528, %v1528
        %v1621 = vpack.c.b16 %v1529, %v1529
        %v1622 = vpack.c.b16 %v1530, %v1530
        %v1623 = vpack.c.b16 %v1531, %v1531
        %v1624 = vpack.c.b16 %v1532, %v1532
        %v1625 = vpack.c.b16 %v1533, %v1533
        %v1626 = vpack.c.b16 %v1534, %v1534
        %v1627 = vpack.c.b16 %v1535, %v1535
        %v1628 = vpack.c.b16 %v1536, %v1536
        %v1629 = vpack.c.b16 %v1537, %v1537
        %v1630 = vpack.c.b16 %v1538, %v1538
        %v1631 = vpack.c.b16 %v1539, %v1539
        %v1632 = vpack.c.b16 %v1540, %v1540
        %v1633 = vpack.c.b16 %v1541, %v1541
        %v1634 = vpack.c.b16 %v1542, %v1542
        %v1635 = vpack.c.b16 %v1543, %v1543
        %v1636 = vpack.c.b16 %v1544, %v1544
        %v1637 = vpack.c.b16 %v1545, %v1545
        %v1638 = vpack.c.b16 %v1546, %v1546
        %v1639 = vpack.c.b16 %v1547, %v1547
        %v1640 = vpack.c.b16 %v1548, %v1548
        %v1641 = vpack.c.b16 %v1549, %v1549
        %v1642 = vpack.c.b16 %v1550, %v1550
        %v1643 = vpack.c.b16 %v1551, %v1551
        %v1644 = vpack.c.b16 %v1552, %v1552
        %v1645 = vpack.c.b16 %v1553, %v1553
        %v1646 = vpack.c.b16 %v1554, %v1554
        %v1647 = vpack.c.b16 %v1555, %v1555
        %v1648 = vpack.c.b16 %v1556, %v1556
        %v1649 = vpack.c.b16 %v1557, %v1557
        %v1650 = vpack.c.b16 %v1558, %v1558
        %v1651 = vpack.c.b16 %v1559, %v1559
        %v1652 = vpack.c.b16 %v1560, %v1560
        %v1653 = vpack.c.b16 %v1561, %v1561
        %v1654 = vpack.c.b16 %v1562, %v1562
        %v1655 = vpack.c.b16 %v1563, %v1563
        %v1656 = vpack.c.b16 %v1564, %v1564
        %1749 = vst [vmem:[%s177] sm:$0xf] %v1565
        %1750 = vst [vmem:[%s177 + $0x4] sm:$0xf] %v1566
        %1751 = vst [vmem:[%s177 + $0x8] sm:$0xf] %v1567
        %1752 = vst [vmem:[%s177 + $0xc] sm:$0xf] %v1568
        %1753 = vst [vmem:[%s177 + $0x10] sm:$0xf] %v1569
        %1754 = vst [vmem:[%s177 + $0x14] sm:$0xf] %v1570
        %1755 = vst [vmem:[%s177 + $0x18] sm:$0xf] %v1571
        %1756 = vst [vmem:[%s177 + $0x1c] sm:$0xf] %v1572
        %1757 = vst [vmem:[%s177 + $0x20] sm:$0xf] %v1573
        %1758 = vst [vmem:[%s177 + $0x24] sm:$0xf] %v1574
        %1759 = vst [vmem:[%s177 + $0x28] sm:$0xf] %v1575
        %1760 = vst [vmem:[%s177 + $0x2c] sm:$0xf] %v1576
        %1761 = vst [vmem:[%s177 + $0x30] sm:$0xf] %v1577
        %1762 = vst [vmem:[%s177 + $0x34] sm:$0xf] %v1578
        %1763 = vst [vmem:[%s177 + $0x38] sm:$0xf] %v1579
        %1764 = vst [vmem:[%s177 + $0x3c] sm:$0xf] %v1580
        %1765 = vst [vmem:[%s177 + $0x40] sm:$0xf] %v1581
        %1766 = vst [vmem:[%s177 + $0x44] sm:$0xf] %v1582
        %1767 = vst [vmem:[%s177 + $0x48] sm:$0xf] %v1583
        %1768 = vst [vmem:[%s177 + $0x4c] sm:$0xf] %v1584
        %1769 = vst [vmem:[%s177 + $0x50] sm:$0xf] %v1585
        %1770 = vst [vmem:[%s177 + $0x54] sm:$0xf] %v1586
        %1771 = vst [vmem:[%s177 + $0x58] sm:$0xf] %v1587
        %1772 = vst [vmem:[%s177 + $0x5c] sm:$0xf] %v1588
        %1773 = vst [vmem:[%s177 + $0x60] sm:$0xf] %v1589
        %1774 = vst [vmem:[%s177 + $0x64] sm:$0xf] %v1590
        %1775 = vst [vmem:[%s177 + $0x68] sm:$0xf] %v1591
        %1776 = vst [vmem:[%s177 + $0x6c] sm:$0xf] %v1592
        %1777 = vst [vmem:[%s177 + $0x70] sm:$0xf] %v1593
        %1778 = vst [vmem:[%s177 + $0x74] sm:$0xf] %v1594
        %1779 = vst [vmem:[%s177 + $0x78] sm:$0xf] %v1595
        %1780 = vst [vmem:[%s177 + $0x7c] sm:$0xf] %v1596
        %1781 = vst [vmem:[%s177 + $0x80] sm:$0xf] %v1597
        %1782 = vst [vmem:[%s177 + $0x84] sm:$0xf] %v1598
        %1783 = vst [vmem:[%s177 + $0x88] sm:$0xf] %v1599
        %1784 = vst [vmem:[%s177 + $0x8c] sm:$0xf] %v1600
        %1785 = vst [vmem:[%s177 + $0x90] sm:$0xf] %v1601
        %1786 = vst [vmem:[%s177 + $0x94] sm:$0xf] %v1602
        %1787 = vst [vmem:[%s177 + $0x98] sm:$0xf] %v1603
        %1788 = vst [vmem:[%s177 + $0x9c] sm:$0xf] %v1604
        %1789 = vst [vmem:[%s177 + $0xa0] sm:$0xf] %v1605
        %1790 = vst [vmem:[%s177 + $0xa4] sm:$0xf] %v1606
        %1791 = vst [vmem:[%s177 + $0xa8] sm:$0xf] %v1607
        %1792 = vst [vmem:[%s177 + $0xac] sm:$0xf] %v1608
        %1793 = vst [vmem:[%s177 + $0xb0] sm:$0xf] %v1609
        %1794 = vst [vmem:[%s177 + $0xb4] sm:$0xf] %v1610
        %1795 = vst [vmem:[%s177 + $0xb8] sm:$0xf] %v1611
        %1796 = vst [vmem:[%s177 + $0xbc] sm:$0xf] %v1612
        %1797 = vst [vmem:[%s177 + $0xc0] sm:$0xf] %v1613
        %1798 = vst [vmem:[%s177 + $0xc4] sm:$0xf] %v1614
        %1799 = vst [vmem:[%s177 + $0xc8] sm:$0xf] %v1615
        %1800 = vst [vmem:[%s177 + $0xcc] sm:$0xf] %v1616
        %1801 = vst [vmem:[%s177 + $0xd0] sm:$0xf] %v1617
        %1802 = vst [vmem:[%s177 + $0xd4] sm:$0xf] %v1618
        %1803 = vst [vmem:[%s177 + $0xd8] sm:$0xf] %v1619
        %1804 = vst [vmem:[%s177 + $0xdc] sm:$0xf] %v1620
        %1805 = vst [vmem:[%s177 + $0xe0] sm:$0xf] %v1621
        %1806 = vst [vmem:[%s177 + $0xe4] sm:$0xf] %v1622
        %1807 = vst [vmem:[%s177 + $0xe8] sm:$0xf] %v1623
        %1808 = vst [vmem:[%s177 + $0xec] sm:$0xf] %v1624
        %1809 = vst [vmem:[%s177 + $0xf0] sm:$0xf] %v1625
        %1810 = vst [vmem:[%s177 + $0xf4] sm:$0xf] %v1626
        %1811 = vst [vmem:[%s177 + $0xf8] sm:$0xf] %v1627
        %1812 = vst [vmem:[%s177 + $0xfc] sm:$0xf] %v1628
        %1813 = vst [vmem:[%s177 + $0x100] sm:$0xf] %v1629
        %1814 = vst [vmem:[%s177 + $0x104] sm:$0xf] %v1630
        %1815 = vst [vmem:[%s177 + $0x108] sm:$0xf] %v1631
        %1816 = vst [vmem:[%s177 + $0x10c] sm:$0xf] %v1632
        %1817 = vst [vmem:[%s177 + $0x110] sm:$0xf] %v1633
        %1818 = vst [vmem:[%s177 + $0x114] sm:$0xf] %v1634
        %1819 = vst [vmem:[%s177 + $0x118] sm:$0xf] %v1635
        %1820 = vst [vmem:[%s177 + $0x11c] sm:$0xf] %v1636
        %1821 = vst [vmem:[%s177 + $0x120] sm:$0xf] %v1637
        %1822 = vst [vmem:[%s177 + $0x124] sm:$0xf] %v1638
        %1823 = vst [vmem:[%s177 + $0x128] sm:$0xf] %v1639
        %1824 = vst [vmem:[%s177 + $0x12c] sm:$0xf] %v1640
        %1825 = vst [vmem:[%s177 + $0x130] sm:$0xf] %v1641
        %1826 = vst [vmem:[%s177 + $0x134] sm:$0xf] %v1642
        %1827 = vst [vmem:[%s177 + $0x138] sm:$0xf] %v1643
        %1828 = vst [vmem:[%s177 + $0x13c] sm:$0xf] %v1644
        %1829 = vst [vmem:[%s177 + $0x140] sm:$0xf] %v1645
        %1830 = vst [vmem:[%s177 + $0x144] sm:$0xf] %v1646
        %1831 = vst [vmem:[%s177 + $0x148] sm:$0xf] %v1647
        %1832 = vst [vmem:[%s177 + $0x14c] sm:$0xf] %v1648
        %1833 = vst [vmem:[%s177 + $0x150] sm:$0xf] %v1649
        %1834 = vst [vmem:[%s177 + $0x154] sm:$0xf] %v1650
        %1835 = vst [vmem:[%s177 + $0x158] sm:$0xf] %v1651
        %1836 = vst [vmem:[%s177 + $0x15c] sm:$0xf] %v1652
        %1837 = vst [vmem:[%s177 + $0x160] sm:$0xf] %v1653
        %1838 = vst [vmem:[%s177 + $0x164] sm:$0xf] %v1654
        %1839 = vst [vmem:[%s177 + $0x168] sm:$0xf] %v1655
        %1840 = vst [vmem:[%s177 + $0x16c] sm:$0xf] %v1656
        %s1841 = sand.u32 %s90, 1
        %s1842 = sand.u32 %s90, 1
        %s1843 = smul.addr %s1842, 368
        %s1844 = scalar_lea.vmem [#allocation2], %s1843
        // Predicated region
        $region33: #{cnn_forward.5} parent=31 // pred_check
          %p1845 = pneg %p100
        $region34: #{cnn_forward.5} parent=31 // pred_check_branch
          %1847 = sbr.rel (%p1845) target = $region36
        $region35: #{cnn_forward.5} parent=31 // pred_region
          %s1848 = smul.u32 92, %s14
          %s1849 = ssub.s32 183, %s1848
          %p1850 = scmp.lt.s32.totalorder %s1849, 92
          %s1851 = scalar_select %p1850, %s1849, 92
          %s1852 = smul.u32 64, %s1851
          %p1853 = scmp.ne.s32.totalorder 0, %s1852
          %s1854 = smul.addr %s1848, 4
          %s1855 = scalar_lea.vmem %s3, %s1854
          // Predicated region
          $region37: #{cnn_forward.5} parent=35 // pred_check
            %p1856 = pneg %p1853
          $region38: #{cnn_forward.5} parent=35 // pred_check_branch
            %1858 = sbr.rel (%p1856) target = $region40
          $region39: #{cnn_forward.5} parent=35 // pred_region
            // Predicated region
            $region41: #{cnn_forward.5} parent=39 // pred_check
              _
            $region42: #{cnn_forward.5} parent=39 // pred_check_branch
              %1860 = sbr.rel target = $region44
            $region43: #{cnn_forward.5} parent=39 // pred_region
              // Predicated region
              $region63: #{cnn_forward.5} parent=43 // pred_check
                _
              $region64: #{cnn_forward.5} parent=43 // pred_check_branch
                %2036 = sbr.rel (0) target = $region66
              $region65: #{cnn_forward.5} parent=43 // pred_region
                %s2038 = ssub.s32 16, 1
                %s2039 = sshrl.u32 %s1851, 6
                // While loop
                $region67: #{cnn_forward.5} parent=65 // loop_pre_header
                  _
                $region68: #{cnn_forward.5} parent=65 // loop_header
                  %s2041 = sphi 0, %s2043
                  %p2042 = scmp.ge.s32.totalorder %s2041, %s2039
                  %s2046 = sphi 0, %s2179
                  %s2047 = sphi %s1844, %s2182
                  %s2048 = sphi %s1855, %s2183
                $region69: #{cnn_forward.5} parent=65 // loop_header_branch
                  %2045 = sbr.rel (%p2042) target = $region73
                $region70: #{cnn_forward.5} parent=65 // loop_body
                  %v2049 = vld [vmem:[%s2047] sm:%s2038]
                  %2050 = vst [vmem:[%s2048] sm:%s2038] %v2049
                  %v2051 = vld [vmem:[%s2047 + $0x4] sm:%s2038]
                  %2052 = vst [vmem:[%s2048 + $0x4] sm:%s2038] %v2051
                  %v2053 = vld [vmem:[%s2047 + $0x8] sm:%s2038]
                  %2054 = vst [vmem:[%s2048 + $0x8] sm:%s2038] %v2053
                  %v2055 = vld [vmem:[%s2047 + $0xc] sm:%s2038]
                  %2056 = vst [vmem:[%s2048 + $0xc] sm:%s2038] %v2055
                  %v2057 = vld [vmem:[%s2047 + $0x10] sm:%s2038]
                  %2058 = vst [vmem:[%s2048 + $0x10] sm:%s2038] %v2057
                  %v2059 = vld [vmem:[%s2047 + $0x14] sm:%s2038]
                  %2060 = vst [vmem:[%s2048 + $0x14] sm:%s2038] %v2059
                  %v2061 = vld [vmem:[%s2047 + $0x18] sm:%s2038]
                  %2062 = vst [vmem:[%s2048 + $0x18] sm:%s2038] %v2061
                  %v2063 = vld [vmem:[%s2047 + $0x1c] sm:%s2038]
                  %2064 = vst [vmem:[%s2048 + $0x1c] sm:%s2038] %v2063
                  %v2065 = vld [vmem:[%s2047 + $0x20] sm:%s2038]
                  %2066 = vst [vmem:[%s2048 + $0x20] sm:%s2038] %v2065
                  %v2067 = vld [vmem:[%s2047 + $0x24] sm:%s2038]
                  %2068 = vst [vmem:[%s2048 + $0x24] sm:%s2038] %v2067
                  %v2069 = vld [vmem:[%s2047 + $0x28] sm:%s2038]
                  %2070 = vst [vmem:[%s2048 + $0x28] sm:%s2038] %v2069
                  %v2071 = vld [vmem:[%s2047 + $0x2c] sm:%s2038]
                  %2072 = vst [vmem:[%s2048 + $0x2c] sm:%s2038] %v2071
                  %v2073 = vld [vmem:[%s2047 + $0x30] sm:%s2038]
                  %2074 = vst [vmem:[%s2048 + $0x30] sm:%s2038] %v2073
                  %v2075 = vld [vmem:[%s2047 + $0x34] sm:%s2038]
                  %2076 = vst [vmem:[%s2048 + $0x34] sm:%s2038] %v2075
                  %v2077 = vld [vmem:[%s2047 + $0x38] sm:%s2038]
                  %2078 = vst [vmem:[%s2048 + $0x38] sm:%s2038] %v2077
                  %v2079 = vld [vmem:[%s2047 + $0x3c] sm:%s2038]
                  %2080 = vst [vmem:[%s2048 + $0x3c] sm:%s2038] %v2079
                  %v2081 = vld [vmem:[%s2047 + $0x40] sm:%s2038]
                  %2082 = vst [vmem:[%s2048 + $0x40] sm:%s2038] %v2081
                  %v2083 = vld [vmem:[%s2047 + $0x44] sm:%s2038]
                  %2084 = vst [vmem:[%s2048 + $0x44] sm:%s2038] %v2083
                  %v2085 = vld [vmem:[%s2047 + $0x48] sm:%s2038]
                  %2086 = vst [vmem:[%s2048 + $0x48] sm:%s2038] %v2085
                  %v2087 = vld [vmem:[%s2047 + $0x4c] sm:%s2038]
                  %2088 = vst [vmem:[%s2048 + $0x4c] sm:%s2038] %v2087
                  %v2089 = vld [vmem:[%s2047 + $0x50] sm:%s2038]
                  %2090 = vst [vmem:[%s2048 + $0x50] sm:%s2038] %v2089
                  %v2091 = vld [vmem:[%s2047 + $0x54] sm:%s2038]
                  %2092 = vst [vmem:[%s2048 + $0x54] sm:%s2038] %v2091
                  %v2093 = vld [vmem:[%s2047 + $0x58] sm:%s2038]
                  %2094 = vst [vmem:[%s2048 + $0x58] sm:%s2038] %v2093
                  %v2095 = vld [vmem:[%s2047 + $0x5c] sm:%s2038]
                  %2096 = vst [vmem:[%s2048 + $0x5c] sm:%s2038] %v2095
                  %v2097 = vld [vmem:[%s2047 + $0x60] sm:%s2038]
                  %2098 = vst [vmem:[%s2048 + $0x60] sm:%s2038] %v2097
                  %v2099 = vld [vmem:[%s2047 + $0x64] sm:%s2038]
                  %2100 = vst [vmem:[%s2048 + $0x64] sm:%s2038] %v2099
                  %v2101 = vld [vmem:[%s2047 + $0x68] sm:%s2038]
                  %2102 = vst [vmem:[%s2048 + $0x68] sm:%s2038] %v2101
                  %v2103 = vld [vmem:[%s2047 + $0x6c] sm:%s2038]
                  %2104 = vst [vmem:[%s2048 + $0x6c] sm:%s2038] %v2103
                  %v2105 = vld [vmem:[%s2047 + $0x70] sm:%s2038]
                  %2106 = vst [vmem:[%s2048 + $0x70] sm:%s2038] %v2105
                  %v2107 = vld [vmem:[%s2047 + $0x74] sm:%s2038]
                  %2108 = vst [vmem:[%s2048 + $0x74] sm:%s2038] %v2107
                  %v2109 = vld [vmem:[%s2047 + $0x78] sm:%s2038]
                  %2110 = vst [vmem:[%s2048 + $0x78] sm:%s2038] %v2109
                  %v2111 = vld [vmem:[%s2047 + $0x7c] sm:%s2038]
                  %2112 = vst [vmem:[%s2048 + $0x7c] sm:%s2038] %v2111
                  %v2113 = vld [vmem:[%s2047 + $0x80] sm:%s2038]
                  %2114 = vst [vmem:[%s2048 + $0x80] sm:%s2038] %v2113
                  %v2115 = vld [vmem:[%s2047 + $0x84] sm:%s2038]
                  %2116 = vst [vmem:[%s2048 + $0x84] sm:%s2038] %v2115
                  %v2117 = vld [vmem:[%s2047 + $0x88] sm:%s2038]
                  %2118 = vst [vmem:[%s2048 + $0x88] sm:%s2038] %v2117
                  %v2119 = vld [vmem:[%s2047 + $0x8c] sm:%s2038]
                  %2120 = vst [vmem:[%s2048 + $0x8c] sm:%s2038] %v2119
                  %v2121 = vld [vmem:[%s2047 + $0x90] sm:%s2038]
                  %2122 = vst [vmem:[%s2048 + $0x90] sm:%s2038] %v2121
                  %v2123 = vld [vmem:[%s2047 + $0x94] sm:%s2038]
                  %2124 = vst [vmem:[%s2048 + $0x94] sm:%s2038] %v2123
                  %v2125 = vld [vmem:[%s2047 + $0x98] sm:%s2038]
                  %2126 = vst [vmem:[%s2048 + $0x98] sm:%s2038] %v2125
                  %v2127 = vld [vmem:[%s2047 + $0x9c] sm:%s2038]
                  %2128 = vst [vmem:[%s2048 + $0x9c] sm:%s2038] %v2127
                  %v2129 = vld [vmem:[%s2047 + $0xa0] sm:%s2038]
                  %2130 = vst [vmem:[%s2048 + $0xa0] sm:%s2038] %v2129
                  %v2131 = vld [vmem:[%s2047 + $0xa4] sm:%s2038]
                  %2132 = vst [vmem:[%s2048 + $0xa4] sm:%s2038] %v2131
                  %v2133 = vld [vmem:[%s2047 + $0xa8] sm:%s2038]
                  %2134 = vst [vmem:[%s2048 + $0xa8] sm:%s2038] %v2133
                  %v2135 = vld [vmem:[%s2047 + $0xac] sm:%s2038]
                  %2136 = vst [vmem:[%s2048 + $0xac] sm:%s2038] %v2135
                  %v2137 = vld [vmem:[%s2047 + $0xb0] sm:%s2038]
                  %2138 = vst [vmem:[%s2048 + $0xb0] sm:%s2038] %v2137
                  %v2139 = vld [vmem:[%s2047 + $0xb4] sm:%s2038]
                  %2140 = vst [vmem:[%s2048 + $0xb4] sm:%s2038] %v2139
                  %v2141 = vld [vmem:[%s2047 + $0xb8] sm:%s2038]
                  %2142 = vst [vmem:[%s2048 + $0xb8] sm:%s2038] %v2141
                  %v2143 = vld [vmem:[%s2047 + $0xbc] sm:%s2038]
                  %2144 = vst [vmem:[%s2048 + $0xbc] sm:%s2038] %v2143
                  %v2145 = vld [vmem:[%s2047 + $0xc0] sm:%s2038]
                  %2146 = vst [vmem:[%s2048 + $0xc0] sm:%s2038] %v2145
                  %v2147 = vld [vmem:[%s2047 + $0xc4] sm:%s2038]
                  %2148 = vst [vmem:[%s2048 + $0xc4] sm:%s2038] %v2147
                  %v2149 = vld [vmem:[%s2047 + $0xc8] sm:%s2038]
                  %2150 = vst [vmem:[%s2048 + $0xc8] sm:%s2038] %v2149
                  %v2151 = vld [vmem:[%s2047 + $0xcc] sm:%s2038]
                  %2152 = vst [vmem:[%s2048 + $0xcc] sm:%s2038] %v2151
                  %v2153 = vld [vmem:[%s2047 + $0xd0] sm:%s2038]
                  %2154 = vst [vmem:[%s2048 + $0xd0] sm:%s2038] %v2153
                  %v2155 = vld [vmem:[%s2047 + $0xd4] sm:%s2038]
                  %2156 = vst [vmem:[%s2048 + $0xd4] sm:%s2038] %v2155
                  %v2157 = vld [vmem:[%s2047 + $0xd8] sm:%s2038]
                  %2158 = vst [vmem:[%s2048 + $0xd8] sm:%s2038] %v2157
                  %v2159 = vld [vmem:[%s2047 + $0xdc] sm:%s2038]
                  %2160 = vst [vmem:[%s2048 + $0xdc] sm:%s2038] %v2159
                  %v2161 = vld [vmem:[%s2047 + $0xe0] sm:%s2038]
                  %2162 = vst [vmem:[%s2048 + $0xe0] sm:%s2038] %v2161
                  %v2163 = vld [vmem:[%s2047 + $0xe4] sm:%s2038]
                  %2164 = vst [vmem:[%s2048 + $0xe4] sm:%s2038] %v2163
                  %v2165 = vld [vmem:[%s2047 + $0xe8] sm:%s2038]
                  %2166 = vst [vmem:[%s2048 + $0xe8] sm:%s2038] %v2165
                  %v2167 = vld [vmem:[%s2047 + $0xec] sm:%s2038]
                  %2168 = vst [vmem:[%s2048 + $0xec] sm:%s2038] %v2167
                  %v2169 = vld [vmem:[%s2047 + $0xf0] sm:%s2038]
                  %2170 = vst [vmem:[%s2048 + $0xf0] sm:%s2038] %v2169
                  %v2171 = vld [vmem:[%s2047 + $0xf4] sm:%s2038]
                  %2172 = vst [vmem:[%s2048 + $0xf4] sm:%s2038] %v2171
                  %v2173 = vld [vmem:[%s2047 + $0xf8] sm:%s2038]
                  %2174 = vst [vmem:[%s2048 + $0xf8] sm:%s2038] %v2173
                  %v2175 = vld [vmem:[%s2047 + $0xfc] sm:%s2038]
                  %2176 = vst [vmem:[%s2048 + $0xfc] sm:%s2038] %v2175
                  %s2177 = sadd.s32 1, %s2046
                  %p2178 = scmp.ge.s32.totalorder %s2177, %s2039
                  %s2179 = scalar_select %p2178, 0, %s2177
                  %s2180 = smul.u32 %s2179, 256
                  %s2181 = smul.u32 %s2179, 256
                  %s2182 = scalar_lea.vmem %s1844, %s2180 [#allocation2]
                  %s2183 = scalar_lea.vmem %s1855, %s2181
                $region71: #{cnn_forward.5} parent=65 // loop_footer
                  %s2043 = sadd.s32 %s2041, 1
                $region72: #{cnn_forward.5} parent=65 // loop_footer_branch
                  %2040 = sbr.rel target = $region68
                $region73: #{cnn_forward.5} parent=65 // loop_exit
                  _
                %s2184 = sshrl.u32 %s1851, 6
                %s2185 = sand.u32 %s1851, 63
                %s2186 = smul.u32 %s2184, 64
                %s2187 = smul.u32 4, %s2186
                %s2188 = scalar_lea.vmem %s1844, %s2187 [#allocation2]
                %s2189 = smul.u32 4, %s2186
                %s2190 = scalar_lea.vmem %s1855, %s2189
                // While loop
                $region74: #{cnn_forward.5} parent=65 // loop_pre_header
                  _
                $region75: #{cnn_forward.5} parent=65 // loop_header
                  %s2192 = sphi 0, %s2194
                  %p2193 = scmp.ge.s32.totalorder %s2192, %s2185
                  %s2197 = sphi 0, %s2204
                  %s2198 = sphi %s2188, %s2207
                  %s2199 = sphi %s2190, %s2208
                $region76: #{cnn_forward.5} parent=65 // loop_header_branch
                  %2196 = sbr.rel (%p2193) target = $region80
                $region77: #{cnn_forward.5} parent=65 // loop_body
                  %v2200 = vld [vmem:[%s2198] sm:%s2038]
                  %2201 = vst [vmem:[%s2199] sm:%s2038] %v2200
                  %s2202 = sadd.s32 1, %s2197
                  %p2203 = scmp.ge.s32.totalorder %s2202, %s2185
                  %s2204 = scalar_select %p2203, 0, %s2202
                  %s2205 = smul.u32 %s2204, 4
                  %s2206 = smul.u32 %s2204, 4
                  %s2207 = scalar_lea.vmem %s2188, %s2205 [#allocation2]
                  %s2208 = scalar_lea.vmem %s2190, %s2206
                $region78: #{cnn_forward.5} parent=65 // loop_footer
                  %s2194 = sadd.s32 %s2192, 1
                $region79: #{cnn_forward.5} parent=65 // loop_footer_branch
                  %2191 = sbr.rel target = $region75
                $region80: #{cnn_forward.5} parent=65 // loop_exit
                  _
              $region66: #{cnn_forward.5} parent=43 // pred_fallthru
                _
            $region44: #{cnn_forward.5} parent=39 // pred_fallthru
              _
            // Predicated region
            $region45: #{cnn_forward.5} parent=39 // pred_check
              _
            $region46: #{cnn_forward.5} parent=39 // pred_check_branch
              %1862 = sbr.rel (0) target = $region48
            $region47: #{cnn_forward.5} parent=39 // pred_region
              %s1864 = ssub.s32 16, 1
              %s1865 = sshrl.u32 %s1851, 6
              // While loop
              $region49: #{cnn_forward.5} parent=47 // loop_pre_header
                _
              $region50: #{cnn_forward.5} parent=47 // loop_header
                %s1867 = sphi 0, %s1869
                %p1868 = scmp.ge.s32.totalorder %s1867, %s1865
                %s1872 = sphi 0, %s2005
                %s1873 = sphi %s1844, %s2008
                %s1874 = sphi %s1855, %s2009
              $region51: #{cnn_forward.5} parent=47 // loop_header_branch
                %1871 = sbr.rel (%p1868) target = $region55
              $region52: #{cnn_forward.5} parent=47 // loop_body
                %v1875 = vld [vmem:[%s1873] sm:%s1864]
                %1876 = vst [vmem:[%s1874] sm:%s1864] %v1875
                %v1877 = vld [vmem:[%s1873 + $0x4] sm:%s1864]
                %1878 = vst [vmem:[%s1874 + $0x4] sm:%s1864] %v1877
                %v1879 = vld [vmem:[%s1873 + $0x8] sm:%s1864]
                %1880 = vst [vmem:[%s1874 + $0x8] sm:%s1864] %v1879
                %v1881 = vld [vmem:[%s1873 + $0xc] sm:%s1864]
                %1882 = vst [vmem:[%s1874 + $0xc] sm:%s1864] %v1881
                %v1883 = vld [vmem:[%s1873 + $0x10] sm:%s1864]
                %1884 = vst [vmem:[%s1874 + $0x10] sm:%s1864] %v1883
                %v1885 = vld [vmem:[%s1873 + $0x14] sm:%s1864]
                %1886 = vst [vmem:[%s1874 + $0x14] sm:%s1864] %v1885
                %v1887 = vld [vmem:[%s1873 + $0x18] sm:%s1864]
                %1888 = vst [vmem:[%s1874 + $0x18] sm:%s1864] %v1887
                %v1889 = vld [vmem:[%s1873 + $0x1c] sm:%s1864]
                %1890 = vst [vmem:[%s1874 + $0x1c] sm:%s1864] %v1889
                %v1891 = vld [vmem:[%s1873 + $0x20] sm:%s1864]
                %1892 = vst [vmem:[%s1874 + $0x20] sm:%s1864] %v1891
                %v1893 = vld [vmem:[%s1873 + $0x24] sm:%s1864]
                %1894 = vst [vmem:[%s1874 + $0x24] sm:%s1864] %v1893
                %v1895 = vld [vmem:[%s1873 + $0x28] sm:%s1864]
                %1896 = vst [vmem:[%s1874 + $0x28] sm:%s1864] %v1895
                %v1897 = vld [vmem:[%s1873 + $0x2c] sm:%s1864]
                %1898 = vst [vmem:[%s1874 + $0x2c] sm:%s1864] %v1897
                %v1899 = vld [vmem:[%s1873 + $0x30] sm:%s1864]
                %1900 = vst [vmem:[%s1874 + $0x30] sm:%s1864] %v1899
                %v1901 = vld [vmem:[%s1873 + $0x34] sm:%s1864]
                %1902 = vst [vmem:[%s1874 + $0x34] sm:%s1864] %v1901
                %v1903 = vld [vmem:[%s1873 + $0x38] sm:%s1864]
                %1904 = vst [vmem:[%s1874 + $0x38] sm:%s1864] %v1903
                %v1905 = vld [vmem:[%s1873 + $0x3c] sm:%s1864]
                %1906 = vst [vmem:[%s1874 + $0x3c] sm:%s1864] %v1905
                %v1907 = vld [vmem:[%s1873 + $0x40] sm:%s1864]
                %1908 = vst [vmem:[%s1874 + $0x40] sm:%s1864] %v1907
                %v1909 = vld [vmem:[%s1873 + $0x44] sm:%s1864]
                %1910 = vst [vmem:[%s1874 + $0x44] sm:%s1864] %v1909
                %v1911 = vld [vmem:[%s1873 + $0x48] sm:%s1864]
                %1912 = vst [vmem:[%s1874 + $0x48] sm:%s1864] %v1911
                %v1913 = vld [vmem:[%s1873 + $0x4c] sm:%s1864]
                %1914 = vst [vmem:[%s1874 + $0x4c] sm:%s1864] %v1913
                %v1915 = vld [vmem:[%s1873 + $0x50] sm:%s1864]
                %1916 = vst [vmem:[%s1874 + $0x50] sm:%s1864] %v1915
                %v1917 = vld [vmem:[%s1873 + $0x54] sm:%s1864]
                %1918 = vst [vmem:[%s1874 + $0x54] sm:%s1864] %v1917
                %v1919 = vld [vmem:[%s1873 + $0x58] sm:%s1864]
                %1920 = vst [vmem:[%s1874 + $0x58] sm:%s1864] %v1919
                %v1921 = vld [vmem:[%s1873 + $0x5c] sm:%s1864]
                %1922 = vst [vmem:[%s1874 + $0x5c] sm:%s1864] %v1921
                %v1923 = vld [vmem:[%s1873 + $0x60] sm:%s1864]
                %1924 = vst [vmem:[%s1874 + $0x60] sm:%s1864] %v1923
                %v1925 = vld [vmem:[%s1873 + $0x64] sm:%s1864]
                %1926 = vst [vmem:[%s1874 + $0x64] sm:%s1864] %v1925
                %v1927 = vld [vmem:[%s1873 + $0x68] sm:%s1864]
                %1928 = vst [vmem:[%s1874 + $0x68] sm:%s1864] %v1927
                %v1929 = vld [vmem:[%s1873 + $0x6c] sm:%s1864]
                %1930 = vst [vmem:[%s1874 + $0x6c] sm:%s1864] %v1929
                %v1931 = vld [vmem:[%s1873 + $0x70] sm:%s1864]
                %1932 = vst [vmem:[%s1874 + $0x70] sm:%s1864] %v1931
                %v1933 = vld [vmem:[%s1873 + $0x74] sm:%s1864]
                %1934 = vst [vmem:[%s1874 + $0x74] sm:%s1864] %v1933
                %v1935 = vld [vmem:[%s1873 + $0x78] sm:%s1864]
                %1936 = vst [vmem:[%s1874 + $0x78] sm:%s1864] %v1935
                %v1937 = vld [vmem:[%s1873 + $0x7c] sm:%s1864]
                %1938 = vst [vmem:[%s1874 + $0x7c] sm:%s1864] %v1937
                %v1939 = vld [vmem:[%s1873 + $0x80] sm:%s1864]
                %1940 = vst [vmem:[%s1874 + $0x80] sm:%s1864] %v1939
                %v1941 = vld [vmem:[%s1873 + $0x84] sm:%s1864]
                %1942 = vst [vmem:[%s1874 + $0x84] sm:%s1864] %v1941
                %v1943 = vld [vmem:[%s1873 + $0x88] sm:%s1864]
                %1944 = vst [vmem:[%s1874 + $0x88] sm:%s1864] %v1943
                %v1945 = vld [vmem:[%s1873 + $0x8c] sm:%s1864]
                %1946 = vst [vmem:[%s1874 + $0x8c] sm:%s1864] %v1945
                %v1947 = vld [vmem:[%s1873 + $0x90] sm:%s1864]
                %1948 = vst [vmem:[%s1874 + $0x90] sm:%s1864] %v1947
                %v1949 = vld [vmem:[%s1873 + $0x94] sm:%s1864]
                %1950 = vst [vmem:[%s1874 + $0x94] sm:%s1864] %v1949
                %v1951 = vld [vmem:[%s1873 + $0x98] sm:%s1864]
                %1952 = vst [vmem:[%s1874 + $0x98] sm:%s1864] %v1951
                %v1953 = vld [vmem:[%s1873 + $0x9c] sm:%s1864]
                %1954 = vst [vmem:[%s1874 + $0x9c] sm:%s1864] %v1953
                %v1955 = vld [vmem:[%s1873 + $0xa0] sm:%s1864]
                %1956 = vst [vmem:[%s1874 + $0xa0] sm:%s1864] %v1955
                %v1957 = vld [vmem:[%s1873 + $0xa4] sm:%s1864]
                %1958 = vst [vmem:[%s1874 + $0xa4] sm:%s1864] %v1957
                %v1959 = vld [vmem:[%s1873 + $0xa8] sm:%s1864]
                %1960 = vst [vmem:[%s1874 + $0xa8] sm:%s1864] %v1959
                %v1961 = vld [vmem:[%s1873 + $0xac] sm:%s1864]
                %1962 = vst [vmem:[%s1874 + $0xac] sm:%s1864] %v1961
                %v1963 = vld [vmem:[%s1873 + $0xb0] sm:%s1864]
                %1964 = vst [vmem:[%s1874 + $0xb0] sm:%s1864] %v1963
                %v1965 = vld [vmem:[%s1873 + $0xb4] sm:%s1864]
                %1966 = vst [vmem:[%s1874 + $0xb4] sm:%s1864] %v1965
                %v1967 = vld [vmem:[%s1873 + $0xb8] sm:%s1864]
                %1968 = vst [vmem:[%s1874 + $0xb8] sm:%s1864] %v1967
                %v1969 = vld [vmem:[%s1873 + $0xbc] sm:%s1864]
                %1970 = vst [vmem:[%s1874 + $0xbc] sm:%s1864] %v1969
                %v1971 = vld [vmem:[%s1873 + $0xc0] sm:%s1864]
                %1972 = vst [vmem:[%s1874 + $0xc0] sm:%s1864] %v1971
                %v1973 = vld [vmem:[%s1873 + $0xc4] sm:%s1864]
                %1974 = vst [vmem:[%s1874 + $0xc4] sm:%s1864] %v1973
                %v1975 = vld [vmem:[%s1873 + $0xc8] sm:%s1864]
                %1976 = vst [vmem:[%s1874 + $0xc8] sm:%s1864] %v1975
                %v1977 = vld [vmem:[%s1873 + $0xcc] sm:%s1864]
                %1978 = vst [vmem:[%s1874 + $0xcc] sm:%s1864] %v1977
                %v1979 = vld [vmem:[%s1873 + $0xd0] sm:%s1864]
                %1980 = vst [vmem:[%s1874 + $0xd0] sm:%s1864] %v1979
                %v1981 = vld [vmem:[%s1873 + $0xd4] sm:%s1864]
                %1982 = vst [vmem:[%s1874 + $0xd4] sm:%s1864] %v1981
                %v1983 = vld [vmem:[%s1873 + $0xd8] sm:%s1864]
                %1984 = vst [vmem:[%s1874 + $0xd8] sm:%s1864] %v1983
                %v1985 = vld [vmem:[%s1873 + $0xdc] sm:%s1864]
                %1986 = vst [vmem:[%s1874 + $0xdc] sm:%s1864] %v1985
                %v1987 = vld [vmem:[%s1873 + $0xe0] sm:%s1864]
                %1988 = vst [vmem:[%s1874 + $0xe0] sm:%s1864] %v1987
                %v1989 = vld [vmem:[%s1873 + $0xe4] sm:%s1864]
                %1990 = vst [vmem:[%s1874 + $0xe4] sm:%s1864] %v1989
                %v1991 = vld [vmem:[%s1873 + $0xe8] sm:%s1864]
                %1992 = vst [vmem:[%s1874 + $0xe8] sm:%s1864] %v1991
                %v1993 = vld [vmem:[%s1873 + $0xec] sm:%s1864]
                %1994 = vst [vmem:[%s1874 + $0xec] sm:%s1864] %v1993
                %v1995 = vld [vmem:[%s1873 + $0xf0] sm:%s1864]
                %1996 = vst [vmem:[%s1874 + $0xf0] sm:%s1864] %v1995
                %v1997 = vld [vmem:[%s1873 + $0xf4] sm:%s1864]
                %1998 = vst [vmem:[%s1874 + $0xf4] sm:%s1864] %v1997
                %v1999 = vld [vmem:[%s1873 + $0xf8] sm:%s1864]
                %2000 = vst [vmem:[%s1874 + $0xf8] sm:%s1864] %v1999
                %v2001 = vld [vmem:[%s1873 + $0xfc] sm:%s1864]
                %2002 = vst [vmem:[%s1874 + $0xfc] sm:%s1864] %v2001
                %s2003 = sadd.s32 1, %s1872
                %p2004 = scmp.ge.s32.totalorder %s2003, %s1865
                %s2005 = scalar_select %p2004, 0, %s2003
                %s2006 = smul.u32 %s2005, 256
                %s2007 = smul.u32 %s2005, 256
                %s2008 = scalar_lea.vmem %s1844, %s2006 [#allocation2]
                %s2009 = scalar_lea.vmem %s1855, %s2007
              $region53: #{cnn_forward.5} parent=47 // loop_footer
                %s1869 = sadd.s32 %s1867, 1
              $region54: #{cnn_forward.5} parent=47 // loop_footer_branch
                %1866 = sbr.rel target = $region50
              $region55: #{cnn_forward.5} parent=47 // loop_exit
                _
              %s2010 = sshrl.u32 %s1851, 6
              %s2011 = sand.u32 %s1851, 63
              %s2012 = smul.u32 %s2010, 64
              %s2013 = smul.u32 4, %s2012
              %s2014 = scalar_lea.vmem %s1844, %s2013 [#allocation2]
              %s2015 = smul.u32 4, %s2012
              %s2016 = scalar_lea.vmem %s1855, %s2015
              // While loop
              $region56: #{cnn_forward.5} parent=47 // loop_pre_header
                _
              $region57: #{cnn_forward.5} parent=47 // loop_header
                %s2018 = sphi 0, %s2020
                %p2019 = scmp.ge.s32.totalorder %s2018, %s2011
                %s2023 = sphi 0, %s2030
                %s2024 = sphi %s2014, %s2033
                %s2025 = sphi %s2016, %s2034
              $region58: #{cnn_forward.5} parent=47 // loop_header_branch
                %2022 = sbr.rel (%p2019) target = $region62
              $region59: #{cnn_forward.5} parent=47 // loop_body
                %v2026 = vld [vmem:[%s2024] sm:%s1864]
                %2027 = vst [vmem:[%s2025] sm:%s1864] %v2026
                %s2028 = sadd.s32 1, %s2023
                %p2029 = scmp.ge.s32.totalorder %s2028, %s2011
                %s2030 = scalar_select %p2029, 0, %s2028
                %s2031 = smul.u32 %s2030, 4
                %s2032 = smul.u32 %s2030, 4
                %s2033 = scalar_lea.vmem %s2014, %s2031 [#allocation2]
                %s2034 = scalar_lea.vmem %s2016, %s2032
              $region60: #{cnn_forward.5} parent=47 // loop_footer
                %s2020 = sadd.s32 %s2018, 1
              $region61: #{cnn_forward.5} parent=47 // loop_footer_branch
                %2017 = sbr.rel target = $region57
              $region62: #{cnn_forward.5} parent=47 // loop_exit
                _
            $region48: #{cnn_forward.5} parent=39 // pred_fallthru
              _
          $region40: #{cnn_forward.5} parent=35 // pred_fallthru
            _
          %2209 = vnop
        $region36: #{cnn_forward.5} parent=31 // pred_fallthru
          _
      $region32: #{cnn_forward.5} parent=5 // pred_fallthru
        _
      %p2210 = scmp.le.s32.totalorder 2, %s9
      // Predicated region
      $region81: #{cnn_forward.5} parent=5 // pred_check
        %p2211 = pneg %p2210
      $region82: #{cnn_forward.5} parent=5 // pred_check_branch
        %2213 = sbr.rel (%p2211) target = $region84
      $region83: #{cnn_forward.5} parent=5 // pred_region
        %s2214 = ssub.s32 %s9, 2
        // Predicated region
        $region85: #{cnn_forward.5} parent=83 // pred_check
          %p2215 = pneg %p106
        $region86: #{cnn_forward.5} parent=83 // pred_check_branch
          %2217 = sbr.rel (%p2215) target = $region88
        $region87: #{cnn_forward.5} parent=83 // pred_region
          %s2218 = sand.u32 %s91, 1
          %s2219 = sand.u32 %s91, 1
          %s2220 = smul.addr %s2219, 368
          %s2221 = scalar_lea.vmem [#allocation2], %s2220
        $region88: #{cnn_forward.5} parent=83 // pred_fallthru
          _
      $region84: #{cnn_forward.5} parent=5 // pred_fallthru
        _
    $region6: #{cnn_forward.5} parent=1 // loop_footer
      %s13 = sadd.s32 1, %s9
    $region7: #{cnn_forward.5} parent=1 // loop_footer_branch
      %8 = sbr.rel target = $region3
    $region8: #{cnn_forward.5} parent=1 // loop_exit
      _

// kernel: cnn_forward.6
$region0: #{cnn_forward.6}
  #allocation0 [shape = 'u32[]', space=smem, size = 0x4, offset = 0x4, fixed_abs, tag = 'smem constant byte address 0x4 - core index']
  #allocation1 [shape = 'u32[144,128]{1,0:T(1,128)}', space=vmem, size = 0x12000, scoped, tag = 'internal scratch']
  %s0 = inlined_call_operand.vmem [shape: bf16[72,384], index: 0, kind: input, shape index: {}]
  %s1 = inlined_call_operand.vmem [shape: bf16[384,128], index: 1, kind: input, shape index: {}]
  %s2 = inlined_call_operand.vmem [shape: f32[1,128], index: 2, kind: input, shape index: {}]
  %s3 = inlined_call_operand.vmem [shape: bf16[72,128], index: 3, kind: output, shape index: {}]
  %s4 = sld [smem:[#allocation0]]
  $region89: #{cnn_forward.6} parent=0
    _
  %s6 = ssub.s32 1, %s4
  %s7 = scalar_select 0, %s6, %s4
  $region1: #{cnn_forward.6} parent=0
    #allocation2 [shape = 'u8[24576]{0}', space=vmem, size = 0x6000, scoped, tag = 'output window, operand 0']
    loop: start=0, step=1, limit=4
    $region2: #{cnn_forward.6} parent=1 // loop_pre_header
      _
    $region3: #{cnn_forward.6} parent=1 // loop_header
      %s9 = sphi 0, %s13
      %p10 = scmp.ge.s32.totalorder %s9, 4
      %s19 = sphi 0, %s21
      %s22 = sphi 0, %s19
      %s23 = sphi 0, %s22
      %s39 = sphi 0, %s23
      %s43 = sphi 0, %s43
      %s45 = sphi 0, %s43
      %s46 = sphi 0, %s45
      %s60 = sphi 0, %s46
      %s64 = sphi 0, %s64
      %s66 = sphi 0, %s64
      %s67 = sphi 0, %s66
      %s81 = sphi 0, %s67
      %s87 = sphi 0, %s89
      %s90 = sphi 0, %s87
      %s91 = sphi 0, %s90
      %s107 = sphi 0, %s91
    $region4: #{cnn_forward.6} parent=1 // loop_header_branch
      %12 = sbr.rel (%p10) target = $region8
    $region5: #{cnn_forward.6} parent=1 // loop_body
      %s14 = ssub.s32 %s9, 1
      %s15 = ssub.s32 %s9, 2
      %s16 = sadd.s32 %s9, 1
      %s17 = ssub.s32 %s9, %s16
      %p18 = scmp.eq.s32.totalorder %s17, 0
      %s20 = sadd.s32 %s19, 1
      %s21 = scalar_select %p18, %s19, %s20
      %p24 = pneg %p18
      %p25 = scmp.eq.s32.totalorder %s9, 1
      %p26 = por %p24, %p25
      %p27 = scmp.ne.s32.totalorder %s19, %s22
      %p28 = scmp.eq.s32.totalorder %s9, 0
      %p29 = por %p27, %p28
      %p30 = scmp.ne.s32.totalorder %s19, %s22
      %p31 = scmp.eq.s32.totalorder %s14, 1
      %p32 = por %p30, %p31
      %p33 = scmp.ne.s32.totalorder %s22, %s23
      %p34 = scmp.eq.s32.totalorder %s14, 0
      %p35 = por %p33, %p34
      %p36 = scmp.ne.s32.totalorder %s22, %s23
      %p37 = scmp.eq.s32.totalorder %s15, 1
      %p38 = por %p36, %p37
      %p40 = scmp.ne.s32.totalorder %s23, %s39
      %p41 = scmp.eq.s32.totalorder %s15, 0
      %p42 = por %p40, %p41
      %s44 = sadd.s32 %s43, 1
      %p47 = scmp.eq.s32.totalorder %s9, 1
      %p48 = scmp.ne.s32.totalorder %s43, %s45
      %p49 = scmp.eq.s32.totalorder %s9, 0
      %p50 = por %p48, %p49
      %p51 = scmp.ne.s32.totalorder %s43, %s45
      %p52 = scmp.eq.s32.totalorder %s14, 1
      %p53 = por %p51, %p52
      %p54 = scmp.ne.s32.totalorder %s45, %s46
      %p55 = scmp.eq.s32.totalorder %s14, 0
      %p56 = por %p54, %p55
      %p57 = scmp.ne.s32.totalorder %s45, %s46
      %p58 = scmp.eq.s32.totalorder %s15, 1
      %p59 = por %p57, %p58
      %p61 = scmp.ne.s32.totalorder %s46, %s60
      %p62 = scmp.eq.s32.totalorder %s15, 0
      %p63 = por %p61, %p62
      %s65 = sadd.s32 %s64, 1
      %p68 = scmp.eq.s32.totalorder %s9, 1
      %p69 = scmp.ne.s32.totalorder %s64, %s66
      %p70 = scmp.eq.s32.totalorder %s9, 0
      %p71 = por %p69, %p70
      %p72 = scmp.ne.s32.totalorder %s64, %s66
      %p73 = scmp.eq.s32.totalorder %s14, 1
      %p74 = por %p72, %p73
      %p75 = scmp.ne.s32.totalorder %s66, %s67
      %p76 = scmp.eq.s32.totalorder %s14, 0
      %p77 = por %p75, %p76
      %p78 = scmp.ne.s32.totalorder %s66, %s67
      %p79 = scmp.eq.s32.totalorder %s15, 1
      %p80 = por %p78, %p79
      %p82 = scmp.ne.s32.totalorder %s67, %s81
      %p83 = scmp.eq.s32.totalorder %s15, 0
      %p84 = por %p82, %p83
      %s85 = ssub.s32 %s9, %s16
      %p86 = scmp.eq.s32.totalorder %s85, 0
      %s88 = sadd.s32 %s87, 1
      %s89 = scalar_select %p86, %s87, %s88
      %p92 = pneg %p86
      %p93 = scmp.eq.s32.totalorder %s9, 1
      %p94 = por %p92, %p93
      %p95 = scmp.ne.s32.totalorder %s87, %s90
      %p96 = scmp.eq.s32.totalorder %s9, 0
      %p97 = por %p95, %p96
      %p98 = scmp.ne.s32.totalorder %s87, %s90
      %p99 = scmp.eq.s32.totalorder %s14, 1
      %p100 = por %p98, %p99
      %p101 = scmp.ne.s32.totalorder %s90, %s91
      %p102 = scmp.eq.s32.totalorder %s14, 0
      %p103 = por %p101, %p102
      %p104 = scmp.ne.s32.totalorder %s90, %s91
      %p105 = scmp.eq.s32.totalorder %s15, 1
      %p106 = por %p104, %p105
      %p108 = scmp.ne.s32.totalorder %s91, %s107
      %p109 = scmp.eq.s32.totalorder %s15, 0
      %p110 = por %p108, %p109
      %p111 = scmp.le.s32.totalorder 1, %s9
      %p112 = scmp.lt.s32.totalorder %s9, 3
      %p113 = pnand %p111, %p112
      %p114 = pneg %p113
      // Predicated region
      $region9: #{cnn_forward.6} parent=5 // pred_check
        _
      $region10: #{cnn_forward.6} parent=5 // pred_check_branch
        %116 = sbr.rel (%p113) target = $region12
      $region11: #{cnn_forward.6} parent=5 // pred_region
        %s117 = ssub.s32 %s9, 1
        // Predicated region
        $region13: #{cnn_forward.6} parent=11 // pred_check
          %p118 = pneg %p56
        $region14: #{cnn_forward.6} parent=11 // pred_check_branch
          %120 = sbr.rel (%p118) target = $region16
        $region15: #{cnn_forward.6} parent=11 // pred_region
          _
        $region16: #{cnn_forward.6} parent=11 // pred_fallthru
          _
        // Predicated region
        $region17: #{cnn_forward.6} parent=11 // pred_check
          %p121 = pneg %p77
        $region18: #{cnn_forward.6} parent=11 // pred_check_branch
          %123 = sbr.rel (%p121) target = $region20
        $region19: #{cnn_forward.6} parent=11 // pred_region
          _
        $region20: #{cnn_forward.6} parent=11 // pred_fallthru
          _
      $region12: #{cnn_forward.6} parent=5 // pred_fallthru
        _
      %p124 = scmp.lt.s32.totalorder %s9, 2
      // Predicated region
      $region21: #{cnn_forward.6} parent=5 // pred_check
        %p125 = pneg %p124
      $region22: #{cnn_forward.6} parent=5 // pred_check_branch
        %127 = sbr.rel (%p125) target = $region24
      $region23: #{cnn_forward.6} parent=5 // pred_region
        // Predicated region
        $region25: #{cnn_forward.6} parent=23 // pred_check
          %p128 = pneg %p29
        $region26: #{cnn_forward.6} parent=23 // pred_check_branch
          %130 = sbr.rel (%p128) target = $region28
        $region27: #{cnn_forward.6} parent=23 // pred_region
          %s131 = smul.u32 6, %s9
          %s132 = ssub.s32 9, %s131
          %p133 = scmp.lt.s32.totalorder %s132, 6
          %s134 = scalar_select %p133, %s132, 6
          %s135 = smul.u32 64, %s134
          %s136 = smul.u32 %s135, 3
          %p137 = scmp.lt.s32.totalorder %s131, 8
          %s138 = scalar_select %p137, %s131, 8
          %s139 = smul.addr %s138, 3
          %s140 = smul.addr %s139, 4
          %s141 = scalar_lea.vmem %s0, %s140
          %s142 = smul.u32 6, %s9
          %s143 = ssub.s32 9, %s142
          %p144 = scmp.lt.s32.totalorder %s143, 6
          %s145 = scalar_select %p144, %s143, 6
          %s146 = smul.u32 64, %s145
          %s147 = smul.u32 %s146, 3
        $region28: #{cnn_forward.6} parent=23 // pred_fallthru
          _
      $region24: #{cnn_forward.6} parent=5 // pred_fallthru
        _
      %p148 = scmp.le.s32.totalorder 1, %s9
      %p149 = scmp.lt.s32.totalorder %s9, 3
      %p150 = pnand %p148, %p149
      %p151 = pneg %p150
      // Predicated region
      $region29: #{cnn_forward.6} parent=5 // pred_check
        _
      $region30: #{cnn_forward.6} parent=5 // pred_check_branch
        %153 = sbr.rel (%p150) target = $region32
      $region31: #{cnn_forward.6} parent=5 // pred_region
        %s154 = ssub.s32 %s9, 1
        %s155 = smul.u32 6, %s14
        %s156 = ssub.s32 9, %s155
        %p157 = scmp.lt.s32.totalorder %s156, 6
        %s158 = scalar_select %p157, %s156, 6
        %s159 = smul.u32 64, %s158
        %s160 = smul.u32 %s159, 3
        %p161 = scmp.lt.s32.totalorder %s155, 8
        %s162 = scalar_select %p161, %s155, 8
        %s163 = smul.addr %s162, 3
        %s164 = smul.addr %s163, 4
        %s165 = scalar_lea.vmem %s0, %s164
        %p166 = pneg %p35
        %p167 = pneg %p32
        %p168 = pneg %p56
        %p169 = pneg %p53
        %p170 = pneg %p77
        %p171 = pneg %p74
        %p172 = pneg %p103
        %p173 = pneg %p100
        %s174 = sand.u32 %s90, 1
        %s175 = sand.u32 %s90, 1
        %s176 = smul.addr %s175, 24
        %s177 = scalar_lea.vmem [#allocation2], %s176
        %s178 = smul.u32 6, %s14
        %s179 = ssub.s32 9, %s178
        %p180 = scmp.lt.s32.totalorder %s179, 6
        %s181 = scalar_select %p180, %s179, 6
        %s182 = smul.u32 64, %s181
        %s183 = smul.u32 %s182, 3
        %p184 = scmp.lt.s32.totalorder %s178, 8
        %s185 = scalar_select %p184, %s178, 8
        %s186 = smul.addr %s185, 3
        %s187 = smul.addr %s186, 4
        %s188 = scalar_lea.vmem %s0, %s187
        %s189 = smul.u32 6, %s14
        %s190 = ssub.s32 9, %s189
        %p191 = scmp.lt.s32.totalorder %s190, 6
        %s192 = scalar_select %p191, %s190, 6
        %s193 = smul.u32 64, %s192
        %s194 = smul.u32 %s193, 3
        %s195 = smul.u32 6, %s14
        %s196 = ssub.s32 9, %s195
        %p197 = scmp.lt.s32.totalorder %s196, 6
        %s198 = scalar_select %p197, %s196, 6
        %s199 = smul.u32 64, %s198
        %v201 = vld [vmem:[%s188] sm:$0xff]
        %v202 = vld [vmem:[%s188 + $0x8] sm:$0xf]
        %v203 = vld [vmem:[%s188 + $0xc] sm:$0xff]
        %v204 = vld [vmem:[%s188 + $0x14] sm:$0xf]
        %v205 = vld [vmem:[%s188 + $0x18] sm:$0xff]
        %v206 = vld [vmem:[%s188 + $0x20] sm:$0xf]
        %v207 = vld [vmem:[%s188 + $0x24] sm:$0xff]
        %v208 = vld [vmem:[%s188 + $0x2c] sm:$0xf]
        %v209 = vld [vmem:[%s188 + $0x30] sm:$0xff]
        %v210 = vld [vmem:[%s188 + $0x38] sm:$0xf]
        %v211 = vld [vmem:[%s188 + $0x3c] sm:$0xff]
        %v212 = vld [vmem:[%s188 + $0x44] sm:$0xf]
        %v213 = vld [vmem:[%s1] sm:$0xf]
        %v214 = vld [vmem:[%s1 + $0x4] sm:$0xf]
        %v215 = vld [vmem:[%s1 + $0x8] sm:$0xf]
        %v216 = vld [vmem:[%s1 + $0xc] sm:$0xf]
        %v217 = vld [vmem:[%s1 + $0x10] sm:$0xf]
        %v218 = vld [vmem:[%s1 + $0x14] sm:$0xf]
        %v219 = vld [vmem:[%s1 + $0x18] sm:$0xf]
        %v220 = vld [vmem:[%s1 + $0x1c] sm:$0xf]
        %v221 = vld [vmem:[%s1 + $0x20] sm:$0xf]
        %v222 = vld [vmem:[%s1 + $0x24] sm:$0xf]
        %v223 = vld [vmem:[%s1 + $0x28] sm:$0xf]
        %v224 = vld [vmem:[%s1 + $0x2c] sm:$0xf]
        %v225 = vld [vmem:[%s1 + $0x30] sm:$0xf]
        %v226 = vld [vmem:[%s1 + $0x34] sm:$0xf]
        %v227 = vld [vmem:[%s1 + $0x38] sm:$0xf]
        %v228 = vld [vmem:[%s1 + $0x3c] sm:$0xf]
        %v229 = vld [vmem:[%s1 + $0x40] sm:$0xf]
        %v230 = vld [vmem:[%s1 + $0x44] sm:$0xf]
        %v231 = vld [vmem:[%s1 + $0x48] sm:$0xf]
        %v232 = vld [vmem:[%s1 + $0x4c] sm:$0xf]
        %v233 = vld [vmem:[%s1 + $0x50] sm:$0xf]
        %v234 = vld [vmem:[%s1 + $0x54] sm:$0xf]
        %v235 = vld [vmem:[%s1 + $0x58] sm:$0xf]
        %v236 = vld [vmem:[%s1 + $0x5c] sm:$0xf]
        %v237 = vld [vmem:[%s1 + $0x60] sm:$0xf]
        %v238 = vld [vmem:[%s1 + $0x64] sm:$0xf]
        %v239 = vld [vmem:[%s1 + $0x68] sm:$0xf]
        %v240 = vld [vmem:[%s1 + $0x6c] sm:$0xf]
        %v241 = vld [vmem:[%s1 + $0x70] sm:$0xf]
        %v242 = vld [vmem:[%s1 + $0x74] sm:$0xf]
        %v243 = vld [vmem:[%s1 + $0x78] sm:$0xf]
        %v244 = vld [vmem:[%s1 + $0x7c] sm:$0xf]
        %v245 = vld [vmem:[%s1 + $0x80] sm:$0xf]
        %v246 = vld [vmem:[%s1 + $0x84] sm:$0xf]
        %v247 = vld [vmem:[%s1 + $0x88] sm:$0xf]
        %v248 = vld [vmem:[%s1 + $0x8c] sm:$0xf]
        %v249 = vld [vmem:[%s1 + $0x90] sm:$0xf]
        %v250 = vld [vmem:[%s1 + $0x94] sm:$0xf]
        %v251 = vld [vmem:[%s1 + $0x98] sm:$0xf]
        %v252 = vld [vmem:[%s1 + $0x9c] sm:$0xf]
        %v253 = vld [vmem:[%s1 + $0xa0] sm:$0xf]
        %v254 = vld [vmem:[%s1 + $0xa4] sm:$0xf]
        %v255 = vld [vmem:[%s1 + $0xa8] sm:$0xf]
        %v256 = vld [vmem:[%s1 + $0xac] sm:$0xf]
        %v257 = vld [vmem:[%s1 + $0xb0] sm:$0xf]
        %v258 = vld [vmem:[%s1 + $0xb4] sm:$0xf]
        %v259 = vld [vmem:[%s1 + $0xb8] sm:$0xf]
        %v260 = vld [vmem:[%s1 + $0xbc] sm:$0xf]
        %v261 = vld [vmem:[%s2] sm:$0x1]
        %v263 = vlaneseq
        %v264 = vshrl.u32 %v263, 7
        %v265 = vsub.s32 0, %v264
        %v266 = vrot.slane %v261, %v265
        %v280 = vunpack.c.l.b16 %v201
        %v281 = vunpack.c.h.b16 %v201
        %v282 = vunpack.c.l.b16 %v202
        %v283 = vunpack.c.l.b16 %v203
        %v284 = vunpack.c.h.b16 %v203
        %v285 = vunpack.c.l.b16 %v204
        %v286 = vunpack.c.l.b16 %v205
        %v287 = vunpack.c.h.b16 %v205
        %v288 = vunpack.c.l.b16 %v206
        %v289 = vunpack.c.l.b16 %v207
        %v290 = vunpack.c.h.b16 %v207
        %v291 = vunpack.c.l.b16 %v208
        %v292 = vunpack.c.l.b16 %v209
        %v293 = vunpack.c.h.b16 %v209
        %v294 = vunpack.c.l.b16 %v210
        %v295 = vunpack.c.l.b16 %v211
        %v296 = vunpack.c.h.b16 %v211
        %v297 = vunpack.c.l.b16 %v212
        %v298 = vpack.c.b16 %v283, %v280
        %v299 = vpack.c.b16 %v284, %v281
        %v300 = vpack.c.b16 %v285, %v282
        %v301 = vpack.c.b16 %v289, %v286
        %v302 = vpack.c.b16 %v290, %v287
        %v303 = vpack.c.b16 %v291, %v288
        %v304 = vpack.c.b16 %v295, %v292
        %v305 = vpack.c.b16 %v296, %v293
        %v306 = vpack.c.b16 %v297, %v294
        %v364 = vunpack.c.l.b16 %v213
        %v365 = vunpack.c.l.b16 %v214
        %v366 = vunpack.c.l.b16 %v215
        %v367 = vunpack.c.l.b16 %v216
        %v368 = vunpack.c.l.b16 %v217
        %v369 = vunpack.c.l.b16 %v218
        %v370 = vunpack.c.l.b16 %v219
        %v371 = vunpack.c.l.b16 %v220
        %v372 = vunpack.c.l.b16 %v221
        %v373 = vunpack.c.l.b16 %v222
        %v374 = vunpack.c.l.b16 %v223
        %v375 = vunpack.c.l.b16 %v224
        %v376 = vunpack.c.l.b16 %v225
        %v377 = vunpack.c.l.b16 %v226
        %v378 = vunpack.c.l.b16 %v227
        %v379 = vunpack.c.l.b16 %v228
        %v380 = vunpack.c.l.b16 %v229
        %v381 = vunpack.c.l.b16 %v230
        %v382 = vunpack.c.l.b16 %v231
        %v383 = vunpack.c.l.b16 %v232
        %v384 = vunpack.c.l.b16 %v233
        %v385 = vunpack.c.l.b16 %v234
        %v386 = vunpack.c.l.b16 %v235
        %v387 = vunpack.c.l.b16 %v236
        %v388 = vunpack.c.l.b16 %v237
        %v389 = vunpack.c.l.b16 %v238
        %v390 = vunpack.c.l.b16 %v239
        %v391 = vunpack.c.l.b16 %v240
        %v392 = vunpack.c.l.b16 %v241
        %v393 = vunpack.c.l.b16 %v242
        %v394 = vunpack.c.l.b16 %v243
        %v395 = vunpack.c.l.b16 %v244
        %v396 = vunpack.c.l.b16 %v245
        %v397 = vunpack.c.l.b16 %v246
        %v398 = vunpack.c.l.b16 %v247
        %v399 = vunpack.c.l.b16 %v248
        %v400 = vunpack.c.l.b16 %v249
        %v401 = vunpack.c.l.b16 %v250
        %v402 = vunpack.c.l.b16 %v251
        %v403 = vunpack.c.l.b16 %v252
        %v404 = vunpack.c.l.b16 %v253
        %v405 = vunpack.c.l.b16 %v254
        %v406 = vunpack.c.l.b16 %v255
        %v407 = vunpack.c.l.b16 %v256
        %v408 = vunpack.c.l.b16 %v257
        %v409 = vunpack.c.l.b16 %v258
        %v410 = vunpack.c.l.b16 %v259
        %v411 = vunpack.c.l.b16 %v260
        %v412 = vpack.c.b16 %v365, %v364
        %v413 = vpack.c.b16 %v367, %v366
        %v414 = vpack.c.b16 %v369, %v368
        %v415 = vpack.c.b16 %v371, %v370
        %v416 = vpack.c.b16 %v373, %v372
        %v417 = vpack.c.b16 %v375, %v374
        %v418 = vpack.c.b16 %v377, %v376
        %v419 = vpack.c.b16 %v379, %v378
        %v420 = vpack.c.b16 %v381, %v380
        %v421 = vpack.c.b16 %v383, %v382
        %v422 = vpack.c.b16 %v385, %v384
        %v423 = vpack.c.b16 %v387, %v386
        %v424 = vpack.c.b16 %v389, %v388
        %v425 = vpack.c.b16 %v391, %v390
        %v426 = vpack.c.b16 %v393, %v392
        %v427 = vpack.c.b16 %v395, %v394
        %v428 = vpack.c.b16 %v397, %v396
        %v429 = vpack.c.b16 %v399, %v398
        %v430 = vpack.c.b16 %v401, %v400
        %v431 = vpack.c.b16 %v403, %v402
        %v432 = vpack.c.b16 %v405, %v404
        %v433 = vpack.c.b16 %v407, %v406
        %v434 = vpack.c.b16 %v409, %v408
        %v435 = vpack.c.b16 %v411, %v410
        %460 = vmatprep.subr.bf16.mxu0 0
        %461 = vmatpush1.bf16.msra.mxu0 %v419
        %462 = vmatprep.subr.bf16.mxu0 0
        %463 = vmatpush1.bf16.msra.mxu0 %v418
        %464 = vmatprep.subr.bf16.mxu0 0
        %465 = vmatpush1.bf16.msra.mxu0 %v417
        %466 = vmatprep.subr.bf16.mxu0 0
        %467 = vmatpush1.bf16.msra.mxu0 %v416
        %468 = vmatprep.subr.bf16.mxu0 0
        %469 = vmatpush1.bf16.msra.mxu0 %v415
        %470 = vmatprep.subr.bf16.mxu0 0
        %471 = vmatpush1.bf16.msra.mxu0 %v414
        %472 = vmatprep.subr.bf16.mxu0 0
        %473 = vmatpush1.bf16.msra.mxu0 %v413
        %474 = vmatprep.subr.bf16.mxu0 0
        %475 = vmatpush1.bf16.msra.mxu0 %v412
        %476 = vmatprep.subr.bf16.mxu0 0
        %477 = vmatpush2.bf16.msra.mxu0 %v427
        %478 = vmatprep.subr.bf16.mxu0 0
        %479 = vmatpush2.bf16.msra.mxu0 %v426
        %480 = vmatprep.subr.bf16.mxu0 0
        %481 = vmatpush2.bf16.msra.mxu0 %v425
        %482 = vmatprep.subr.bf16.mxu0 0
        %483 = vmatpush2.bf16.msra.mxu0 %v424
        %484 = vmatprep.subr.bf16.mxu0 0
        %485 = vmatpush2.bf16.msra.mxu0 %v423
        %486 = vmatprep.subr.bf16.mxu0 0
        %487 = vmatpush2.bf16.msra.mxu0 %v422
        %488 = vmatprep.subr.bf16.mxu0 0
        %489 = vmatpush2.bf16.msra.mxu0 %v421
        %490 = vmatprep.subr.bf16.mxu0 0
        %491 = vmatpush2.bf16.msra.mxu0 %v420
        %492 = vmatprep.mubr.bf16.mxu0 %v299
        %493 = vmatmul.mubr.bf16.gmra.mxu0 %v298
        %v494 = vpop.f32.mrf.mxu0
        %v495 = vadd.f32 %v266, %v494
        %v496 = vpop.f32.mrf.mxu0
        %v497 = vpop.f32.mrf.mxu0
        %v498 = vadd.f32 %v266, %v497
        %v499 = vpop.f32.mrf.mxu0
        %500 = vmatprep.mubr.bf16.mxu0 %v302
        %501 = vmatmul.mubr.bf16.gmra.mxu0 %v301
        %v502 = vpop.f32.mrf.mxu0
        %v503 = vadd.f32 %v266, %v502
        %v504 = vpop.f32.mrf.mxu0
        %v505 = vpop.f32.mrf.mxu0
        %v506 = vadd.f32 %v266, %v505
        %v507 = vpop.f32.mrf.mxu0
        %508 = vmatprep.mubr.bf16.mxu0 %v305
        %509 = vmatmul.mubr.bf16.gmra.mxu0 %v304
        %v510 = vpop.f32.mrf.mxu0
        %v511 = vadd.f32 %v266, %v510
        %v512 = vpop.f32.mrf.mxu0
        %v513 = vpop.f32.mrf.mxu0
        %v514 = vadd.f32 %v266, %v513
        %v515 = vpop.f32.mrf.mxu0
        %516 = vdwg.mxu0
        %517 = vmatprep.subr.bf16.mxu0 0
        %518 = vmatpush1.bf16.msra.mxu0 %v435
        %519 = vmatprep.subr.bf16.mxu0 0
        %520 = vmatpush1.bf16.msra.mxu0 %v434
        %521 = vmatprep.subr.bf16.mxu0 0
        %522 = vmatpush1.bf16.msra.mxu0 %v433
        %523 = vmatprep.subr.bf16.mxu0 0
        %524 = vmatpush1.bf16.msra.mxu0 %v432
        %525 = vmatprep.subr.bf16.mxu0 0
        %526 = vmatpush1.bf16.msra.mxu0 %v431
        %527 = vmatprep.subr.bf16.mxu0 0
        %528 = vmatpush1.bf16.msra.mxu0 %v430
        %529 = vmatprep.subr.bf16.mxu0 0
        %530 = vmatpush1.bf16.msra.mxu0 %v429
        %531 = vmatprep.subr.bf16.mxu0 0
        %532 = vmatpush1.bf16.msra.mxu0 %v428
        %533 = vmatprep.subr.bf16.mxu0 0
        %534 = vmatpush2.bf16.msra.mxu0 0
        %535 = vmatprep.subr.bf16.mxu0 0
        %536 = vmatpush2.bf16.msra.mxu0 0
        %537 = vmatprep.subr.bf16.mxu0 0
        %538 = vmatpush2.bf16.msra.mxu0 0
        %539 = vmatprep.subr.bf16.mxu0 0
        %540 = vmatpush2.bf16.msra.mxu0 0
        %541 = vmatprep.subr.bf16.mxu0 0
        %542 = vmatpush2.bf16.msra.mxu0 0
        %543 = vmatprep.subr.bf16.mxu0 0
        %544 = vmatpush2.bf16.msra.mxu0 0
        %545 = vmatprep.subr.bf16.mxu0 0
        %546 = vmatpush2.bf16.msra.mxu0 0
        %547 = vmatprep.subr.bf16.mxu0 0
        %548 = vmatpush2.bf16.msra.mxu0 0
        %549 = vmatprep.mubr.bf16.mxu0 0
        %550 = vmatmul.mubr.bf16.gmra.mxu0 %v300
        %v551 = vpop.f32.mrf.mxu0
        %v552 = vadd.f32 %v495, %v551
        %v553 = vpop.f32.mrf.mxu0
        %v554 = vpop.f32.mrf.mxu0
        %v555 = vadd.f32 %v498, %v554
        %v556 = vpop.f32.mrf.mxu0
        %557 = vmatprep.mubr.bf16.mxu0 0
        %558 = vmatmul.mubr.bf16.gmra.mxu0 %v303
        %v559 = vpop.f32.mrf.mxu0
        %v560 = vadd.f32 %v503, %v559
        %v561 = vpop.f32.mrf.mxu0
        %v562 = vpop.f32.mrf.mxu0
        %v563 = vadd.f32 %v506, %v562
        %v564 = vpop.f32.mrf.mxu0
        %565 = vmatprep.mubr.bf16.mxu0 0
        %566 = vmatmul.mubr.bf16.gmra.mxu0 %v306
        %v567 = vpop.f32.mrf.mxu0
        %v568 = vadd.f32 %v511, %v567
        %v569 = vpop.f32.mrf.mxu0
        %v570 = vpop.f32.mrf.mxu0
        %v571 = vadd.f32 %v514, %v570
        %v572 = vpop.f32.mrf.mxu0
        %573 = vdwg.mxu0
        %v574 = vmax.f32 %v552, 0.0
        %v575 = vmax.f32 %v555, 0.0
        %v576 = vmax.f32 %v560, 0.0
        %v577 = vmax.f32 %v563, 0.0
        %v578 = vmax.f32 %v568, 0.0
        %v579 = vmax.f32 %v571, 0.0
        %v580 = vpack.c.bf16 %v575, %v574
        %v581 = vpack.c.bf16 %v577, %v576
        %v582 = vpack.c.bf16 %v579, %v578
        %v586 = vunpack.c.l.b16 %v580
        %v587 = vunpack.c.h.b16 %v580
        %v588 = vunpack.c.l.b16 %v581
        %v589 = vunpack.c.h.b16 %v581
        %v590 = vunpack.c.l.b16 %v582
        %v591 = vunpack.c.h.b16 %v582
        %v592 = vpack.c.b16 %v586, %v586
        %v593 = vpack.c.b16 %v587, %v587
        %v594 = vpack.c.b16 %v588, %v588
        %v595 = vpack.c.b16 %v589, %v589
        %v596 = vpack.c.b16 %v590, %v590
        %v597 = vpack.c.b16 %v591, %v591
        %604 = vst [vmem:[%s177] sm:$0xf] %v592
        %605 = vst [vmem:[%s177 + $0x4] sm:$0xf] %v593
        %606 = vst [vmem:[%s177 + $0x8] sm:$0xf] %v594
        %607 = vst [vmem:[%s177 + $0xc] sm:$0xf] %v595
        %608 = vst [vmem:[%s177 + $0x10] sm:$0xf] %v596
        %609 = vst [vmem:[%s177 + $0x14] sm:$0xf] %v597
        %s610 = sand.u32 %s90, 1
        %s611 = sand.u32 %s90, 1
        %s612 = smul.addr %s611, 24
        %s613 = scalar_lea.vmem [#allocation2], %s612
        // Predicated region
        $region33: #{cnn_forward.6} parent=31 // pred_check
          %p614 = pneg %p100
        $region34: #{cnn_forward.6} parent=31 // pred_check_branch
          %616 = sbr.rel (%p614) target = $region36
        $region35: #{cnn_forward.6} parent=31 // pred_region
          %s617 = smul.u32 6, %s14
          %s618 = ssub.s32 9, %s617
          %p619 = scmp.lt.s32.totalorder %s618, 6
          %s620 = scalar_select %p619, %s618, 6
          %s621 = smul.u32 64, %s620
          %p622 = scmp.ne.s32.totalorder 0, %s621
          %s623 = smul.addr %s617, 4
          %s624 = scalar_lea.vmem %s3, %s623
          // Predicated region
          $region37: #{cnn_forward.6} parent=35 // pred_check
            %p625 = pneg %p622
          $region38: #{cnn_forward.6} parent=35 // pred_check_branch
            %627 = sbr.rel (%p625) target = $region40
          $region39: #{cnn_forward.6} parent=35 // pred_region
            // Predicated region
            $region41: #{cnn_forward.6} parent=39 // pred_check
              _
            $region42: #{cnn_forward.6} parent=39 // pred_check_branch
              %629 = sbr.rel target = $region44
            $region43: #{cnn_forward.6} parent=39 // pred_region
              // Predicated region
              $region63: #{cnn_forward.6} parent=43 // pred_check
                _
              $region64: #{cnn_forward.6} parent=43 // pred_check_branch
                %690 = sbr.rel (0) target = $region66
              $region65: #{cnn_forward.6} parent=43 // pred_region
                %s692 = ssub.s32 16, 1
                %s693 = sdiv.u32.pop %s620, 6
                %s694 = srem.u32.pop %s620, 6
                // While loop
                $region67: #{cnn_forward.6} parent=65 // loop_pre_header
                  _
                $region68: #{cnn_forward.6} parent=65 // loop_header
                  %s696 = sphi 0, %s698
                  %p697 = scmp.ge.s32.totalorder %s696, %s693
                  %s701 = sphi 0, %s718
                  %s702 = sphi %s613, %s721
                  %s703 = sphi %s624, %s722
                $region69: #{cnn_forward.6} parent=65 // loop_header_branch
                  %700 = sbr.rel (%p697) target = $region73
                $region70: #{cnn_forward.6} parent=65 // loop_body
                  %v704 = vld [vmem:[%s702] sm:%s692]
                  %705 = vst [vmem:[%s703] sm:%s692] %v704
                  %v706 = vld [vmem:[%s702 + $0x4] sm:%s692]
                  %707 = vst [vmem:[%s703 + $0x4] sm:%s692] %v706
                  %v708 = vld [vmem:[%s702 + $0x8] sm:%s692]
                  %709 = vst [vmem:[%s703 + $0x8] sm:%s692] %v708
                  %v710 = vld [vmem:[%s702 + $0xc] sm:%s692]
                  %711 = vst [vmem:[%s703 + $0xc] sm:%s692] %v710
                  %v712 = vld [vmem:[%s702 + $0x10] sm:%s692]
                  %713 = vst [vmem:[%s703 + $0x10] sm:%s692] %v712
                  %v714 = vld [vmem:[%s702 + $0x14] sm:%s692]
                  %715 = vst [vmem:[%s703 + $0x14] sm:%s692] %v714
                  %s716 = sadd.s32 1, %s701
                  %p717 = scmp.ge.s32.totalorder %s716, %s693
                  %s718 = scalar_select %p717, 0, %s716
                  %s719 = smul.u32 %s718, 24
                  %s720 = smul.u32 %s718, 24
                  %s721 = scalar_lea.vmem %s613, %s719 [#allocation2]
                  %s722 = scalar_lea.vmem %s624, %s720
                $region71: #{cnn_forward.6} parent=65 // loop_footer
                  %s698 = sadd.s32 %s696, 1
                $region72: #{cnn_forward.6} parent=65 // loop_footer_branch
                  %695 = sbr.rel target = $region68
                $region73: #{cnn_forward.6} parent=65 // loop_exit
                  _
                %s723 = sdiv.u32.pop %s620, 6
                %s724 = srem.u32.pop %s620, 6
                %s725 = smul.u32 %s723, 6
                %s726 = smul.u32 4, %s725
                %s727 = scalar_lea.vmem %s613, %s726 [#allocation2]
                %s728 = smul.u32 4, %s725
                %s729 = scalar_lea.vmem %s624, %s728
                // While loop
                $region74: #{cnn_forward.6} parent=65 // loop_pre_header
                  _
                $region75: #{cnn_forward.6} parent=65 // loop_header
                  %s731 = sphi 0, %s733
                  %p732 = scmp.ge.s32.totalorder %s731, %s724
                  %s736 = sphi 0, %s743
                  %s737 = sphi %s727, %s746
                  %s738 = sphi %s729, %s747
                $region76: #{cnn_forward.6} parent=65 // loop_header_branch
                  %735 = sbr.rel (%p732) target = $region80
                $region77: #{cnn_forward.6} parent=65 // loop_body
                  %v739 = vld [vmem:[%s737] sm:%s692]
                  %740 = vst [vmem:[%s738] sm:%s692] %v739
                  %s741 = sadd.s32 1, %s736
                  %p742 = scmp.ge.s32.totalorder %s741, %s724
                  %s743 = scalar_select %p742, 0, %s741
                  %s744 = smul.u32 %s743, 4
                  %s745 = smul.u32 %s743, 4
                  %s746 = scalar_lea.vmem %s727, %s744 [#allocation2]
                  %s747 = scalar_lea.vmem %s729, %s745
                $region78: #{cnn_forward.6} parent=65 // loop_footer
                  %s733 = sadd.s32 %s731, 1
                $region79: #{cnn_forward.6} parent=65 // loop_footer_branch
                  %730 = sbr.rel target = $region75
                $region80: #{cnn_forward.6} parent=65 // loop_exit
                  _
              $region66: #{cnn_forward.6} parent=43 // pred_fallthru
                _
            $region44: #{cnn_forward.6} parent=39 // pred_fallthru
              _
            // Predicated region
            $region45: #{cnn_forward.6} parent=39 // pred_check
              _
            $region46: #{cnn_forward.6} parent=39 // pred_check_branch
              %631 = sbr.rel (0) target = $region48
            $region47: #{cnn_forward.6} parent=39 // pred_region
              %s633 = ssub.s32 16, 1
              %s634 = sdiv.u32.pop %s620, 6
              %s635 = srem.u32.pop %s620, 6
              // While loop
              $region49: #{cnn_forward.6} parent=47 // loop_pre_header
                _
              $region50: #{cnn_forward.6} parent=47 // loop_header
                %s637 = sphi 0, %s639
                %p638 = scmp.ge.s32.totalorder %s637, %s634
                %s642 = sphi 0, %s659
                %s643 = sphi %s613, %s662
                %s644 = sphi %s624, %s663
              $region51: #{cnn_forward.6} parent=47 // loop_header_branch
                %641 = sbr.rel (%p638) target = $region55
              $region52: #{cnn_forward.6} parent=47 // loop_body
                %v645 = vld [vmem:[%s643] sm:%s633]
                %646 = vst [vmem:[%s644] sm:%s633] %v645
                %v647 = vld [vmem:[%s643 + $0x4] sm:%s633]
                %648 = vst [vmem:[%s644 + $0x4] sm:%s633] %v647
                %v649 = vld [vmem:[%s643 + $0x8] sm:%s633]
                %650 = vst [vmem:[%s644 + $0x8] sm:%s633] %v649
                %v651 = vld [vmem:[%s643 + $0xc] sm:%s633]
                %652 = vst [vmem:[%s644 + $0xc] sm:%s633] %v651
                %v653 = vld [vmem:[%s643 + $0x10] sm:%s633]
                %654 = vst [vmem:[%s644 + $0x10] sm:%s633] %v653
                %v655 = vld [vmem:[%s643 + $0x14] sm:%s633]
                %656 = vst [vmem:[%s644 + $0x14] sm:%s633] %v655
                %s657 = sadd.s32 1, %s642
                %p658 = scmp.ge.s32.totalorder %s657, %s634
                %s659 = scalar_select %p658, 0, %s657
                %s660 = smul.u32 %s659, 24
                %s661 = smul.u32 %s659, 24
                %s662 = scalar_lea.vmem %s613, %s660 [#allocation2]
                %s663 = scalar_lea.vmem %s624, %s661
              $region53: #{cnn_forward.6} parent=47 // loop_footer
                %s639 = sadd.s32 %s637, 1
              $region54: #{cnn_forward.6} parent=47 // loop_footer_branch
                %636 = sbr.rel target = $region50
              $region55: #{cnn_forward.6} parent=47 // loop_exit
                _
              %s664 = sdiv.u32.pop %s620, 6
              %s665 = srem.u32.pop %s620, 6
              %s666 = smul.u32 %s664, 6
              %s667 = smul.u32 4, %s666
              %s668 = scalar_lea.vmem %s613, %s667 [#allocation2]
              %s669 = smul.u32 4, %s666
              %s670 = scalar_lea.vmem %s624, %s669
              // While loop
              $region56: #{cnn_forward.6} parent=47 // loop_pre_header
                _
              $region57: #{cnn_forward.6} parent=47 // loop_header
                %s672 = sphi 0, %s674
                %p673 = scmp.ge.s32.totalorder %s672, %s665
                %s677 = sphi 0, %s684
                %s678 = sphi %s668, %s687
                %s679 = sphi %s670, %s688
              $region58: #{cnn_forward.6} parent=47 // loop_header_branch
                %676 = sbr.rel (%p673) target = $region62
              $region59: #{cnn_forward.6} parent=47 // loop_body
                %v680 = vld [vmem:[%s678] sm:%s633]
                %681 = vst [vmem:[%s679] sm:%s633] %v680
                %s682 = sadd.s32 1, %s677
                %p683 = scmp.ge.s32.totalorder %s682, %s665
                %s684 = scalar_select %p683, 0, %s682
                %s685 = smul.u32 %s684, 4
                %s686 = smul.u32 %s684, 4
                %s687 = scalar_lea.vmem %s668, %s685 [#allocation2]
                %s688 = scalar_lea.vmem %s670, %s686
              $region60: #{cnn_forward.6} parent=47 // loop_footer
                %s674 = sadd.s32 %s672, 1
              $region61: #{cnn_forward.6} parent=47 // loop_footer_branch
                %671 = sbr.rel target = $region57
              $region62: #{cnn_forward.6} parent=47 // loop_exit
                _
            $region48: #{cnn_forward.6} parent=39 // pred_fallthru
              _
          $region40: #{cnn_forward.6} parent=35 // pred_fallthru
            _
          %748 = vnop
        $region36: #{cnn_forward.6} parent=31 // pred_fallthru
          _
      $region32: #{cnn_forward.6} parent=5 // pred_fallthru
        _
      %p749 = scmp.le.s32.totalorder 2, %s9
      // Predicated region
      $region81: #{cnn_forward.6} parent=5 // pred_check
        %p750 = pneg %p749
      $region82: #{cnn_forward.6} parent=5 // pred_check_branch
        %752 = sbr.rel (%p750) target = $region84
      $region83: #{cnn_forward.6} parent=5 // pred_region
        %s753 = ssub.s32 %s9, 2
        // Predicated region
        $region85: #{cnn_forward.6} parent=83 // pred_check
          %p754 = pneg %p106
        $region86: #{cnn_forward.6} parent=83 // pred_check_branch
          %756 = sbr.rel (%p754) target = $region88
        $region87: #{cnn_forward.6} parent=83 // pred_region
          %s757 = sand.u32 %s91, 1
          %s758 = sand.u32 %s91, 1
          %s759 = smul.addr %s758, 24
          %s760 = scalar_lea.vmem [#allocation2], %s759
        $region88: #{cnn_forward.6} parent=83 // pred_fallthru
          _
      $region84: #{cnn_forward.6} parent=5 // pred_fallthru
        _
    $region6: #{cnn_forward.6} parent=1 // loop_footer
      %s13 = sadd.s32 1, %s9
    $region7: #{cnn_forward.6} parent=1 // loop_footer_branch
      %8 = sbr.rel target = $region3
    $region8: #{cnn_forward.6} parent=1 // loop_exit
      _

// kernel: cnn_forward.7
$region0: #{cnn_forward.7}
  #allocation0 [shape = 'u32[]', space=smem, size = 0x4, offset = 0x4, fixed_abs, tag = 'smem constant byte address 0x4 - core index']
  #allocation1 [shape = 'u32[144,128]{1,0:T(1,128)}', space=vmem, size = 0x12000, scoped, tag = 'internal scratch']
  %s0 = inlined_call_operand.vmem [shape: bf16[2,576], index: 0, kind: input, shape index: {}]
  %s1 = inlined_call_operand.vmem [shape: bf16[576,64], index: 1, kind: input, shape index: {}]
  %s2 = inlined_call_operand.vmem [shape: f32[1,64], index: 2, kind: input, shape index: {}]
  %s3 = inlined_call_operand.vmem [shape: bf16[64,10], index: 3, kind: input, shape index: {}]
  %s4 = inlined_call_operand.vmem [shape: f32[1,10], index: 4, kind: input, shape index: {}]
  %s5 = inlined_call_operand.hbm [shape: f32[2,10], index: 5, kind: output, shape index: {}]
  %s6 = sld [smem:[#allocation0]]
  $region30: #{cnn_forward.7} parent=0
    _
  %s8 = ssub.s32 1, %s6
  %s9 = scalar_select 0, %s8, %s6
  $region1: #{cnn_forward.7} parent=0
    #allocation2 [shape = 'u8[1024]{0}', space=vmem, size = 0x400, scoped, tag = 'output window, operand 0, single buffered']
    #allocation3 [shape = 's32[1]{0}', space=sflag, size = 0x4, scoped, tag = 'scoped memory for cnn_forward.7']
    %10 = vsyncpa [#allocation3], 0
    // Predicated region
    $region2: #{cnn_forward.7} parent=1 // pred_check
      _
    $region3: #{cnn_forward.7} parent=1 // pred_check_branch
      %12 = sbr.rel (0) target = $region5
    $region4: #{cnn_forward.7} parent=1 // pred_region
      _
    $region5: #{cnn_forward.7} parent=1 // pred_fallthru
      _
    // Predicated region
    $region6: #{cnn_forward.7} parent=1 // pred_check
      _
    $region7: #{cnn_forward.7} parent=1 // pred_check_branch
      %14 = sbr.rel (0) target = $region9
    $region8: #{cnn_forward.7} parent=1 // pred_region
      _
    $region9: #{cnn_forward.7} parent=1 // pred_fallthru
      _
    // Predicated region
    $region10: #{cnn_forward.7} parent=1 // pred_check
      _
    $region11: #{cnn_forward.7} parent=1 // pred_check_branch
      %16 = sbr.rel (0) target = $region13
    $region12: #{cnn_forward.7} parent=1 // pred_region
      _
    $region13: #{cnn_forward.7} parent=1 // pred_fallthru
      _
    // Predicated region
    $region14: #{cnn_forward.7} parent=1 // pred_check
      _
    $region15: #{cnn_forward.7} parent=1 // pred_check_branch
      %18 = sbr.rel (0) target = $region17
    $region16: #{cnn_forward.7} parent=1 // pred_region
      _
    $region17: #{cnn_forward.7} parent=1 // pred_fallthru
      _
    // Predicated region
    $region18: #{cnn_forward.7} parent=1 // pred_check
      _
    $region19: #{cnn_forward.7} parent=1 // pred_check_branch
      %20 = sbr.rel (0) target = $region21
    $region20: #{cnn_forward.7} parent=1 // pred_region
      _
    $region21: #{cnn_forward.7} parent=1 // pred_fallthru
      _
    %v22 = vld [vmem:[%s0] sm:$0x1f]
    %v23 = vld [vmem:[%s1] sm:$0xf]
    %v24 = vld [vmem:[%s1 + $0x4] sm:$0xf]
    %v25 = vld [vmem:[%s1 + $0x8] sm:$0xf]
    %v26 = vld [vmem:[%s1 + $0xc] sm:$0xf]
    %v27 = vld [vmem:[%s1 + $0x10] sm:$0xf]
    %v28 = vld [vmem:[%s1 + $0x14] sm:$0xf]
    %v29 = vld [vmem:[%s1 + $0x18] sm:$0xf]
    %v30 = vld [vmem:[%s1 + $0x1c] sm:$0xf]
    %v31 = vld [vmem:[%s1 + $0x20] sm:$0xf]
    %v32 = vld [vmem:[%s1 + $0x24] sm:$0xf]
    %v33 = vld [vmem:[%s1 + $0x28] sm:$0xf]
    %v34 = vld [vmem:[%s1 + $0x2c] sm:$0xf]
    %v35 = vld [vmem:[%s1 + $0x30] sm:$0xf]
    %v36 = vld [vmem:[%s1 + $0x34] sm:$0xf]
    %v37 = vld [vmem:[%s1 + $0x38] sm:$0xf]
    %v38 = vld [vmem:[%s1 + $0x3c] sm:$0xf]
    %v39 = vld [vmem:[%s1 + $0x40] sm:$0xf]
    %v40 = vld [vmem:[%s1 + $0x44] sm:$0xf]
    %v41 = vld [vmem:[%s1 + $0x48] sm:$0xf]
    %v42 = vld [vmem:[%s1 + $0x4c] sm:$0xf]
    %v43 = vld [vmem:[%s1 + $0x50] sm:$0xf]
    %v44 = vld [vmem:[%s1 + $0x54] sm:$0xf]
    %v45 = vld [vmem:[%s1 + $0x58] sm:$0xf]
    %v46 = vld [vmem:[%s1 + $0x5c] sm:$0xf]
    %v47 = vld [vmem:[%s1 + $0x60] sm:$0xf]
    %v48 = vld [vmem:[%s1 + $0x64] sm:$0xf]
    %v49 = vld [vmem:[%s1 + $0x68] sm:$0xf]
    %v50 = vld [vmem:[%s1 + $0x6c] sm:$0xf]
    %v51 = vld [vmem:[%s1 + $0x70] sm:$0xf]
    %v52 = vld [vmem:[%s1 + $0x74] sm:$0xf]
    %v53 = vld [vmem:[%s1 + $0x78] sm:$0xf]
    %v54 = vld [vmem:[%s1 + $0x7c] sm:$0xf]
    %v55 = vld [vmem:[%s1 + $0x80] sm:$0xf]
    %v56 = vld [vmem:[%s1 + $0x84] sm:$0xf]
    %v57 = vld [vmem:[%s1 + $0x88] sm:$0xf]
    %v58 = vld [vmem:[%s1 + $0x8c] sm:$0xf]
    %v59 = vld [vmem:[%s1 + $0x90] sm:$0xf]
    %v60 = vld [vmem:[%s1 + $0x94] sm:$0xf]
    %v61 = vld [vmem:[%s1 + $0x98] sm:$0xf]
    %v62 = vld [vmem:[%s1 + $0x9c] sm:$0xf]
    %v63 = vld [vmem:[%s1 + $0xa0] sm:$0xf]
    %v64 = vld [vmem:[%s1 + $0xa4] sm:$0xf]
    %v65 = vld [vmem:[%s1 + $0xa8] sm:$0xf]
    %v66 = vld [vmem:[%s1 + $0xac] sm:$0xf]
    %v67 = vld [vmem:[%s1 + $0xb0] sm:$0xf]
    %v68 = vld [vmem:[%s1 + $0xb4] sm:$0xf]
    %v69 = vld [vmem:[%s1 + $0xb8] sm:$0xf]
    %v70 = vld [vmem:[%s1 + $0xbc] sm:$0xf]
    %v71 = vld [vmem:[%s1 + $0xc0] sm:$0xf]
    %v72 = vld [vmem:[%s1 + $0xc4] sm:$0xf]
    %v73 = vld [vmem:[%s1 + $0xc8] sm:$0xf]
    %v74 = vld [vmem:[%s1 + $0xcc] sm:$0xf]
    %v75 = vld [vmem:[%s1 + $0xd0] sm:$0xf]
    %v76 = vld [vmem:[%s1 + $0xd4] sm:$0xf]
    %v77 = vld [vmem:[%s1 + $0xd8] sm:$0xf]
    %v78 = vld [vmem:[%s1 + $0xdc] sm:$0xf]
    %v79 = vld [vmem:[%s1 + $0xe0] sm:$0xf]
    %v80 = vld [vmem:[%s1 + $0xe4] sm:$0xf]
    %v81 = vld [vmem:[%s1 + $0xe8] sm:$0xf]
    %v82 = vld [vmem:[%s1 + $0xec] sm:$0xf]
    %v83 = vld [vmem:[%s1 + $0xf0] sm:$0xf]
    %v84 = vld [vmem:[%s1 + $0xf4] sm:$0xf]
    %v85 = vld [vmem:[%s1 + $0xf8] sm:$0xf]
    %v86 = vld [vmem:[%s1 + $0xfc] sm:$0xf]
    %v87 = vld [vmem:[%s1 + $0x100] sm:$0xf]
    %v88 = vld [vmem:[%s1 + $0x104] sm:$0xf]
    %v89 = vld [vmem:[%s1 + $0x108] sm:$0xf]
    %v90 = vld [vmem:[%s1 + $0x10c] sm:$0xf]
    %v91 = vld [vmem:[%s1 + $0x110] sm:$0xf]
    %v92 = vld [vmem:[%s1 + $0x114] sm:$0xf]
    %v93 = vld [vmem:[%s1 + $0x118] sm:$0xf]
    %v94 = vld [vmem:[%s1 + $0x11c] sm:$0xf]
    %v95 = vld [vmem:[%s2] sm:$0x1]
    %v97 = vlaneseq
    %v98 = vshrl.u32 %v97, 7
    %v99 = vsub.s32 0, %v98
    %v100 = vrot.slane %v95, %v99
    %v103 = vcombine.high %v22, %v22
    %v105 = vunpack.c.l.s4 1966171168
    %v106 = vunpack.c.0.s8 %v105
    %v107 = vlaneseq
    %v108 = vshrl.u32 %v107, 7
    %v109 = vsub.s32 %v106, %v108
    %v110 = vrot.slane %v22, %v109
    %v112 = vunpack.c.l.s4 1966171168
    %v113 = vunpack.c.0.s8 %v112
    %v114 = vlaneseq
    %v115 = vshrl.u32 %v114, 7
    %v116 = vsub.s32 %v113, %v115
    %v117 = vrot.slane %v103, %v116
    %v118 = vcombine.high %v110, %v110
    %v120 = vunpack.c.l.s4 1966171168
    %v121 = vunpack.c.0.s8 %v120
    %v122 = vlaneseq
    %v123 = vshrl.u32 %v122, 7
    %v124 = vsub.s32 %v121, %v123
    %v125 = vrot.slane %v110, %v124
    %v127 = vunpack.c.l.s4 1966171168
    %v128 = vunpack.c.0.s8 %v127
    %v129 = vlaneseq
    %v130 = vshrl.u32 %v129, 7
    %v131 = vsub.s32 %v128, %v130
    %v132 = vrot.slane %v117, %v131
    %v134 = vunpack.c.l.s4 1966171168
    %v135 = vunpack.c.0.s8 %v134
    %v136 = vlaneseq
    %v137 = vshrl.u32 %v136, 7
    %v138 = vsub.s32 %v135, %v137
    %v139 = vrot.slane %v118, %v138
    %v140 = vcombine.high %v125, %v125
    %v141 = vcombine.high %v139, %v139
    %v218 = vunpack.c.l.b16 %v23
    %v219 = vunpack.c.l.b16 %v24
    %v220 = vunpack.c.l.b16 %v25
    %v221 = vunpack.c.l.b16 %v26
    %v222 = vunpack.c.l.b16 %v27
    %v223 = vunpack.c.l.b16 %v28
    %v224 = vunpack.c.l.b16 %v29
    %v225 = vunpack.c.l.b16 %v30
    %v226 = vunpack.c.l.b16 %v31
    %v227 = vunpack.c.l.b16 %v32
    %v228 = vunpack.c.l.b16 %v33
    %v229 = vunpack.c.l.b16 %v34
    %v230 = vunpack.c.l.b16 %v35
    %v231 = vunpack.c.l.b16 %v36
    %v232 = vunpack.c.l.b16 %v37
    %v233 = vunpack.c.l.b16 %v38
    %v234 = vunpack.c.l.b16 %v39
    %v235 = vunpack.c.l.b16 %v40
    %v236 = vunpack.c.l.b16 %v41
    %v237 = vunpack.c.l.b16 %v42
    %v238 = vunpack.c.l.b16 %v43
    %v239 = vunpack.c.l.b16 %v44
    %v240 = vunpack.c.l.b16 %v45
    %v241 = vunpack.c.l.b16 %v46
    %v242 = vunpack.c.l.b16 %v47
    %v243 = vunpack.c.l.b16 %v48
    %v244 = vunpack.c.l.b16 %v49
    %v245 = vunpack.c.l.b16 %v50
    %v246 = vunpack.c.l.b16 %v51
    %v247 = vunpack.c.l.b16 %v52
    %v248 = vunpack.c.l.b16 %v53
    %v249 = vunpack.c.l.b16 %v54
    %v250 = vunpack.c.l.b16 %v55
    %v251 = vunpack.c.l.b16 %v56
    %v252 = vunpack.c.l.b16 %v57
    %v253 = vunpack.c.l.b16 %v58
    %v254 = vunpack.c.l.b16 %v59
    %v255 = vunpack.c.l.b16 %v60
    %v256 = vunpack.c.l.b16 %v61
    %v257 = vunpack.c.l.b16 %v62
    %v258 = vunpack.c.l.b16 %v63
    %v259 = vunpack.c.l.b16 %v64
    %v260 = vunpack.c.l.b16 %v65
    %v261 = vunpack.c.l.b16 %v66
    %v262 = vunpack.c.l.b16 %v67
    %v263 = vunpack.c.l.b16 %v68
    %v264 = vunpack.c.l.b16 %v69
    %v265 = vunpack.c.l.b16 %v70
    %v266 = vunpack.c.l.b16 %v71
    %v267 = vunpack.c.l.b16 %v72
    %v268 = vunpack.c.l.b16 %v73
    %v269 = vunpack.c.l.b16 %v74
    %v270 = vunpack.c.l.b16 %v75
    %v271 = vunpack.c.l.b16 %v76
    %v272 = vunpack.c.l.b16 %v77
    %v273 = vunpack.c.l.b16 %v78
    %v274 = vunpack.c.l.b16 %v79
    %v275 = vunpack.c.l.b16 %v80
    %v276 = vunpack.c.l.b16 %v81
    %v277 = vunpack.c.l.b16 %v82
    %v278 = vunpack.c.l.b16 %v83
    %v279 = vunpack.c.l.b16 %v84
    %v280 = vunpack.c.l.b16 %v85
    %v281 = vunpack.c.l.b16 %v86
    %v282 = vunpack.c.l.b16 %v87
    %v283 = vunpack.c.l.b16 %v88
    %v284 = vunpack.c.l.b16 %v89
    %v285 = vunpack.c.l.b16 %v90
    %v286 = vunpack.c.l.b16 %v91
    %v287 = vunpack.c.l.b16 %v92
    %v288 = vunpack.c.l.b16 %v93
    %v289 = vunpack.c.l.b16 %v94
    %v290 = vpack.c.b16 %v219, %v218
    %v291 = vpack.c.b16 %v221, %v220
    %v292 = vpack.c.b16 %v223, %v222
    %v293 = vpack.c.b16 %v225, %v224
    %v294 = vpack.c.b16 %v227, %v226
    %v295 = vpack.c.b16 %v229, %v228
    %v296 = vpack.c.b16 %v231, %v230
    %v297 = vpack.c.b16 %v233, %v232
    %v298 = vpack.c.b16 %v235, %v234
    %v299 = vpack.c.b16 %v237, %v236
    %v300 = vpack.c.b16 %v239, %v238
    %v301 = vpack.c.b16 %v241, %v240
    %v302 = vpack.c.b16 %v243, %v242
    %v303 = vpack.c.b16 %v245, %v244
    %v304 = vpack.c.b16 %v247, %v246
    %v305 = vpack.c.b16 %v249, %v248
    %v306 = vpack.c.b16 %v251, %v250
    %v307 = vpack.c.b16 %v253, %v252
    %v308 = vpack.c.b16 %v255, %v254
    %v309 = vpack.c.b16 %v257, %v256
    %v310 = vpack.c.b16 %v259, %v258
    %v311 = vpack.c.b16 %v261, %v260
    %v312 = vpack.c.b16 %v263, %v262
    %v313 = vpack.c.b16 %v265, %v264
    %v314 = vpack.c.b16 %v267, %v266
    %v315 = vpack.c.b16 %v269, %v268
    %v316 = vpack.c.b16 %v271, %v270
    %v317 = vpack.c.b16 %v273, %v272
    %v318 = vpack.c.b16 %v275, %v274
    %v319 = vpack.c.b16 %v277, %v276
    %v320 = vpack.c.b16 %v279, %v278
    %v321 = vpack.c.b16 %v281, %v280
    %v322 = vpack.c.b16 %v283, %v282
    %v323 = vpack.c.b16 %v285, %v284
    %v324 = vpack.c.b16 %v287, %v286
    %v325 = vpack.c.b16 %v289, %v288
    %vm362 = vcmask 523264
    %v364 = vsel %vm362, %v132, 0
    %366 = vmatprep.subr.bf16.mxu0 0
    %367 = vmatpush1.bf16.msra.mxu0 %v297
    %368 = vmatprep.subr.bf16.mxu0 0
    %369 = vmatpush1.bf16.msra.mxu0 %v296
    %370 = vmatprep.subr.bf16.mxu0 0
    %371 = vmatpush1.bf16.msra.mxu0 %v295
    %372 = vmatprep.subr.bf16.mxu0 0
    %373 = vmatpush1.bf16.msra.mxu0 %v294
    %374 = vmatprep.subr.bf16.mxu0 0
    %375 = vmatpush1.bf16.msra.mxu0 %v293
    %376 = vmatprep.subr.bf16.mxu0 0
    %377 = vmatpush1.bf16.msra.mxu0 %v292
    %378 = vmatprep.subr.bf16.mxu0 0
    %379 = vmatpush1.bf16.msra.mxu0 %v291
    %380 = vmatprep.subr.bf16.mxu0 0
    %381 = vmatpush1.bf16.msra.mxu0 %v290
    %382 = vmatprep.subr.bf16.mxu0 0
    %383 = vmatpush2.bf16.msra.mxu0 %v305
    %384 = vmatprep.subr.bf16.mxu0 0
    %385 = vmatpush2.bf16.msra.mxu0 %v304
    %386 = vmatprep.subr.bf16.mxu0 0
    %387 = vmatpush2.bf16.msra.mxu0 %v303
    %388 = vmatprep.subr.bf16.mxu0 0
    %389 = vmatpush2.bf16.msra.mxu0 %v302
    %390 = vmatprep.subr.bf16.mxu0 0
    %391 = vmatpush2.bf16.msra.mxu0 %v301
    %392 = vmatprep.subr.bf16.mxu0 0
    %393 = vmatpush2.bf16.msra.mxu0 %v300
    %394 = vmatprep.subr.bf16.mxu0 0
    %395 = vmatpush2.bf16.msra.mxu0 %v299
    %396 = vmatprep.subr.bf16.mxu0 0
    %397 = vmatpush2.bf16.msra.mxu0 %v298
    %398 = vmatprep.mubr.bf16.mxu0 %v139
    %399 = vmatmul.mubr.bf16.gmra.mxu0 %v125
    %v400 = vpop.f32.mrf.mxu0
    %v401 = vadd.f32 %v100, %v400
    %v402 = vpop.f32.mrf.mxu0
    %v403 = vpop.f32.mrf.mxu0
    %v404 = vpop.f32.mrf.mxu0
    %405 = vdwg.mxu0
    %406 = vmatprep.subr.bf16.mxu0 0
    %407 = vmatpush1.bf16.msra.mxu0 %v313
    %408 = vmatprep.subr.bf16.mxu0 0
    %409 = vmatpush1.bf16.msra.mxu0 %v312
    %410 = vmatprep.subr.bf16.mxu0 0
    %411 = vmatpush1.bf16.msra.mxu0 %v311
    %412 = vmatprep.subr.bf16.mxu0 0
    %413 = vmatpush1.bf16.msra.mxu0 %v310
    %414 = vmatprep.subr.bf16.mxu0 0
    %415 = vmatpush1.bf16.msra.mxu0 %v309
    %416 = vmatprep.subr.bf16.mxu0 0
    %417 = vmatpush1.bf16.msra.mxu0 %v308
    %418 = vmatprep.subr.bf16.mxu0 0
    %419 = vmatpush1.bf16.msra.mxu0 %v307
    %420 = vmatprep.subr.bf16.mxu0 0
    %421 = vmatpush1.bf16.msra.mxu0 %v306
    %422 = vmatprep.subr.bf16.mxu0 0
    %423 = vmatpush2.bf16.msra.mxu0 %v321
    %424 = vmatprep.subr.bf16.mxu0 0
    %425 = vmatpush2.bf16.msra.mxu0 %v320
    %426 = vmatprep.subr.bf16.mxu0 0
    %427 = vmatpush2.bf16.msra.mxu0 %v319
    %428 = vmatprep.subr.bf16.mxu0 0
    %429 = vmatpush2.bf16.msra.mxu0 %v318
    %430 = vmatprep.subr.bf16.mxu0 0
    %431 = vmatpush2.bf16.msra.mxu0 %v317
    %432 = vmatprep.subr.bf16.mxu0 0
    %433 = vmatpush2.bf16.msra.mxu0 %v316
    %434 = vmatprep.subr.bf16.mxu0 0
    %435 = vmatpush2.bf16.msra.mxu0 %v315
    %436 = vmatprep.subr.bf16.mxu0 0
    %437 = vmatpush2.bf16.msra.mxu0 %v314
    %438 = vmatprep.mubr.bf16.mxu0 %v141
    %439 = vmatmul.mubr.bf16.gmra.mxu0 %v140
    %v440 = vpop.f32.mrf.mxu0
    %v441 = vadd.f32 %v401, %v440
    %v442 = vpop.f32.mrf.mxu0
    %v443 = vpop.f32.mrf.mxu0
    %v444 = vpop.f32.mrf.mxu0
    %445 = vdwg.mxu0
    %446 = vmatprep.subr.bf16.mxu0 0
    %447 = vmatpush1.bf16.msra.mxu0 0
    %448 = vmatprep.subr.bf16.mxu0 0
    %449 = vmatpush1.bf16.msra.mxu0 0
    %450 = vmatprep.subr.bf16.mxu0 0
    %451 = vmatpush1.bf16.msra.mxu0 0
    %452 = vmatprep.subr.bf16.mxu0 0
    %453 = vmatpush1.bf16.msra.mxu0 0
    %454 = vmatprep.subr.bf16.mxu0 0
    %455 = vmatpush1.bf16.msra.mxu0 %v325
    %456 = vmatprep.subr.bf16.mxu0 0
    %457 = vmatpush1.bf16.msra.mxu0 %v324
    %458 = vmatprep.subr.bf16.mxu0 0
    %459 = vmatpush1.bf16.msra.mxu0 %v323
    %460 = vmatprep.subr.bf16.mxu0 0
    %461 = vmatpush1.bf16.msra.mxu0 %v322
    %462 = vmatprep.subr.bf16.mxu0 0
    %463 = vmatpush2.bf16.msra.mxu0 0
    %464 = vmatprep.subr.bf16.mxu0 0
    %465 = vmatpush2.bf16.msra.mxu0 0
    %466 = vmatprep.subr.bf16.mxu0 0
    %467 = vmatpush2.bf16.msra.mxu0 0
    %468 = vmatprep.subr.bf16.mxu0 0
    %469 = vmatpush2.bf16.msra.mxu0 0
    %470 = vmatprep.subr.bf16.mxu0 0
    %471 = vmatpush2.bf16.msra.mxu0 0
    %472 = vmatprep.subr.bf16.mxu0 0
    %473 = vmatpush2.bf16.msra.mxu0 0
    %474 = vmatprep.subr.bf16.mxu0 0
    %475 = vmatpush2.bf16.msra.mxu0 0
    %476 = vmatprep.subr.bf16.mxu0 0
    %477 = vmatpush2.bf16.msra.mxu0 0
    %478 = vmatprep.mubr.bf16.mxu0 0
    %479 = vmatmul.mubr.bf16.gmra.mxu0 %v364
    %v480 = vpop.f32.mrf.mxu0
    %v481 = vadd.f32 %v441, %v480
    %v482 = vpop.f32.mrf.mxu0
    %v483 = vpop.f32.mrf.mxu0
    %v484 = vpop.f32.mrf.mxu0
    %485 = vdwg.mxu0
    %v486 = vmax.f32 %v481, 0.0
    %v487 = vpack.c.bf16 %v486, %v486
    %v488 = vld [vmem:[%s3] sm:$0xf]
    %v489 = vld [vmem:[%s3 + $0x4] sm:$0xf]
    %v490 = vld [vmem:[%s3 + $0x8] sm:$0xf]
    %v491 = vld [vmem:[%s3 + $0xc] sm:$0xf]
    %v492 = vld [vmem:[%s3 + $0x10] sm:$0xf]
    %v493 = vld [vmem:[%s3 + $0x14] sm:$0xf]
    %v494 = vld [vmem:[%s3 + $0x18] sm:$0xf]
    %v495 = vld [vmem:[%s3 + $0x1c] sm:$0xf]
    %v496 = vld [vmem:[%s4] sm:$0x1]
    %v498 = vlaneseq
    %v499 = vshrl.u32 %v498, 7
    %v500 = vsub.s32 0, %v499
    %v501 = vrot.slane %v496, %v500
    %v511 = vunpack.c.l.b16 %v488
    %v512 = vunpack.c.l.b16 %v489
    %v513 = vunpack.c.l.b16 %v490
    %v514 = vunpack.c.l.b16 %v491
    %v515 = vunpack.c.l.b16 %v492
    %v516 = vunpack.c.l.b16 %v493
    %v517 = vunpack.c.l.b16 %v494
    %v518 = vunpack.c.l.b16 %v495
    %v519 = vpack.c.b16 %v512, %v511
    %v520 = vpack.c.b16 %v514, %v513
    %v521 = vpack.c.b16 %v516, %v515
    %v522 = vpack.c.b16 %v518, %v517
    %v528 = vsel %vm362, %v487, 0
    %530 = vmatprep.subr.bf16.mxu0 0
    %531 = vmatpush1.bf16.msra.mxu0 0
    %532 = vmatprep.subr.bf16.mxu0 0
    %533 = vmatpush1.bf16.msra.mxu0 0
    %534 = vmatprep.subr.bf16.mxu0 0
    %535 = vmatpush1.bf16.msra.mxu0 0
    %536 = vmatprep.subr.bf16.mxu0 0
    %537 = vmatpush1.bf16.msra.mxu0 0
    %538 = vmatprep.subr.bf16.mxu0 0
    %539 = vmatpush1.bf16.msra.mxu0 %v522
    %540 = vmatprep.subr.bf16.mxu0 0
    %541 = vmatpush1.bf16.msra.mxu0 %v521
    %542 = vmatprep.subr.bf16.mxu0 0
    %543 = vmatpush1.bf16.msra.mxu0 %v520
    %544 = vmatprep.subr.bf16.mxu0 0
    %545 = vmatpush1.bf16.msra.mxu0 %v519
    %546 = vmatprep.subr.bf16.mxu0 0
    %547 = vmatpush2.bf16.msra.mxu0 0
    %548 = vmatprep.subr.bf16.mxu0 0
    %549 = vmatpush2.bf16.msra.mxu0 0
    %550 = vmatprep.subr.bf16.mxu0 0
    %551 = vmatpush2.bf16.msra.mxu0 0
    %552 = vmatprep.subr.bf16.mxu0 0
    %553 = vmatpush2.bf16.msra.mxu0 0
    %554 = vmatprep.subr.bf16.mxu0 0
    %555 = vmatpush2.bf16.msra.mxu0 0
    %556 = vmatprep.subr.bf16.mxu0 0
    %557 = vmatpush2.bf16.msra.mxu0 0
    %558 = vmatprep.subr.bf16.mxu0 0
    %559 = vmatpush2.bf16.msra.mxu0 0
    %560 = vmatprep.subr.bf16.mxu0 0
    %561 = vmatpush2.bf16.msra.mxu0 0
    %562 = vmatprep.mubr.bf16.mxu0 0
    %563 = vmatmul.mubr.bf16.gmra.mxu0 %v528
    %v564 = vpop.f32.mrf.mxu0
    %v565 = vadd.f32 %v501, %v564
    %v566 = vpop.f32.mrf.mxu0
    %v567 = vpop.f32.mrf.mxu0
    %v568 = vpop.f32.mrf.mxu0
    %569 = vdwg.mxu0
    %v570 = vmax.f32 %v565, 0.0
    %vm571 = vcmask 74752
    %v572 = vsel %vm571, %v570, -inf
    %573 = vmax.xlane.f32.xlu0 %v572
    %v574 = vpop.xlane.xlu0 %573
    %v575 = vsub.f32 %v570, %v574
    %v576 = vmul.f32 %v575, 1.442695
    %v577 = vpow.pop %v576
    %v578 = vsel %vm571, %v577, 0.0
    %579 = vadd.xlane.f32.xlu0 %v578
    %v580 = vpop.xlane.xlu0 %579
    %v581 = vlog2.pop %v580
    %v582 = vmul.f32 %v581, 0.6931472
    %v583 = vsub.f32 %v575, %v582
    %584 = vst.msk [vmem:[#allocation2] sm:$0x3] %vm571, %v583
    // Predicated region
    $region22: #{cnn_forward.7} parent=1 // pred_check
      _
    $region23: #{cnn_forward.7} parent=1 // pred_check_branch
      %586 = sbr.rel (0) target = $region25
    $region24: #{cnn_forward.7} parent=1 // pred_region
      %s588 = ssub.s32 32, 32
      %589 = vsyncadd [#allocation3], %s588
      %s591 = sshll.u32 [#allocation2], 4
      %s592 = int_to_ptr.vmem [resolvable:$true] %s591
      %594 = dma.vmem_to_hbm [thread:$0]  %s592, 32, %s5, [#allocation3]
    $region25: #{cnn_forward.7} parent=1 // pred_fallthru
      _
    // Predicated region
    $region26: #{cnn_forward.7} parent=1 // pred_check
      _
    $region27: #{cnn_forward.7} parent=1 // pred_check_branch
      %596 = sbr.rel (0) target = $region29
    $region28: #{cnn_forward.7} parent=1 // pred_region
      %597 = dma.done [#allocation3], 32
    $region29: #{cnn_forward.7} parent=1 // pred_fallthru
      _
    %598 = vsyncpa [#allocation3], 1

</llo_original>
